<compile_context>
chip_gen: v5e
topology: v5e:2x2
jax: 0.10.0
libtpu: 0.0.40
codegen_flags: <defaults>
</compile_context>

<pallas_src>
import functools

import jax
import jax.numpy as jnp
from jax.experimental import pallas as pl
from jax.experimental.pallas import tpu as pltpu


# -----------------------------------------------------------------------------
# helpers
# -----------------------------------------------------------------------------
_NEG_MASK = -1e30  # bias for padded class lanes: exp(-1e30 - m) == 0 exactly


def _round_up(x, m):
    return ((x + m - 1) // m) * m


def _pad_axis(x, axis, target):
    pad = target - x.shape[axis]
    if pad <= 0:
        return x
    widths = [(0, 0)] * x.ndim
    widths[axis] = (0, pad)
    return jnp.pad(x, widths)


def _pick_tk(f_in_pad, tk_max):
    """Largest K-tile <= tk_max, multiple of 256, dividing f_in_pad."""
    tk = min(tk_max, f_in_pad)
    while f_in_pad % tk != 0:
        tk -= 256
    return tk


# -----------------------------------------------------------------------------
# Pallas kernels
# -----------------------------------------------------------------------------
def _head_and_logits(feat_f32, w1_ref, b1_ref, w23_ref, b23_ref):
    """Fused classifier head on a [Bp, 1024] f32 feature block."""
    h1 = jnp.dot(feat_f32.astype(jnp.bfloat16), w1_ref[...],
                 preferred_element_type=jnp.float32) + b1_ref[...]
    h1 = jnp.maximum(h1, 0.0)
    logits = jnp.dot(h1.astype(jnp.bfloat16), w23_ref[...],
                     preferred_element_type=jnp.float32) + b23_ref[...]
    return logits


def _enc_cls_train_kernel(x_ref, we_ref, be_ref, w1_ref, b1_ref, w23_ref,
                          b23_ref, feat_ref, out_ref):
    """Train path: K-tiled encoder accumulating directly into feat_ref,
    head fused on the last K step.  Outputs (feat, logits)."""
    k = pl.program_id(0)

    @pl.when(k == 0)
    def _():
        feat_ref[...] = jnp.zeros_like(feat_ref)

    x_bf = x_ref[...].astype(jnp.bfloat16)          # cast hides under weight DMA
    feat_ref[...] += jnp.dot(x_bf, we_ref[...],
                             preferred_element_type=jnp.float32)

    @pl.when(k == pl.num_programs(0) - 1)
    def _():
        feat = jnp.maximum(feat_ref[...] + be_ref[...], 0.0)   # bias + ReLU
        feat_ref[...] = feat
        out_ref[...] = _head_and_logits(feat, w1_ref, b1_ref, w23_ref, b23_ref)


def _enc_cls_test_kernel(x_ref, we_ref, be_ref, w1_ref, b1_ref, w23_ref,
                         b23_ref, out_ref, acc_ref):
    """Test path: same pipeline but no feat output (no [Bp,1024] HBM
    writeback); softmax fused into the epilogue."""
    k = pl.program_id(0)

    @pl.when(k == 0)
    def _():
        acc_ref[...] = jnp.zeros_like(acc_ref)

    x_bf = x_ref[...].astype(jnp.bfloat16)
    acc_ref[...] += jnp.dot(x_bf, we_ref[...],
                            preferred_element_type=jnp.float32)

    @pl.when(k == pl.num_programs(0) - 1)
    def _():
        feat = jnp.maximum(acc_ref[...] + be_ref[...], 0.0)
        logits = _head_and_logits(feat, w1_ref, b1_ref, w23_ref, b23_ref)
        m = jnp.max(logits, axis=-1, keepdims=True)
        e = jnp.exp(logits - m)                      # padded lanes -> exactly 0
        s = jnp.sum(e, axis=-1, keepdims=True)
        out_ref[...] = e * pl.reciprocal(s, approx=False)


# -----------------------------------------------------------------------------
# pallas_call wrappers
# -----------------------------------------------------------------------------
_COMPILER_PARAMS = pltpu.CompilerParams(
    dimension_semantics=("arbitrary",),          # K reduction axis
    vmem_limit_bytes=48 * 1024 * 1024,           # fits v7x's 64 MiB physical
)


def _common_in_specs(Bp, tk, H, NCp):
    return [
        pl.BlockSpec((Bp, tk), lambda k: (0, k)),     # x K-tile (f32)
        pl.BlockSpec((tk, H), lambda k: (k, 0)),      # encoder weight K-tile
        pl.BlockSpec((1, H), lambda k: (0, 0)),       # encoder bias
        pl.BlockSpec((H, 256), lambda k: (0, 0)),     # head w1
        pl.BlockSpec((1, 256), lambda k: (0, 0)),     # head b1
        pl.BlockSpec((256, NCp), lambda k: (0, 0)),   # folded w23 (lane-padded)
        pl.BlockSpec((1, NCp), lambda k: (0, 0)),     # folded b23 (lane-padded)
    ]


def fused_encoder_cls_train(x_pad, enc, head, tk):
    """x_pad: [Bp, F_in_pad] f32 -> (feat [Bp,1024] f32, logits [Bp,NCp] f32)."""
    Bp, Fp = x_pad.shape
    H = enc["w"].shape[1]
    NCp = head["w23"].shape[1]
    return pl.pallas_call(
        _enc_cls_train_kernel,
        out_shape=(jax.ShapeDtypeStruct((Bp, H), jnp.float32),
                   jax.ShapeDtypeStruct((Bp, NCp), jnp.float32)),
        grid_spec=pltpu.PrefetchScalarGridSpec(
            num_scalar_prefetch=0,
            grid=(Fp // tk,),
            in_specs=_common_in_specs(Bp, tk, H, NCp),
            out_specs=[
                pl.BlockSpec((Bp, H), lambda k: (0, 0)),    # feat == accumulator
                pl.BlockSpec((Bp, NCp), lambda k: (0, 0)),
            ],
        ),
        compiler_params=_COMPILER_PARAMS,
    )(x_pad, enc["w"], enc["b"], head["w1"], head["b1"],
      head["w23"], head["b23"])


def fused_encoder_cls_test(x_pad, enc, head, tk):
    """x_pad: [Bp, F_in_pad] f32 -> softmax probs [Bp, NCp] f32 (no feat out)."""
    Bp, Fp = x_pad.shape
    H = enc["w"].shape[1]
    NCp = head["w23"].shape[1]
    return pl.pallas_call(
        _enc_cls_test_kernel,
        out_shape=jax.ShapeDtypeStruct((Bp, NCp), jnp.float32),
        grid_spec=pltpu.PrefetchScalarGridSpec(
            num_scalar_prefetch=0,
            grid=(Fp // tk,),
            in_specs=_common_in_specs(Bp, tk, H, NCp),
            out_specs=pl.BlockSpec((Bp, NCp), lambda k: (0, 0)),
            scratch_shapes=[pltpu.VMEM((Bp, H), jnp.float32)],
        ),
        compiler_params=_COMPILER_PARAMS,
    )(x_pad, enc["w"], enc["b"], head["w1"], head["b1"],
      head["w23"], head["b23"])


# -----------------------------------------------------------------------------
# Parameter construction (deterministic, in-script)
# -----------------------------------------------------------------------------
def _linear_params(key, fan_in, fan_out):
    kw, kb = jax.random.split(key)
    scale = 1.0 / jnp.sqrt(jnp.float32(fan_in))
    w = jax.random.uniform(kw, (fan_in, fan_out), jnp.float32, -scale, scale)
    b = jax.random.uniform(kb, (1, fan_out), jnp.float32, -scale, scale)
    return w, b


class JointClsModel:
    HIDDEN_DIM = 1024
    SUBLANES = 8
    TK_MAX = 8192   # bf16 weight K-tile: 2 bufs x 8192x1024x2B = 32 MiB < limit

    def __init__(self, config, input_shapes, key):
        """input_shapes: dict modality -> (C, D, H, W) for the encoder stubs."""
        self.num_class = config["setting"]["num_class"]
        self.nc_pad = _round_up(max(self.num_class, 1), 128)   # lane-dense out
        keys = jax.random.split(key, 12)
        ki = iter(keys)

        # encoder stubs: flatten -> Linear(F_in,1024) -> ReLU  (bf16 weights)
        self.enc = {}
        self.enc_meta = {}
        for name in ("rgb", "of", "depth"):
            C, D, H, W = input_shapes[name]
            f_in = C * D * H * W
            f_in_pad = _round_up(f_in, 256)
            tk = _pick_tk(f_in_pad, self.TK_MAX)
            w, b = _linear_params(next(ki), f_in, self.HIDDEN_DIM)
            w = _pad_axis(w, 0, f_in_pad).astype(jnp.bfloat16)  # zero rows: no-op
            self.enc[name] = {"w": w, "b": b}
            self.enc_meta[name] = {"f_in": f_in, "f_in_pad": f_in_pad, "tk": tk}

        # classifier heads: Linear(1024,256)->ReLU->Linear(256,64)->Linear(64,NC)
        # last two layers folded exactly: w23 = w2 @ w3, b23 = b2 @ w3 + b3.
        # Class axis lane-padded to 128; padded bias lanes masked to -1e30 so
        # the in-kernel softmax over NCp lanes equals softmax over NC classes.
        self.cls = {}
        for name in ("r", "o", "d"):
            k1, k2, k3 = jax.random.split(next(ki), 3)
            w1, b1 = _linear_params(k1, self.HIDDEN_DIM, 256)
            w2, b2 = _linear_params(k2, 256, 64)
            w3, b3 = _linear_params(k3, 64, self.num_class)
            w23 = jnp.dot(w2, w3)                      # [256, NC] f32 (exact fold)
            b23 = jnp.dot(b2, w3) + b3                 # [1, NC]   f32
            pad = self.nc_pad - self.num_class
            w23 = jnp.pad(w23, ((0, 0), (0, pad)))
            b23 = jnp.pad(b23, ((0, 0), (0, pad)), constant_values=_NEG_MASK)
            self.cls[name] = {"w1": w1.astype(jnp.bfloat16), "b1": b1,
                              "w23": w23.astype(jnp.bfloat16), "b23": b23}

    # --- one fused encoder+head kernel per modality ---
    def _prep(self, x, enc_name):
        B = x.shape[0]
        meta = self.enc_meta[enc_name]
        Bp = _round_up(B, self.SUBLANES)
        x_flat = x.reshape(B, -1)
        # single pad pass over x (batch + K together); kept f32 (cast in-kernel)
        x_flat = jnp.pad(x_flat, ((0, Bp - B),
                                  (0, meta["f_in_pad"] - meta["f_in"])))
        return x_flat, meta["tk"], B

    def _run_train(self, x, enc_name, cls_name):
        x_pad, tk, B = self._prep(x, enc_name)
        feat_p, out_p = fused_encoder_cls_train(
            x_pad, self.enc[enc_name], self.cls[cls_name], tk)
        return feat_p[:B], out_p[:B, :self.num_class]

    def _run_test(self, x, enc_name, cls_name):
        x_pad, tk, B = self._prep(x, enc_name)
        probs_p = fused_encoder_cls_test(
            x_pad, self.enc[enc_name], self.cls[cls_name], tk)
        return probs_p, B

    def forward(self, input_list):
        rgb, of, depth, state = input_list
        if state == "train_rgb":
            return self._run_train(rgb, "rgb", "r")
        elif state == "train_of":
            return self._run_train(of, "of", "o")
        elif state == "train_depth":
            return self._run_train(depth, "depth", "d")
        elif state == "test_rgb":
            p, B = self._run_test(rgb, "rgb", "r")
            return p[:B, :self.num_class]
        elif state == "test_of":
            p, B = self._run_test(of, "of", "o")
            return p[:B, :self.num_class]
        elif state == "test_depth":
            p, B = self._run_test(depth, "depth", "d")
            return p[:B, :self.num_class]
        elif state == "test":
            p_r, B = self._run_test(rgb, "rgb", "r")
            p_o, _ = self._run_test(of, "of", "o")
            p_d, _ = self._run_test(depth, "depth", "d")
            # tiny [Bp, NCp] average: plain JAX (a pallas_call here would cost
            # more in launch overhead than the work itself)
            avg = (p_d + p_o + p_r) * (1.0 / 3.0)
            return avg[:B, :self.num_class]
        else:
            raise ValueError(f"unknown state: {state}")


# -----------------------------------------------------------------------------
# Demo
# -----------------------------------------------------------------------------
if __name__ == "__main__":
    key = jax.random.PRNGKey(0)
    k_params, k_rgb, k_of, k_depth = jax.random.split(key, 4)

    B, D, H, W = 2, 4, 16, 16
    num_class = 8
    config = {"setting": {"num_class": num_class},
              "train": {"temperature1": 1.0}}

    input_shapes = {"rgb": (3, D, H, W), "of": (2, D, H, W), "depth": (1, D, H, W)}
    model = JointClsModel(config, input_shapes, k_params)

    rgb = jax.random.normal(k_rgb, (B, 3, D, H, W), jnp.float32)
    of = jax.random.normal(k_of, (B, 2, D, H, W), jnp.float32)
    depth = jax.random.normal(k_depth, (B, 1, D, H, W), jnp.float32)

    # 'train_rgb' path: (feature, logits)
    feat, logits = model.forward([rgb, of, depth, "train_rgb"])
    jax.block_until_ready(feat)
    jax.block_until_ready(logits)
    assert feat.shape == (B, 1024)
    assert logits.shape == (B, num_class)
    assert bool(jnp.all(jnp.isfinite(feat))) and bool(jnp.all(jnp.isfinite(logits)))

    # 'test_of' path: single-modality softmax
    soft_of = model.forward([rgb, of, depth, "test_of"])
    soft_of = jax.block_until_ready(soft_of)
    assert soft_of.shape == (B, num_class)
    assert bool(jnp.all(jnp.abs(jnp.sum(soft_of, axis=1) - 1.0) < 1e-4))

    # 'test' path: averaged softmax over the three modalities
    soft = model.forward([rgb, of, depth, "test"])
    soft = jax.block_until_ready(soft)
    assert soft.shape == (B, num_class)
    row_sums = jnp.sum(soft, axis=1)
    assert bool(jnp.all(jnp.abs(row_sums - 1.0) < 1e-4))

    print("KERNEL_OK")
</pallas_src>

<mosaic_0001>
module attributes {stable_mosaic.version = 11 : i64} {
  func.func @_enc_cls_train_kernel(%arg0: i32, %arg1: memref<8x3072xf32, #tpu.memory_space<vmem>>, %arg2: memref<3072x1024xbf16, #tpu.memory_space<vmem>>, %arg3: memref<1x1024xf32, #tpu.memory_space<vmem>>, %arg4: memref<1024x256xbf16, #tpu.memory_space<vmem>>, %arg5: memref<1x256xf32, #tpu.memory_space<vmem>>, %arg6: memref<256x128xbf16, #tpu.memory_space<vmem>>, %arg7: memref<1x128xf32, #tpu.memory_space<vmem>>, %arg8: memref<8x1024xf32, #tpu.memory_space<vmem>>, %arg9: memref<8x128xf32, #tpu.memory_space<vmem>>) attributes {dimension_semantics = [#tpu.dimension_semantics<arbitrary>], iteration_bounds = array<i64: 1>, scalar_prefetch = 0 : i64, scratch_operands = 0 : i64, tpu.core_type = #tpu.core_type<tc>, window_params = [{transform_indices = @transform_0, window_bounds = array<i64: 8, 3072>}, {transform_indices = @transform_1, window_bounds = array<i64: 3072, 1024>}, {pipeline_mode = #tpu.pipeline_mode<synchronous>, transform_indices = @transform_2, window_bounds = array<i64: 1, 1024>}, {pipeline_mode = #tpu.pipeline_mode<synchronous>, transform_indices = @transform_3, window_bounds = array<i64: 1024, 256>}, {pipeline_mode = #tpu.pipeline_mode<synchronous>, transform_indices = @transform_4, window_bounds = array<i64: 1, 256>}, {pipeline_mode = #tpu.pipeline_mode<synchronous>, transform_indices = @transform_5, window_bounds = array<i64: 256, 128>}, {pipeline_mode = #tpu.pipeline_mode<synchronous>, transform_indices = @transform_6, window_bounds = array<i64: 1, 128>}, {pipeline_mode = #tpu.pipeline_mode<synchronous>, transform_indices = @transform_7, window_bounds = array<i64: 8, 1024>}, {pipeline_mode = #tpu.pipeline_mode<synchronous>, transform_indices = @transform_8, window_bounds = array<i64: 8, 128>}]} {
    %c0_i32 = arith.constant 0 : i32
    %0 = arith.cmpi eq, %arg0, %c0_i32 : i32
    %1 = arith.extui %0 : i1 to i32
    %c0_i32_0 = arith.constant 0 : i32
    %2 = arith.cmpi ne, %1, %c0_i32_0 : i32
    scf.if %2 {
      %cst_10 = arith.constant 0.000000e+00 : f32
      %13 = vector.broadcast %cst_10 : f32 to vector<8x1024xf32>
      %c0_11 = arith.constant 0 : index
      %c0_12 = arith.constant 0 : index
      %14 = vector.load %arg8[%c0_11, %c0_12] : memref<8x1024xf32, #tpu.memory_space<vmem>>, vector<8x1024xf32>
      tpu.vector_store %arg8[%c0_11, %c0_12], %13 {strides = array<i32>} : memref<8x1024xf32, #tpu.memory_space<vmem>>, vector<8x1024xf32>,
    } else {
    }
    %c0 = arith.constant 0 : index
    %c0_1 = arith.constant 0 : index
    %3 = vector.load %arg1[%c0, %c0_1] : memref<8x3072xf32, #tpu.memory_space<vmem>>, vector<8x3072xf32>
    %4 = arith.truncf %3 : vector<8x3072xf32> to vector<8x3072xbf16>
    %c0_2 = arith.constant 0 : index
    %c0_3 = arith.constant 0 : index
    %5 = vector.load %arg8[%c0_2, %c0_3] : memref<8x1024xf32, #tpu.memory_space<vmem>>, vector<8x1024xf32>
    %c0_4 = arith.constant 0 : index
    %c0_5 = arith.constant 0 : index
    %6 = vector.load %arg2[%c0_4, %c0_5] : memref<3072x1024xbf16, #tpu.memory_space<vmem>>, vector<3072x1024xbf16>
    %cst = arith.constant dense<0.000000e+00> : vector<8x1024xf32>
    %7 = tpu.matmul %4, %6, %cst {dimension_numbers = #tpu.dot_dimension_numbers<[1], [0], [0], [1], [0, 0, 1, 1], [], []>} : vector<8x3072xbf16>, vector<3072x1024xbf16>, vector<8x1024xf32> -> vector<8x1024xf32>
    %8 = arith.addf %5, %7 : vector<8x1024xf32>
    %c0_6 = arith.constant 0 : index
    %c0_7 = arith.constant 0 : index
    %9 = vector.load %arg8[%c0_6, %c0_7] : memref<8x1024xf32, #tpu.memory_space<vmem>>, vector<8x1024xf32>
    tpu.vector_store %arg8[%c0_6, %c0_7], %8 {strides = array<i32>} : memref<8x1024xf32, #tpu.memory_space<vmem>>, vector<8x1024xf32>,
    %c0_i32_8 = arith.constant 0 : i32
    %10 = arith.cmpi eq, %arg0, %c0_i32_8 : i32
    %11 = arith.extui %10 : i1 to i32
    %c0_i32_9 = arith.constant 0 : i32
    %12 = arith.cmpi ne, %11, %c0_i32_9 : i32
    scf.if %12 {
      %c0_10 = arith.constant 0 : index
      %c0_11 = arith.constant 0 : index
      %13 = vector.load %arg8[%c0_10, %c0_11] : memref<8x1024xf32, #tpu.memory_space<vmem>>, vector<8x1024xf32>
      %c0_12 = arith.constant 0 : index
      %c0_13 = arith.constant 0 : index
      %14 = vector.load %arg3[%c0_12, %c0_13] : memref<1x1024xf32, #tpu.memory_space<vmem>>, vector<1x1024xf32>
      %15 = vector.broadcast %14 : vector<1x1024xf32> to vector<8x1024xf32>
      %16 = arith.addf %13, %15 : vector<8x1024xf32>
      %cst_14 = arith.constant 0.000000e+00 : f32
      %17 = vector.broadcast %cst_14 : f32 to vector<8x1024xf32>
      %18 = arith.maximumf %16, %17 : vector<8x1024xf32>
      %c0_15 = arith.constant 0 : index
      %c0_16 = arith.constant 0 : index
      %19 = vector.load %arg8[%c0_15, %c0_16] : memref<8x1024xf32, #tpu.memory_space<vmem>>, vector<8x1024xf32>
      tpu.vector_store %arg8[%c0_15, %c0_16], %18 {strides = array<i32>} : memref<8x1024xf32, #tpu.memory_space<vmem>>, vector<8x1024xf32>,
      %20 = arith.truncf %18 : vector<8x1024xf32> to vector<8x1024xbf16>
      %c0_17 = arith.constant 0 : index
      %c0_18 = arith.constant 0 : index
      %21 = vector.load %arg4[%c0_17, %c0_18] : memref<1024x256xbf16, #tpu.memory_space<vmem>>, vector<1024x256xbf16>
      %cst_19 = arith.constant dense<0.000000e+00> : vector<8x256xf32>
      %22 = tpu.matmul %20, %21, %cst_19 {dimension_numbers = #tpu.dot_dimension_numbers<[1], [0], [0], [1], [0, 0, 1, 1], [], []>} : vector<8x1024xbf16>, vector<1024x256xbf16>, vector<8x256xf32> -> vector<8x256xf32>
      %c0_20 = arith.constant 0 : index
      %c0_21 = arith.constant 0 : index
      %23 = vector.load %arg5[%c0_20, %c0_21] : memref<1x256xf32, #tpu.memory_space<vmem>>, vector<1x256xf32>
      %24 = vector.broadcast %23 : vector<1x256xf32> to vector<8x256xf32>
      %25 = arith.addf %22, %24 : vector<8x256xf32>
      %cst_22 = arith.constant 0.000000e+00 : f32
      %26 = vector.broadcast %cst_22 : f32 to vector<8x256xf32>
      %27 = arith.maximumf %25, %26 : vector<8x256xf32>
      %28 = arith.truncf %27 : vector<8x256xf32> to vector<8x256xbf16>
      %c0_23 = arith.constant 0 : index
      %c0_24 = arith.constant 0 : index
      %29 = vector.load %arg6[%c0_23, %c0_24] : memref<256x128xbf16, #tpu.memory_space<vmem>>, vector<256x128xbf16>
      %cst_25 = arith.constant dense<0.000000e+00> : vector<8x128xf32>
      %30 = tpu.matmul %28, %29, %cst_25 {dimension_numbers = #tpu.dot_dimension_numbers<[1], [0], [0], [1], [0, 0, 1, 1], [], []>} : vector<8x256xbf16>, vector<256x128xbf16>, vector<8x128xf32> -> vector<8x128xf32>
      %c0_26 = arith.constant 0 : index
      %c0_27 = arith.constant 0 : index
      %31 = vector.load %arg7[%c0_26, %c0_27] : memref<1x128xf32, #tpu.memory_space<vmem>>, vector<1x128xf32>
      %32 = vector.broadcast %31 : vector<1x128xf32> to vector<8x128xf32>
      %33 = arith.addf %30, %32 : vector<8x128xf32>
      %c0_28 = arith.constant 0 : index
      %c0_29 = arith.constant 0 : index
      %34 = vector.load %arg9[%c0_28, %c0_29] : memref<8x128xf32, #tpu.memory_space<vmem>>, vector<8x128xf32>
      tpu.vector_store %arg9[%c0_28, %c0_29], %33 {strides = array<i32>} : memref<8x128xf32, #tpu.memory_space<vmem>>, vector<8x128xf32>,
    } else {
    }
    return
  }
  func.func @transform_0(%arg0: i32) -> (i32, i32) {
    %c0_i32 = arith.constant 0 : i32
    %c0_i32_0 = arith.constant 0 : i32
    return %c0_i32, %arg0 : i32, i32
  }
  func.func @transform_1(%arg0: i32) -> (i32, i32) {
    %c0_i32 = arith.constant 0 : i32
    %c0_i32_0 = arith.constant 0 : i32
    return %arg0, %c0_i32 : i32, i32
  }
  func.func @transform_2(%arg0: i32) -> (i32, i32) {
    %c0_i32 = arith.constant 0 : i32
    %c0_i32_0 = arith.constant 0 : i32
    %c0_i32_1 = arith.constant 0 : i32
    return %c0_i32, %c0_i32_0 : i32, i32
  }
  func.func @transform_3(%arg0: i32) -> (i32, i32) {
    %c0_i32 = arith.constant 0 : i32
    %c0_i32_0 = arith.constant 0 : i32
    %c0_i32_1 = arith.constant 0 : i32
    return %c0_i32, %c0_i32_0 : i32, i32
  }
  func.func @transform_4(%arg0: i32) -> (i32, i32) {
    %c0_i32 = arith.constant 0 : i32
    %c0_i32_0 = arith.constant 0 : i32
    %c0_i32_1 = arith.constant 0 : i32
    return %c0_i32, %c0_i32_0 : i32, i32
  }
  func.func @transform_5(%arg0: i32) -> (i32, i32) {
    %c0_i32 = arith.constant 0 : i32
    %c0_i32_0 = arith.constant 0 : i32
    %c0_i32_1 = arith.constant 0 : i32
    return %c0_i32, %c0_i32_0 : i32, i32
  }
  func.func @transform_6(%arg0: i32) -> (i32, i32) {
    %c0_i32 = arith.constant 0 : i32
    %c0_i32_0 = arith.constant 0 : i32
    %c0_i32_1 = arith.constant 0 : i32
    return %c0_i32, %c0_i32_0 : i32, i32
  }
  func.func @transform_7(%arg0: i32) -> (i32, i32) {
    %c0_i32 = arith.constant 0 : i32
    %c0_i32_0 = arith.constant 0 : i32
    %c0_i32_1 = arith.constant 0 : i32
    return %c0_i32, %c0_i32_0 : i32, i32
  }
  func.func @transform_8(%arg0: i32) -> (i32, i32) {
    %c0_i32 = arith.constant 0 : i32
    %c0_i32_0 = arith.constant 0 : i32
    %c0_i32_1 = arith.constant 0 : i32
    return %c0_i32, %c0_i32_0 : i32, i32
  }
}

</mosaic_0001>

<llo_original>
// kernel: tpu_custom_call.1
$region0: #{tpu_custom_call.1}
  #allocation0 [shape = 'u32[]', space=smem, size = 0x4, offset = 0x4, fixed_abs, tag = 'smem constant byte address 0x4 - core index']
  #allocation1 [shape = 'u32[72,128]{1,0:T(1,128)}', space=vmem, size = 0x9000, scoped, tag = 'internal scratch']
  %s0 = inlined_call_operand.hbm [shape: f32[8,3072], index: 0, kind: input, shape index: {}]
  %s1 = inlined_call_operand.hbm [shape: bf16[3072,1024], index: 1, kind: input, shape index: {}]
  %s2 = inlined_call_operand.hbm [shape: f32[1,1024], index: 2, kind: input, shape index: {}]
  %s3 = inlined_call_operand.hbm [shape: bf16[1024,256], index: 3, kind: input, shape index: {}]
  %s4 = inlined_call_operand.hbm [shape: f32[1,256], index: 4, kind: input, shape index: {}]
  %s5 = inlined_call_operand.hbm [shape: bf16[256,128], index: 5, kind: input, shape index: {}]
  %s6 = inlined_call_operand.hbm [shape: f32[1,128], index: 6, kind: input, shape index: {}]
  %s7 = inlined_call_operand.hbm [shape: f32[8,1024], index: 7, kind: output, shape index: {0}]
  %s8 = inlined_call_operand.hbm [shape: f32[8,128], index: 8, kind: output, shape index: {1}]
  %9 = xla_tuple %s7, %s8
  %s10 = sld [smem:[#allocation0]]
  $region82: #{tpu_custom_call.1} parent=0
    _
  %s12 = ssub.s32 1, %s10
  %s13 = scalar_select 0, %s12, %s10
  $region1: #{tpu_custom_call.1} parent=0
    #allocation2 [shape = 'u8[98304]{0}', space=vmem, size = 0x18000, scoped, tag = 'input window, operand 0, single buffered']
    #allocation3 [shape = 's32[1]{0}', space=sflag, size = 0x4, scoped, tag = 'scoped memory for tpu_custom_call.1']
    #allocation4 [shape = 's32[1]{0}', space=sflag, size = 0x4, scoped, tag = 'scoped memory for tpu_custom_call.1']
    #allocation5 [shape = 'u8[6291456]{0}', space=vmem, size = 0x600000, scoped, tag = 'input window, operand 1, single buffered']
    #allocation6 [shape = 's32[1]{0}', space=sflag, size = 0x4, scoped, tag = 'scoped memory for tpu_custom_call.1']
    #allocation7 [shape = 'u8[4096]{0}', space=vmem, size = 0x1000, scoped, tag = 'input window, operand 2, single buffered']
    #allocation8 [shape = 'u8[524288]{0}', space=vmem, size = 0x80000, scoped, tag = 'input window, operand 3, single buffered']
    #allocation9 [shape = 's32[1]{0}', space=sflag, size = 0x4, scoped, tag = 'scoped memory for tpu_custom_call.1']
    #allocation10 [shape = 'u8[1024]{0}', space=vmem, size = 0x400, scoped, tag = 'input window, operand 4, single buffered']
    #allocation11 [shape = 'u8[65536]{0}', space=vmem, size = 0x10000, scoped, tag = 'input window, operand 5, single buffered']
    #allocation12 [shape = 's32[1]{0}', space=sflag, size = 0x4, scoped, tag = 'scoped memory for tpu_custom_call.1']
    #allocation13 [shape = 'u8[512]{0}', space=vmem, size = 0x400, scoped, tag = 'input window, operand 6, single buffered']
    #allocation14 [shape = 'u8[32768]{0}', space=vmem, size = 0x8000, scoped, tag = 'output window, operand 0, single buffered']
    #allocation15 [shape = 'u8[4096]{0}', space=vmem, size = 0x1000, scoped, tag = 'output window, operand 1, single buffered']
    #allocation16 [shape = 's32[1]{0}', space=sflag, size = 0x4, scoped, tag = 'scoped memory for tpu_custom_call.1']
    %14 = vsyncpa [#allocation3], 0
    %15 = vsyncpa [#allocation6], 0
    %16 = vsyncpa [#allocation9], 0
    %17 = vsyncpa [#allocation12], 0
    %18 = vsyncpa [#allocation4], 0
    %19 = vsyncpa [#allocation16], 0
    // Predicated region
    $region2: #{tpu_custom_call.1} parent=1 // pred_check
      _
    $region3: #{tpu_custom_call.1} parent=1 // pred_check_branch
      %21 = sbr.rel (0) target = $region5
    $region4: #{tpu_custom_call.1} parent=1 // pred_region
      %23 = vsyncadd [#allocation3], 0
      %s25 = sshll.u32 %s0, 4
      %s26 = int_to_ptr.hbm [resolvable:$true] %s25
      %s27 = sshll.u32 [#allocation2], 4
      %s28 = int_to_ptr.vmem [resolvable:$true] %s27
      %30 = dma.hbm_to_vmem [thread:$0]  %s26, 3072, %s28, [#allocation3]
    $region5: #{tpu_custom_call.1} parent=1 // pred_fallthru
      _
    // Predicated region
    $region6: #{tpu_custom_call.1} parent=1 // pred_check
      _
    $region7: #{tpu_custom_call.1} parent=1 // pred_check_branch
      %32 = sbr.rel (0) target = $region9
    $region8: #{tpu_custom_call.1} parent=1 // pred_region
      %34 = vsyncadd [#allocation6], 0
      %s35 = sshll.u32 %s1, 4
      %s36 = int_to_ptr.hbm [resolvable:$true] %s35
      %s37 = sshll.u32 [#allocation5], 4
      %s38 = int_to_ptr.vmem [resolvable:$true] %s37
      %43 = dma.hbm_to_vmem [thread:$0]  %s36, 196608, %s38, [#allocation6], 512, 512, 32
    $region9: #{tpu_custom_call.1} parent=1 // pred_fallthru
      _
    // Predicated region
    $region10: #{tpu_custom_call.1} parent=1 // pred_check
      _
    $region11: #{tpu_custom_call.1} parent=1 // pred_check_branch
      %45 = sbr.rel (0) target = $region13
    $region12: #{tpu_custom_call.1} parent=1 // pred_region
      %47 = vsyncadd [#allocation6], 0
      %s49 = sshll.u32 %s2, 4
      %s50 = int_to_ptr.hbm [resolvable:$true] %s49
      %s51 = sshll.u32 [#allocation7], 4
      %s52 = int_to_ptr.vmem [resolvable:$true] %s51
      %54 = dma.hbm_to_vmem [thread:$0]  %s50, 128, %s52, [#allocation6]
    $region13: #{tpu_custom_call.1} parent=1 // pred_fallthru
      _
    // Predicated region
    $region14: #{tpu_custom_call.1} parent=1 // pred_check
      _
    $region15: #{tpu_custom_call.1} parent=1 // pred_check_branch
      %56 = sbr.rel (0) target = $region17
    $region16: #{tpu_custom_call.1} parent=1 // pred_region
      %58 = vsyncadd [#allocation9], 0
      %s59 = sshll.u32 %s3, 4
      %s60 = int_to_ptr.hbm [resolvable:$true] %s59
      %s61 = sshll.u32 [#allocation8], 4
      %s62 = int_to_ptr.vmem [resolvable:$true] %s61
      %67 = dma.hbm_to_vmem [thread:$0]  %s60, 16384, %s62, [#allocation9], 128, 128, 8
    $region17: #{tpu_custom_call.1} parent=1 // pred_fallthru
      _
    // Predicated region
    $region18: #{tpu_custom_call.1} parent=1 // pred_check
      _
    $region19: #{tpu_custom_call.1} parent=1 // pred_check_branch
      %69 = sbr.rel (0) target = $region21
    $region20: #{tpu_custom_call.1} parent=1 // pred_region
      %71 = vsyncadd [#allocation9], 0
      %s73 = sshll.u32 %s4, 4
      %s74 = int_to_ptr.hbm [resolvable:$true] %s73
      %s75 = sshll.u32 [#allocation10], 4
      %s76 = int_to_ptr.vmem [resolvable:$true] %s75
      %78 = dma.hbm_to_vmem [thread:$0]  %s74, 32, %s76, [#allocation9]
    $region21: #{tpu_custom_call.1} parent=1 // pred_fallthru
      _
    // Predicated region
    $region22: #{tpu_custom_call.1} parent=1 // pred_check
      _
    $region23: #{tpu_custom_call.1} parent=1 // pred_check_branch
      %80 = sbr.rel (0) target = $region25
    $region24: #{tpu_custom_call.1} parent=1 // pred_region
      %82 = vsyncadd [#allocation12], 0
      %s83 = sshll.u32 %s5, 4
      %s84 = int_to_ptr.hbm [resolvable:$true] %s83
      %s85 = sshll.u32 [#allocation11], 4
      %s86 = int_to_ptr.vmem [resolvable:$true] %s85
      %91 = dma.hbm_to_vmem [thread:$0]  %s84, 2048, %s86, [#allocation12], 64, 64, 4
    $region25: #{tpu_custom_call.1} parent=1 // pred_fallthru
      _
    // Predicated region
    $region26: #{tpu_custom_call.1} parent=1 // pred_check
      _
    $region27: #{tpu_custom_call.1} parent=1 // pred_check_branch
      %93 = sbr.rel (0) target = $region29
    $region28: #{tpu_custom_call.1} parent=1 // pred_region
      %95 = vsyncadd [#allocation12], 0
      %s97 = sshll.u32 %s6, 4
      %s98 = int_to_ptr.hbm [resolvable:$true] %s97
      %s99 = sshll.u32 [#allocation13], 4
      %s100 = int_to_ptr.vmem [resolvable:$true] %s99
      %102 = dma.hbm_to_vmem [thread:$0]  %s98, 16, %s100, [#allocation12]
    $region29: #{tpu_custom_call.1} parent=1 // pred_fallthru
      _
    // Predicated region
    $region30: #{tpu_custom_call.1} parent=1 // pred_check
      _
    $region31: #{tpu_custom_call.1} parent=1 // pred_check_branch
      %104 = sbr.rel (0) target = $region33
    $region32: #{tpu_custom_call.1} parent=1 // pred_region
      %106 = dma.done [#allocation3], 3072
    $region33: #{tpu_custom_call.1} parent=1 // pred_fallthru
      _
    // Predicated region
    $region34: #{tpu_custom_call.1} parent=1 // pred_check
      _
    $region35: #{tpu_custom_call.1} parent=1 // pred_check_branch
      %108 = sbr.rel (0) target = $region37
    $region36: #{tpu_custom_call.1} parent=1 // pred_region
      %110 = dma.done [#allocation6], 196608
    $region37: #{tpu_custom_call.1} parent=1 // pred_fallthru
      _
    // Predicated region
    $region38: #{tpu_custom_call.1} parent=1 // pred_check
      _
    $region39: #{tpu_custom_call.1} parent=1 // pred_check_branch
      %112 = sbr.rel (0) target = $region41
    $region40: #{tpu_custom_call.1} parent=1 // pred_region
      %114 = dma.done [#allocation6], 128
    $region41: #{tpu_custom_call.1} parent=1 // pred_fallthru
      _
    // Predicated region
    $region42: #{tpu_custom_call.1} parent=1 // pred_check
      _
    $region43: #{tpu_custom_call.1} parent=1 // pred_check_branch
      %116 = sbr.rel (0) target = $region45
    $region44: #{tpu_custom_call.1} parent=1 // pred_region
      %118 = dma.done [#allocation9], 16384
    $region45: #{tpu_custom_call.1} parent=1 // pred_fallthru
      _
    // Predicated region
    $region46: #{tpu_custom_call.1} parent=1 // pred_check
      _
    $region47: #{tpu_custom_call.1} parent=1 // pred_check_branch
      %120 = sbr.rel (0) target = $region49
    $region48: #{tpu_custom_call.1} parent=1 // pred_region
      %122 = dma.done [#allocation9], 32
    $region49: #{tpu_custom_call.1} parent=1 // pred_fallthru
      _
    // Predicated region
    $region50: #{tpu_custom_call.1} parent=1 // pred_check
      _
    $region51: #{tpu_custom_call.1} parent=1 // pred_check_branch
      %124 = sbr.rel (0) target = $region53
    $region52: #{tpu_custom_call.1} parent=1 // pred_region
      %126 = dma.done [#allocation12], 2048
    $region53: #{tpu_custom_call.1} parent=1 // pred_fallthru
      _
    // Predicated region
    $region54: #{tpu_custom_call.1} parent=1 // pred_check
      _
    $region55: #{tpu_custom_call.1} parent=1 // pred_check_branch
      %128 = sbr.rel (0) target = $region57
    $region56: #{tpu_custom_call.1} parent=1 // pred_region
      %130 = dma.done [#allocation12], 16
    $region57: #{tpu_custom_call.1} parent=1 // pred_fallthru
      _
    %p131 = scmp.eq.s32.totalorder 0, 0
    // Predicated region
    $region58: #{tpu_custom_call.1} parent=1 // pred_check
      %p132 = pneg %p131
    $region59: #{tpu_custom_call.1} parent=1 // pred_check_branch
      %134 = sbr.rel (%p132) target = $region61
    $region60: #{tpu_custom_call.1} parent=1 // pred_region
      %135 = vst [vmem:[#allocation14] sm:$0xff] 0.0
      %136 = vst [vmem:[#allocation14 + $0x8] sm:$0xff] 0.0
      %137 = vst [vmem:[#allocation14 + $0x10] sm:$0xff] 0.0
      %138 = vst [vmem:[#allocation14 + $0x18] sm:$0xff] 0.0
      %139 = vst [vmem:[#allocation14 + $0x20] sm:$0xff] 0.0
      %140 = vst [vmem:[#allocation14 + $0x28] sm:$0xff] 0.0
      %141 = vst [vmem:[#allocation14 + $0x30] sm:$0xff] 0.0
      %142 = vst [vmem:[#allocation14 + $0x38] sm:$0xff] 0.0
    $region61: #{tpu_custom_call.1} parent=1 // pred_fallthru
      _
    %v143 = vld [vmem:[#allocation2] sm:$0xff]
    %v144 = vld [vmem:[#allocation2 + $0x8] sm:$0xff]
    %v145 = vld [vmem:[#allocation2 + $0x10] sm:$0xff]
    %v146 = vld [vmem:[#allocation2 + $0x18] sm:$0xff]
    %v147 = vld [vmem:[#allocation2 + $0x20] sm:$0xff]
    %v148 = vld [vmem:[#allocation2 + $0x28] sm:$0xff]
    %v149 = vld [vmem:[#allocation2 + $0x30] sm:$0xff]
    %v150 = vld [vmem:[#allocation2 + $0x38] sm:$0xff]
    %v151 = vld [vmem:[#allocation2 + $0x40] sm:$0xff]
    %v152 = vld [vmem:[#allocation2 + $0x48] sm:$0xff]
    %v153 = vld [vmem:[#allocation2 + $0x50] sm:$0xff]
    %v154 = vld [vmem:[#allocation2 + $0x58] sm:$0xff]
    %v155 = vld [vmem:[#allocation2 + $0x60] sm:$0xff]
    %v156 = vld [vmem:[#allocation2 + $0x68] sm:$0xff]
    %v157 = vld [vmem:[#allocation2 + $0x70] sm:$0xff]
    %v158 = vld [vmem:[#allocation2 + $0x78] sm:$0xff]
    %v159 = vld [vmem:[#allocation2 + $0x80] sm:$0xff]
    %v160 = vld [vmem:[#allocation2 + $0x88] sm:$0xff]
    %v161 = vld [vmem:[#allocation2 + $0x90] sm:$0xff]
    %v162 = vld [vmem:[#allocation2 + $0x98] sm:$0xff]
    %v163 = vld [vmem:[#allocation2 + $0xa0] sm:$0xff]
    %v164 = vld [vmem:[#allocation2 + $0xa8] sm:$0xff]
    %v165 = vld [vmem:[#allocation2 + $0xb0] sm:$0xff]
    %v166 = vld [vmem:[#allocation2 + $0xb8] sm:$0xff]
    %v167 = vpack.c.bf16 %v143, %v143
    %v168 = vpack.c.bf16 %v144, %v144
    %v169 = vpack.c.bf16 %v145, %v145
    %v170 = vpack.c.bf16 %v146, %v146
    %v171 = vpack.c.bf16 %v147, %v147
    %v172 = vpack.c.bf16 %v148, %v148
    %v173 = vpack.c.bf16 %v149, %v149
    %v174 = vpack.c.bf16 %v150, %v150
    %v175 = vpack.c.bf16 %v151, %v151
    %v176 = vpack.c.bf16 %v152, %v152
    %v177 = vpack.c.bf16 %v153, %v153
    %v178 = vpack.c.bf16 %v154, %v154
    %v179 = vpack.c.bf16 %v155, %v155
    %v180 = vpack.c.bf16 %v156, %v156
    %v181 = vpack.c.bf16 %v157, %v157
    %v182 = vpack.c.bf16 %v158, %v158
    %v183 = vpack.c.bf16 %v159, %v159
    %v184 = vpack.c.bf16 %v160, %v160
    %v185 = vpack.c.bf16 %v161, %v161
    %v186 = vpack.c.bf16 %v162, %v162
    %v187 = vpack.c.bf16 %v163, %v163
    %v188 = vpack.c.bf16 %v164, %v164
    %v189 = vpack.c.bf16 %v165, %v165
    %v190 = vpack.c.bf16 %v166, %v166
    %v191 = vld [vmem:[#allocation14] sm:$0xff]
    %v192 = vld [vmem:[#allocation14 + $0x8] sm:$0xff]
    %v193 = vld [vmem:[#allocation14 + $0x10] sm:$0xff]
    %v194 = vld [vmem:[#allocation14 + $0x18] sm:$0xff]
    %v195 = vld [vmem:[#allocation14 + $0x20] sm:$0xff]
    %v196 = vld [vmem:[#allocation14 + $0x28] sm:$0xff]
    %v197 = vld [vmem:[#allocation14 + $0x30] sm:$0xff]
    %v198 = vld [vmem:[#allocation14 + $0x38] sm:$0xff]
    %v199 = vld [vmem:[#allocation5] sm:$0xff]
    %v200 = vld [vmem:[#allocation5 + $0x8] sm:$0xff]
    %v201 = vld [vmem:[#allocation5 + $0x10] sm:$0xff]
    %v202 = vld [vmem:[#allocation5 + $0x18] sm:$0xff]
    %v203 = vld [vmem:[#allocation5 + $0x20] sm:$0xff]
    %v204 = vld [vmem:[#allocation5 + $0x28] sm:$0xff]
    %v205 = vld [vmem:[#allocation5 + $0x30] sm:$0xff]
    %v206 = vld [vmem:[#allocation5 + $0x38] sm:$0xff]
    %v207 = vld [vmem:[#allocation5 + $0x40] sm:$0xff]
    %v208 = vld [vmem:[#allocation5 + $0x48] sm:$0xff]
    %v209 = vld [vmem:[#allocation5 + $0x50] sm:$0xff]
    %v210 = vld [vmem:[#allocation5 + $0x58] sm:$0xff]
    %v211 = vld [vmem:[#allocation5 + $0x60] sm:$0xff]
    %v212 = vld [vmem:[#allocation5 + $0x68] sm:$0xff]
    %v213 = vld [vmem:[#allocation5 + $0x70] sm:$0xff]
    %v214 = vld [vmem:[#allocation5 + $0x78] sm:$0xff]
    %v215 = vld [vmem:[#allocation5 + $0x80] sm:$0xff]
    %v216 = vld [vmem:[#allocation5 + $0x88] sm:$0xff]
    %v217 = vld [vmem:[#allocation5 + $0x90] sm:$0xff]
    %v218 = vld [vmem:[#allocation5 + $0x98] sm:$0xff]
    %v219 = vld [vmem:[#allocation5 + $0xa0] sm:$0xff]
    %v220 = vld [vmem:[#allocation5 + $0xa8] sm:$0xff]
    %v221 = vld [vmem:[#allocation5 + $0xb0] sm:$0xff]
    %v222 = vld [vmem:[#allocation5 + $0xb8] sm:$0xff]
    %v223 = vld [vmem:[#allocation5 + $0xc0] sm:$0xff]
    %v224 = vld [vmem:[#allocation5 + $0xc8] sm:$0xff]
    %v225 = vld [vmem:[#allocation5 + $0xd0] sm:$0xff]
    %v226 = vld [vmem:[#allocation5 + $0xd8] sm:$0xff]
    %v227 = vld [vmem:[#allocation5 + $0xe0] sm:$0xff]
    %v228 = vld [vmem:[#allocation5 + $0xe8] sm:$0xff]
    %v229 = vld [vmem:[#allocation5 + $0xf0] sm:$0xff]
    %v230 = vld [vmem:[#allocation5 + $0xf8] sm:$0xff]
    %v231 = vld [vmem:[#allocation5 + $0x100] sm:$0xff]
    %v232 = vld [vmem:[#allocation5 + $0x108] sm:$0xff]
    %v233 = vld [vmem:[#allocation5 + $0x110] sm:$0xff]
    %v234 = vld [vmem:[#allocation5 + $0x118] sm:$0xff]
    %v235 = vld [vmem:[#allocation5 + $0x120] sm:$0xff]
    %v236 = vld [vmem:[#allocation5 + $0x128] sm:$0xff]
    %v237 = vld [vmem:[#allocation5 + $0x130] sm:$0xff]
    %v238 = vld [vmem:[#allocation5 + $0x138] sm:$0xff]
    %v239 = vld [vmem:[#allocation5 + $0x140] sm:$0xff]
    %v240 = vld [vmem:[#allocation5 + $0x148] sm:$0xff]
    %v241 = vld [vmem:[#allocation5 + $0x150] sm:$0xff]
    %v242 = vld [vmem:[#allocation5 + $0x158] sm:$0xff]
    %v243 = vld [vmem:[#allocation5 + $0x160] sm:$0xff]
    %v244 = vld [vmem:[#allocation5 + $0x168] sm:$0xff]
    %v245 = vld [vmem:[#allocation5 + $0x170] sm:$0xff]
    %v246 = vld [vmem:[#allocation5 + $0x178] sm:$0xff]
    %v247 = vld [vmem:[#allocation5 + $0x180] sm:$0xff]
    %v248 = vld [vmem:[#allocation5 + $0x188] sm:$0xff]
    %v249 = vld [vmem:[#allocation5 + $0x190] sm:$0xff]
    %v250 = vld [vmem:[#allocation5 + $0x198] sm:$0xff]
    %v251 = vld [vmem:[#allocation5 + $0x1a0] sm:$0xff]
    %v252 = vld [vmem:[#allocation5 + $0x1a8] sm:$0xff]
    %v253 = vld [vmem:[#allocation5 + $0x1b0] sm:$0xff]
    %v254 = vld [vmem:[#allocation5 + $0x1b8] sm:$0xff]
    %v255 = vld [vmem:[#allocation5 + $0x1c0] sm:$0xff]
    %v256 = vld [vmem:[#allocation5 + $0x1c8] sm:$0xff]
    %v257 = vld [vmem:[#allocation5 + $0x1d0] sm:$0xff]
    %v258 = vld [vmem:[#allocation5 + $0x1d8] sm:$0xff]
    %v259 = vld [vmem:[#allocation5 + $0x1e0] sm:$0xff]
    %v260 = vld [vmem:[#allocation5 + $0x1e8] sm:$0xff]
    %v261 = vld [vmem:[#allocation5 + $0x1f0] sm:$0xff]
    %v262 = vld [vmem:[#allocation5 + $0x1f8] sm:$0xff]
    %v263 = vld [vmem:[#allocation5 + $0x200] sm:$0xff]
    %v264 = vld [vmem:[#allocation5 + $0x208] sm:$0xff]
    %v265 = vld [vmem:[#allocation5 + $0x210] sm:$0xff]
    %v266 = vld [vmem:[#allocation5 + $0x218] sm:$0xff]
    %v267 = vld [vmem:[#allocation5 + $0x220] sm:$0xff]
    %v268 = vld [vmem:[#allocation5 + $0x228] sm:$0xff]
    %v269 = vld [vmem:[#allocation5 + $0x230] sm:$0xff]
    %v270 = vld [vmem:[#allocation5 + $0x238] sm:$0xff]
    %v271 = vld [vmem:[#allocation5 + $0x240] sm:$0xff]
    %v272 = vld [vmem:[#allocation5 + $0x248] sm:$0xff]
    %v273 = vld [vmem:[#allocation5 + $0x250] sm:$0xff]
    %v274 = vld [vmem:[#allocation5 + $0x258] sm:$0xff]
    %v275 = vld [vmem:[#allocation5 + $0x260] sm:$0xff]
    %v276 = vld [vmem:[#allocation5 + $0x268] sm:$0xff]
    %v277 = vld [vmem:[#allocation5 + $0x270] sm:$0xff]
    %v278 = vld [vmem:[#allocation5 + $0x278] sm:$0xff]
    %v279 = vld [vmem:[#allocation5 + $0x280] sm:$0xff]
    %v280 = vld [vmem:[#allocation5 + $0x288] sm:$0xff]
    %v281 = vld [vmem:[#allocation5 + $0x290] sm:$0xff]
    %v282 = vld [vmem:[#allocation5 + $0x298] sm:$0xff]
    %v283 = vld [vmem:[#allocation5 + $0x2a0] sm:$0xff]
    %v284 = vld [vmem:[#allocation5 + $0x2a8] sm:$0xff]
    %v285 = vld [vmem:[#allocation5 + $0x2b0] sm:$0xff]
    %v286 = vld [vmem:[#allocation5 + $0x2b8] sm:$0xff]
    %v287 = vld [vmem:[#allocation5 + $0x2c0] sm:$0xff]
    %v288 = vld [vmem:[#allocation5 + $0x2c8] sm:$0xff]
    %v289 = vld [vmem:[#allocation5 + $0x2d0] sm:$0xff]
    %v290 = vld [vmem:[#allocation5 + $0x2d8] sm:$0xff]
    %v291 = vld [vmem:[#allocation5 + $0x2e0] sm:$0xff]
    %v292 = vld [vmem:[#allocation5 + $0x2e8] sm:$0xff]
    %v293 = vld [vmem:[#allocation5 + $0x2f0] sm:$0xff]
    %v294 = vld [vmem:[#allocation5 + $0x2f8] sm:$0xff]
    %v295 = vld [vmem:[#allocation5 + $0x300] sm:$0xff]
    %v296 = vld [vmem:[#allocation5 + $0x308] sm:$0xff]
    %v297 = vld [vmem:[#allocation5 + $0x310] sm:$0xff]
    %v298 = vld [vmem:[#allocation5 + $0x318] sm:$0xff]
    %v299 = vld [vmem:[#allocation5 + $0x320] sm:$0xff]
    %v300 = vld [vmem:[#allocation5 + $0x328] sm:$0xff]
    %v301 = vld [vmem:[#allocation5 + $0x330] sm:$0xff]
    %v302 = vld [vmem:[#allocation5 + $0x338] sm:$0xff]
    %v303 = vld [vmem:[#allocation5 + $0x340] sm:$0xff]
    %v304 = vld [vmem:[#allocation5 + $0x348] sm:$0xff]
    %v305 = vld [vmem:[#allocation5 + $0x350] sm:$0xff]
    %v306 = vld [vmem:[#allocation5 + $0x358] sm:$0xff]
    %v307 = vld [vmem:[#allocation5 + $0x360] sm:$0xff]
    %v308 = vld [vmem:[#allocation5 + $0x368] sm:$0xff]
    %v309 = vld [vmem:[#allocation5 + $0x370] sm:$0xff]
    %v310 = vld [vmem:[#allocation5 + $0x378] sm:$0xff]
    %v311 = vld [vmem:[#allocation5 + $0x380] sm:$0xff]
    %v312 = vld [vmem:[#allocation5 + $0x388] sm:$0xff]
    %v313 = vld [vmem:[#allocation5 + $0x390] sm:$0xff]
    %v314 = vld [vmem:[#allocation5 + $0x398] sm:$0xff]
    %v315 = vld [vmem:[#allocation5 + $0x3a0] sm:$0xff]
    %v316 = vld [vmem:[#allocation5 + $0x3a8] sm:$0xff]
    %v317 = vld [vmem:[#allocation5 + $0x3b0] sm:$0xff]
    %v318 = vld [vmem:[#allocation5 + $0x3b8] sm:$0xff]
    %v319 = vld [vmem:[#allocation5 + $0x3c0] sm:$0xff]
    %v320 = vld [vmem:[#allocation5 + $0x3c8] sm:$0xff]
    %v321 = vld [vmem:[#allocation5 + $0x3d0] sm:$0xff]
    %v322 = vld [vmem:[#allocation5 + $0x3d8] sm:$0xff]
    %v323 = vld [vmem:[#allocation5 + $0x3e0] sm:$0xff]
    %v324 = vld [vmem:[#allocation5 + $0x3e8] sm:$0xff]
    %v325 = vld [vmem:[#allocation5 + $0x3f0] sm:$0xff]
    %v326 = vld [vmem:[#allocation5 + $0x3f8] sm:$0xff]
    %v327 = vld [vmem:[#allocation5 + $0x400] sm:$0xff]
    %v328 = vld [vmem:[#allocation5 + $0x408] sm:$0xff]
    %v329 = vld [vmem:[#allocation5 + $0x410] sm:$0xff]
    %v330 = vld [vmem:[#allocation5 + $0x418] sm:$0xff]
    %v331 = vld [vmem:[#allocation5 + $0x420] sm:$0xff]
    %v332 = vld [vmem:[#allocation5 + $0x428] sm:$0xff]
    %v333 = vld [vmem:[#allocation5 + $0x430] sm:$0xff]
    %v334 = vld [vmem:[#allocation5 + $0x438] sm:$0xff]
    %v335 = vld [vmem:[#allocation5 + $0x440] sm:$0xff]
    %v336 = vld [vmem:[#allocation5 + $0x448] sm:$0xff]
    %v337 = vld [vmem:[#allocation5 + $0x450] sm:$0xff]
    %v338 = vld [vmem:[#allocation5 + $0x458] sm:$0xff]
    %v339 = vld [vmem:[#allocation5 + $0x460] sm:$0xff]
    %v340 = vld [vmem:[#allocation5 + $0x468] sm:$0xff]
    %v341 = vld [vmem:[#allocation5 + $0x470] sm:$0xff]
    %v342 = vld [vmem:[#allocation5 + $0x478] sm:$0xff]
    %v343 = vld [vmem:[#allocation5 + $0x480] sm:$0xff]
    %v344 = vld [vmem:[#allocation5 + $0x488] sm:$0xff]
    %v345 = vld [vmem:[#allocation5 + $0x490] sm:$0xff]
    %v346 = vld [vmem:[#allocation5 + $0x498] sm:$0xff]
    %v347 = vld [vmem:[#allocation5 + $0x4a0] sm:$0xff]
    %v348 = vld [vmem:[#allocation5 + $0x4a8] sm:$0xff]
    %v349 = vld [vmem:[#allocation5 + $0x4b0] sm:$0xff]
    %v350 = vld [vmem:[#allocation5 + $0x4b8] sm:$0xff]
    %v351 = vld [vmem:[#allocation5 + $0x4c0] sm:$0xff]
    %v352 = vld [vmem:[#allocation5 + $0x4c8] sm:$0xff]
    %v353 = vld [vmem:[#allocation5 + $0x4d0] sm:$0xff]
    %v354 = vld [vmem:[#allocation5 + $0x4d8] sm:$0xff]
    %v355 = vld [vmem:[#allocation5 + $0x4e0] sm:$0xff]
    %v356 = vld [vmem:[#allocation5 + $0x4e8] sm:$0xff]
    %v357 = vld [vmem:[#allocation5 + $0x4f0] sm:$0xff]
    %v358 = vld [vmem:[#allocation5 + $0x4f8] sm:$0xff]
    %v359 = vld [vmem:[#allocation5 + $0x500] sm:$0xff]
    %v360 = vld [vmem:[#allocation5 + $0x508] sm:$0xff]
    %v361 = vld [vmem:[#allocation5 + $0x510] sm:$0xff]
    %v362 = vld [vmem:[#allocation5 + $0x518] sm:$0xff]
    %v363 = vld [vmem:[#allocation5 + $0x520] sm:$0xff]
    %v364 = vld [vmem:[#allocation5 + $0x528] sm:$0xff]
    %v365 = vld [vmem:[#allocation5 + $0x530] sm:$0xff]
    %v366 = vld [vmem:[#allocation5 + $0x538] sm:$0xff]
    %v367 = vld [vmem:[#allocation5 + $0x540] sm:$0xff]
    %v368 = vld [vmem:[#allocation5 + $0x548] sm:$0xff]
    %v369 = vld [vmem:[#allocation5 + $0x550] sm:$0xff]
    %v370 = vld [vmem:[#allocation5 + $0x558] sm:$0xff]
    %v371 = vld [vmem:[#allocation5 + $0x560] sm:$0xff]
    %v372 = vld [vmem:[#allocation5 + $0x568] sm:$0xff]
    %v373 = vld [vmem:[#allocation5 + $0x570] sm:$0xff]
    %v374 = vld [vmem:[#allocation5 + $0x578] sm:$0xff]
    %v375 = vld [vmem:[#allocation5 + $0x580] sm:$0xff]
    %v376 = vld [vmem:[#allocation5 + $0x588] sm:$0xff]
    %v377 = vld [vmem:[#allocation5 + $0x590] sm:$0xff]
    %v378 = vld [vmem:[#allocation5 + $0x598] sm:$0xff]
    %v379 = vld [vmem:[#allocation5 + $0x5a0] sm:$0xff]
    %v380 = vld [vmem:[#allocation5 + $0x5a8] sm:$0xff]
    %v381 = vld [vmem:[#allocation5 + $0x5b0] sm:$0xff]
    %v382 = vld [vmem:[#allocation5 + $0x5b8] sm:$0xff]
    %v383 = vld [vmem:[#allocation5 + $0x5c0] sm:$0xff]
    %v384 = vld [vmem:[#allocation5 + $0x5c8] sm:$0xff]
    %v385 = vld [vmem:[#allocation5 + $0x5d0] sm:$0xff]
    %v386 = vld [vmem:[#allocation5 + $0x5d8] sm:$0xff]
    %v387 = vld [vmem:[#allocation5 + $0x5e0] sm:$0xff]
    %v388 = vld [vmem:[#allocation5 + $0x5e8] sm:$0xff]
    %v389 = vld [vmem:[#allocation5 + $0x5f0] sm:$0xff]
    %v390 = vld [vmem:[#allocation5 + $0x5f8] sm:$0xff]
    %v391 = vld [vmem:[#allocation5 + $0x600] sm:$0xff]
    %v392 = vld [vmem:[#allocation5 + $0x608] sm:$0xff]
    %v393 = vld [vmem:[#allocation5 + $0x610] sm:$0xff]
    %v394 = vld [vmem:[#allocation5 + $0x618] sm:$0xff]
    %v395 = vld [vmem:[#allocation5 + $0x620] sm:$0xff]
    %v396 = vld [vmem:[#allocation5 + $0x628] sm:$0xff]
    %v397 = vld [vmem:[#allocation5 + $0x630] sm:$0xff]
    %v398 = vld [vmem:[#allocation5 + $0x638] sm:$0xff]
    %v399 = vld [vmem:[#allocation5 + $0x640] sm:$0xff]
    %v400 = vld [vmem:[#allocation5 + $0x648] sm:$0xff]
    %v401 = vld [vmem:[#allocation5 + $0x650] sm:$0xff]
    %v402 = vld [vmem:[#allocation5 + $0x658] sm:$0xff]
    %v403 = vld [vmem:[#allocation5 + $0x660] sm:$0xff]
    %v404 = vld [vmem:[#allocation5 + $0x668] sm:$0xff]
    %v405 = vld [vmem:[#allocation5 + $0x670] sm:$0xff]
    %v406 = vld [vmem:[#allocation5 + $0x678] sm:$0xff]
    %v407 = vld [vmem:[#allocation5 + $0x680] sm:$0xff]
    %v408 = vld [vmem:[#allocation5 + $0x688] sm:$0xff]
    %v409 = vld [vmem:[#allocation5 + $0x690] sm:$0xff]
    %v410 = vld [vmem:[#allocation5 + $0x698] sm:$0xff]
    %v411 = vld [vmem:[#allocation5 + $0x6a0] sm:$0xff]
    %v412 = vld [vmem:[#allocation5 + $0x6a8] sm:$0xff]
    %v413 = vld [vmem:[#allocation5 + $0x6b0] sm:$0xff]
    %v414 = vld [vmem:[#allocation5 + $0x6b8] sm:$0xff]
    %v415 = vld [vmem:[#allocation5 + $0x6c0] sm:$0xff]
    %v416 = vld [vmem:[#allocation5 + $0x6c8] sm:$0xff]
    %v417 = vld [vmem:[#allocation5 + $0x6d0] sm:$0xff]
    %v418 = vld [vmem:[#allocation5 + $0x6d8] sm:$0xff]
    %v419 = vld [vmem:[#allocation5 + $0x6e0] sm:$0xff]
    %v420 = vld [vmem:[#allocation5 + $0x6e8] sm:$0xff]
    %v421 = vld [vmem:[#allocation5 + $0x6f0] sm:$0xff]
    %v422 = vld [vmem:[#allocation5 + $0x6f8] sm:$0xff]
    %v423 = vld [vmem:[#allocation5 + $0x700] sm:$0xff]
    %v424 = vld [vmem:[#allocation5 + $0x708] sm:$0xff]
    %v425 = vld [vmem:[#allocation5 + $0x710] sm:$0xff]
    %v426 = vld [vmem:[#allocation5 + $0x718] sm:$0xff]
    %v427 = vld [vmem:[#allocation5 + $0x720] sm:$0xff]
    %v428 = vld [vmem:[#allocation5 + $0x728] sm:$0xff]
    %v429 = vld [vmem:[#allocation5 + $0x730] sm:$0xff]
    %v430 = vld [vmem:[#allocation5 + $0x738] sm:$0xff]
    %v431 = vld [vmem:[#allocation5 + $0x740] sm:$0xff]
    %v432 = vld [vmem:[#allocation5 + $0x748] sm:$0xff]
    %v433 = vld [vmem:[#allocation5 + $0x750] sm:$0xff]
    %v434 = vld [vmem:[#allocation5 + $0x758] sm:$0xff]
    %v435 = vld [vmem:[#allocation5 + $0x760] sm:$0xff]
    %v436 = vld [vmem:[#allocation5 + $0x768] sm:$0xff]
    %v437 = vld [vmem:[#allocation5 + $0x770] sm:$0xff]
    %v438 = vld [vmem:[#allocation5 + $0x778] sm:$0xff]
    %v439 = vld [vmem:[#allocation5 + $0x780] sm:$0xff]
    %v440 = vld [vmem:[#allocation5 + $0x788] sm:$0xff]
    %v441 = vld [vmem:[#allocation5 + $0x790] sm:$0xff]
    %v442 = vld [vmem:[#allocation5 + $0x798] sm:$0xff]
    %v443 = vld [vmem:[#allocation5 + $0x7a0] sm:$0xff]
    %v444 = vld [vmem:[#allocation5 + $0x7a8] sm:$0xff]
    %v445 = vld [vmem:[#allocation5 + $0x7b0] sm:$0xff]
    %v446 = vld [vmem:[#allocation5 + $0x7b8] sm:$0xff]
    %v447 = vld [vmem:[#allocation5 + $0x7c0] sm:$0xff]
    %v448 = vld [vmem:[#allocation5 + $0x7c8] sm:$0xff]
    %v449 = vld [vmem:[#allocation5 + $0x7d0] sm:$0xff]
    %v450 = vld [vmem:[#allocation5 + $0x7d8] sm:$0xff]
    %v451 = vld [vmem:[#allocation5 + $0x7e0] sm:$0xff]
    %v452 = vld [vmem:[#allocation5 + $0x7e8] sm:$0xff]
    %v453 = vld [vmem:[#allocation5 + $0x7f0] sm:$0xff]
    %v454 = vld [vmem:[#allocation5 + $0x7f8] sm:$0xff]
    %v455 = vld [vmem:[#allocation5 + $0x800] sm:$0xff]
    %v456 = vld [vmem:[#allocation5 + $0x808] sm:$0xff]
    %v457 = vld [vmem:[#allocation5 + $0x810] sm:$0xff]
    %v458 = vld [vmem:[#allocation5 + $0x818] sm:$0xff]
    %v459 = vld [vmem:[#allocation5 + $0x820] sm:$0xff]
    %v460 = vld [vmem:[#allocation5 + $0x828] sm:$0xff]
    %v461 = vld [vmem:[#allocation5 + $0x830] sm:$0xff]
    %v462 = vld [vmem:[#allocation5 + $0x838] sm:$0xff]
    %v463 = vld [vmem:[#allocation5 + $0x840] sm:$0xff]
    %v464 = vld [vmem:[#allocation5 + $0x848] sm:$0xff]
    %v465 = vld [vmem:[#allocation5 + $0x850] sm:$0xff]
    %v466 = vld [vmem:[#allocation5 + $0x858] sm:$0xff]
    %v467 = vld [vmem:[#allocation5 + $0x860] sm:$0xff]
    %v468 = vld [vmem:[#allocation5 + $0x868] sm:$0xff]
    %v469 = vld [vmem:[#allocation5 + $0x870] sm:$0xff]
    %v470 = vld [vmem:[#allocation5 + $0x878] sm:$0xff]
    %v471 = vld [vmem:[#allocation5 + $0x880] sm:$0xff]
    %v472 = vld [vmem:[#allocation5 + $0x888] sm:$0xff]
    %v473 = vld [vmem:[#allocation5 + $0x890] sm:$0xff]
    %v474 = vld [vmem:[#allocation5 + $0x898] sm:$0xff]
    %v475 = vld [vmem:[#allocation5 + $0x8a0] sm:$0xff]
    %v476 = vld [vmem:[#allocation5 + $0x8a8] sm:$0xff]
    %v477 = vld [vmem:[#allocation5 + $0x8b0] sm:$0xff]
    %v478 = vld [vmem:[#allocation5 + $0x8b8] sm:$0xff]
    %v479 = vld [vmem:[#allocation5 + $0x8c0] sm:$0xff]
    %v480 = vld [vmem:[#allocation5 + $0x8c8] sm:$0xff]
    %v481 = vld [vmem:[#allocation5 + $0x8d0] sm:$0xff]
    %v482 = vld [vmem:[#allocation5 + $0x8d8] sm:$0xff]
    %v483 = vld [vmem:[#allocation5 + $0x8e0] sm:$0xff]
    %v484 = vld [vmem:[#allocation5 + $0x8e8] sm:$0xff]
    %v485 = vld [vmem:[#allocation5 + $0x8f0] sm:$0xff]
    %v486 = vld [vmem:[#allocation5 + $0x8f8] sm:$0xff]
    %v487 = vld [vmem:[#allocation5 + $0x900] sm:$0xff]
    %v488 = vld [vmem:[#allocation5 + $0x908] sm:$0xff]
    %v489 = vld [vmem:[#allocation5 + $0x910] sm:$0xff]
    %v490 = vld [vmem:[#allocation5 + $0x918] sm:$0xff]
    %v491 = vld [vmem:[#allocation5 + $0x920] sm:$0xff]
    %v492 = vld [vmem:[#allocation5 + $0x928] sm:$0xff]
    %v493 = vld [vmem:[#allocation5 + $0x930] sm:$0xff]
    %v494 = vld [vmem:[#allocation5 + $0x938] sm:$0xff]
    %v495 = vld [vmem:[#allocation5 + $0x940] sm:$0xff]
    %v496 = vld [vmem:[#allocation5 + $0x948] sm:$0xff]
    %v497 = vld [vmem:[#allocation5 + $0x950] sm:$0xff]
    %v498 = vld [vmem:[#allocation5 + $0x958] sm:$0xff]
    %v499 = vld [vmem:[#allocation5 + $0x960] sm:$0xff]
    %v500 = vld [vmem:[#allocation5 + $0x968] sm:$0xff]
    %v501 = vld [vmem:[#allocation5 + $0x970] sm:$0xff]
    %v502 = vld [vmem:[#allocation5 + $0x978] sm:$0xff]
    %v503 = vld [vmem:[#allocation5 + $0x980] sm:$0xff]
    %v504 = vld [vmem:[#allocation5 + $0x988] sm:$0xff]
    %v505 = vld [vmem:[#allocation5 + $0x990] sm:$0xff]
    %v506 = vld [vmem:[#allocation5 + $0x998] sm:$0xff]
    %v507 = vld [vmem:[#allocation5 + $0x9a0] sm:$0xff]
    %v508 = vld [vmem:[#allocation5 + $0x9a8] sm:$0xff]
    %v509 = vld [vmem:[#allocation5 + $0x9b0] sm:$0xff]
    %v510 = vld [vmem:[#allocation5 + $0x9b8] sm:$0xff]
    %v511 = vld [vmem:[#allocation5 + $0x9c0] sm:$0xff]
    %v512 = vld [vmem:[#allocation5 + $0x9c8] sm:$0xff]
    %v513 = vld [vmem:[#allocation5 + $0x9d0] sm:$0xff]
    %v514 = vld [vmem:[#allocation5 + $0x9d8] sm:$0xff]
    %v515 = vld [vmem:[#allocation5 + $0x9e0] sm:$0xff]
    %v516 = vld [vmem:[#allocation5 + $0x9e8] sm:$0xff]
    %v517 = vld [vmem:[#allocation5 + $0x9f0] sm:$0xff]
    %v518 = vld [vmem:[#allocation5 + $0x9f8] sm:$0xff]
    %v519 = vld [vmem:[#allocation5 + $0xa00] sm:$0xff]
    %v520 = vld [vmem:[#allocation5 + $0xa08] sm:$0xff]
    %v521 = vld [vmem:[#allocation5 + $0xa10] sm:$0xff]
    %v522 = vld [vmem:[#allocation5 + $0xa18] sm:$0xff]
    %v523 = vld [vmem:[#allocation5 + $0xa20] sm:$0xff]
    %v524 = vld [vmem:[#allocation5 + $0xa28] sm:$0xff]
    %v525 = vld [vmem:[#allocation5 + $0xa30] sm:$0xff]
    %v526 = vld [vmem:[#allocation5 + $0xa38] sm:$0xff]
    %v527 = vld [vmem:[#allocation5 + $0xa40] sm:$0xff]
    %v528 = vld [vmem:[#allocation5 + $0xa48] sm:$0xff]
    %v529 = vld [vmem:[#allocation5 + $0xa50] sm:$0xff]
    %v530 = vld [vmem:[#allocation5 + $0xa58] sm:$0xff]
    %v531 = vld [vmem:[#allocation5 + $0xa60] sm:$0xff]
    %v532 = vld [vmem:[#allocation5 + $0xa68] sm:$0xff]
    %v533 = vld [vmem:[#allocation5 + $0xa70] sm:$0xff]
    %v534 = vld [vmem:[#allocation5 + $0xa78] sm:$0xff]
    %v535 = vld [vmem:[#allocation5 + $0xa80] sm:$0xff]
    %v536 = vld [vmem:[#allocation5 + $0xa88] sm:$0xff]
    %v537 = vld [vmem:[#allocation5 + $0xa90] sm:$0xff]
    %v538 = vld [vmem:[#allocation5 + $0xa98] sm:$0xff]
    %v539 = vld [vmem:[#allocation5 + $0xaa0] sm:$0xff]
    %v540 = vld [vmem:[#allocation5 + $0xaa8] sm:$0xff]
    %v541 = vld [vmem:[#allocation5 + $0xab0] sm:$0xff]
    %v542 = vld [vmem:[#allocation5 + $0xab8] sm:$0xff]
    %v543 = vld [vmem:[#allocation5 + $0xac0] sm:$0xff]
    %v544 = vld [vmem:[#allocation5 + $0xac8] sm:$0xff]
    %v545 = vld [vmem:[#allocation5 + $0xad0] sm:$0xff]
    %v546 = vld [vmem:[#allocation5 + $0xad8] sm:$0xff]
    %v547 = vld [vmem:[#allocation5 + $0xae0] sm:$0xff]
    %v548 = vld [vmem:[#allocation5 + $0xae8] sm:$0xff]
    %v549 = vld [vmem:[#allocation5 + $0xaf0] sm:$0xff]
    %v550 = vld [vmem:[#allocation5 + $0xaf8] sm:$0xff]
    %v551 = vld [vmem:[#allocation5 + $0xb00] sm:$0xff]
    %v552 = vld [vmem:[#allocation5 + $0xb08] sm:$0xff]
    %v553 = vld [vmem:[#allocation5 + $0xb10] sm:$0xff]
    %v554 = vld [vmem:[#allocation5 + $0xb18] sm:$0xff]
    %v555 = vld [vmem:[#allocation5 + $0xb20] sm:$0xff]
    %v556 = vld [vmem:[#allocation5 + $0xb28] sm:$0xff]
    %v557 = vld [vmem:[#allocation5 + $0xb30] sm:$0xff]
    %v558 = vld [vmem:[#allocation5 + $0xb38] sm:$0xff]
    %v559 = vld [vmem:[#allocation5 + $0xb40] sm:$0xff]
    %v560 = vld [vmem:[#allocation5 + $0xb48] sm:$0xff]
    %v561 = vld [vmem:[#allocation5 + $0xb50] sm:$0xff]
    %v562 = vld [vmem:[#allocation5 + $0xb58] sm:$0xff]
    %v563 = vld [vmem:[#allocation5 + $0xb60] sm:$0xff]
    %v564 = vld [vmem:[#allocation5 + $0xb68] sm:$0xff]
    %v565 = vld [vmem:[#allocation5 + $0xb70] sm:$0xff]
    %v566 = vld [vmem:[#allocation5 + $0xb78] sm:$0xff]
    %v567 = vld [vmem:[#allocation5 + $0xb80] sm:$0xff]
    %v568 = vld [vmem:[#allocation5 + $0xb88] sm:$0xff]
    %v569 = vld [vmem:[#allocation5 + $0xb90] sm:$0xff]
    %v570 = vld [vmem:[#allocation5 + $0xb98] sm:$0xff]
    %v571 = vld [vmem:[#allocation5 + $0xba0] sm:$0xff]
    %v572 = vld [vmem:[#allocation5 + $0xba8] sm:$0xff]
    %v573 = vld [vmem:[#allocation5 + $0xbb0] sm:$0xff]
    %v574 = vld [vmem:[#allocation5 + $0xbb8] sm:$0xff]
    %v575 = vld [vmem:[#allocation5 + $0xbc0] sm:$0xff]
    %v576 = vld [vmem:[#allocation5 + $0xbc8] sm:$0xff]
    %v577 = vld [vmem:[#allocation5 + $0xbd0] sm:$0xff]
    %v578 = vld [vmem:[#allocation5 + $0xbd8] sm:$0xff]
    %v579 = vld [vmem:[#allocation5 + $0xbe0] sm:$0xff]
    %v580 = vld [vmem:[#allocation5 + $0xbe8] sm:$0xff]
    %v581 = vld [vmem:[#allocation5 + $0xbf0] sm:$0xff]
    %v582 = vld [vmem:[#allocation5 + $0xbf8] sm:$0xff]
    %v583 = vld [vmem:[#allocation5 + $0xc00] sm:$0xff]
    %v584 = vld [vmem:[#allocation5 + $0xc08] sm:$0xff]
    %v585 = vld [vmem:[#allocation5 + $0xc10] sm:$0xff]
    %v586 = vld [vmem:[#allocation5 + $0xc18] sm:$0xff]
    %v587 = vld [vmem:[#allocation5 + $0xc20] sm:$0xff]
    %v588 = vld [vmem:[#allocation5 + $0xc28] sm:$0xff]
    %v589 = vld [vmem:[#allocation5 + $0xc30] sm:$0xff]
    %v590 = vld [vmem:[#allocation5 + $0xc38] sm:$0xff]
    %v591 = vld [vmem:[#allocation5 + $0xc40] sm:$0xff]
    %v592 = vld [vmem:[#allocation5 + $0xc48] sm:$0xff]
    %v593 = vld [vmem:[#allocation5 + $0xc50] sm:$0xff]
    %v594 = vld [vmem:[#allocation5 + $0xc58] sm:$0xff]
    %v595 = vld [vmem:[#allocation5 + $0xc60] sm:$0xff]
    %v596 = vld [vmem:[#allocation5 + $0xc68] sm:$0xff]
    %v597 = vld [vmem:[#allocation5 + $0xc70] sm:$0xff]
    %v598 = vld [vmem:[#allocation5 + $0xc78] sm:$0xff]
    %v599 = vld [vmem:[#allocation5 + $0xc80] sm:$0xff]
    %v600 = vld [vmem:[#allocation5 + $0xc88] sm:$0xff]
    %v601 = vld [vmem:[#allocation5 + $0xc90] sm:$0xff]
    %v602 = vld [vmem:[#allocation5 + $0xc98] sm:$0xff]
    %v603 = vld [vmem:[#allocation5 + $0xca0] sm:$0xff]
    %v604 = vld [vmem:[#allocation5 + $0xca8] sm:$0xff]
    %v605 = vld [vmem:[#allocation5 + $0xcb0] sm:$0xff]
    %v606 = vld [vmem:[#allocation5 + $0xcb8] sm:$0xff]
    %v607 = vld [vmem:[#allocation5 + $0xcc0] sm:$0xff]
    %v608 = vld [vmem:[#allocation5 + $0xcc8] sm:$0xff]
    %v609 = vld [vmem:[#allocation5 + $0xcd0] sm:$0xff]
    %v610 = vld [vmem:[#allocation5 + $0xcd8] sm:$0xff]
    %v611 = vld [vmem:[#allocation5 + $0xce0] sm:$0xff]
    %v612 = vld [vmem:[#allocation5 + $0xce8] sm:$0xff]
    %v613 = vld [vmem:[#allocation5 + $0xcf0] sm:$0xff]
    %v614 = vld [vmem:[#allocation5 + $0xcf8] sm:$0xff]
    %v615 = vld [vmem:[#allocation5 + $0xd00] sm:$0xff]
    %v616 = vld [vmem:[#allocation5 + $0xd08] sm:$0xff]
    %v617 = vld [vmem:[#allocation5 + $0xd10] sm:$0xff]
    %v618 = vld [vmem:[#allocation5 + $0xd18] sm:$0xff]
    %v619 = vld [vmem:[#allocation5 + $0xd20] sm:$0xff]
    %v620 = vld [vmem:[#allocation5 + $0xd28] sm:$0xff]
    %v621 = vld [vmem:[#allocation5 + $0xd30] sm:$0xff]
    %v622 = vld [vmem:[#allocation5 + $0xd38] sm:$0xff]
    %v623 = vld [vmem:[#allocation5 + $0xd40] sm:$0xff]
    %v624 = vld [vmem:[#allocation5 + $0xd48] sm:$0xff]
    %v625 = vld [vmem:[#allocation5 + $0xd50] sm:$0xff]
    %v626 = vld [vmem:[#allocation5 + $0xd58] sm:$0xff]
    %v627 = vld [vmem:[#allocation5 + $0xd60] sm:$0xff]
    %v628 = vld [vmem:[#allocation5 + $0xd68] sm:$0xff]
    %v629 = vld [vmem:[#allocation5 + $0xd70] sm:$0xff]
    %v630 = vld [vmem:[#allocation5 + $0xd78] sm:$0xff]
    %v631 = vld [vmem:[#allocation5 + $0xd80] sm:$0xff]
    %v632 = vld [vmem:[#allocation5 + $0xd88] sm:$0xff]
    %v633 = vld [vmem:[#allocation5 + $0xd90] sm:$0xff]
    %v634 = vld [vmem:[#allocation5 + $0xd98] sm:$0xff]
    %v635 = vld [vmem:[#allocation5 + $0xda0] sm:$0xff]
    %v636 = vld [vmem:[#allocation5 + $0xda8] sm:$0xff]
    %v637 = vld [vmem:[#allocation5 + $0xdb0] sm:$0xff]
    %v638 = vld [vmem:[#allocation5 + $0xdb8] sm:$0xff]
    %v639 = vld [vmem:[#allocation5 + $0xdc0] sm:$0xff]
    %v640 = vld [vmem:[#allocation5 + $0xdc8] sm:$0xff]
    %v641 = vld [vmem:[#allocation5 + $0xdd0] sm:$0xff]
    %v642 = vld [vmem:[#allocation5 + $0xdd8] sm:$0xff]
    %v643 = vld [vmem:[#allocation5 + $0xde0] sm:$0xff]
    %v644 = vld [vmem:[#allocation5 + $0xde8] sm:$0xff]
    %v645 = vld [vmem:[#allocation5 + $0xdf0] sm:$0xff]
    %v646 = vld [vmem:[#allocation5 + $0xdf8] sm:$0xff]
    %v647 = vld [vmem:[#allocation5 + $0xe00] sm:$0xff]
    %v648 = vld [vmem:[#allocation5 + $0xe08] sm:$0xff]
    %v649 = vld [vmem:[#allocation5 + $0xe10] sm:$0xff]
    %v650 = vld [vmem:[#allocation5 + $0xe18] sm:$0xff]
    %v651 = vld [vmem:[#allocation5 + $0xe20] sm:$0xff]
    %v652 = vld [vmem:[#allocation5 + $0xe28] sm:$0xff]
    %v653 = vld [vmem:[#allocation5 + $0xe30] sm:$0xff]
    %v654 = vld [vmem:[#allocation5 + $0xe38] sm:$0xff]
    %v655 = vld [vmem:[#allocation5 + $0xe40] sm:$0xff]
    %v656 = vld [vmem:[#allocation5 + $0xe48] sm:$0xff]
    %v657 = vld [vmem:[#allocation5 + $0xe50] sm:$0xff]
    %v658 = vld [vmem:[#allocation5 + $0xe58] sm:$0xff]
    %v659 = vld [vmem:[#allocation5 + $0xe60] sm:$0xff]
    %v660 = vld [vmem:[#allocation5 + $0xe68] sm:$0xff]
    %v661 = vld [vmem:[#allocation5 + $0xe70] sm:$0xff]
    %v662 = vld [vmem:[#allocation5 + $0xe78] sm:$0xff]
    %v663 = vld [vmem:[#allocation5 + $0xe80] sm:$0xff]
    %v664 = vld [vmem:[#allocation5 + $0xe88] sm:$0xff]
    %v665 = vld [vmem:[#allocation5 + $0xe90] sm:$0xff]
    %v666 = vld [vmem:[#allocation5 + $0xe98] sm:$0xff]
    %v667 = vld [vmem:[#allocation5 + $0xea0] sm:$0xff]
    %v668 = vld [vmem:[#allocation5 + $0xea8] sm:$0xff]
    %v669 = vld [vmem:[#allocation5 + $0xeb0] sm:$0xff]
    %v670 = vld [vmem:[#allocation5 + $0xeb8] sm:$0xff]
    %v671 = vld [vmem:[#allocation5 + $0xec0] sm:$0xff]
    %v672 = vld [vmem:[#allocation5 + $0xec8] sm:$0xff]
    %v673 = vld [vmem:[#allocation5 + $0xed0] sm:$0xff]
    %v674 = vld [vmem:[#allocation5 + $0xed8] sm:$0xff]
    %v675 = vld [vmem:[#allocation5 + $0xee0] sm:$0xff]
    %v676 = vld [vmem:[#allocation5 + $0xee8] sm:$0xff]
    %v677 = vld [vmem:[#allocation5 + $0xef0] sm:$0xff]
    %v678 = vld [vmem:[#allocation5 + $0xef8] sm:$0xff]
    %v679 = vld [vmem:[#allocation5 + $0xf00] sm:$0xff]
    %v680 = vld [vmem:[#allocation5 + $0xf08] sm:$0xff]
    %v681 = vld [vmem:[#allocation5 + $0xf10] sm:$0xff]
    %v682 = vld [vmem:[#allocation5 + $0xf18] sm:$0xff]
    %v683 = vld [vmem:[#allocation5 + $0xf20] sm:$0xff]
    %v684 = vld [vmem:[#allocation5 + $0xf28] sm:$0xff]
    %v685 = vld [vmem:[#allocation5 + $0xf30] sm:$0xff]
    %v686 = vld [vmem:[#allocation5 + $0xf38] sm:$0xff]
    %v687 = vld [vmem:[#allocation5 + $0xf40] sm:$0xff]
    %v688 = vld [vmem:[#allocation5 + $0xf48] sm:$0xff]
    %v689 = vld [vmem:[#allocation5 + $0xf50] sm:$0xff]
    %v690 = vld [vmem:[#allocation5 + $0xf58] sm:$0xff]
    %v691 = vld [vmem:[#allocation5 + $0xf60] sm:$0xff]
    %v692 = vld [vmem:[#allocation5 + $0xf68] sm:$0xff]
    %v693 = vld [vmem:[#allocation5 + $0xf70] sm:$0xff]
    %v694 = vld [vmem:[#allocation5 + $0xf78] sm:$0xff]
    %v695 = vld [vmem:[#allocation5 + $0xf80] sm:$0xff]
    %v696 = vld [vmem:[#allocation5 + $0xf88] sm:$0xff]
    %v697 = vld [vmem:[#allocation5 + $0xf90] sm:$0xff]
    %v698 = vld [vmem:[#allocation5 + $0xf98] sm:$0xff]
    %v699 = vld [vmem:[#allocation5 + $0xfa0] sm:$0xff]
    %v700 = vld [vmem:[#allocation5 + $0xfa8] sm:$0xff]
    %v701 = vld [vmem:[#allocation5 + $0xfb0] sm:$0xff]
    %v702 = vld [vmem:[#allocation5 + $0xfb8] sm:$0xff]
    %v703 = vld [vmem:[#allocation5 + $0xfc0] sm:$0xff]
    %v704 = vld [vmem:[#allocation5 + $0xfc8] sm:$0xff]
    %v705 = vld [vmem:[#allocation5 + $0xfd0] sm:$0xff]
    %v706 = vld [vmem:[#allocation5 + $0xfd8] sm:$0xff]
    %v707 = vld [vmem:[#allocation5 + $0xfe0] sm:$0xff]
    %v708 = vld [vmem:[#allocation5 + $0xfe8] sm:$0xff]
    %v709 = vld [vmem:[#allocation5 + $0xff0] sm:$0xff]
    %v710 = vld [vmem:[#allocation5 + $0xff8] sm:$0xff]
    %v711 = vld [vmem:[#allocation5 + $0x1000] sm:$0xff]
    %v712 = vld [vmem:[#allocation5 + $0x1008] sm:$0xff]
    %v713 = vld [vmem:[#allocation5 + $0x1010] sm:$0xff]
    %v714 = vld [vmem:[#allocation5 + $0x1018] sm:$0xff]
    %v715 = vld [vmem:[#allocation5 + $0x1020] sm:$0xff]
    %v716 = vld [vmem:[#allocation5 + $0x1028] sm:$0xff]
    %v717 = vld [vmem:[#allocation5 + $0x1030] sm:$0xff]
    %v718 = vld [vmem:[#allocation5 + $0x1038] sm:$0xff]
    %v719 = vld [vmem:[#allocation5 + $0x1040] sm:$0xff]
    %v720 = vld [vmem:[#allocation5 + $0x1048] sm:$0xff]
    %v721 = vld [vmem:[#allocation5 + $0x1050] sm:$0xff]
    %v722 = vld [vmem:[#allocation5 + $0x1058] sm:$0xff]
    %v723 = vld [vmem:[#allocation5 + $0x1060] sm:$0xff]
    %v724 = vld [vmem:[#allocation5 + $0x1068] sm:$0xff]
    %v725 = vld [vmem:[#allocation5 + $0x1070] sm:$0xff]
    %v726 = vld [vmem:[#allocation5 + $0x1078] sm:$0xff]
    %v727 = vld [vmem:[#allocation5 + $0x1080] sm:$0xff]
    %v728 = vld [vmem:[#allocation5 + $0x1088] sm:$0xff]
    %v729 = vld [vmem:[#allocation5 + $0x1090] sm:$0xff]
    %v730 = vld [vmem:[#allocation5 + $0x1098] sm:$0xff]
    %v731 = vld [vmem:[#allocation5 + $0x10a0] sm:$0xff]
    %v732 = vld [vmem:[#allocation5 + $0x10a8] sm:$0xff]
    %v733 = vld [vmem:[#allocation5 + $0x10b0] sm:$0xff]
    %v734 = vld [vmem:[#allocation5 + $0x10b8] sm:$0xff]
    %v735 = vld [vmem:[#allocation5 + $0x10c0] sm:$0xff]
    %v736 = vld [vmem:[#allocation5 + $0x10c8] sm:$0xff]
    %v737 = vld [vmem:[#allocation5 + $0x10d0] sm:$0xff]
    %v738 = vld [vmem:[#allocation5 + $0x10d8] sm:$0xff]
    %v739 = vld [vmem:[#allocation5 + $0x10e0] sm:$0xff]
    %v740 = vld [vmem:[#allocation5 + $0x10e8] sm:$0xff]
    %v741 = vld [vmem:[#allocation5 + $0x10f0] sm:$0xff]
    %v742 = vld [vmem:[#allocation5 + $0x10f8] sm:$0xff]
    %v743 = vld [vmem:[#allocation5 + $0x1100] sm:$0xff]
    %v744 = vld [vmem:[#allocation5 + $0x1108] sm:$0xff]
    %v745 = vld [vmem:[#allocation5 + $0x1110] sm:$0xff]
    %v746 = vld [vmem:[#allocation5 + $0x1118] sm:$0xff]
    %v747 = vld [vmem:[#allocation5 + $0x1120] sm:$0xff]
    %v748 = vld [vmem:[#allocation5 + $0x1128] sm:$0xff]
    %v749 = vld [vmem:[#allocation5 + $0x1130] sm:$0xff]
    %v750 = vld [vmem:[#allocation5 + $0x1138] sm:$0xff]
    %v751 = vld [vmem:[#allocation5 + $0x1140] sm:$0xff]
    %v752 = vld [vmem:[#allocation5 + $0x1148] sm:$0xff]
    %v753 = vld [vmem:[#allocation5 + $0x1150] sm:$0xff]
    %v754 = vld [vmem:[#allocation5 + $0x1158] sm:$0xff]
    %v755 = vld [vmem:[#allocation5 + $0x1160] sm:$0xff]
    %v756 = vld [vmem:[#allocation5 + $0x1168] sm:$0xff]
    %v757 = vld [vmem:[#allocation5 + $0x1170] sm:$0xff]
    %v758 = vld [vmem:[#allocation5 + $0x1178] sm:$0xff]
    %v759 = vld [vmem:[#allocation5 + $0x1180] sm:$0xff]
    %v760 = vld [vmem:[#allocation5 + $0x1188] sm:$0xff]
    %v761 = vld [vmem:[#allocation5 + $0x1190] sm:$0xff]
    %v762 = vld [vmem:[#allocation5 + $0x1198] sm:$0xff]
    %v763 = vld [vmem:[#allocation5 + $0x11a0] sm:$0xff]
    %v764 = vld [vmem:[#allocation5 + $0x11a8] sm:$0xff]
    %v765 = vld [vmem:[#allocation5 + $0x11b0] sm:$0xff]
    %v766 = vld [vmem:[#allocation5 + $0x11b8] sm:$0xff]
    %v767 = vld [vmem:[#allocation5 + $0x11c0] sm:$0xff]
    %v768 = vld [vmem:[#allocation5 + $0x11c8] sm:$0xff]
    %v769 = vld [vmem:[#allocation5 + $0x11d0] sm:$0xff]
    %v770 = vld [vmem:[#allocation5 + $0x11d8] sm:$0xff]
    %v771 = vld [vmem:[#allocation5 + $0x11e0] sm:$0xff]
    %v772 = vld [vmem:[#allocation5 + $0x11e8] sm:$0xff]
    %v773 = vld [vmem:[#allocation5 + $0x11f0] sm:$0xff]
    %v774 = vld [vmem:[#allocation5 + $0x11f8] sm:$0xff]
    %v775 = vld [vmem:[#allocation5 + $0x1200] sm:$0xff]
    %v776 = vld [vmem:[#allocation5 + $0x1208] sm:$0xff]
    %v777 = vld [vmem:[#allocation5 + $0x1210] sm:$0xff]
    %v778 = vld [vmem:[#allocation5 + $0x1218] sm:$0xff]
    %v779 = vld [vmem:[#allocation5 + $0x1220] sm:$0xff]
    %v780 = vld [vmem:[#allocation5 + $0x1228] sm:$0xff]
    %v781 = vld [vmem:[#allocation5 + $0x1230] sm:$0xff]
    %v782 = vld [vmem:[#allocation5 + $0x1238] sm:$0xff]
    %v783 = vld [vmem:[#allocation5 + $0x1240] sm:$0xff]
    %v784 = vld [vmem:[#allocation5 + $0x1248] sm:$0xff]
    %v785 = vld [vmem:[#allocation5 + $0x1250] sm:$0xff]
    %v786 = vld [vmem:[#allocation5 + $0x1258] sm:$0xff]
    %v787 = vld [vmem:[#allocation5 + $0x1260] sm:$0xff]
    %v788 = vld [vmem:[#allocation5 + $0x1268] sm:$0xff]
    %v789 = vld [vmem:[#allocation5 + $0x1270] sm:$0xff]
    %v790 = vld [vmem:[#allocation5 + $0x1278] sm:$0xff]
    %v791 = vld [vmem:[#allocation5 + $0x1280] sm:$0xff]
    %v792 = vld [vmem:[#allocation5 + $0x1288] sm:$0xff]
    %v793 = vld [vmem:[#allocation5 + $0x1290] sm:$0xff]
    %v794 = vld [vmem:[#allocation5 + $0x1298] sm:$0xff]
    %v795 = vld [vmem:[#allocation5 + $0x12a0] sm:$0xff]
    %v796 = vld [vmem:[#allocation5 + $0x12a8] sm:$0xff]
    %v797 = vld [vmem:[#allocation5 + $0x12b0] sm:$0xff]
    %v798 = vld [vmem:[#allocation5 + $0x12b8] sm:$0xff]
    %v799 = vld [vmem:[#allocation5 + $0x12c0] sm:$0xff]
    %v800 = vld [vmem:[#allocation5 + $0x12c8] sm:$0xff]
    %v801 = vld [vmem:[#allocation5 + $0x12d0] sm:$0xff]
    %v802 = vld [vmem:[#allocation5 + $0x12d8] sm:$0xff]
    %v803 = vld [vmem:[#allocation5 + $0x12e0] sm:$0xff]
    %v804 = vld [vmem:[#allocation5 + $0x12e8] sm:$0xff]
    %v805 = vld [vmem:[#allocation5 + $0x12f0] sm:$0xff]
    %v806 = vld [vmem:[#allocation5 + $0x12f8] sm:$0xff]
    %v807 = vld [vmem:[#allocation5 + $0x1300] sm:$0xff]
    %v808 = vld [vmem:[#allocation5 + $0x1308] sm:$0xff]
    %v809 = vld [vmem:[#allocation5 + $0x1310] sm:$0xff]
    %v810 = vld [vmem:[#allocation5 + $0x1318] sm:$0xff]
    %v811 = vld [vmem:[#allocation5 + $0x1320] sm:$0xff]
    %v812 = vld [vmem:[#allocation5 + $0x1328] sm:$0xff]
    %v813 = vld [vmem:[#allocation5 + $0x1330] sm:$0xff]
    %v814 = vld [vmem:[#allocation5 + $0x1338] sm:$0xff]
    %v815 = vld [vmem:[#allocation5 + $0x1340] sm:$0xff]
    %v816 = vld [vmem:[#allocation5 + $0x1348] sm:$0xff]
    %v817 = vld [vmem:[#allocation5 + $0x1350] sm:$0xff]
    %v818 = vld [vmem:[#allocation5 + $0x1358] sm:$0xff]
    %v819 = vld [vmem:[#allocation5 + $0x1360] sm:$0xff]
    %v820 = vld [vmem:[#allocation5 + $0x1368] sm:$0xff]
    %v821 = vld [vmem:[#allocation5 + $0x1370] sm:$0xff]
    %v822 = vld [vmem:[#allocation5 + $0x1378] sm:$0xff]
    %v823 = vld [vmem:[#allocation5 + $0x1380] sm:$0xff]
    %v824 = vld [vmem:[#allocation5 + $0x1388] sm:$0xff]
    %v825 = vld [vmem:[#allocation5 + $0x1390] sm:$0xff]
    %v826 = vld [vmem:[#allocation5 + $0x1398] sm:$0xff]
    %v827 = vld [vmem:[#allocation5 + $0x13a0] sm:$0xff]
    %v828 = vld [vmem:[#allocation5 + $0x13a8] sm:$0xff]
    %v829 = vld [vmem:[#allocation5 + $0x13b0] sm:$0xff]
    %v830 = vld [vmem:[#allocation5 + $0x13b8] sm:$0xff]
    %v831 = vld [vmem:[#allocation5 + $0x13c0] sm:$0xff]
    %v832 = vld [vmem:[#allocation5 + $0x13c8] sm:$0xff]
    %v833 = vld [vmem:[#allocation5 + $0x13d0] sm:$0xff]
    %v834 = vld [vmem:[#allocation5 + $0x13d8] sm:$0xff]
    %v835 = vld [vmem:[#allocation5 + $0x13e0] sm:$0xff]
    %v836 = vld [vmem:[#allocation5 + $0x13e8] sm:$0xff]
    %v837 = vld [vmem:[#allocation5 + $0x13f0] sm:$0xff]
    %v838 = vld [vmem:[#allocation5 + $0x13f8] sm:$0xff]
    %v839 = vld [vmem:[#allocation5 + $0x1400] sm:$0xff]
    %v840 = vld [vmem:[#allocation5 + $0x1408] sm:$0xff]
    %v841 = vld [vmem:[#allocation5 + $0x1410] sm:$0xff]
    %v842 = vld [vmem:[#allocation5 + $0x1418] sm:$0xff]
    %v843 = vld [vmem:[#allocation5 + $0x1420] sm:$0xff]
    %v844 = vld [vmem:[#allocation5 + $0x1428] sm:$0xff]
    %v845 = vld [vmem:[#allocation5 + $0x1430] sm:$0xff]
    %v846 = vld [vmem:[#allocation5 + $0x1438] sm:$0xff]
    %v847 = vld [vmem:[#allocation5 + $0x1440] sm:$0xff]
    %v848 = vld [vmem:[#allocation5 + $0x1448] sm:$0xff]
    %v849 = vld [vmem:[#allocation5 + $0x1450] sm:$0xff]
    %v850 = vld [vmem:[#allocation5 + $0x1458] sm:$0xff]
    %v851 = vld [vmem:[#allocation5 + $0x1460] sm:$0xff]
    %v852 = vld [vmem:[#allocation5 + $0x1468] sm:$0xff]
    %v853 = vld [vmem:[#allocation5 + $0x1470] sm:$0xff]
    %v854 = vld [vmem:[#allocation5 + $0x1478] sm:$0xff]
    %v855 = vld [vmem:[#allocation5 + $0x1480] sm:$0xff]
    %v856 = vld [vmem:[#allocation5 + $0x1488] sm:$0xff]
    %v857 = vld [vmem:[#allocation5 + $0x1490] sm:$0xff]
    %v858 = vld [vmem:[#allocation5 + $0x1498] sm:$0xff]
    %v859 = vld [vmem:[#allocation5 + $0x14a0] sm:$0xff]
    %v860 = vld [vmem:[#allocation5 + $0x14a8] sm:$0xff]
    %v861 = vld [vmem:[#allocation5 + $0x14b0] sm:$0xff]
    %v862 = vld [vmem:[#allocation5 + $0x14b8] sm:$0xff]
    %v863 = vld [vmem:[#allocation5 + $0x14c0] sm:$0xff]
    %v864 = vld [vmem:[#allocation5 + $0x14c8] sm:$0xff]
    %v865 = vld [vmem:[#allocation5 + $0x14d0] sm:$0xff]
    %v866 = vld [vmem:[#allocation5 + $0x14d8] sm:$0xff]
    %v867 = vld [vmem:[#allocation5 + $0x14e0] sm:$0xff]
    %v868 = vld [vmem:[#allocation5 + $0x14e8] sm:$0xff]
    %v869 = vld [vmem:[#allocation5 + $0x14f0] sm:$0xff]
    %v870 = vld [vmem:[#allocation5 + $0x14f8] sm:$0xff]
    %v871 = vld [vmem:[#allocation5 + $0x1500] sm:$0xff]
    %v872 = vld [vmem:[#allocation5 + $0x1508] sm:$0xff]
    %v873 = vld [vmem:[#allocation5 + $0x1510] sm:$0xff]
    %v874 = vld [vmem:[#allocation5 + $0x1518] sm:$0xff]
    %v875 = vld [vmem:[#allocation5 + $0x1520] sm:$0xff]
    %v876 = vld [vmem:[#allocation5 + $0x1528] sm:$0xff]
    %v877 = vld [vmem:[#allocation5 + $0x1530] sm:$0xff]
    %v878 = vld [vmem:[#allocation5 + $0x1538] sm:$0xff]
    %v879 = vld [vmem:[#allocation5 + $0x1540] sm:$0xff]
    %v880 = vld [vmem:[#allocation5 + $0x1548] sm:$0xff]
    %v881 = vld [vmem:[#allocation5 + $0x1550] sm:$0xff]
    %v882 = vld [vmem:[#allocation5 + $0x1558] sm:$0xff]
    %v883 = vld [vmem:[#allocation5 + $0x1560] sm:$0xff]
    %v884 = vld [vmem:[#allocation5 + $0x1568] sm:$0xff]
    %v885 = vld [vmem:[#allocation5 + $0x1570] sm:$0xff]
    %v886 = vld [vmem:[#allocation5 + $0x1578] sm:$0xff]
    %v887 = vld [vmem:[#allocation5 + $0x1580] sm:$0xff]
    %v888 = vld [vmem:[#allocation5 + $0x1588] sm:$0xff]
    %v889 = vld [vmem:[#allocation5 + $0x1590] sm:$0xff]
    %v890 = vld [vmem:[#allocation5 + $0x1598] sm:$0xff]
    %v891 = vld [vmem:[#allocation5 + $0x15a0] sm:$0xff]
    %v892 = vld [vmem:[#allocation5 + $0x15a8] sm:$0xff]
    %v893 = vld [vmem:[#allocation5 + $0x15b0] sm:$0xff]
    %v894 = vld [vmem:[#allocation5 + $0x15b8] sm:$0xff]
    %v895 = vld [vmem:[#allocation5 + $0x15c0] sm:$0xff]
    %v896 = vld [vmem:[#allocation5 + $0x15c8] sm:$0xff]
    %v897 = vld [vmem:[#allocation5 + $0x15d0] sm:$0xff]
    %v898 = vld [vmem:[#allocation5 + $0x15d8] sm:$0xff]
    %v899 = vld [vmem:[#allocation5 + $0x15e0] sm:$0xff]
    %v900 = vld [vmem:[#allocation5 + $0x15e8] sm:$0xff]
    %v901 = vld [vmem:[#allocation5 + $0x15f0] sm:$0xff]
    %v902 = vld [vmem:[#allocation5 + $0x15f8] sm:$0xff]
    %v903 = vld [vmem:[#allocation5 + $0x1600] sm:$0xff]
    %v904 = vld [vmem:[#allocation5 + $0x1608] sm:$0xff]
    %v905 = vld [vmem:[#allocation5 + $0x1610] sm:$0xff]
    %v906 = vld [vmem:[#allocation5 + $0x1618] sm:$0xff]
    %v907 = vld [vmem:[#allocation5 + $0x1620] sm:$0xff]
    %v908 = vld [vmem:[#allocation5 + $0x1628] sm:$0xff]
    %v909 = vld [vmem:[#allocation5 + $0x1630] sm:$0xff]
    %v910 = vld [vmem:[#allocation5 + $0x1638] sm:$0xff]
    %v911 = vld [vmem:[#allocation5 + $0x1640] sm:$0xff]
    %v912 = vld [vmem:[#allocation5 + $0x1648] sm:$0xff]
    %v913 = vld [vmem:[#allocation5 + $0x1650] sm:$0xff]
    %v914 = vld [vmem:[#allocation5 + $0x1658] sm:$0xff]
    %v915 = vld [vmem:[#allocation5 + $0x1660] sm:$0xff]
    %v916 = vld [vmem:[#allocation5 + $0x1668] sm:$0xff]
    %v917 = vld [vmem:[#allocation5 + $0x1670] sm:$0xff]
    %v918 = vld [vmem:[#allocation5 + $0x1678] sm:$0xff]
    %v919 = vld [vmem:[#allocation5 + $0x1680] sm:$0xff]
    %v920 = vld [vmem:[#allocation5 + $0x1688] sm:$0xff]
    %v921 = vld [vmem:[#allocation5 + $0x1690] sm:$0xff]
    %v922 = vld [vmem:[#allocation5 + $0x1698] sm:$0xff]
    %v923 = vld [vmem:[#allocation5 + $0x16a0] sm:$0xff]
    %v924 = vld [vmem:[#allocation5 + $0x16a8] sm:$0xff]
    %v925 = vld [vmem:[#allocation5 + $0x16b0] sm:$0xff]
    %v926 = vld [vmem:[#allocation5 + $0x16b8] sm:$0xff]
    %v927 = vld [vmem:[#allocation5 + $0x16c0] sm:$0xff]
    %v928 = vld [vmem:[#allocation5 + $0x16c8] sm:$0xff]
    %v929 = vld [vmem:[#allocation5 + $0x16d0] sm:$0xff]
    %v930 = vld [vmem:[#allocation5 + $0x16d8] sm:$0xff]
    %v931 = vld [vmem:[#allocation5 + $0x16e0] sm:$0xff]
    %v932 = vld [vmem:[#allocation5 + $0x16e8] sm:$0xff]
    %v933 = vld [vmem:[#allocation5 + $0x16f0] sm:$0xff]
    %v934 = vld [vmem:[#allocation5 + $0x16f8] sm:$0xff]
    %v935 = vld [vmem:[#allocation5 + $0x1700] sm:$0xff]
    %v936 = vld [vmem:[#allocation5 + $0x1708] sm:$0xff]
    %v937 = vld [vmem:[#allocation5 + $0x1710] sm:$0xff]
    %v938 = vld [vmem:[#allocation5 + $0x1718] sm:$0xff]
    %v939 = vld [vmem:[#allocation5 + $0x1720] sm:$0xff]
    %v940 = vld [vmem:[#allocation5 + $0x1728] sm:$0xff]
    %v941 = vld [vmem:[#allocation5 + $0x1730] sm:$0xff]
    %v942 = vld [vmem:[#allocation5 + $0x1738] sm:$0xff]
    %v943 = vld [vmem:[#allocation5 + $0x1740] sm:$0xff]
    %v944 = vld [vmem:[#allocation5 + $0x1748] sm:$0xff]
    %v945 = vld [vmem:[#allocation5 + $0x1750] sm:$0xff]
    %v946 = vld [vmem:[#allocation5 + $0x1758] sm:$0xff]
    %v947 = vld [vmem:[#allocation5 + $0x1760] sm:$0xff]
    %v948 = vld [vmem:[#allocation5 + $0x1768] sm:$0xff]
    %v949 = vld [vmem:[#allocation5 + $0x1770] sm:$0xff]
    %v950 = vld [vmem:[#allocation5 + $0x1778] sm:$0xff]
    %v951 = vld [vmem:[#allocation5 + $0x1780] sm:$0xff]
    %v952 = vld [vmem:[#allocation5 + $0x1788] sm:$0xff]
    %v953 = vld [vmem:[#allocation5 + $0x1790] sm:$0xff]
    %v954 = vld [vmem:[#allocation5 + $0x1798] sm:$0xff]
    %v955 = vld [vmem:[#allocation5 + $0x17a0] sm:$0xff]
    %v956 = vld [vmem:[#allocation5 + $0x17a8] sm:$0xff]
    %v957 = vld [vmem:[#allocation5 + $0x17b0] sm:$0xff]
    %v958 = vld [vmem:[#allocation5 + $0x17b8] sm:$0xff]
    %v959 = vld [vmem:[#allocation5 + $0x17c0] sm:$0xff]
    %v960 = vld [vmem:[#allocation5 + $0x17c8] sm:$0xff]
    %v961 = vld [vmem:[#allocation5 + $0x17d0] sm:$0xff]
    %v962 = vld [vmem:[#allocation5 + $0x17d8] sm:$0xff]
    %v963 = vld [vmem:[#allocation5 + $0x17e0] sm:$0xff]
    %v964 = vld [vmem:[#allocation5 + $0x17e8] sm:$0xff]
    %v965 = vld [vmem:[#allocation5 + $0x17f0] sm:$0xff]
    %v966 = vld [vmem:[#allocation5 + $0x17f8] sm:$0xff]
    %v967 = vld [vmem:[#allocation5 + $0x1800] sm:$0xff]
    %v968 = vld [vmem:[#allocation5 + $0x1808] sm:$0xff]
    %v969 = vld [vmem:[#allocation5 + $0x1810] sm:$0xff]
    %v970 = vld [vmem:[#allocation5 + $0x1818] sm:$0xff]
    %v971 = vld [vmem:[#allocation5 + $0x1820] sm:$0xff]
    %v972 = vld [vmem:[#allocation5 + $0x1828] sm:$0xff]
    %v973 = vld [vmem:[#allocation5 + $0x1830] sm:$0xff]
    %v974 = vld [vmem:[#allocation5 + $0x1838] sm:$0xff]
    %v975 = vld [vmem:[#allocation5 + $0x1840] sm:$0xff]
    %v976 = vld [vmem:[#allocation5 + $0x1848] sm:$0xff]
    %v977 = vld [vmem:[#allocation5 + $0x1850] sm:$0xff]
    %v978 = vld [vmem:[#allocation5 + $0x1858] sm:$0xff]
    %v979 = vld [vmem:[#allocation5 + $0x1860] sm:$0xff]
    %v980 = vld [vmem:[#allocation5 + $0x1868] sm:$0xff]
    %v981 = vld [vmem:[#allocation5 + $0x1870] sm:$0xff]
    %v982 = vld [vmem:[#allocation5 + $0x1878] sm:$0xff]
    %v983 = vld [vmem:[#allocation5 + $0x1880] sm:$0xff]
    %v984 = vld [vmem:[#allocation5 + $0x1888] sm:$0xff]
    %v985 = vld [vmem:[#allocation5 + $0x1890] sm:$0xff]
    %v986 = vld [vmem:[#allocation5 + $0x1898] sm:$0xff]
    %v987 = vld [vmem:[#allocation5 + $0x18a0] sm:$0xff]
    %v988 = vld [vmem:[#allocation5 + $0x18a8] sm:$0xff]
    %v989 = vld [vmem:[#allocation5 + $0x18b0] sm:$0xff]
    %v990 = vld [vmem:[#allocation5 + $0x18b8] sm:$0xff]
    %v991 = vld [vmem:[#allocation5 + $0x18c0] sm:$0xff]
    %v992 = vld [vmem:[#allocation5 + $0x18c8] sm:$0xff]
    %v993 = vld [vmem:[#allocation5 + $0x18d0] sm:$0xff]
    %v994 = vld [vmem:[#allocation5 + $0x18d8] sm:$0xff]
    %v995 = vld [vmem:[#allocation5 + $0x18e0] sm:$0xff]
    %v996 = vld [vmem:[#allocation5 + $0x18e8] sm:$0xff]
    %v997 = vld [vmem:[#allocation5 + $0x18f0] sm:$0xff]
    %v998 = vld [vmem:[#allocation5 + $0x18f8] sm:$0xff]
    %v999 = vld [vmem:[#allocation5 + $0x1900] sm:$0xff]
    %v1000 = vld [vmem:[#allocation5 + $0x1908] sm:$0xff]
    %v1001 = vld [vmem:[#allocation5 + $0x1910] sm:$0xff]
    %v1002 = vld [vmem:[#allocation5 + $0x1918] sm:$0xff]
    %v1003 = vld [vmem:[#allocation5 + $0x1920] sm:$0xff]
    %v1004 = vld [vmem:[#allocation5 + $0x1928] sm:$0xff]
    %v1005 = vld [vmem:[#allocation5 + $0x1930] sm:$0xff]
    %v1006 = vld [vmem:[#allocation5 + $0x1938] sm:$0xff]
    %v1007 = vld [vmem:[#allocation5 + $0x1940] sm:$0xff]
    %v1008 = vld [vmem:[#allocation5 + $0x1948] sm:$0xff]
    %v1009 = vld [vmem:[#allocation5 + $0x1950] sm:$0xff]
    %v1010 = vld [vmem:[#allocation5 + $0x1958] sm:$0xff]
    %v1011 = vld [vmem:[#allocation5 + $0x1960] sm:$0xff]
    %v1012 = vld [vmem:[#allocation5 + $0x1968] sm:$0xff]
    %v1013 = vld [vmem:[#allocation5 + $0x1970] sm:$0xff]
    %v1014 = vld [vmem:[#allocation5 + $0x1978] sm:$0xff]
    %v1015 = vld [vmem:[#allocation5 + $0x1980] sm:$0xff]
    %v1016 = vld [vmem:[#allocation5 + $0x1988] sm:$0xff]
    %v1017 = vld [vmem:[#allocation5 + $0x1990] sm:$0xff]
    %v1018 = vld [vmem:[#allocation5 + $0x1998] sm:$0xff]
    %v1019 = vld [vmem:[#allocation5 + $0x19a0] sm:$0xff]
    %v1020 = vld [vmem:[#allocation5 + $0x19a8] sm:$0xff]
    %v1021 = vld [vmem:[#allocation5 + $0x19b0] sm:$0xff]
    %v1022 = vld [vmem:[#allocation5 + $0x19b8] sm:$0xff]
    %v1023 = vld [vmem:[#allocation5 + $0x19c0] sm:$0xff]
    %v1024 = vld [vmem:[#allocation5 + $0x19c8] sm:$0xff]
    %v1025 = vld [vmem:[#allocation5 + $0x19d0] sm:$0xff]
    %v1026 = vld [vmem:[#allocation5 + $0x19d8] sm:$0xff]
    %v1027 = vld [vmem:[#allocation5 + $0x19e0] sm:$0xff]
    %v1028 = vld [vmem:[#allocation5 + $0x19e8] sm:$0xff]
    %v1029 = vld [vmem:[#allocation5 + $0x19f0] sm:$0xff]
    %v1030 = vld [vmem:[#allocation5 + $0x19f8] sm:$0xff]
    %v1031 = vld [vmem:[#allocation5 + $0x1a00] sm:$0xff]
    %v1032 = vld [vmem:[#allocation5 + $0x1a08] sm:$0xff]
    %v1033 = vld [vmem:[#allocation5 + $0x1a10] sm:$0xff]
    %v1034 = vld [vmem:[#allocation5 + $0x1a18] sm:$0xff]
    %v1035 = vld [vmem:[#allocation5 + $0x1a20] sm:$0xff]
    %v1036 = vld [vmem:[#allocation5 + $0x1a28] sm:$0xff]
    %v1037 = vld [vmem:[#allocation5 + $0x1a30] sm:$0xff]
    %v1038 = vld [vmem:[#allocation5 + $0x1a38] sm:$0xff]
    %v1039 = vld [vmem:[#allocation5 + $0x1a40] sm:$0xff]
    %v1040 = vld [vmem:[#allocation5 + $0x1a48] sm:$0xff]
    %v1041 = vld [vmem:[#allocation5 + $0x1a50] sm:$0xff]
    %v1042 = vld [vmem:[#allocation5 + $0x1a58] sm:$0xff]
    %v1043 = vld [vmem:[#allocation5 + $0x1a60] sm:$0xff]
    %v1044 = vld [vmem:[#allocation5 + $0x1a68] sm:$0xff]
    %v1045 = vld [vmem:[#allocation5 + $0x1a70] sm:$0xff]
    %v1046 = vld [vmem:[#allocation5 + $0x1a78] sm:$0xff]
    %v1047 = vld [vmem:[#allocation5 + $0x1a80] sm:$0xff]
    %v1048 = vld [vmem:[#allocation5 + $0x1a88] sm:$0xff]
    %v1049 = vld [vmem:[#allocation5 + $0x1a90] sm:$0xff]
    %v1050 = vld [vmem:[#allocation5 + $0x1a98] sm:$0xff]
    %v1051 = vld [vmem:[#allocation5 + $0x1aa0] sm:$0xff]
    %v1052 = vld [vmem:[#allocation5 + $0x1aa8] sm:$0xff]
    %v1053 = vld [vmem:[#allocation5 + $0x1ab0] sm:$0xff]
    %v1054 = vld [vmem:[#allocation5 + $0x1ab8] sm:$0xff]
    %v1055 = vld [vmem:[#allocation5 + $0x1ac0] sm:$0xff]
    %v1056 = vld [vmem:[#allocation5 + $0x1ac8] sm:$0xff]
    %v1057 = vld [vmem:[#allocation5 + $0x1ad0] sm:$0xff]
    %v1058 = vld [vmem:[#allocation5 + $0x1ad8] sm:$0xff]
    %v1059 = vld [vmem:[#allocation5 + $0x1ae0] sm:$0xff]
    %v1060 = vld [vmem:[#allocation5 + $0x1ae8] sm:$0xff]
    %v1061 = vld [vmem:[#allocation5 + $0x1af0] sm:$0xff]
    %v1062 = vld [vmem:[#allocation5 + $0x1af8] sm:$0xff]
    %v1063 = vld [vmem:[#allocation5 + $0x1b00] sm:$0xff]
    %v1064 = vld [vmem:[#allocation5 + $0x1b08] sm:$0xff]
    %v1065 = vld [vmem:[#allocation5 + $0x1b10] sm:$0xff]
    %v1066 = vld [vmem:[#allocation5 + $0x1b18] sm:$0xff]
    %v1067 = vld [vmem:[#allocation5 + $0x1b20] sm:$0xff]
    %v1068 = vld [vmem:[#allocation5 + $0x1b28] sm:$0xff]
    %v1069 = vld [vmem:[#allocation5 + $0x1b30] sm:$0xff]
    %v1070 = vld [vmem:[#allocation5 + $0x1b38] sm:$0xff]
    %v1071 = vld [vmem:[#allocation5 + $0x1b40] sm:$0xff]
    %v1072 = vld [vmem:[#allocation5 + $0x1b48] sm:$0xff]
    %v1073 = vld [vmem:[#allocation5 + $0x1b50] sm:$0xff]
    %v1074 = vld [vmem:[#allocation5 + $0x1b58] sm:$0xff]
    %v1075 = vld [vmem:[#allocation5 + $0x1b60] sm:$0xff]
    %v1076 = vld [vmem:[#allocation5 + $0x1b68] sm:$0xff]
    %v1077 = vld [vmem:[#allocation5 + $0x1b70] sm:$0xff]
    %v1078 = vld [vmem:[#allocation5 + $0x1b78] sm:$0xff]
    %v1079 = vld [vmem:[#allocation5 + $0x1b80] sm:$0xff]
    %v1080 = vld [vmem:[#allocation5 + $0x1b88] sm:$0xff]
    %v1081 = vld [vmem:[#allocation5 + $0x1b90] sm:$0xff]
    %v1082 = vld [vmem:[#allocation5 + $0x1b98] sm:$0xff]
    %v1083 = vld [vmem:[#allocation5 + $0x1ba0] sm:$0xff]
    %v1084 = vld [vmem:[#allocation5 + $0x1ba8] sm:$0xff]
    %v1085 = vld [vmem:[#allocation5 + $0x1bb0] sm:$0xff]
    %v1086 = vld [vmem:[#allocation5 + $0x1bb8] sm:$0xff]
    %v1087 = vld [vmem:[#allocation5 + $0x1bc0] sm:$0xff]
    %v1088 = vld [vmem:[#allocation5 + $0x1bc8] sm:$0xff]
    %v1089 = vld [vmem:[#allocation5 + $0x1bd0] sm:$0xff]
    %v1090 = vld [vmem:[#allocation5 + $0x1bd8] sm:$0xff]
    %v1091 = vld [vmem:[#allocation5 + $0x1be0] sm:$0xff]
    %v1092 = vld [vmem:[#allocation5 + $0x1be8] sm:$0xff]
    %v1093 = vld [vmem:[#allocation5 + $0x1bf0] sm:$0xff]
    %v1094 = vld [vmem:[#allocation5 + $0x1bf8] sm:$0xff]
    %v1095 = vld [vmem:[#allocation5 + $0x1c00] sm:$0xff]
    %v1096 = vld [vmem:[#allocation5 + $0x1c08] sm:$0xff]
    %v1097 = vld [vmem:[#allocation5 + $0x1c10] sm:$0xff]
    %v1098 = vld [vmem:[#allocation5 + $0x1c18] sm:$0xff]
    %v1099 = vld [vmem:[#allocation5 + $0x1c20] sm:$0xff]
    %v1100 = vld [vmem:[#allocation5 + $0x1c28] sm:$0xff]
    %v1101 = vld [vmem:[#allocation5 + $0x1c30] sm:$0xff]
    %v1102 = vld [vmem:[#allocation5 + $0x1c38] sm:$0xff]
    %v1103 = vld [vmem:[#allocation5 + $0x1c40] sm:$0xff]
    %v1104 = vld [vmem:[#allocation5 + $0x1c48] sm:$0xff]
    %v1105 = vld [vmem:[#allocation5 + $0x1c50] sm:$0xff]
    %v1106 = vld [vmem:[#allocation5 + $0x1c58] sm:$0xff]
    %v1107 = vld [vmem:[#allocation5 + $0x1c60] sm:$0xff]
    %v1108 = vld [vmem:[#allocation5 + $0x1c68] sm:$0xff]
    %v1109 = vld [vmem:[#allocation5 + $0x1c70] sm:$0xff]
    %v1110 = vld [vmem:[#allocation5 + $0x1c78] sm:$0xff]
    %v1111 = vld [vmem:[#allocation5 + $0x1c80] sm:$0xff]
    %v1112 = vld [vmem:[#allocation5 + $0x1c88] sm:$0xff]
    %v1113 = vld [vmem:[#allocation5 + $0x1c90] sm:$0xff]
    %v1114 = vld [vmem:[#allocation5 + $0x1c98] sm:$0xff]
    %v1115 = vld [vmem:[#allocation5 + $0x1ca0] sm:$0xff]
    %v1116 = vld [vmem:[#allocation5 + $0x1ca8] sm:$0xff]
    %v1117 = vld [vmem:[#allocation5 + $0x1cb0] sm:$0xff]
    %v1118 = vld [vmem:[#allocation5 + $0x1cb8] sm:$0xff]
    %v1119 = vld [vmem:[#allocation5 + $0x1cc0] sm:$0xff]
    %v1120 = vld [vmem:[#allocation5 + $0x1cc8] sm:$0xff]
    %v1121 = vld [vmem:[#allocation5 + $0x1cd0] sm:$0xff]
    %v1122 = vld [vmem:[#allocation5 + $0x1cd8] sm:$0xff]
    %v1123 = vld [vmem:[#allocation5 + $0x1ce0] sm:$0xff]
    %v1124 = vld [vmem:[#allocation5 + $0x1ce8] sm:$0xff]
    %v1125 = vld [vmem:[#allocation5 + $0x1cf0] sm:$0xff]
    %v1126 = vld [vmem:[#allocation5 + $0x1cf8] sm:$0xff]
    %v1127 = vld [vmem:[#allocation5 + $0x1d00] sm:$0xff]
    %v1128 = vld [vmem:[#allocation5 + $0x1d08] sm:$0xff]
    %v1129 = vld [vmem:[#allocation5 + $0x1d10] sm:$0xff]
    %v1130 = vld [vmem:[#allocation5 + $0x1d18] sm:$0xff]
    %v1131 = vld [vmem:[#allocation5 + $0x1d20] sm:$0xff]
    %v1132 = vld [vmem:[#allocation5 + $0x1d28] sm:$0xff]
    %v1133 = vld [vmem:[#allocation5 + $0x1d30] sm:$0xff]
    %v1134 = vld [vmem:[#allocation5 + $0x1d38] sm:$0xff]
    %v1135 = vld [vmem:[#allocation5 + $0x1d40] sm:$0xff]
    %v1136 = vld [vmem:[#allocation5 + $0x1d48] sm:$0xff]
    %v1137 = vld [vmem:[#allocation5 + $0x1d50] sm:$0xff]
    %v1138 = vld [vmem:[#allocation5 + $0x1d58] sm:$0xff]
    %v1139 = vld [vmem:[#allocation5 + $0x1d60] sm:$0xff]
    %v1140 = vld [vmem:[#allocation5 + $0x1d68] sm:$0xff]
    %v1141 = vld [vmem:[#allocation5 + $0x1d70] sm:$0xff]
    %v1142 = vld [vmem:[#allocation5 + $0x1d78] sm:$0xff]
    %v1143 = vld [vmem:[#allocation5 + $0x1d80] sm:$0xff]
    %v1144 = vld [vmem:[#allocation5 + $0x1d88] sm:$0xff]
    %v1145 = vld [vmem:[#allocation5 + $0x1d90] sm:$0xff]
    %v1146 = vld [vmem:[#allocation5 + $0x1d98] sm:$0xff]
    %v1147 = vld [vmem:[#allocation5 + $0x1da0] sm:$0xff]
    %v1148 = vld [vmem:[#allocation5 + $0x1da8] sm:$0xff]
    %v1149 = vld [vmem:[#allocation5 + $0x1db0] sm:$0xff]
    %v1150 = vld [vmem:[#allocation5 + $0x1db8] sm:$0xff]
    %v1151 = vld [vmem:[#allocation5 + $0x1dc0] sm:$0xff]
    %v1152 = vld [vmem:[#allocation5 + $0x1dc8] sm:$0xff]
    %v1153 = vld [vmem:[#allocation5 + $0x1dd0] sm:$0xff]
    %v1154 = vld [vmem:[#allocation5 + $0x1dd8] sm:$0xff]
    %v1155 = vld [vmem:[#allocation5 + $0x1de0] sm:$0xff]
    %v1156 = vld [vmem:[#allocation5 + $0x1de8] sm:$0xff]
    %v1157 = vld [vmem:[#allocation5 + $0x1df0] sm:$0xff]
    %v1158 = vld [vmem:[#allocation5 + $0x1df8] sm:$0xff]
    %v1159 = vld [vmem:[#allocation5 + $0x1e00] sm:$0xff]
    %v1160 = vld [vmem:[#allocation5 + $0x1e08] sm:$0xff]
    %v1161 = vld [vmem:[#allocation5 + $0x1e10] sm:$0xff]
    %v1162 = vld [vmem:[#allocation5 + $0x1e18] sm:$0xff]
    %v1163 = vld [vmem:[#allocation5 + $0x1e20] sm:$0xff]
    %v1164 = vld [vmem:[#allocation5 + $0x1e28] sm:$0xff]
    %v1165 = vld [vmem:[#allocation5 + $0x1e30] sm:$0xff]
    %v1166 = vld [vmem:[#allocation5 + $0x1e38] sm:$0xff]
    %v1167 = vld [vmem:[#allocation5 + $0x1e40] sm:$0xff]
    %v1168 = vld [vmem:[#allocation5 + $0x1e48] sm:$0xff]
    %v1169 = vld [vmem:[#allocation5 + $0x1e50] sm:$0xff]
    %v1170 = vld [vmem:[#allocation5 + $0x1e58] sm:$0xff]
    %v1171 = vld [vmem:[#allocation5 + $0x1e60] sm:$0xff]
    %v1172 = vld [vmem:[#allocation5 + $0x1e68] sm:$0xff]
    %v1173 = vld [vmem:[#allocation5 + $0x1e70] sm:$0xff]
    %v1174 = vld [vmem:[#allocation5 + $0x1e78] sm:$0xff]
    %v1175 = vld [vmem:[#allocation5 + $0x1e80] sm:$0xff]
    %v1176 = vld [vmem:[#allocation5 + $0x1e88] sm:$0xff]
    %v1177 = vld [vmem:[#allocation5 + $0x1e90] sm:$0xff]
    %v1178 = vld [vmem:[#allocation5 + $0x1e98] sm:$0xff]
    %v1179 = vld [vmem:[#allocation5 + $0x1ea0] sm:$0xff]
    %v1180 = vld [vmem:[#allocation5 + $0x1ea8] sm:$0xff]
    %v1181 = vld [vmem:[#allocation5 + $0x1eb0] sm:$0xff]
    %v1182 = vld [vmem:[#allocation5 + $0x1eb8] sm:$0xff]
    %v1183 = vld [vmem:[#allocation5 + $0x1ec0] sm:$0xff]
    %v1184 = vld [vmem:[#allocation5 + $0x1ec8] sm:$0xff]
    %v1185 = vld [vmem:[#allocation5 + $0x1ed0] sm:$0xff]
    %v1186 = vld [vmem:[#allocation5 + $0x1ed8] sm:$0xff]
    %v1187 = vld [vmem:[#allocation5 + $0x1ee0] sm:$0xff]
    %v1188 = vld [vmem:[#allocation5 + $0x1ee8] sm:$0xff]
    %v1189 = vld [vmem:[#allocation5 + $0x1ef0] sm:$0xff]
    %v1190 = vld [vmem:[#allocation5 + $0x1ef8] sm:$0xff]
    %v1191 = vld [vmem:[#allocation5 + $0x1f00] sm:$0xff]
    %v1192 = vld [vmem:[#allocation5 + $0x1f08] sm:$0xff]
    %v1193 = vld [vmem:[#allocation5 + $0x1f10] sm:$0xff]
    %v1194 = vld [vmem:[#allocation5 + $0x1f18] sm:$0xff]
    %v1195 = vld [vmem:[#allocation5 + $0x1f20] sm:$0xff]
    %v1196 = vld [vmem:[#allocation5 + $0x1f28] sm:$0xff]
    %v1197 = vld [vmem:[#allocation5 + $0x1f30] sm:$0xff]
    %v1198 = vld [vmem:[#allocation5 + $0x1f38] sm:$0xff]
    %v1199 = vld [vmem:[#allocation5 + $0x1f40] sm:$0xff]
    %v1200 = vld [vmem:[#allocation5 + $0x1f48] sm:$0xff]
    %v1201 = vld [vmem:[#allocation5 + $0x1f50] sm:$0xff]
    %v1202 = vld [vmem:[#allocation5 + $0x1f58] sm:$0xff]
    %v1203 = vld [vmem:[#allocation5 + $0x1f60] sm:$0xff]
    %v1204 = vld [vmem:[#allocation5 + $0x1f68] sm:$0xff]
    %v1205 = vld [vmem:[#allocation5 + $0x1f70] sm:$0xff]
    %v1206 = vld [vmem:[#allocation5 + $0x1f78] sm:$0xff]
    %v1207 = vld [vmem:[#allocation5 + $0x1f80] sm:$0xff]
    %v1208 = vld [vmem:[#allocation5 + $0x1f88] sm:$0xff]
    %v1209 = vld [vmem:[#allocation5 + $0x1f90] sm:$0xff]
    %v1210 = vld [vmem:[#allocation5 + $0x1f98] sm:$0xff]
    %v1211 = vld [vmem:[#allocation5 + $0x1fa0] sm:$0xff]
    %v1212 = vld [vmem:[#allocation5 + $0x1fa8] sm:$0xff]
    %v1213 = vld [vmem:[#allocation5 + $0x1fb0] sm:$0xff]
    %v1214 = vld [vmem:[#allocation5 + $0x1fb8] sm:$0xff]
    %v1215 = vld [vmem:[#allocation5 + $0x1fc0] sm:$0xff]
    %v1216 = vld [vmem:[#allocation5 + $0x1fc8] sm:$0xff]
    %v1217 = vld [vmem:[#allocation5 + $0x1fd0] sm:$0xff]
    %v1218 = vld [vmem:[#allocation5 + $0x1fd8] sm:$0xff]
    %v1219 = vld [vmem:[#allocation5 + $0x1fe0] sm:$0xff]
    %v1220 = vld [vmem:[#allocation5 + $0x1fe8] sm:$0xff]
    %v1221 = vld [vmem:[#allocation5 + $0x1ff0] sm:$0xff]
    %v1222 = vld [vmem:[#allocation5 + $0x1ff8] sm:$0xff]
    %v1223 = vld [vmem:[#allocation5 + $0x2000] sm:$0xff]
    %v1224 = vld [vmem:[#allocation5 + $0x2008] sm:$0xff]
    %v1225 = vld [vmem:[#allocation5 + $0x2010] sm:$0xff]
    %v1226 = vld [vmem:[#allocation5 + $0x2018] sm:$0xff]
    %v1227 = vld [vmem:[#allocation5 + $0x2020] sm:$0xff]
    %v1228 = vld [vmem:[#allocation5 + $0x2028] sm:$0xff]
    %v1229 = vld [vmem:[#allocation5 + $0x2030] sm:$0xff]
    %v1230 = vld [vmem:[#allocation5 + $0x2038] sm:$0xff]
    %v1231 = vld [vmem:[#allocation5 + $0x2040] sm:$0xff]
    %v1232 = vld [vmem:[#allocation5 + $0x2048] sm:$0xff]
    %v1233 = vld [vmem:[#allocation5 + $0x2050] sm:$0xff]
    %v1234 = vld [vmem:[#allocation5 + $0x2058] sm:$0xff]
    %v1235 = vld [vmem:[#allocation5 + $0x2060] sm:$0xff]
    %v1236 = vld [vmem:[#allocation5 + $0x2068] sm:$0xff]
    %v1237 = vld [vmem:[#allocation5 + $0x2070] sm:$0xff]
    %v1238 = vld [vmem:[#allocation5 + $0x2078] sm:$0xff]
    %v1239 = vld [vmem:[#allocation5 + $0x2080] sm:$0xff]
    %v1240 = vld [vmem:[#allocation5 + $0x2088] sm:$0xff]
    %v1241 = vld [vmem:[#allocation5 + $0x2090] sm:$0xff]
    %v1242 = vld [vmem:[#allocation5 + $0x2098] sm:$0xff]
    %v1243 = vld [vmem:[#allocation5 + $0x20a0] sm:$0xff]
    %v1244 = vld [vmem:[#allocation5 + $0x20a8] sm:$0xff]
    %v1245 = vld [vmem:[#allocation5 + $0x20b0] sm:$0xff]
    %v1246 = vld [vmem:[#allocation5 + $0x20b8] sm:$0xff]
    %v1247 = vld [vmem:[#allocation5 + $0x20c0] sm:$0xff]
    %v1248 = vld [vmem:[#allocation5 + $0x20c8] sm:$0xff]
    %v1249 = vld [vmem:[#allocation5 + $0x20d0] sm:$0xff]
    %v1250 = vld [vmem:[#allocation5 + $0x20d8] sm:$0xff]
    %v1251 = vld [vmem:[#allocation5 + $0x20e0] sm:$0xff]
    %v1252 = vld [vmem:[#allocation5 + $0x20e8] sm:$0xff]
    %v1253 = vld [vmem:[#allocation5 + $0x20f0] sm:$0xff]
    %v1254 = vld [vmem:[#allocation5 + $0x20f8] sm:$0xff]
    %v1255 = vld [vmem:[#allocation5 + $0x2100] sm:$0xff]
    %v1256 = vld [vmem:[#allocation5 + $0x2108] sm:$0xff]
    %v1257 = vld [vmem:[#allocation5 + $0x2110] sm:$0xff]
    %v1258 = vld [vmem:[#allocation5 + $0x2118] sm:$0xff]
    %v1259 = vld [vmem:[#allocation5 + $0x2120] sm:$0xff]
    %v1260 = vld [vmem:[#allocation5 + $0x2128] sm:$0xff]
    %v1261 = vld [vmem:[#allocation5 + $0x2130] sm:$0xff]
    %v1262 = vld [vmem:[#allocation5 + $0x2138] sm:$0xff]
    %v1263 = vld [vmem:[#allocation5 + $0x2140] sm:$0xff]
    %v1264 = vld [vmem:[#allocation5 + $0x2148] sm:$0xff]
    %v1265 = vld [vmem:[#allocation5 + $0x2150] sm:$0xff]
    %v1266 = vld [vmem:[#allocation5 + $0x2158] sm:$0xff]
    %v1267 = vld [vmem:[#allocation5 + $0x2160] sm:$0xff]
    %v1268 = vld [vmem:[#allocation5 + $0x2168] sm:$0xff]
    %v1269 = vld [vmem:[#allocation5 + $0x2170] sm:$0xff]
    %v1270 = vld [vmem:[#allocation5 + $0x2178] sm:$0xff]
    %v1271 = vld [vmem:[#allocation5 + $0x2180] sm:$0xff]
    %v1272 = vld [vmem:[#allocation5 + $0x2188] sm:$0xff]
    %v1273 = vld [vmem:[#allocation5 + $0x2190] sm:$0xff]
    %v1274 = vld [vmem:[#allocation5 + $0x2198] sm:$0xff]
    %v1275 = vld [vmem:[#allocation5 + $0x21a0] sm:$0xff]
    %v1276 = vld [vmem:[#allocation5 + $0x21a8] sm:$0xff]
    %v1277 = vld [vmem:[#allocation5 + $0x21b0] sm:$0xff]
    %v1278 = vld [vmem:[#allocation5 + $0x21b8] sm:$0xff]
    %v1279 = vld [vmem:[#allocation5 + $0x21c0] sm:$0xff]
    %v1280 = vld [vmem:[#allocation5 + $0x21c8] sm:$0xff]
    %v1281 = vld [vmem:[#allocation5 + $0x21d0] sm:$0xff]
    %v1282 = vld [vmem:[#allocation5 + $0x21d8] sm:$0xff]
    %v1283 = vld [vmem:[#allocation5 + $0x21e0] sm:$0xff]
    %v1284 = vld [vmem:[#allocation5 + $0x21e8] sm:$0xff]
    %v1285 = vld [vmem:[#allocation5 + $0x21f0] sm:$0xff]
    %v1286 = vld [vmem:[#allocation5 + $0x21f8] sm:$0xff]
    %v1287 = vld [vmem:[#allocation5 + $0x2200] sm:$0xff]
    %v1288 = vld [vmem:[#allocation5 + $0x2208] sm:$0xff]
    %v1289 = vld [vmem:[#allocation5 + $0x2210] sm:$0xff]
    %v1290 = vld [vmem:[#allocation5 + $0x2218] sm:$0xff]
    %v1291 = vld [vmem:[#allocation5 + $0x2220] sm:$0xff]
    %v1292 = vld [vmem:[#allocation5 + $0x2228] sm:$0xff]
    %v1293 = vld [vmem:[#allocation5 + $0x2230] sm:$0xff]
    %v1294 = vld [vmem:[#allocation5 + $0x2238] sm:$0xff]
    %v1295 = vld [vmem:[#allocation5 + $0x2240] sm:$0xff]
    %v1296 = vld [vmem:[#allocation5 + $0x2248] sm:$0xff]
    %v1297 = vld [vmem:[#allocation5 + $0x2250] sm:$0xff]
    %v1298 = vld [vmem:[#allocation5 + $0x2258] sm:$0xff]
    %v1299 = vld [vmem:[#allocation5 + $0x2260] sm:$0xff]
    %v1300 = vld [vmem:[#allocation5 + $0x2268] sm:$0xff]
    %v1301 = vld [vmem:[#allocation5 + $0x2270] sm:$0xff]
    %v1302 = vld [vmem:[#allocation5 + $0x2278] sm:$0xff]
    %v1303 = vld [vmem:[#allocation5 + $0x2280] sm:$0xff]
    %v1304 = vld [vmem:[#allocation5 + $0x2288] sm:$0xff]
    %v1305 = vld [vmem:[#allocation5 + $0x2290] sm:$0xff]
    %v1306 = vld [vmem:[#allocation5 + $0x2298] sm:$0xff]
    %v1307 = vld [vmem:[#allocation5 + $0x22a0] sm:$0xff]
    %v1308 = vld [vmem:[#allocation5 + $0x22a8] sm:$0xff]
    %v1309 = vld [vmem:[#allocation5 + $0x22b0] sm:$0xff]
    %v1310 = vld [vmem:[#allocation5 + $0x22b8] sm:$0xff]
    %v1311 = vld [vmem:[#allocation5 + $0x22c0] sm:$0xff]
    %v1312 = vld [vmem:[#allocation5 + $0x22c8] sm:$0xff]
    %v1313 = vld [vmem:[#allocation5 + $0x22d0] sm:$0xff]
    %v1314 = vld [vmem:[#allocation5 + $0x22d8] sm:$0xff]
    %v1315 = vld [vmem:[#allocation5 + $0x22e0] sm:$0xff]
    %v1316 = vld [vmem:[#allocation5 + $0x22e8] sm:$0xff]
    %v1317 = vld [vmem:[#allocation5 + $0x22f0] sm:$0xff]
    %v1318 = vld [vmem:[#allocation5 + $0x22f8] sm:$0xff]
    %v1319 = vld [vmem:[#allocation5 + $0x2300] sm:$0xff]
    %v1320 = vld [vmem:[#allocation5 + $0x2308] sm:$0xff]
    %v1321 = vld [vmem:[#allocation5 + $0x2310] sm:$0xff]
    %v1322 = vld [vmem:[#allocation5 + $0x2318] sm:$0xff]
    %v1323 = vld [vmem:[#allocation5 + $0x2320] sm:$0xff]
    %v1324 = vld [vmem:[#allocation5 + $0x2328] sm:$0xff]
    %v1325 = vld [vmem:[#allocation5 + $0x2330] sm:$0xff]
    %v1326 = vld [vmem:[#allocation5 + $0x2338] sm:$0xff]
    %v1327 = vld [vmem:[#allocation5 + $0x2340] sm:$0xff]
    %v1328 = vld [vmem:[#allocation5 + $0x2348] sm:$0xff]
    %v1329 = vld [vmem:[#allocation5 + $0x2350] sm:$0xff]
    %v1330 = vld [vmem:[#allocation5 + $0x2358] sm:$0xff]
    %v1331 = vld [vmem:[#allocation5 + $0x2360] sm:$0xff]
    %v1332 = vld [vmem:[#allocation5 + $0x2368] sm:$0xff]
    %v1333 = vld [vmem:[#allocation5 + $0x2370] sm:$0xff]
    %v1334 = vld [vmem:[#allocation5 + $0x2378] sm:$0xff]
    %v1335 = vld [vmem:[#allocation5 + $0x2380] sm:$0xff]
    %v1336 = vld [vmem:[#allocation5 + $0x2388] sm:$0xff]
    %v1337 = vld [vmem:[#allocation5 + $0x2390] sm:$0xff]
    %v1338 = vld [vmem:[#allocation5 + $0x2398] sm:$0xff]
    %v1339 = vld [vmem:[#allocation5 + $0x23a0] sm:$0xff]
    %v1340 = vld [vmem:[#allocation5 + $0x23a8] sm:$0xff]
    %v1341 = vld [vmem:[#allocation5 + $0x23b0] sm:$0xff]
    %v1342 = vld [vmem:[#allocation5 + $0x23b8] sm:$0xff]
    %v1343 = vld [vmem:[#allocation5 + $0x23c0] sm:$0xff]
    %v1344 = vld [vmem:[#allocation5 + $0x23c8] sm:$0xff]
    %v1345 = vld [vmem:[#allocation5 + $0x23d0] sm:$0xff]
    %v1346 = vld [vmem:[#allocation5 + $0x23d8] sm:$0xff]
    %v1347 = vld [vmem:[#allocation5 + $0x23e0] sm:$0xff]
    %v1348 = vld [vmem:[#allocation5 + $0x23e8] sm:$0xff]
    %v1349 = vld [vmem:[#allocation5 + $0x23f0] sm:$0xff]
    %v1350 = vld [vmem:[#allocation5 + $0x23f8] sm:$0xff]
    %v1351 = vld [vmem:[#allocation5 + $0x2400] sm:$0xff]
    %v1352 = vld [vmem:[#allocation5 + $0x2408] sm:$0xff]
    %v1353 = vld [vmem:[#allocation5 + $0x2410] sm:$0xff]
    %v1354 = vld [vmem:[#allocation5 + $0x2418] sm:$0xff]
    %v1355 = vld [vmem:[#allocation5 + $0x2420] sm:$0xff]
    %v1356 = vld [vmem:[#allocation5 + $0x2428] sm:$0xff]
    %v1357 = vld [vmem:[#allocation5 + $0x2430] sm:$0xff]
    %v1358 = vld [vmem:[#allocation5 + $0x2438] sm:$0xff]
    %v1359 = vld [vmem:[#allocation5 + $0x2440] sm:$0xff]
    %v1360 = vld [vmem:[#allocation5 + $0x2448] sm:$0xff]
    %v1361 = vld [vmem:[#allocation5 + $0x2450] sm:$0xff]
    %v1362 = vld [vmem:[#allocation5 + $0x2458] sm:$0xff]
    %v1363 = vld [vmem:[#allocation5 + $0x2460] sm:$0xff]
    %v1364 = vld [vmem:[#allocation5 + $0x2468] sm:$0xff]
    %v1365 = vld [vmem:[#allocation5 + $0x2470] sm:$0xff]
    %v1366 = vld [vmem:[#allocation5 + $0x2478] sm:$0xff]
    %v1367 = vld [vmem:[#allocation5 + $0x2480] sm:$0xff]
    %v1368 = vld [vmem:[#allocation5 + $0x2488] sm:$0xff]
    %v1369 = vld [vmem:[#allocation5 + $0x2490] sm:$0xff]
    %v1370 = vld [vmem:[#allocation5 + $0x2498] sm:$0xff]
    %v1371 = vld [vmem:[#allocation5 + $0x24a0] sm:$0xff]
    %v1372 = vld [vmem:[#allocation5 + $0x24a8] sm:$0xff]
    %v1373 = vld [vmem:[#allocation5 + $0x24b0] sm:$0xff]
    %v1374 = vld [vmem:[#allocation5 + $0x24b8] sm:$0xff]
    %v1375 = vld [vmem:[#allocation5 + $0x24c0] sm:$0xff]
    %v1376 = vld [vmem:[#allocation5 + $0x24c8] sm:$0xff]
    %v1377 = vld [vmem:[#allocation5 + $0x24d0] sm:$0xff]
    %v1378 = vld [vmem:[#allocation5 + $0x24d8] sm:$0xff]
    %v1379 = vld [vmem:[#allocation5 + $0x24e0] sm:$0xff]
    %v1380 = vld [vmem:[#allocation5 + $0x24e8] sm:$0xff]
    %v1381 = vld [vmem:[#allocation5 + $0x24f0] sm:$0xff]
    %v1382 = vld [vmem:[#allocation5 + $0x24f8] sm:$0xff]
    %v1383 = vld [vmem:[#allocation5 + $0x2500] sm:$0xff]
    %v1384 = vld [vmem:[#allocation5 + $0x2508] sm:$0xff]
    %v1385 = vld [vmem:[#allocation5 + $0x2510] sm:$0xff]
    %v1386 = vld [vmem:[#allocation5 + $0x2518] sm:$0xff]
    %v1387 = vld [vmem:[#allocation5 + $0x2520] sm:$0xff]
    %v1388 = vld [vmem:[#allocation5 + $0x2528] sm:$0xff]
    %v1389 = vld [vmem:[#allocation5 + $0x2530] sm:$0xff]
    %v1390 = vld [vmem:[#allocation5 + $0x2538] sm:$0xff]
    %v1391 = vld [vmem:[#allocation5 + $0x2540] sm:$0xff]
    %v1392 = vld [vmem:[#allocation5 + $0x2548] sm:$0xff]
    %v1393 = vld [vmem:[#allocation5 + $0x2550] sm:$0xff]
    %v1394 = vld [vmem:[#allocation5 + $0x2558] sm:$0xff]
    %v1395 = vld [vmem:[#allocation5 + $0x2560] sm:$0xff]
    %v1396 = vld [vmem:[#allocation5 + $0x2568] sm:$0xff]
    %v1397 = vld [vmem:[#allocation5 + $0x2570] sm:$0xff]
    %v1398 = vld [vmem:[#allocation5 + $0x2578] sm:$0xff]
    %v1399 = vld [vmem:[#allocation5 + $0x2580] sm:$0xff]
    %v1400 = vld [vmem:[#allocation5 + $0x2588] sm:$0xff]
    %v1401 = vld [vmem:[#allocation5 + $0x2590] sm:$0xff]
    %v1402 = vld [vmem:[#allocation5 + $0x2598] sm:$0xff]
    %v1403 = vld [vmem:[#allocation5 + $0x25a0] sm:$0xff]
    %v1404 = vld [vmem:[#allocation5 + $0x25a8] sm:$0xff]
    %v1405 = vld [vmem:[#allocation5 + $0x25b0] sm:$0xff]
    %v1406 = vld [vmem:[#allocation5 + $0x25b8] sm:$0xff]
    %v1407 = vld [vmem:[#allocation5 + $0x25c0] sm:$0xff]
    %v1408 = vld [vmem:[#allocation5 + $0x25c8] sm:$0xff]
    %v1409 = vld [vmem:[#allocation5 + $0x25d0] sm:$0xff]
    %v1410 = vld [vmem:[#allocation5 + $0x25d8] sm:$0xff]
    %v1411 = vld [vmem:[#allocation5 + $0x25e0] sm:$0xff]
    %v1412 = vld [vmem:[#allocation5 + $0x25e8] sm:$0xff]
    %v1413 = vld [vmem:[#allocation5 + $0x25f0] sm:$0xff]
    %v1414 = vld [vmem:[#allocation5 + $0x25f8] sm:$0xff]
    %v1415 = vld [vmem:[#allocation5 + $0x2600] sm:$0xff]
    %v1416 = vld [vmem:[#allocation5 + $0x2608] sm:$0xff]
    %v1417 = vld [vmem:[#allocation5 + $0x2610] sm:$0xff]
    %v1418 = vld [vmem:[#allocation5 + $0x2618] sm:$0xff]
    %v1419 = vld [vmem:[#allocation5 + $0x2620] sm:$0xff]
    %v1420 = vld [vmem:[#allocation5 + $0x2628] sm:$0xff]
    %v1421 = vld [vmem:[#allocation5 + $0x2630] sm:$0xff]
    %v1422 = vld [vmem:[#allocation5 + $0x2638] sm:$0xff]
    %v1423 = vld [vmem:[#allocation5 + $0x2640] sm:$0xff]
    %v1424 = vld [vmem:[#allocation5 + $0x2648] sm:$0xff]
    %v1425 = vld [vmem:[#allocation5 + $0x2650] sm:$0xff]
    %v1426 = vld [vmem:[#allocation5 + $0x2658] sm:$0xff]
    %v1427 = vld [vmem:[#allocation5 + $0x2660] sm:$0xff]
    %v1428 = vld [vmem:[#allocation5 + $0x2668] sm:$0xff]
    %v1429 = vld [vmem:[#allocation5 + $0x2670] sm:$0xff]
    %v1430 = vld [vmem:[#allocation5 + $0x2678] sm:$0xff]
    %v1431 = vld [vmem:[#allocation5 + $0x2680] sm:$0xff]
    %v1432 = vld [vmem:[#allocation5 + $0x2688] sm:$0xff]
    %v1433 = vld [vmem:[#allocation5 + $0x2690] sm:$0xff]
    %v1434 = vld [vmem:[#allocation5 + $0x2698] sm:$0xff]
    %v1435 = vld [vmem:[#allocation5 + $0x26a0] sm:$0xff]
    %v1436 = vld [vmem:[#allocation5 + $0x26a8] sm:$0xff]
    %v1437 = vld [vmem:[#allocation5 + $0x26b0] sm:$0xff]
    %v1438 = vld [vmem:[#allocation5 + $0x26b8] sm:$0xff]
    %v1439 = vld [vmem:[#allocation5 + $0x26c0] sm:$0xff]
    %v1440 = vld [vmem:[#allocation5 + $0x26c8] sm:$0xff]
    %v1441 = vld [vmem:[#allocation5 + $0x26d0] sm:$0xff]
    %v1442 = vld [vmem:[#allocation5 + $0x26d8] sm:$0xff]
    %v1443 = vld [vmem:[#allocation5 + $0x26e0] sm:$0xff]
    %v1444 = vld [vmem:[#allocation5 + $0x26e8] sm:$0xff]
    %v1445 = vld [vmem:[#allocation5 + $0x26f0] sm:$0xff]
    %v1446 = vld [vmem:[#allocation5 + $0x26f8] sm:$0xff]
    %v1447 = vld [vmem:[#allocation5 + $0x2700] sm:$0xff]
    %v1448 = vld [vmem:[#allocation5 + $0x2708] sm:$0xff]
    %v1449 = vld [vmem:[#allocation5 + $0x2710] sm:$0xff]
    %v1450 = vld [vmem:[#allocation5 + $0x2718] sm:$0xff]
    %v1451 = vld [vmem:[#allocation5 + $0x2720] sm:$0xff]
    %v1452 = vld [vmem:[#allocation5 + $0x2728] sm:$0xff]
    %v1453 = vld [vmem:[#allocation5 + $0x2730] sm:$0xff]
    %v1454 = vld [vmem:[#allocation5 + $0x2738] sm:$0xff]
    %v1455 = vld [vmem:[#allocation5 + $0x2740] sm:$0xff]
    %v1456 = vld [vmem:[#allocation5 + $0x2748] sm:$0xff]
    %v1457 = vld [vmem:[#allocation5 + $0x2750] sm:$0xff]
    %v1458 = vld [vmem:[#allocation5 + $0x2758] sm:$0xff]
    %v1459 = vld [vmem:[#allocation5 + $0x2760] sm:$0xff]
    %v1460 = vld [vmem:[#allocation5 + $0x2768] sm:$0xff]
    %v1461 = vld [vmem:[#allocation5 + $0x2770] sm:$0xff]
    %v1462 = vld [vmem:[#allocation5 + $0x2778] sm:$0xff]
    %v1463 = vld [vmem:[#allocation5 + $0x2780] sm:$0xff]
    %v1464 = vld [vmem:[#allocation5 + $0x2788] sm:$0xff]
    %v1465 = vld [vmem:[#allocation5 + $0x2790] sm:$0xff]
    %v1466 = vld [vmem:[#allocation5 + $0x2798] sm:$0xff]
    %v1467 = vld [vmem:[#allocation5 + $0x27a0] sm:$0xff]
    %v1468 = vld [vmem:[#allocation5 + $0x27a8] sm:$0xff]
    %v1469 = vld [vmem:[#allocation5 + $0x27b0] sm:$0xff]
    %v1470 = vld [vmem:[#allocation5 + $0x27b8] sm:$0xff]
    %v1471 = vld [vmem:[#allocation5 + $0x27c0] sm:$0xff]
    %v1472 = vld [vmem:[#allocation5 + $0x27c8] sm:$0xff]
    %v1473 = vld [vmem:[#allocation5 + $0x27d0] sm:$0xff]
    %v1474 = vld [vmem:[#allocation5 + $0x27d8] sm:$0xff]
    %v1475 = vld [vmem:[#allocation5 + $0x27e0] sm:$0xff]
    %v1476 = vld [vmem:[#allocation5 + $0x27e8] sm:$0xff]
    %v1477 = vld [vmem:[#allocation5 + $0x27f0] sm:$0xff]
    %v1478 = vld [vmem:[#allocation5 + $0x27f8] sm:$0xff]
    %v1479 = vld [vmem:[#allocation5 + $0x2800] sm:$0xff]
    %v1480 = vld [vmem:[#allocation5 + $0x2808] sm:$0xff]
    %v1481 = vld [vmem:[#allocation5 + $0x2810] sm:$0xff]
    %v1482 = vld [vmem:[#allocation5 + $0x2818] sm:$0xff]
    %v1483 = vld [vmem:[#allocation5 + $0x2820] sm:$0xff]
    %v1484 = vld [vmem:[#allocation5 + $0x2828] sm:$0xff]
    %v1485 = vld [vmem:[#allocation5 + $0x2830] sm:$0xff]
    %v1486 = vld [vmem:[#allocation5 + $0x2838] sm:$0xff]
    %v1487 = vld [vmem:[#allocation5 + $0x2840] sm:$0xff]
    %v1488 = vld [vmem:[#allocation5 + $0x2848] sm:$0xff]
    %v1489 = vld [vmem:[#allocation5 + $0x2850] sm:$0xff]
    %v1490 = vld [vmem:[#allocation5 + $0x2858] sm:$0xff]
    %v1491 = vld [vmem:[#allocation5 + $0x2860] sm:$0xff]
    %v1492 = vld [vmem:[#allocation5 + $0x2868] sm:$0xff]
    %v1493 = vld [vmem:[#allocation5 + $0x2870] sm:$0xff]
    %v1494 = vld [vmem:[#allocation5 + $0x2878] sm:$0xff]
    %v1495 = vld [vmem:[#allocation5 + $0x2880] sm:$0xff]
    %v1496 = vld [vmem:[#allocation5 + $0x2888] sm:$0xff]
    %v1497 = vld [vmem:[#allocation5 + $0x2890] sm:$0xff]
    %v1498 = vld [vmem:[#allocation5 + $0x2898] sm:$0xff]
    %v1499 = vld [vmem:[#allocation5 + $0x28a0] sm:$0xff]
    %v1500 = vld [vmem:[#allocation5 + $0x28a8] sm:$0xff]
    %v1501 = vld [vmem:[#allocation5 + $0x28b0] sm:$0xff]
    %v1502 = vld [vmem:[#allocation5 + $0x28b8] sm:$0xff]
    %v1503 = vld [vmem:[#allocation5 + $0x28c0] sm:$0xff]
    %v1504 = vld [vmem:[#allocation5 + $0x28c8] sm:$0xff]
    %v1505 = vld [vmem:[#allocation5 + $0x28d0] sm:$0xff]
    %v1506 = vld [vmem:[#allocation5 + $0x28d8] sm:$0xff]
    %v1507 = vld [vmem:[#allocation5 + $0x28e0] sm:$0xff]
    %v1508 = vld [vmem:[#allocation5 + $0x28e8] sm:$0xff]
    %v1509 = vld [vmem:[#allocation5 + $0x28f0] sm:$0xff]
    %v1510 = vld [vmem:[#allocation5 + $0x28f8] sm:$0xff]
    %v1511 = vld [vmem:[#allocation5 + $0x2900] sm:$0xff]
    %v1512 = vld [vmem:[#allocation5 + $0x2908] sm:$0xff]
    %v1513 = vld [vmem:[#allocation5 + $0x2910] sm:$0xff]
    %v1514 = vld [vmem:[#allocation5 + $0x2918] sm:$0xff]
    %v1515 = vld [vmem:[#allocation5 + $0x2920] sm:$0xff]
    %v1516 = vld [vmem:[#allocation5 + $0x2928] sm:$0xff]
    %v1517 = vld [vmem:[#allocation5 + $0x2930] sm:$0xff]
    %v1518 = vld [vmem:[#allocation5 + $0x2938] sm:$0xff]
    %v1519 = vld [vmem:[#allocation5 + $0x2940] sm:$0xff]
    %v1520 = vld [vmem:[#allocation5 + $0x2948] sm:$0xff]
    %v1521 = vld [vmem:[#allocation5 + $0x2950] sm:$0xff]
    %v1522 = vld [vmem:[#allocation5 + $0x2958] sm:$0xff]
    %v1523 = vld [vmem:[#allocation5 + $0x2960] sm:$0xff]
    %v1524 = vld [vmem:[#allocation5 + $0x2968] sm:$0xff]
    %v1525 = vld [vmem:[#allocation5 + $0x2970] sm:$0xff]
    %v1526 = vld [vmem:[#allocation5 + $0x2978] sm:$0xff]
    %v1527 = vld [vmem:[#allocation5 + $0x2980] sm:$0xff]
    %v1528 = vld [vmem:[#allocation5 + $0x2988] sm:$0xff]
    %v1529 = vld [vmem:[#allocation5 + $0x2990] sm:$0xff]
    %v1530 = vld [vmem:[#allocation5 + $0x2998] sm:$0xff]
    %v1531 = vld [vmem:[#allocation5 + $0x29a0] sm:$0xff]
    %v1532 = vld [vmem:[#allocation5 + $0x29a8] sm:$0xff]
    %v1533 = vld [vmem:[#allocation5 + $0x29b0] sm:$0xff]
    %v1534 = vld [vmem:[#allocation5 + $0x29b8] sm:$0xff]
    %v1535 = vld [vmem:[#allocation5 + $0x29c0] sm:$0xff]
    %v1536 = vld [vmem:[#allocation5 + $0x29c8] sm:$0xff]
    %v1537 = vld [vmem:[#allocation5 + $0x29d0] sm:$0xff]
    %v1538 = vld [vmem:[#allocation5 + $0x29d8] sm:$0xff]
    %v1539 = vld [vmem:[#allocation5 + $0x29e0] sm:$0xff]
    %v1540 = vld [vmem:[#allocation5 + $0x29e8] sm:$0xff]
    %v1541 = vld [vmem:[#allocation5 + $0x29f0] sm:$0xff]
    %v1542 = vld [vmem:[#allocation5 + $0x29f8] sm:$0xff]
    %v1543 = vld [vmem:[#allocation5 + $0x2a00] sm:$0xff]
    %v1544 = vld [vmem:[#allocation5 + $0x2a08] sm:$0xff]
    %v1545 = vld [vmem:[#allocation5 + $0x2a10] sm:$0xff]
    %v1546 = vld [vmem:[#allocation5 + $0x2a18] sm:$0xff]
    %v1547 = vld [vmem:[#allocation5 + $0x2a20] sm:$0xff]
    %v1548 = vld [vmem:[#allocation5 + $0x2a28] sm:$0xff]
    %v1549 = vld [vmem:[#allocation5 + $0x2a30] sm:$0xff]
    %v1550 = vld [vmem:[#allocation5 + $0x2a38] sm:$0xff]
    %v1551 = vld [vmem:[#allocation5 + $0x2a40] sm:$0xff]
    %v1552 = vld [vmem:[#allocation5 + $0x2a48] sm:$0xff]
    %v1553 = vld [vmem:[#allocation5 + $0x2a50] sm:$0xff]
    %v1554 = vld [vmem:[#allocation5 + $0x2a58] sm:$0xff]
    %v1555 = vld [vmem:[#allocation5 + $0x2a60] sm:$0xff]
    %v1556 = vld [vmem:[#allocation5 + $0x2a68] sm:$0xff]
    %v1557 = vld [vmem:[#allocation5 + $0x2a70] sm:$0xff]
    %v1558 = vld [vmem:[#allocation5 + $0x2a78] sm:$0xff]
    %v1559 = vld [vmem:[#allocation5 + $0x2a80] sm:$0xff]
    %v1560 = vld [vmem:[#allocation5 + $0x2a88] sm:$0xff]
    %v1561 = vld [vmem:[#allocation5 + $0x2a90] sm:$0xff]
    %v1562 = vld [vmem:[#allocation5 + $0x2a98] sm:$0xff]
    %v1563 = vld [vmem:[#allocation5 + $0x2aa0] sm:$0xff]
    %v1564 = vld [vmem:[#allocation5 + $0x2aa8] sm:$0xff]
    %v1565 = vld [vmem:[#allocation5 + $0x2ab0] sm:$0xff]
    %v1566 = vld [vmem:[#allocation5 + $0x2ab8] sm:$0xff]
    %v1567 = vld [vmem:[#allocation5 + $0x2ac0] sm:$0xff]
    %v1568 = vld [vmem:[#allocation5 + $0x2ac8] sm:$0xff]
    %v1569 = vld [vmem:[#allocation5 + $0x2ad0] sm:$0xff]
    %v1570 = vld [vmem:[#allocation5 + $0x2ad8] sm:$0xff]
    %v1571 = vld [vmem:[#allocation5 + $0x2ae0] sm:$0xff]
    %v1572 = vld [vmem:[#allocation5 + $0x2ae8] sm:$0xff]
    %v1573 = vld [vmem:[#allocation5 + $0x2af0] sm:$0xff]
    %v1574 = vld [vmem:[#allocation5 + $0x2af8] sm:$0xff]
    %v1575 = vld [vmem:[#allocation5 + $0x2b00] sm:$0xff]
    %v1576 = vld [vmem:[#allocation5 + $0x2b08] sm:$0xff]
    %v1577 = vld [vmem:[#allocation5 + $0x2b10] sm:$0xff]
    %v1578 = vld [vmem:[#allocation5 + $0x2b18] sm:$0xff]
    %v1579 = vld [vmem:[#allocation5 + $0x2b20] sm:$0xff]
    %v1580 = vld [vmem:[#allocation5 + $0x2b28] sm:$0xff]
    %v1581 = vld [vmem:[#allocation5 + $0x2b30] sm:$0xff]
    %v1582 = vld [vmem:[#allocation5 + $0x2b38] sm:$0xff]
    %v1583 = vld [vmem:[#allocation5 + $0x2b40] sm:$0xff]
    %v1584 = vld [vmem:[#allocation5 + $0x2b48] sm:$0xff]
    %v1585 = vld [vmem:[#allocation5 + $0x2b50] sm:$0xff]
    %v1586 = vld [vmem:[#allocation5 + $0x2b58] sm:$0xff]
    %v1587 = vld [vmem:[#allocation5 + $0x2b60] sm:$0xff]
    %v1588 = vld [vmem:[#allocation5 + $0x2b68] sm:$0xff]
    %v1589 = vld [vmem:[#allocation5 + $0x2b70] sm:$0xff]
    %v1590 = vld [vmem:[#allocation5 + $0x2b78] sm:$0xff]
    %v1591 = vld [vmem:[#allocation5 + $0x2b80] sm:$0xff]
    %v1592 = vld [vmem:[#allocation5 + $0x2b88] sm:$0xff]
    %v1593 = vld [vmem:[#allocation5 + $0x2b90] sm:$0xff]
    %v1594 = vld [vmem:[#allocation5 + $0x2b98] sm:$0xff]
    %v1595 = vld [vmem:[#allocation5 + $0x2ba0] sm:$0xff]
    %v1596 = vld [vmem:[#allocation5 + $0x2ba8] sm:$0xff]
    %v1597 = vld [vmem:[#allocation5 + $0x2bb0] sm:$0xff]
    %v1598 = vld [vmem:[#allocation5 + $0x2bb8] sm:$0xff]
    %v1599 = vld [vmem:[#allocation5 + $0x2bc0] sm:$0xff]
    %v1600 = vld [vmem:[#allocation5 + $0x2bc8] sm:$0xff]
    %v1601 = vld [vmem:[#allocation5 + $0x2bd0] sm:$0xff]
    %v1602 = vld [vmem:[#allocation5 + $0x2bd8] sm:$0xff]
    %v1603 = vld [vmem:[#allocation5 + $0x2be0] sm:$0xff]
    %v1604 = vld [vmem:[#allocation5 + $0x2be8] sm:$0xff]
    %v1605 = vld [vmem:[#allocation5 + $0x2bf0] sm:$0xff]
    %v1606 = vld [vmem:[#allocation5 + $0x2bf8] sm:$0xff]
    %v1607 = vld [vmem:[#allocation5 + $0x2c00] sm:$0xff]
    %v1608 = vld [vmem:[#allocation5 + $0x2c08] sm:$0xff]
    %v1609 = vld [vmem:[#allocation5 + $0x2c10] sm:$0xff]
    %v1610 = vld [vmem:[#allocation5 + $0x2c18] sm:$0xff]
    %v1611 = vld [vmem:[#allocation5 + $0x2c20] sm:$0xff]
    %v1612 = vld [vmem:[#allocation5 + $0x2c28] sm:$0xff]
    %v1613 = vld [vmem:[#allocation5 + $0x2c30] sm:$0xff]
    %v1614 = vld [vmem:[#allocation5 + $0x2c38] sm:$0xff]
    %v1615 = vld [vmem:[#allocation5 + $0x2c40] sm:$0xff]
    %v1616 = vld [vmem:[#allocation5 + $0x2c48] sm:$0xff]
    %v1617 = vld [vmem:[#allocation5 + $0x2c50] sm:$0xff]
    %v1618 = vld [vmem:[#allocation5 + $0x2c58] sm:$0xff]
    %v1619 = vld [vmem:[#allocation5 + $0x2c60] sm:$0xff]
    %v1620 = vld [vmem:[#allocation5 + $0x2c68] sm:$0xff]
    %v1621 = vld [vmem:[#allocation5 + $0x2c70] sm:$0xff]
    %v1622 = vld [vmem:[#allocation5 + $0x2c78] sm:$0xff]
    %v1623 = vld [vmem:[#allocation5 + $0x2c80] sm:$0xff]
    %v1624 = vld [vmem:[#allocation5 + $0x2c88] sm:$0xff]
    %v1625 = vld [vmem:[#allocation5 + $0x2c90] sm:$0xff]
    %v1626 = vld [vmem:[#allocation5 + $0x2c98] sm:$0xff]
    %v1627 = vld [vmem:[#allocation5 + $0x2ca0] sm:$0xff]
    %v1628 = vld [vmem:[#allocation5 + $0x2ca8] sm:$0xff]
    %v1629 = vld [vmem:[#allocation5 + $0x2cb0] sm:$0xff]
    %v1630 = vld [vmem:[#allocation5 + $0x2cb8] sm:$0xff]
    %v1631 = vld [vmem:[#allocation5 + $0x2cc0] sm:$0xff]
    %v1632 = vld [vmem:[#allocation5 + $0x2cc8] sm:$0xff]
    %v1633 = vld [vmem:[#allocation5 + $0x2cd0] sm:$0xff]
    %v1634 = vld [vmem:[#allocation5 + $0x2cd8] sm:$0xff]
    %v1635 = vld [vmem:[#allocation5 + $0x2ce0] sm:$0xff]
    %v1636 = vld [vmem:[#allocation5 + $0x2ce8] sm:$0xff]
    %v1637 = vld [vmem:[#allocation5 + $0x2cf0] sm:$0xff]
    %v1638 = vld [vmem:[#allocation5 + $0x2cf8] sm:$0xff]
    %v1639 = vld [vmem:[#allocation5 + $0x2d00] sm:$0xff]
    %v1640 = vld [vmem:[#allocation5 + $0x2d08] sm:$0xff]
    %v1641 = vld [vmem:[#allocation5 + $0x2d10] sm:$0xff]
    %v1642 = vld [vmem:[#allocation5 + $0x2d18] sm:$0xff]
    %v1643 = vld [vmem:[#allocation5 + $0x2d20] sm:$0xff]
    %v1644 = vld [vmem:[#allocation5 + $0x2d28] sm:$0xff]
    %v1645 = vld [vmem:[#allocation5 + $0x2d30] sm:$0xff]
    %v1646 = vld [vmem:[#allocation5 + $0x2d38] sm:$0xff]
    %v1647 = vld [vmem:[#allocation5 + $0x2d40] sm:$0xff]
    %v1648 = vld [vmem:[#allocation5 + $0x2d48] sm:$0xff]
    %v1649 = vld [vmem:[#allocation5 + $0x2d50] sm:$0xff]
    %v1650 = vld [vmem:[#allocation5 + $0x2d58] sm:$0xff]
    %v1651 = vld [vmem:[#allocation5 + $0x2d60] sm:$0xff]
    %v1652 = vld [vmem:[#allocation5 + $0x2d68] sm:$0xff]
    %v1653 = vld [vmem:[#allocation5 + $0x2d70] sm:$0xff]
    %v1654 = vld [vmem:[#allocation5 + $0x2d78] sm:$0xff]
    %v1655 = vld [vmem:[#allocation5 + $0x2d80] sm:$0xff]
    %v1656 = vld [vmem:[#allocation5 + $0x2d88] sm:$0xff]
    %v1657 = vld [vmem:[#allocation5 + $0x2d90] sm:$0xff]
    %v1658 = vld [vmem:[#allocation5 + $0x2d98] sm:$0xff]
    %v1659 = vld [vmem:[#allocation5 + $0x2da0] sm:$0xff]
    %v1660 = vld [vmem:[#allocation5 + $0x2da8] sm:$0xff]
    %v1661 = vld [vmem:[#allocation5 + $0x2db0] sm:$0xff]
    %v1662 = vld [vmem:[#allocation5 + $0x2db8] sm:$0xff]
    %v1663 = vld [vmem:[#allocation5 + $0x2dc0] sm:$0xff]
    %v1664 = vld [vmem:[#allocation5 + $0x2dc8] sm:$0xff]
    %v1665 = vld [vmem:[#allocation5 + $0x2dd0] sm:$0xff]
    %v1666 = vld [vmem:[#allocation5 + $0x2dd8] sm:$0xff]
    %v1667 = vld [vmem:[#allocation5 + $0x2de0] sm:$0xff]
    %v1668 = vld [vmem:[#allocation5 + $0x2de8] sm:$0xff]
    %v1669 = vld [vmem:[#allocation5 + $0x2df0] sm:$0xff]
    %v1670 = vld [vmem:[#allocation5 + $0x2df8] sm:$0xff]
    %v1671 = vld [vmem:[#allocation5 + $0x2e00] sm:$0xff]
    %v1672 = vld [vmem:[#allocation5 + $0x2e08] sm:$0xff]
    %v1673 = vld [vmem:[#allocation5 + $0x2e10] sm:$0xff]
    %v1674 = vld [vmem:[#allocation5 + $0x2e18] sm:$0xff]
    %v1675 = vld [vmem:[#allocation5 + $0x2e20] sm:$0xff]
    %v1676 = vld [vmem:[#allocation5 + $0x2e28] sm:$0xff]
    %v1677 = vld [vmem:[#allocation5 + $0x2e30] sm:$0xff]
    %v1678 = vld [vmem:[#allocation5 + $0x2e38] sm:$0xff]
    %v1679 = vld [vmem:[#allocation5 + $0x2e40] sm:$0xff]
    %v1680 = vld [vmem:[#allocation5 + $0x2e48] sm:$0xff]
    %v1681 = vld [vmem:[#allocation5 + $0x2e50] sm:$0xff]
    %v1682 = vld [vmem:[#allocation5 + $0x2e58] sm:$0xff]
    %v1683 = vld [vmem:[#allocation5 + $0x2e60] sm:$0xff]
    %v1684 = vld [vmem:[#allocation5 + $0x2e68] sm:$0xff]
    %v1685 = vld [vmem:[#allocation5 + $0x2e70] sm:$0xff]
    %v1686 = vld [vmem:[#allocation5 + $0x2e78] sm:$0xff]
    %v1687 = vld [vmem:[#allocation5 + $0x2e80] sm:$0xff]
    %v1688 = vld [vmem:[#allocation5 + $0x2e88] sm:$0xff]
    %v1689 = vld [vmem:[#allocation5 + $0x2e90] sm:$0xff]
    %v1690 = vld [vmem:[#allocation5 + $0x2e98] sm:$0xff]
    %v1691 = vld [vmem:[#allocation5 + $0x2ea0] sm:$0xff]
    %v1692 = vld [vmem:[#allocation5 + $0x2ea8] sm:$0xff]
    %v1693 = vld [vmem:[#allocation5 + $0x2eb0] sm:$0xff]
    %v1694 = vld [vmem:[#allocation5 + $0x2eb8] sm:$0xff]
    %v1695 = vld [vmem:[#allocation5 + $0x2ec0] sm:$0xff]
    %v1696 = vld [vmem:[#allocation5 + $0x2ec8] sm:$0xff]
    %v1697 = vld [vmem:[#allocation5 + $0x2ed0] sm:$0xff]
    %v1698 = vld [vmem:[#allocation5 + $0x2ed8] sm:$0xff]
    %v1699 = vld [vmem:[#allocation5 + $0x2ee0] sm:$0xff]
    %v1700 = vld [vmem:[#allocation5 + $0x2ee8] sm:$0xff]
    %v1701 = vld [vmem:[#allocation5 + $0x2ef0] sm:$0xff]
    %v1702 = vld [vmem:[#allocation5 + $0x2ef8] sm:$0xff]
    %v1703 = vld [vmem:[#allocation5 + $0x2f00] sm:$0xff]
    %v1704 = vld [vmem:[#allocation5 + $0x2f08] sm:$0xff]
    %v1705 = vld [vmem:[#allocation5 + $0x2f10] sm:$0xff]
    %v1706 = vld [vmem:[#allocation5 + $0x2f18] sm:$0xff]
    %v1707 = vld [vmem:[#allocation5 + $0x2f20] sm:$0xff]
    %v1708 = vld [vmem:[#allocation5 + $0x2f28] sm:$0xff]
    %v1709 = vld [vmem:[#allocation5 + $0x2f30] sm:$0xff]
    %v1710 = vld [vmem:[#allocation5 + $0x2f38] sm:$0xff]
    %v1711 = vld [vmem:[#allocation5 + $0x2f40] sm:$0xff]
    %v1712 = vld [vmem:[#allocation5 + $0x2f48] sm:$0xff]
    %v1713 = vld [vmem:[#allocation5 + $0x2f50] sm:$0xff]
    %v1714 = vld [vmem:[#allocation5 + $0x2f58] sm:$0xff]
    %v1715 = vld [vmem:[#allocation5 + $0x2f60] sm:$0xff]
    %v1716 = vld [vmem:[#allocation5 + $0x2f68] sm:$0xff]
    %v1717 = vld [vmem:[#allocation5 + $0x2f70] sm:$0xff]
    %v1718 = vld [vmem:[#allocation5 + $0x2f78] sm:$0xff]
    %v1719 = vld [vmem:[#allocation5 + $0x2f80] sm:$0xff]
    %v1720 = vld [vmem:[#allocation5 + $0x2f88] sm:$0xff]
    %v1721 = vld [vmem:[#allocation5 + $0x2f90] sm:$0xff]
    %v1722 = vld [vmem:[#allocation5 + $0x2f98] sm:$0xff]
    %v1723 = vld [vmem:[#allocation5 + $0x2fa0] sm:$0xff]
    %v1724 = vld [vmem:[#allocation5 + $0x2fa8] sm:$0xff]
    %v1725 = vld [vmem:[#allocation5 + $0x2fb0] sm:$0xff]
    %v1726 = vld [vmem:[#allocation5 + $0x2fb8] sm:$0xff]
    %v1727 = vld [vmem:[#allocation5 + $0x2fc0] sm:$0xff]
    %v1728 = vld [vmem:[#allocation5 + $0x2fc8] sm:$0xff]
    %v1729 = vld [vmem:[#allocation5 + $0x2fd0] sm:$0xff]
    %v1730 = vld [vmem:[#allocation5 + $0x2fd8] sm:$0xff]
    %v1731 = vld [vmem:[#allocation5 + $0x2fe0] sm:$0xff]
    %v1732 = vld [vmem:[#allocation5 + $0x2fe8] sm:$0xff]
    %v1733 = vld [vmem:[#allocation5 + $0x2ff0] sm:$0xff]
    %v1734 = vld [vmem:[#allocation5 + $0x2ff8] sm:$0xff]
    %v3271 = vunpack.c.l.b16 %v199
    %v3272 = vunpack.c.h.b16 %v199
    %v3273 = vunpack.c.l.b16 %v200
    %v3274 = vunpack.c.h.b16 %v200
    %v3275 = vunpack.c.l.b16 %v201
    %v3276 = vunpack.c.h.b16 %v201
    %v3277 = vunpack.c.l.b16 %v202
    %v3278 = vunpack.c.h.b16 %v202
    %v3279 = vunpack.c.l.b16 %v203
    %v3280 = vunpack.c.h.b16 %v203
    %v3281 = vunpack.c.l.b16 %v204
    %v3282 = vunpack.c.h.b16 %v204
    %v3283 = vunpack.c.l.b16 %v205
    %v3284 = vunpack.c.h.b16 %v205
    %v3285 = vunpack.c.l.b16 %v206
    %v3286 = vunpack.c.h.b16 %v206
    %v3287 = vunpack.c.l.b16 %v207
    %v3288 = vunpack.c.h.b16 %v207
    %v3289 = vunpack.c.l.b16 %v208
    %v3290 = vunpack.c.h.b16 %v208
    %v3291 = vunpack.c.l.b16 %v209
    %v3292 = vunpack.c.h.b16 %v209
    %v3293 = vunpack.c.l.b16 %v210
    %v3294 = vunpack.c.h.b16 %v210
    %v3295 = vunpack.c.l.b16 %v211
    %v3296 = vunpack.c.h.b16 %v211
    %v3297 = vunpack.c.l.b16 %v212
    %v3298 = vunpack.c.h.b16 %v212
    %v3299 = vunpack.c.l.b16 %v213
    %v3300 = vunpack.c.h.b16 %v213
    %v3301 = vunpack.c.l.b16 %v214
    %v3302 = vunpack.c.h.b16 %v214
    %v3303 = vunpack.c.l.b16 %v215
    %v3304 = vunpack.c.h.b16 %v215
    %v3305 = vunpack.c.l.b16 %v216
    %v3306 = vunpack.c.h.b16 %v216
    %v3307 = vunpack.c.l.b16 %v217
    %v3308 = vunpack.c.h.b16 %v217
    %v3309 = vunpack.c.l.b16 %v218
    %v3310 = vunpack.c.h.b16 %v218
    %v3311 = vunpack.c.l.b16 %v219
    %v3312 = vunpack.c.h.b16 %v219
    %v3313 = vunpack.c.l.b16 %v220
    %v3314 = vunpack.c.h.b16 %v220
    %v3315 = vunpack.c.l.b16 %v221
    %v3316 = vunpack.c.h.b16 %v221
    %v3317 = vunpack.c.l.b16 %v222
    %v3318 = vunpack.c.h.b16 %v222
    %v3319 = vunpack.c.l.b16 %v223
    %v3320 = vunpack.c.h.b16 %v223
    %v3321 = vunpack.c.l.b16 %v224
    %v3322 = vunpack.c.h.b16 %v224
    %v3323 = vunpack.c.l.b16 %v225
    %v3324 = vunpack.c.h.b16 %v225
    %v3325 = vunpack.c.l.b16 %v226
    %v3326 = vunpack.c.h.b16 %v226
    %v3327 = vunpack.c.l.b16 %v227
    %v3328 = vunpack.c.h.b16 %v227
    %v3329 = vunpack.c.l.b16 %v228
    %v3330 = vunpack.c.h.b16 %v228
    %v3331 = vunpack.c.l.b16 %v229
    %v3332 = vunpack.c.h.b16 %v229
    %v3333 = vunpack.c.l.b16 %v230
    %v3334 = vunpack.c.h.b16 %v230
    %v3335 = vunpack.c.l.b16 %v231
    %v3336 = vunpack.c.h.b16 %v231
    %v3337 = vunpack.c.l.b16 %v232
    %v3338 = vunpack.c.h.b16 %v232
    %v3339 = vunpack.c.l.b16 %v233
    %v3340 = vunpack.c.h.b16 %v233
    %v3341 = vunpack.c.l.b16 %v234
    %v3342 = vunpack.c.h.b16 %v234
    %v3343 = vunpack.c.l.b16 %v235
    %v3344 = vunpack.c.h.b16 %v235
    %v3345 = vunpack.c.l.b16 %v236
    %v3346 = vunpack.c.h.b16 %v236
    %v3347 = vunpack.c.l.b16 %v237
    %v3348 = vunpack.c.h.b16 %v237
    %v3349 = vunpack.c.l.b16 %v238
    %v3350 = vunpack.c.h.b16 %v238
    %v3351 = vunpack.c.l.b16 %v239
    %v3352 = vunpack.c.h.b16 %v239
    %v3353 = vunpack.c.l.b16 %v240
    %v3354 = vunpack.c.h.b16 %v240
    %v3355 = vunpack.c.l.b16 %v241
    %v3356 = vunpack.c.h.b16 %v241
    %v3357 = vunpack.c.l.b16 %v242
    %v3358 = vunpack.c.h.b16 %v242
    %v3359 = vunpack.c.l.b16 %v243
    %v3360 = vunpack.c.h.b16 %v243
    %v3361 = vunpack.c.l.b16 %v244
    %v3362 = vunpack.c.h.b16 %v244
    %v3363 = vunpack.c.l.b16 %v245
    %v3364 = vunpack.c.h.b16 %v245
    %v3365 = vunpack.c.l.b16 %v246
    %v3366 = vunpack.c.h.b16 %v246
    %v3367 = vunpack.c.l.b16 %v247
    %v3368 = vunpack.c.h.b16 %v247
    %v3369 = vunpack.c.l.b16 %v248
    %v3370 = vunpack.c.h.b16 %v248
    %v3371 = vunpack.c.l.b16 %v249
    %v3372 = vunpack.c.h.b16 %v249
    %v3373 = vunpack.c.l.b16 %v250
    %v3374 = vunpack.c.h.b16 %v250
    %v3375 = vunpack.c.l.b16 %v251
    %v3376 = vunpack.c.h.b16 %v251
    %v3377 = vunpack.c.l.b16 %v252
    %v3378 = vunpack.c.h.b16 %v252
    %v3379 = vunpack.c.l.b16 %v253
    %v3380 = vunpack.c.h.b16 %v253
    %v3381 = vunpack.c.l.b16 %v254
    %v3382 = vunpack.c.h.b16 %v254
    %v3383 = vunpack.c.l.b16 %v255
    %v3384 = vunpack.c.h.b16 %v255
    %v3385 = vunpack.c.l.b16 %v256
    %v3386 = vunpack.c.h.b16 %v256
    %v3387 = vunpack.c.l.b16 %v257
    %v3388 = vunpack.c.h.b16 %v257
    %v3389 = vunpack.c.l.b16 %v258
    %v3390 = vunpack.c.h.b16 %v258
    %v3391 = vunpack.c.l.b16 %v259
    %v3392 = vunpack.c.h.b16 %v259
    %v3393 = vunpack.c.l.b16 %v260
    %v3394 = vunpack.c.h.b16 %v260
    %v3395 = vunpack.c.l.b16 %v261
    %v3396 = vunpack.c.h.b16 %v261
    %v3397 = vunpack.c.l.b16 %v262
    %v3398 = vunpack.c.h.b16 %v262
    %v3399 = vunpack.c.l.b16 %v263
    %v3400 = vunpack.c.h.b16 %v263
    %v3401 = vunpack.c.l.b16 %v264
    %v3402 = vunpack.c.h.b16 %v264
    %v3403 = vunpack.c.l.b16 %v265
    %v3404 = vunpack.c.h.b16 %v265
    %v3405 = vunpack.c.l.b16 %v266
    %v3406 = vunpack.c.h.b16 %v266
    %v3407 = vunpack.c.l.b16 %v267
    %v3408 = vunpack.c.h.b16 %v267
    %v3409 = vunpack.c.l.b16 %v268
    %v3410 = vunpack.c.h.b16 %v268
    %v3411 = vunpack.c.l.b16 %v269
    %v3412 = vunpack.c.h.b16 %v269
    %v3413 = vunpack.c.l.b16 %v270
    %v3414 = vunpack.c.h.b16 %v270
    %v3415 = vunpack.c.l.b16 %v271
    %v3416 = vunpack.c.h.b16 %v271
    %v3417 = vunpack.c.l.b16 %v272
    %v3418 = vunpack.c.h.b16 %v272
    %v3419 = vunpack.c.l.b16 %v273
    %v3420 = vunpack.c.h.b16 %v273
    %v3421 = vunpack.c.l.b16 %v274
    %v3422 = vunpack.c.h.b16 %v274
    %v3423 = vunpack.c.l.b16 %v275
    %v3424 = vunpack.c.h.b16 %v275
    %v3425 = vunpack.c.l.b16 %v276
    %v3426 = vunpack.c.h.b16 %v276
    %v3427 = vunpack.c.l.b16 %v277
    %v3428 = vunpack.c.h.b16 %v277
    %v3429 = vunpack.c.l.b16 %v278
    %v3430 = vunpack.c.h.b16 %v278
    %v3431 = vunpack.c.l.b16 %v279
    %v3432 = vunpack.c.h.b16 %v279
    %v3433 = vunpack.c.l.b16 %v280
    %v3434 = vunpack.c.h.b16 %v280
    %v3435 = vunpack.c.l.b16 %v281
    %v3436 = vunpack.c.h.b16 %v281
    %v3437 = vunpack.c.l.b16 %v282
    %v3438 = vunpack.c.h.b16 %v282
    %v3439 = vunpack.c.l.b16 %v283
    %v3440 = vunpack.c.h.b16 %v283
    %v3441 = vunpack.c.l.b16 %v284
    %v3442 = vunpack.c.h.b16 %v284
    %v3443 = vunpack.c.l.b16 %v285
    %v3444 = vunpack.c.h.b16 %v285
    %v3445 = vunpack.c.l.b16 %v286
    %v3446 = vunpack.c.h.b16 %v286
    %v3447 = vunpack.c.l.b16 %v287
    %v3448 = vunpack.c.h.b16 %v287
    %v3449 = vunpack.c.l.b16 %v288
    %v3450 = vunpack.c.h.b16 %v288
    %v3451 = vunpack.c.l.b16 %v289
    %v3452 = vunpack.c.h.b16 %v289
    %v3453 = vunpack.c.l.b16 %v290
    %v3454 = vunpack.c.h.b16 %v290
    %v3455 = vunpack.c.l.b16 %v291
    %v3456 = vunpack.c.h.b16 %v291
    %v3457 = vunpack.c.l.b16 %v292
    %v3458 = vunpack.c.h.b16 %v292
    %v3459 = vunpack.c.l.b16 %v293
    %v3460 = vunpack.c.h.b16 %v293
    %v3461 = vunpack.c.l.b16 %v294
    %v3462 = vunpack.c.h.b16 %v294
    %v3463 = vunpack.c.l.b16 %v295
    %v3464 = vunpack.c.h.b16 %v295
    %v3465 = vunpack.c.l.b16 %v296
    %v3466 = vunpack.c.h.b16 %v296
    %v3467 = vunpack.c.l.b16 %v297
    %v3468 = vunpack.c.h.b16 %v297
    %v3469 = vunpack.c.l.b16 %v298
    %v3470 = vunpack.c.h.b16 %v298
    %v3471 = vunpack.c.l.b16 %v299
    %v3472 = vunpack.c.h.b16 %v299
    %v3473 = vunpack.c.l.b16 %v300
    %v3474 = vunpack.c.h.b16 %v300
    %v3475 = vunpack.c.l.b16 %v301
    %v3476 = vunpack.c.h.b16 %v301
    %v3477 = vunpack.c.l.b16 %v302
    %v3478 = vunpack.c.h.b16 %v302
    %v3479 = vunpack.c.l.b16 %v303
    %v3480 = vunpack.c.h.b16 %v303
    %v3481 = vunpack.c.l.b16 %v304
    %v3482 = vunpack.c.h.b16 %v304
    %v3483 = vunpack.c.l.b16 %v305
    %v3484 = vunpack.c.h.b16 %v305
    %v3485 = vunpack.c.l.b16 %v306
    %v3486 = vunpack.c.h.b16 %v306
    %v3487 = vunpack.c.l.b16 %v307
    %v3488 = vunpack.c.h.b16 %v307
    %v3489 = vunpack.c.l.b16 %v308
    %v3490 = vunpack.c.h.b16 %v308
    %v3491 = vunpack.c.l.b16 %v309
    %v3492 = vunpack.c.h.b16 %v309
    %v3493 = vunpack.c.l.b16 %v310
    %v3494 = vunpack.c.h.b16 %v310
    %v3495 = vunpack.c.l.b16 %v311
    %v3496 = vunpack.c.h.b16 %v311
    %v3497 = vunpack.c.l.b16 %v312
    %v3498 = vunpack.c.h.b16 %v312
    %v3499 = vunpack.c.l.b16 %v313
    %v3500 = vunpack.c.h.b16 %v313
    %v3501 = vunpack.c.l.b16 %v314
    %v3502 = vunpack.c.h.b16 %v314
    %v3503 = vunpack.c.l.b16 %v315
    %v3504 = vunpack.c.h.b16 %v315
    %v3505 = vunpack.c.l.b16 %v316
    %v3506 = vunpack.c.h.b16 %v316
    %v3507 = vunpack.c.l.b16 %v317
    %v3508 = vunpack.c.h.b16 %v317
    %v3509 = vunpack.c.l.b16 %v318
    %v3510 = vunpack.c.h.b16 %v318
    %v3511 = vunpack.c.l.b16 %v319
    %v3512 = vunpack.c.h.b16 %v319
    %v3513 = vunpack.c.l.b16 %v320
    %v3514 = vunpack.c.h.b16 %v320
    %v3515 = vunpack.c.l.b16 %v321
    %v3516 = vunpack.c.h.b16 %v321
    %v3517 = vunpack.c.l.b16 %v322
    %v3518 = vunpack.c.h.b16 %v322
    %v3519 = vunpack.c.l.b16 %v323
    %v3520 = vunpack.c.h.b16 %v323
    %v3521 = vunpack.c.l.b16 %v324
    %v3522 = vunpack.c.h.b16 %v324
    %v3523 = vunpack.c.l.b16 %v325
    %v3524 = vunpack.c.h.b16 %v325
    %v3525 = vunpack.c.l.b16 %v326
    %v3526 = vunpack.c.h.b16 %v326
    %v3527 = vunpack.c.l.b16 %v327
    %v3528 = vunpack.c.h.b16 %v327
    %v3529 = vunpack.c.l.b16 %v328
    %v3530 = vunpack.c.h.b16 %v328
    %v3531 = vunpack.c.l.b16 %v329
    %v3532 = vunpack.c.h.b16 %v329
    %v3533 = vunpack.c.l.b16 %v330
    %v3534 = vunpack.c.h.b16 %v330
    %v3535 = vunpack.c.l.b16 %v331
    %v3536 = vunpack.c.h.b16 %v331
    %v3537 = vunpack.c.l.b16 %v332
    %v3538 = vunpack.c.h.b16 %v332
    %v3539 = vunpack.c.l.b16 %v333
    %v3540 = vunpack.c.h.b16 %v333
    %v3541 = vunpack.c.l.b16 %v334
    %v3542 = vunpack.c.h.b16 %v334
    %v3543 = vunpack.c.l.b16 %v335
    %v3544 = vunpack.c.h.b16 %v335
    %v3545 = vunpack.c.l.b16 %v336
    %v3546 = vunpack.c.h.b16 %v336
    %v3547 = vunpack.c.l.b16 %v337
    %v3548 = vunpack.c.h.b16 %v337
    %v3549 = vunpack.c.l.b16 %v338
    %v3550 = vunpack.c.h.b16 %v338
    %v3551 = vunpack.c.l.b16 %v339
    %v3552 = vunpack.c.h.b16 %v339
    %v3553 = vunpack.c.l.b16 %v340
    %v3554 = vunpack.c.h.b16 %v340
    %v3555 = vunpack.c.l.b16 %v341
    %v3556 = vunpack.c.h.b16 %v341
    %v3557 = vunpack.c.l.b16 %v342
    %v3558 = vunpack.c.h.b16 %v342
    %v3559 = vunpack.c.l.b16 %v343
    %v3560 = vunpack.c.h.b16 %v343
    %v3561 = vunpack.c.l.b16 %v344
    %v3562 = vunpack.c.h.b16 %v344
    %v3563 = vunpack.c.l.b16 %v345
    %v3564 = vunpack.c.h.b16 %v345
    %v3565 = vunpack.c.l.b16 %v346
    %v3566 = vunpack.c.h.b16 %v346
    %v3567 = vunpack.c.l.b16 %v347
    %v3568 = vunpack.c.h.b16 %v347
    %v3569 = vunpack.c.l.b16 %v348
    %v3570 = vunpack.c.h.b16 %v348
    %v3571 = vunpack.c.l.b16 %v349
    %v3572 = vunpack.c.h.b16 %v349
    %v3573 = vunpack.c.l.b16 %v350
    %v3574 = vunpack.c.h.b16 %v350
    %v3575 = vunpack.c.l.b16 %v351
    %v3576 = vunpack.c.h.b16 %v351
    %v3577 = vunpack.c.l.b16 %v352
    %v3578 = vunpack.c.h.b16 %v352
    %v3579 = vunpack.c.l.b16 %v353
    %v3580 = vunpack.c.h.b16 %v353
    %v3581 = vunpack.c.l.b16 %v354
    %v3582 = vunpack.c.h.b16 %v354
    %v3583 = vunpack.c.l.b16 %v355
    %v3584 = vunpack.c.h.b16 %v355
    %v3585 = vunpack.c.l.b16 %v356
    %v3586 = vunpack.c.h.b16 %v356
    %v3587 = vunpack.c.l.b16 %v357
    %v3588 = vunpack.c.h.b16 %v357
    %v3589 = vunpack.c.l.b16 %v358
    %v3590 = vunpack.c.h.b16 %v358
    %v3591 = vunpack.c.l.b16 %v359
    %v3592 = vunpack.c.h.b16 %v359
    %v3593 = vunpack.c.l.b16 %v360
    %v3594 = vunpack.c.h.b16 %v360
    %v3595 = vunpack.c.l.b16 %v361
    %v3596 = vunpack.c.h.b16 %v361
    %v3597 = vunpack.c.l.b16 %v362
    %v3598 = vunpack.c.h.b16 %v362
    %v3599 = vunpack.c.l.b16 %v363
    %v3600 = vunpack.c.h.b16 %v363
    %v3601 = vunpack.c.l.b16 %v364
    %v3602 = vunpack.c.h.b16 %v364
    %v3603 = vunpack.c.l.b16 %v365
    %v3604 = vunpack.c.h.b16 %v365
    %v3605 = vunpack.c.l.b16 %v366
    %v3606 = vunpack.c.h.b16 %v366
    %v3607 = vunpack.c.l.b16 %v367
    %v3608 = vunpack.c.h.b16 %v367
    %v3609 = vunpack.c.l.b16 %v368
    %v3610 = vunpack.c.h.b16 %v368
    %v3611 = vunpack.c.l.b16 %v369
    %v3612 = vunpack.c.h.b16 %v369
    %v3613 = vunpack.c.l.b16 %v370
    %v3614 = vunpack.c.h.b16 %v370
    %v3615 = vunpack.c.l.b16 %v371
    %v3616 = vunpack.c.h.b16 %v371
    %v3617 = vunpack.c.l.b16 %v372
    %v3618 = vunpack.c.h.b16 %v372
    %v3619 = vunpack.c.l.b16 %v373
    %v3620 = vunpack.c.h.b16 %v373
    %v3621 = vunpack.c.l.b16 %v374
    %v3622 = vunpack.c.h.b16 %v374
    %v3623 = vunpack.c.l.b16 %v375
    %v3624 = vunpack.c.h.b16 %v375
    %v3625 = vunpack.c.l.b16 %v376
    %v3626 = vunpack.c.h.b16 %v376
    %v3627 = vunpack.c.l.b16 %v377
    %v3628 = vunpack.c.h.b16 %v377
    %v3629 = vunpack.c.l.b16 %v378
    %v3630 = vunpack.c.h.b16 %v378
    %v3631 = vunpack.c.l.b16 %v379
    %v3632 = vunpack.c.h.b16 %v379
    %v3633 = vunpack.c.l.b16 %v380
    %v3634 = vunpack.c.h.b16 %v380
    %v3635 = vunpack.c.l.b16 %v381
    %v3636 = vunpack.c.h.b16 %v381
    %v3637 = vunpack.c.l.b16 %v382
    %v3638 = vunpack.c.h.b16 %v382
    %v3639 = vunpack.c.l.b16 %v383
    %v3640 = vunpack.c.h.b16 %v383
    %v3641 = vunpack.c.l.b16 %v384
    %v3642 = vunpack.c.h.b16 %v384
    %v3643 = vunpack.c.l.b16 %v385
    %v3644 = vunpack.c.h.b16 %v385
    %v3645 = vunpack.c.l.b16 %v386
    %v3646 = vunpack.c.h.b16 %v386
    %v3647 = vunpack.c.l.b16 %v387
    %v3648 = vunpack.c.h.b16 %v387
    %v3649 = vunpack.c.l.b16 %v388
    %v3650 = vunpack.c.h.b16 %v388
    %v3651 = vunpack.c.l.b16 %v389
    %v3652 = vunpack.c.h.b16 %v389
    %v3653 = vunpack.c.l.b16 %v390
    %v3654 = vunpack.c.h.b16 %v390
    %v3655 = vunpack.c.l.b16 %v391
    %v3656 = vunpack.c.h.b16 %v391
    %v3657 = vunpack.c.l.b16 %v392
    %v3658 = vunpack.c.h.b16 %v392
    %v3659 = vunpack.c.l.b16 %v393
    %v3660 = vunpack.c.h.b16 %v393
    %v3661 = vunpack.c.l.b16 %v394
    %v3662 = vunpack.c.h.b16 %v394
    %v3663 = vunpack.c.l.b16 %v395
    %v3664 = vunpack.c.h.b16 %v395
    %v3665 = vunpack.c.l.b16 %v396
    %v3666 = vunpack.c.h.b16 %v396
    %v3667 = vunpack.c.l.b16 %v397
    %v3668 = vunpack.c.h.b16 %v397
    %v3669 = vunpack.c.l.b16 %v398
    %v3670 = vunpack.c.h.b16 %v398
    %v3671 = vunpack.c.l.b16 %v399
    %v3672 = vunpack.c.h.b16 %v399
    %v3673 = vunpack.c.l.b16 %v400
    %v3674 = vunpack.c.h.b16 %v400
    %v3675 = vunpack.c.l.b16 %v401
    %v3676 = vunpack.c.h.b16 %v401
    %v3677 = vunpack.c.l.b16 %v402
    %v3678 = vunpack.c.h.b16 %v402
    %v3679 = vunpack.c.l.b16 %v403
    %v3680 = vunpack.c.h.b16 %v403
    %v3681 = vunpack.c.l.b16 %v404
    %v3682 = vunpack.c.h.b16 %v404
    %v3683 = vunpack.c.l.b16 %v405
    %v3684 = vunpack.c.h.b16 %v405
    %v3685 = vunpack.c.l.b16 %v406
    %v3686 = vunpack.c.h.b16 %v406
    %v3687 = vunpack.c.l.b16 %v407
    %v3688 = vunpack.c.h.b16 %v407
    %v3689 = vunpack.c.l.b16 %v408
    %v3690 = vunpack.c.h.b16 %v408
    %v3691 = vunpack.c.l.b16 %v409
    %v3692 = vunpack.c.h.b16 %v409
    %v3693 = vunpack.c.l.b16 %v410
    %v3694 = vunpack.c.h.b16 %v410
    %v3695 = vunpack.c.l.b16 %v411
    %v3696 = vunpack.c.h.b16 %v411
    %v3697 = vunpack.c.l.b16 %v412
    %v3698 = vunpack.c.h.b16 %v412
    %v3699 = vunpack.c.l.b16 %v413
    %v3700 = vunpack.c.h.b16 %v413
    %v3701 = vunpack.c.l.b16 %v414
    %v3702 = vunpack.c.h.b16 %v414
    %v3703 = vunpack.c.l.b16 %v415
    %v3704 = vunpack.c.h.b16 %v415
    %v3705 = vunpack.c.l.b16 %v416
    %v3706 = vunpack.c.h.b16 %v416
    %v3707 = vunpack.c.l.b16 %v417
    %v3708 = vunpack.c.h.b16 %v417
    %v3709 = vunpack.c.l.b16 %v418
    %v3710 = vunpack.c.h.b16 %v418
    %v3711 = vunpack.c.l.b16 %v419
    %v3712 = vunpack.c.h.b16 %v419
    %v3713 = vunpack.c.l.b16 %v420
    %v3714 = vunpack.c.h.b16 %v420
    %v3715 = vunpack.c.l.b16 %v421
    %v3716 = vunpack.c.h.b16 %v421
    %v3717 = vunpack.c.l.b16 %v422
    %v3718 = vunpack.c.h.b16 %v422
    %v3719 = vunpack.c.l.b16 %v423
    %v3720 = vunpack.c.h.b16 %v423
    %v3721 = vunpack.c.l.b16 %v424
    %v3722 = vunpack.c.h.b16 %v424
    %v3723 = vunpack.c.l.b16 %v425
    %v3724 = vunpack.c.h.b16 %v425
    %v3725 = vunpack.c.l.b16 %v426
    %v3726 = vunpack.c.h.b16 %v426
    %v3727 = vunpack.c.l.b16 %v427
    %v3728 = vunpack.c.h.b16 %v427
    %v3729 = vunpack.c.l.b16 %v428
    %v3730 = vunpack.c.h.b16 %v428
    %v3731 = vunpack.c.l.b16 %v429
    %v3732 = vunpack.c.h.b16 %v429
    %v3733 = vunpack.c.l.b16 %v430
    %v3734 = vunpack.c.h.b16 %v430
    %v3735 = vunpack.c.l.b16 %v431
    %v3736 = vunpack.c.h.b16 %v431
    %v3737 = vunpack.c.l.b16 %v432
    %v3738 = vunpack.c.h.b16 %v432
    %v3739 = vunpack.c.l.b16 %v433
    %v3740 = vunpack.c.h.b16 %v433
    %v3741 = vunpack.c.l.b16 %v434
    %v3742 = vunpack.c.h.b16 %v434
    %v3743 = vunpack.c.l.b16 %v435
    %v3744 = vunpack.c.h.b16 %v435
    %v3745 = vunpack.c.l.b16 %v436
    %v3746 = vunpack.c.h.b16 %v436
    %v3747 = vunpack.c.l.b16 %v437
    %v3748 = vunpack.c.h.b16 %v437
    %v3749 = vunpack.c.l.b16 %v438
    %v3750 = vunpack.c.h.b16 %v438
    %v3751 = vunpack.c.l.b16 %v439
    %v3752 = vunpack.c.h.b16 %v439
    %v3753 = vunpack.c.l.b16 %v440
    %v3754 = vunpack.c.h.b16 %v440
    %v3755 = vunpack.c.l.b16 %v441
    %v3756 = vunpack.c.h.b16 %v441
    %v3757 = vunpack.c.l.b16 %v442
    %v3758 = vunpack.c.h.b16 %v442
    %v3759 = vunpack.c.l.b16 %v443
    %v3760 = vunpack.c.h.b16 %v443
    %v3761 = vunpack.c.l.b16 %v444
    %v3762 = vunpack.c.h.b16 %v444
    %v3763 = vunpack.c.l.b16 %v445
    %v3764 = vunpack.c.h.b16 %v445
    %v3765 = vunpack.c.l.b16 %v446
    %v3766 = vunpack.c.h.b16 %v446
    %v3767 = vunpack.c.l.b16 %v447
    %v3768 = vunpack.c.h.b16 %v447
    %v3769 = vunpack.c.l.b16 %v448
    %v3770 = vunpack.c.h.b16 %v448
    %v3771 = vunpack.c.l.b16 %v449
    %v3772 = vunpack.c.h.b16 %v449
    %v3773 = vunpack.c.l.b16 %v450
    %v3774 = vunpack.c.h.b16 %v450
    %v3775 = vunpack.c.l.b16 %v451
    %v3776 = vunpack.c.h.b16 %v451
    %v3777 = vunpack.c.l.b16 %v452
    %v3778 = vunpack.c.h.b16 %v452
    %v3779 = vunpack.c.l.b16 %v453
    %v3780 = vunpack.c.h.b16 %v453
    %v3781 = vunpack.c.l.b16 %v454
    %v3782 = vunpack.c.h.b16 %v454
    %v3783 = vunpack.c.l.b16 %v455
    %v3784 = vunpack.c.h.b16 %v455
    %v3785 = vunpack.c.l.b16 %v456
    %v3786 = vunpack.c.h.b16 %v456
    %v3787 = vunpack.c.l.b16 %v457
    %v3788 = vunpack.c.h.b16 %v457
    %v3789 = vunpack.c.l.b16 %v458
    %v3790 = vunpack.c.h.b16 %v458
    %v3791 = vunpack.c.l.b16 %v459
    %v3792 = vunpack.c.h.b16 %v459
    %v3793 = vunpack.c.l.b16 %v460
    %v3794 = vunpack.c.h.b16 %v460
    %v3795 = vunpack.c.l.b16 %v461
    %v3796 = vunpack.c.h.b16 %v461
    %v3797 = vunpack.c.l.b16 %v462
    %v3798 = vunpack.c.h.b16 %v462
    %v3799 = vunpack.c.l.b16 %v463
    %v3800 = vunpack.c.h.b16 %v463
    %v3801 = vunpack.c.l.b16 %v464
    %v3802 = vunpack.c.h.b16 %v464
    %v3803 = vunpack.c.l.b16 %v465
    %v3804 = vunpack.c.h.b16 %v465
    %v3805 = vunpack.c.l.b16 %v466
    %v3806 = vunpack.c.h.b16 %v466
    %v3807 = vunpack.c.l.b16 %v467
    %v3808 = vunpack.c.h.b16 %v467
    %v3809 = vunpack.c.l.b16 %v468
    %v3810 = vunpack.c.h.b16 %v468
    %v3811 = vunpack.c.l.b16 %v469
    %v3812 = vunpack.c.h.b16 %v469
    %v3813 = vunpack.c.l.b16 %v470
    %v3814 = vunpack.c.h.b16 %v470
    %v3815 = vunpack.c.l.b16 %v471
    %v3816 = vunpack.c.h.b16 %v471
    %v3817 = vunpack.c.l.b16 %v472
    %v3818 = vunpack.c.h.b16 %v472
    %v3819 = vunpack.c.l.b16 %v473
    %v3820 = vunpack.c.h.b16 %v473
    %v3821 = vunpack.c.l.b16 %v474
    %v3822 = vunpack.c.h.b16 %v474
    %v3823 = vunpack.c.l.b16 %v475
    %v3824 = vunpack.c.h.b16 %v475
    %v3825 = vunpack.c.l.b16 %v476
    %v3826 = vunpack.c.h.b16 %v476
    %v3827 = vunpack.c.l.b16 %v477
    %v3828 = vunpack.c.h.b16 %v477
    %v3829 = vunpack.c.l.b16 %v478
    %v3830 = vunpack.c.h.b16 %v478
    %v3831 = vunpack.c.l.b16 %v479
    %v3832 = vunpack.c.h.b16 %v479
    %v3833 = vunpack.c.l.b16 %v480
    %v3834 = vunpack.c.h.b16 %v480
    %v3835 = vunpack.c.l.b16 %v481
    %v3836 = vunpack.c.h.b16 %v481
    %v3837 = vunpack.c.l.b16 %v482
    %v3838 = vunpack.c.h.b16 %v482
    %v3839 = vunpack.c.l.b16 %v483
    %v3840 = vunpack.c.h.b16 %v483
    %v3841 = vunpack.c.l.b16 %v484
    %v3842 = vunpack.c.h.b16 %v484
    %v3843 = vunpack.c.l.b16 %v485
    %v3844 = vunpack.c.h.b16 %v485
    %v3845 = vunpack.c.l.b16 %v486
    %v3846 = vunpack.c.h.b16 %v486
    %v3847 = vunpack.c.l.b16 %v487
    %v3848 = vunpack.c.h.b16 %v487
    %v3849 = vunpack.c.l.b16 %v488
    %v3850 = vunpack.c.h.b16 %v488
    %v3851 = vunpack.c.l.b16 %v489
    %v3852 = vunpack.c.h.b16 %v489
    %v3853 = vunpack.c.l.b16 %v490
    %v3854 = vunpack.c.h.b16 %v490
    %v3855 = vunpack.c.l.b16 %v491
    %v3856 = vunpack.c.h.b16 %v491
    %v3857 = vunpack.c.l.b16 %v492
    %v3858 = vunpack.c.h.b16 %v492
    %v3859 = vunpack.c.l.b16 %v493
    %v3860 = vunpack.c.h.b16 %v493
    %v3861 = vunpack.c.l.b16 %v494
    %v3862 = vunpack.c.h.b16 %v494
    %v3863 = vunpack.c.l.b16 %v495
    %v3864 = vunpack.c.h.b16 %v495
    %v3865 = vunpack.c.l.b16 %v496
    %v3866 = vunpack.c.h.b16 %v496
    %v3867 = vunpack.c.l.b16 %v497
    %v3868 = vunpack.c.h.b16 %v497
    %v3869 = vunpack.c.l.b16 %v498
    %v3870 = vunpack.c.h.b16 %v498
    %v3871 = vunpack.c.l.b16 %v499
    %v3872 = vunpack.c.h.b16 %v499
    %v3873 = vunpack.c.l.b16 %v500
    %v3874 = vunpack.c.h.b16 %v500
    %v3875 = vunpack.c.l.b16 %v501
    %v3876 = vunpack.c.h.b16 %v501
    %v3877 = vunpack.c.l.b16 %v502
    %v3878 = vunpack.c.h.b16 %v502
    %v3879 = vunpack.c.l.b16 %v503
    %v3880 = vunpack.c.h.b16 %v503
    %v3881 = vunpack.c.l.b16 %v504
    %v3882 = vunpack.c.h.b16 %v504
    %v3883 = vunpack.c.l.b16 %v505
    %v3884 = vunpack.c.h.b16 %v505
    %v3885 = vunpack.c.l.b16 %v506
    %v3886 = vunpack.c.h.b16 %v506
    %v3887 = vunpack.c.l.b16 %v507
    %v3888 = vunpack.c.h.b16 %v507
    %v3889 = vunpack.c.l.b16 %v508
    %v3890 = vunpack.c.h.b16 %v508
    %v3891 = vunpack.c.l.b16 %v509
    %v3892 = vunpack.c.h.b16 %v509
    %v3893 = vunpack.c.l.b16 %v510
    %v3894 = vunpack.c.h.b16 %v510
    %v3895 = vunpack.c.l.b16 %v511
    %v3896 = vunpack.c.h.b16 %v511
    %v3897 = vunpack.c.l.b16 %v512
    %v3898 = vunpack.c.h.b16 %v512
    %v3899 = vunpack.c.l.b16 %v513
    %v3900 = vunpack.c.h.b16 %v513
    %v3901 = vunpack.c.l.b16 %v514
    %v3902 = vunpack.c.h.b16 %v514
    %v3903 = vunpack.c.l.b16 %v515
    %v3904 = vunpack.c.h.b16 %v515
    %v3905 = vunpack.c.l.b16 %v516
    %v3906 = vunpack.c.h.b16 %v516
    %v3907 = vunpack.c.l.b16 %v517
    %v3908 = vunpack.c.h.b16 %v517
    %v3909 = vunpack.c.l.b16 %v518
    %v3910 = vunpack.c.h.b16 %v518
    %v3911 = vunpack.c.l.b16 %v519
    %v3912 = vunpack.c.h.b16 %v519
    %v3913 = vunpack.c.l.b16 %v520
    %v3914 = vunpack.c.h.b16 %v520
    %v3915 = vunpack.c.l.b16 %v521
    %v3916 = vunpack.c.h.b16 %v521
    %v3917 = vunpack.c.l.b16 %v522
    %v3918 = vunpack.c.h.b16 %v522
    %v3919 = vunpack.c.l.b16 %v523
    %v3920 = vunpack.c.h.b16 %v523
    %v3921 = vunpack.c.l.b16 %v524
    %v3922 = vunpack.c.h.b16 %v524
    %v3923 = vunpack.c.l.b16 %v525
    %v3924 = vunpack.c.h.b16 %v525
    %v3925 = vunpack.c.l.b16 %v526
    %v3926 = vunpack.c.h.b16 %v526
    %v3927 = vunpack.c.l.b16 %v527
    %v3928 = vunpack.c.h.b16 %v527
    %v3929 = vunpack.c.l.b16 %v528
    %v3930 = vunpack.c.h.b16 %v528
    %v3931 = vunpack.c.l.b16 %v529
    %v3932 = vunpack.c.h.b16 %v529
    %v3933 = vunpack.c.l.b16 %v530
    %v3934 = vunpack.c.h.b16 %v530
    %v3935 = vunpack.c.l.b16 %v531
    %v3936 = vunpack.c.h.b16 %v531
    %v3937 = vunpack.c.l.b16 %v532
    %v3938 = vunpack.c.h.b16 %v532
    %v3939 = vunpack.c.l.b16 %v533
    %v3940 = vunpack.c.h.b16 %v533
    %v3941 = vunpack.c.l.b16 %v534
    %v3942 = vunpack.c.h.b16 %v534
    %v3943 = vunpack.c.l.b16 %v535
    %v3944 = vunpack.c.h.b16 %v535
    %v3945 = vunpack.c.l.b16 %v536
    %v3946 = vunpack.c.h.b16 %v536
    %v3947 = vunpack.c.l.b16 %v537
    %v3948 = vunpack.c.h.b16 %v537
    %v3949 = vunpack.c.l.b16 %v538
    %v3950 = vunpack.c.h.b16 %v538
    %v3951 = vunpack.c.l.b16 %v539
    %v3952 = vunpack.c.h.b16 %v539
    %v3953 = vunpack.c.l.b16 %v540
    %v3954 = vunpack.c.h.b16 %v540
    %v3955 = vunpack.c.l.b16 %v541
    %v3956 = vunpack.c.h.b16 %v541
    %v3957 = vunpack.c.l.b16 %v542
    %v3958 = vunpack.c.h.b16 %v542
    %v3959 = vunpack.c.l.b16 %v543
    %v3960 = vunpack.c.h.b16 %v543
    %v3961 = vunpack.c.l.b16 %v544
    %v3962 = vunpack.c.h.b16 %v544
    %v3963 = vunpack.c.l.b16 %v545
    %v3964 = vunpack.c.h.b16 %v545
    %v3965 = vunpack.c.l.b16 %v546
    %v3966 = vunpack.c.h.b16 %v546
    %v3967 = vunpack.c.l.b16 %v547
    %v3968 = vunpack.c.h.b16 %v547
    %v3969 = vunpack.c.l.b16 %v548
    %v3970 = vunpack.c.h.b16 %v548
    %v3971 = vunpack.c.l.b16 %v549
    %v3972 = vunpack.c.h.b16 %v549
    %v3973 = vunpack.c.l.b16 %v550
    %v3974 = vunpack.c.h.b16 %v550
    %v3975 = vunpack.c.l.b16 %v551
    %v3976 = vunpack.c.h.b16 %v551
    %v3977 = vunpack.c.l.b16 %v552
    %v3978 = vunpack.c.h.b16 %v552
    %v3979 = vunpack.c.l.b16 %v553
    %v3980 = vunpack.c.h.b16 %v553
    %v3981 = vunpack.c.l.b16 %v554
    %v3982 = vunpack.c.h.b16 %v554
    %v3983 = vunpack.c.l.b16 %v555
    %v3984 = vunpack.c.h.b16 %v555
    %v3985 = vunpack.c.l.b16 %v556
    %v3986 = vunpack.c.h.b16 %v556
    %v3987 = vunpack.c.l.b16 %v557
    %v3988 = vunpack.c.h.b16 %v557
    %v3989 = vunpack.c.l.b16 %v558
    %v3990 = vunpack.c.h.b16 %v558
    %v3991 = vunpack.c.l.b16 %v559
    %v3992 = vunpack.c.h.b16 %v559
    %v3993 = vunpack.c.l.b16 %v560
    %v3994 = vunpack.c.h.b16 %v560
    %v3995 = vunpack.c.l.b16 %v561
    %v3996 = vunpack.c.h.b16 %v561
    %v3997 = vunpack.c.l.b16 %v562
    %v3998 = vunpack.c.h.b16 %v562
    %v3999 = vunpack.c.l.b16 %v563
    %v4000 = vunpack.c.h.b16 %v563
    %v4001 = vunpack.c.l.b16 %v564
    %v4002 = vunpack.c.h.b16 %v564
    %v4003 = vunpack.c.l.b16 %v565
    %v4004 = vunpack.c.h.b16 %v565
    %v4005 = vunpack.c.l.b16 %v566
    %v4006 = vunpack.c.h.b16 %v566
    %v4007 = vunpack.c.l.b16 %v567
    %v4008 = vunpack.c.h.b16 %v567
    %v4009 = vunpack.c.l.b16 %v568
    %v4010 = vunpack.c.h.b16 %v568
    %v4011 = vunpack.c.l.b16 %v569
    %v4012 = vunpack.c.h.b16 %v569
    %v4013 = vunpack.c.l.b16 %v570
    %v4014 = vunpack.c.h.b16 %v570
    %v4015 = vunpack.c.l.b16 %v571
    %v4016 = vunpack.c.h.b16 %v571
    %v4017 = vunpack.c.l.b16 %v572
    %v4018 = vunpack.c.h.b16 %v572
    %v4019 = vunpack.c.l.b16 %v573
    %v4020 = vunpack.c.h.b16 %v573
    %v4021 = vunpack.c.l.b16 %v574
    %v4022 = vunpack.c.h.b16 %v574
    %v4023 = vunpack.c.l.b16 %v575
    %v4024 = vunpack.c.h.b16 %v575
    %v4025 = vunpack.c.l.b16 %v576
    %v4026 = vunpack.c.h.b16 %v576
    %v4027 = vunpack.c.l.b16 %v577
    %v4028 = vunpack.c.h.b16 %v577
    %v4029 = vunpack.c.l.b16 %v578
    %v4030 = vunpack.c.h.b16 %v578
    %v4031 = vunpack.c.l.b16 %v579
    %v4032 = vunpack.c.h.b16 %v579
    %v4033 = vunpack.c.l.b16 %v580
    %v4034 = vunpack.c.h.b16 %v580
    %v4035 = vunpack.c.l.b16 %v581
    %v4036 = vunpack.c.h.b16 %v581
    %v4037 = vunpack.c.l.b16 %v582
    %v4038 = vunpack.c.h.b16 %v582
    %v4039 = vunpack.c.l.b16 %v583
    %v4040 = vunpack.c.h.b16 %v583
    %v4041 = vunpack.c.l.b16 %v584
    %v4042 = vunpack.c.h.b16 %v584
    %v4043 = vunpack.c.l.b16 %v585
    %v4044 = vunpack.c.h.b16 %v585
    %v4045 = vunpack.c.l.b16 %v586
    %v4046 = vunpack.c.h.b16 %v586
    %v4047 = vunpack.c.l.b16 %v587
    %v4048 = vunpack.c.h.b16 %v587
    %v4049 = vunpack.c.l.b16 %v588
    %v4050 = vunpack.c.h.b16 %v588
    %v4051 = vunpack.c.l.b16 %v589
    %v4052 = vunpack.c.h.b16 %v589
    %v4053 = vunpack.c.l.b16 %v590
    %v4054 = vunpack.c.h.b16 %v590
    %v4055 = vunpack.c.l.b16 %v591
    %v4056 = vunpack.c.h.b16 %v591
    %v4057 = vunpack.c.l.b16 %v592
    %v4058 = vunpack.c.h.b16 %v592
    %v4059 = vunpack.c.l.b16 %v593
    %v4060 = vunpack.c.h.b16 %v593
    %v4061 = vunpack.c.l.b16 %v594
    %v4062 = vunpack.c.h.b16 %v594
    %v4063 = vunpack.c.l.b16 %v595
    %v4064 = vunpack.c.h.b16 %v595
    %v4065 = vunpack.c.l.b16 %v596
    %v4066 = vunpack.c.h.b16 %v596
    %v4067 = vunpack.c.l.b16 %v597
    %v4068 = vunpack.c.h.b16 %v597
    %v4069 = vunpack.c.l.b16 %v598
    %v4070 = vunpack.c.h.b16 %v598
    %v4071 = vunpack.c.l.b16 %v599
    %v4072 = vunpack.c.h.b16 %v599
    %v4073 = vunpack.c.l.b16 %v600
    %v4074 = vunpack.c.h.b16 %v600
    %v4075 = vunpack.c.l.b16 %v601
    %v4076 = vunpack.c.h.b16 %v601
    %v4077 = vunpack.c.l.b16 %v602
    %v4078 = vunpack.c.h.b16 %v602
    %v4079 = vunpack.c.l.b16 %v603
    %v4080 = vunpack.c.h.b16 %v603
    %v4081 = vunpack.c.l.b16 %v604
    %v4082 = vunpack.c.h.b16 %v604
    %v4083 = vunpack.c.l.b16 %v605
    %v4084 = vunpack.c.h.b16 %v605
    %v4085 = vunpack.c.l.b16 %v606
    %v4086 = vunpack.c.h.b16 %v606
    %v4087 = vunpack.c.l.b16 %v607
    %v4088 = vunpack.c.h.b16 %v607
    %v4089 = vunpack.c.l.b16 %v608
    %v4090 = vunpack.c.h.b16 %v608
    %v4091 = vunpack.c.l.b16 %v609
    %v4092 = vunpack.c.h.b16 %v609
    %v4093 = vunpack.c.l.b16 %v610
    %v4094 = vunpack.c.h.b16 %v610
    %v4095 = vunpack.c.l.b16 %v611
    %v4096 = vunpack.c.h.b16 %v611
    %v4097 = vunpack.c.l.b16 %v612
    %v4098 = vunpack.c.h.b16 %v612
    %v4099 = vunpack.c.l.b16 %v613
    %v4100 = vunpack.c.h.b16 %v613
    %v4101 = vunpack.c.l.b16 %v614
    %v4102 = vunpack.c.h.b16 %v614
    %v4103 = vunpack.c.l.b16 %v615
    %v4104 = vunpack.c.h.b16 %v615
    %v4105 = vunpack.c.l.b16 %v616
    %v4106 = vunpack.c.h.b16 %v616
    %v4107 = vunpack.c.l.b16 %v617
    %v4108 = vunpack.c.h.b16 %v617
    %v4109 = vunpack.c.l.b16 %v618
    %v4110 = vunpack.c.h.b16 %v618
    %v4111 = vunpack.c.l.b16 %v619
    %v4112 = vunpack.c.h.b16 %v619
    %v4113 = vunpack.c.l.b16 %v620
    %v4114 = vunpack.c.h.b16 %v620
    %v4115 = vunpack.c.l.b16 %v621
    %v4116 = vunpack.c.h.b16 %v621
    %v4117 = vunpack.c.l.b16 %v622
    %v4118 = vunpack.c.h.b16 %v622
    %v4119 = vunpack.c.l.b16 %v623
    %v4120 = vunpack.c.h.b16 %v623
    %v4121 = vunpack.c.l.b16 %v624
    %v4122 = vunpack.c.h.b16 %v624
    %v4123 = vunpack.c.l.b16 %v625
    %v4124 = vunpack.c.h.b16 %v625
    %v4125 = vunpack.c.l.b16 %v626
    %v4126 = vunpack.c.h.b16 %v626
    %v4127 = vunpack.c.l.b16 %v627
    %v4128 = vunpack.c.h.b16 %v627
    %v4129 = vunpack.c.l.b16 %v628
    %v4130 = vunpack.c.h.b16 %v628
    %v4131 = vunpack.c.l.b16 %v629
    %v4132 = vunpack.c.h.b16 %v629
    %v4133 = vunpack.c.l.b16 %v630
    %v4134 = vunpack.c.h.b16 %v630
    %v4135 = vunpack.c.l.b16 %v631
    %v4136 = vunpack.c.h.b16 %v631
    %v4137 = vunpack.c.l.b16 %v632
    %v4138 = vunpack.c.h.b16 %v632
    %v4139 = vunpack.c.l.b16 %v633
    %v4140 = vunpack.c.h.b16 %v633
    %v4141 = vunpack.c.l.b16 %v634
    %v4142 = vunpack.c.h.b16 %v634
    %v4143 = vunpack.c.l.b16 %v635
    %v4144 = vunpack.c.h.b16 %v635
    %v4145 = vunpack.c.l.b16 %v636
    %v4146 = vunpack.c.h.b16 %v636
    %v4147 = vunpack.c.l.b16 %v637
    %v4148 = vunpack.c.h.b16 %v637
    %v4149 = vunpack.c.l.b16 %v638
    %v4150 = vunpack.c.h.b16 %v638
    %v4151 = vunpack.c.l.b16 %v639
    %v4152 = vunpack.c.h.b16 %v639
    %v4153 = vunpack.c.l.b16 %v640
    %v4154 = vunpack.c.h.b16 %v640
    %v4155 = vunpack.c.l.b16 %v641
    %v4156 = vunpack.c.h.b16 %v641
    %v4157 = vunpack.c.l.b16 %v642
    %v4158 = vunpack.c.h.b16 %v642
    %v4159 = vunpack.c.l.b16 %v643
    %v4160 = vunpack.c.h.b16 %v643
    %v4161 = vunpack.c.l.b16 %v644
    %v4162 = vunpack.c.h.b16 %v644
    %v4163 = vunpack.c.l.b16 %v645
    %v4164 = vunpack.c.h.b16 %v645
    %v4165 = vunpack.c.l.b16 %v646
    %v4166 = vunpack.c.h.b16 %v646
    %v4167 = vunpack.c.l.b16 %v647
    %v4168 = vunpack.c.h.b16 %v647
    %v4169 = vunpack.c.l.b16 %v648
    %v4170 = vunpack.c.h.b16 %v648
    %v4171 = vunpack.c.l.b16 %v649
    %v4172 = vunpack.c.h.b16 %v649
    %v4173 = vunpack.c.l.b16 %v650
    %v4174 = vunpack.c.h.b16 %v650
    %v4175 = vunpack.c.l.b16 %v651
    %v4176 = vunpack.c.h.b16 %v651
    %v4177 = vunpack.c.l.b16 %v652
    %v4178 = vunpack.c.h.b16 %v652
    %v4179 = vunpack.c.l.b16 %v653
    %v4180 = vunpack.c.h.b16 %v653
    %v4181 = vunpack.c.l.b16 %v654
    %v4182 = vunpack.c.h.b16 %v654
    %v4183 = vunpack.c.l.b16 %v655
    %v4184 = vunpack.c.h.b16 %v655
    %v4185 = vunpack.c.l.b16 %v656
    %v4186 = vunpack.c.h.b16 %v656
    %v4187 = vunpack.c.l.b16 %v657
    %v4188 = vunpack.c.h.b16 %v657
    %v4189 = vunpack.c.l.b16 %v658
    %v4190 = vunpack.c.h.b16 %v658
    %v4191 = vunpack.c.l.b16 %v659
    %v4192 = vunpack.c.h.b16 %v659
    %v4193 = vunpack.c.l.b16 %v660
    %v4194 = vunpack.c.h.b16 %v660
    %v4195 = vunpack.c.l.b16 %v661
    %v4196 = vunpack.c.h.b16 %v661
    %v4197 = vunpack.c.l.b16 %v662
    %v4198 = vunpack.c.h.b16 %v662
    %v4199 = vunpack.c.l.b16 %v663
    %v4200 = vunpack.c.h.b16 %v663
    %v4201 = vunpack.c.l.b16 %v664
    %v4202 = vunpack.c.h.b16 %v664
    %v4203 = vunpack.c.l.b16 %v665
    %v4204 = vunpack.c.h.b16 %v665
    %v4205 = vunpack.c.l.b16 %v666
    %v4206 = vunpack.c.h.b16 %v666
    %v4207 = vunpack.c.l.b16 %v667
    %v4208 = vunpack.c.h.b16 %v667
    %v4209 = vunpack.c.l.b16 %v668
    %v4210 = vunpack.c.h.b16 %v668
    %v4211 = vunpack.c.l.b16 %v669
    %v4212 = vunpack.c.h.b16 %v669
    %v4213 = vunpack.c.l.b16 %v670
    %v4214 = vunpack.c.h.b16 %v670
    %v4215 = vunpack.c.l.b16 %v671
    %v4216 = vunpack.c.h.b16 %v671
    %v4217 = vunpack.c.l.b16 %v672
    %v4218 = vunpack.c.h.b16 %v672
    %v4219 = vunpack.c.l.b16 %v673
    %v4220 = vunpack.c.h.b16 %v673
    %v4221 = vunpack.c.l.b16 %v674
    %v4222 = vunpack.c.h.b16 %v674
    %v4223 = vunpack.c.l.b16 %v675
    %v4224 = vunpack.c.h.b16 %v675
    %v4225 = vunpack.c.l.b16 %v676
    %v4226 = vunpack.c.h.b16 %v676
    %v4227 = vunpack.c.l.b16 %v677
    %v4228 = vunpack.c.h.b16 %v677
    %v4229 = vunpack.c.l.b16 %v678
    %v4230 = vunpack.c.h.b16 %v678
    %v4231 = vunpack.c.l.b16 %v679
    %v4232 = vunpack.c.h.b16 %v679
    %v4233 = vunpack.c.l.b16 %v680
    %v4234 = vunpack.c.h.b16 %v680
    %v4235 = vunpack.c.l.b16 %v681
    %v4236 = vunpack.c.h.b16 %v681
    %v4237 = vunpack.c.l.b16 %v682
    %v4238 = vunpack.c.h.b16 %v682
    %v4239 = vunpack.c.l.b16 %v683
    %v4240 = vunpack.c.h.b16 %v683
    %v4241 = vunpack.c.l.b16 %v684
    %v4242 = vunpack.c.h.b16 %v684
    %v4243 = vunpack.c.l.b16 %v685
    %v4244 = vunpack.c.h.b16 %v685
    %v4245 = vunpack.c.l.b16 %v686
    %v4246 = vunpack.c.h.b16 %v686
    %v4247 = vunpack.c.l.b16 %v687
    %v4248 = vunpack.c.h.b16 %v687
    %v4249 = vunpack.c.l.b16 %v688
    %v4250 = vunpack.c.h.b16 %v688
    %v4251 = vunpack.c.l.b16 %v689
    %v4252 = vunpack.c.h.b16 %v689
    %v4253 = vunpack.c.l.b16 %v690
    %v4254 = vunpack.c.h.b16 %v690
    %v4255 = vunpack.c.l.b16 %v691
    %v4256 = vunpack.c.h.b16 %v691
    %v4257 = vunpack.c.l.b16 %v692
    %v4258 = vunpack.c.h.b16 %v692
    %v4259 = vunpack.c.l.b16 %v693
    %v4260 = vunpack.c.h.b16 %v693
    %v4261 = vunpack.c.l.b16 %v694
    %v4262 = vunpack.c.h.b16 %v694
    %v4263 = vunpack.c.l.b16 %v695
    %v4264 = vunpack.c.h.b16 %v695
    %v4265 = vunpack.c.l.b16 %v696
    %v4266 = vunpack.c.h.b16 %v696
    %v4267 = vunpack.c.l.b16 %v697
    %v4268 = vunpack.c.h.b16 %v697
    %v4269 = vunpack.c.l.b16 %v698
    %v4270 = vunpack.c.h.b16 %v698
    %v4271 = vunpack.c.l.b16 %v699
    %v4272 = vunpack.c.h.b16 %v699
    %v4273 = vunpack.c.l.b16 %v700
    %v4274 = vunpack.c.h.b16 %v700
    %v4275 = vunpack.c.l.b16 %v701
    %v4276 = vunpack.c.h.b16 %v701
    %v4277 = vunpack.c.l.b16 %v702
    %v4278 = vunpack.c.h.b16 %v702
    %v4279 = vunpack.c.l.b16 %v703
    %v4280 = vunpack.c.h.b16 %v703
    %v4281 = vunpack.c.l.b16 %v704
    %v4282 = vunpack.c.h.b16 %v704
    %v4283 = vunpack.c.l.b16 %v705
    %v4284 = vunpack.c.h.b16 %v705
    %v4285 = vunpack.c.l.b16 %v706
    %v4286 = vunpack.c.h.b16 %v706
    %v4287 = vunpack.c.l.b16 %v707
    %v4288 = vunpack.c.h.b16 %v707
    %v4289 = vunpack.c.l.b16 %v708
    %v4290 = vunpack.c.h.b16 %v708
    %v4291 = vunpack.c.l.b16 %v709
    %v4292 = vunpack.c.h.b16 %v709
    %v4293 = vunpack.c.l.b16 %v710
    %v4294 = vunpack.c.h.b16 %v710
    %v4295 = vunpack.c.l.b16 %v711
    %v4296 = vunpack.c.h.b16 %v711
    %v4297 = vunpack.c.l.b16 %v712
    %v4298 = vunpack.c.h.b16 %v712
    %v4299 = vunpack.c.l.b16 %v713
    %v4300 = vunpack.c.h.b16 %v713
    %v4301 = vunpack.c.l.b16 %v714
    %v4302 = vunpack.c.h.b16 %v714
    %v4303 = vunpack.c.l.b16 %v715
    %v4304 = vunpack.c.h.b16 %v715
    %v4305 = vunpack.c.l.b16 %v716
    %v4306 = vunpack.c.h.b16 %v716
    %v4307 = vunpack.c.l.b16 %v717
    %v4308 = vunpack.c.h.b16 %v717
    %v4309 = vunpack.c.l.b16 %v718
    %v4310 = vunpack.c.h.b16 %v718
    %v4311 = vunpack.c.l.b16 %v719
    %v4312 = vunpack.c.h.b16 %v719
    %v4313 = vunpack.c.l.b16 %v720
    %v4314 = vunpack.c.h.b16 %v720
    %v4315 = vunpack.c.l.b16 %v721
    %v4316 = vunpack.c.h.b16 %v721
    %v4317 = vunpack.c.l.b16 %v722
    %v4318 = vunpack.c.h.b16 %v722
    %v4319 = vunpack.c.l.b16 %v723
    %v4320 = vunpack.c.h.b16 %v723
    %v4321 = vunpack.c.l.b16 %v724
    %v4322 = vunpack.c.h.b16 %v724
    %v4323 = vunpack.c.l.b16 %v725
    %v4324 = vunpack.c.h.b16 %v725
    %v4325 = vunpack.c.l.b16 %v726
    %v4326 = vunpack.c.h.b16 %v726
    %v4327 = vunpack.c.l.b16 %v727
    %v4328 = vunpack.c.h.b16 %v727
    %v4329 = vunpack.c.l.b16 %v728
    %v4330 = vunpack.c.h.b16 %v728
    %v4331 = vunpack.c.l.b16 %v729
    %v4332 = vunpack.c.h.b16 %v729
    %v4333 = vunpack.c.l.b16 %v730
    %v4334 = vunpack.c.h.b16 %v730
    %v4335 = vunpack.c.l.b16 %v731
    %v4336 = vunpack.c.h.b16 %v731
    %v4337 = vunpack.c.l.b16 %v732
    %v4338 = vunpack.c.h.b16 %v732
    %v4339 = vunpack.c.l.b16 %v733
    %v4340 = vunpack.c.h.b16 %v733
    %v4341 = vunpack.c.l.b16 %v734
    %v4342 = vunpack.c.h.b16 %v734
    %v4343 = vunpack.c.l.b16 %v735
    %v4344 = vunpack.c.h.b16 %v735
    %v4345 = vunpack.c.l.b16 %v736
    %v4346 = vunpack.c.h.b16 %v736
    %v4347 = vunpack.c.l.b16 %v737
    %v4348 = vunpack.c.h.b16 %v737
    %v4349 = vunpack.c.l.b16 %v738
    %v4350 = vunpack.c.h.b16 %v738
    %v4351 = vunpack.c.l.b16 %v739
    %v4352 = vunpack.c.h.b16 %v739
    %v4353 = vunpack.c.l.b16 %v740
    %v4354 = vunpack.c.h.b16 %v740
    %v4355 = vunpack.c.l.b16 %v741
    %v4356 = vunpack.c.h.b16 %v741
    %v4357 = vunpack.c.l.b16 %v742
    %v4358 = vunpack.c.h.b16 %v742
    %v4359 = vunpack.c.l.b16 %v743
    %v4360 = vunpack.c.h.b16 %v743
    %v4361 = vunpack.c.l.b16 %v744
    %v4362 = vunpack.c.h.b16 %v744
    %v4363 = vunpack.c.l.b16 %v745
    %v4364 = vunpack.c.h.b16 %v745
    %v4365 = vunpack.c.l.b16 %v746
    %v4366 = vunpack.c.h.b16 %v746
    %v4367 = vunpack.c.l.b16 %v747
    %v4368 = vunpack.c.h.b16 %v747
    %v4369 = vunpack.c.l.b16 %v748
    %v4370 = vunpack.c.h.b16 %v748
    %v4371 = vunpack.c.l.b16 %v749
    %v4372 = vunpack.c.h.b16 %v749
    %v4373 = vunpack.c.l.b16 %v750
    %v4374 = vunpack.c.h.b16 %v750
    %v4375 = vunpack.c.l.b16 %v751
    %v4376 = vunpack.c.h.b16 %v751
    %v4377 = vunpack.c.l.b16 %v752
    %v4378 = vunpack.c.h.b16 %v752
    %v4379 = vunpack.c.l.b16 %v753
    %v4380 = vunpack.c.h.b16 %v753
    %v4381 = vunpack.c.l.b16 %v754
    %v4382 = vunpack.c.h.b16 %v754
    %v4383 = vunpack.c.l.b16 %v755
    %v4384 = vunpack.c.h.b16 %v755
    %v4385 = vunpack.c.l.b16 %v756
    %v4386 = vunpack.c.h.b16 %v756
    %v4387 = vunpack.c.l.b16 %v757
    %v4388 = vunpack.c.h.b16 %v757
    %v4389 = vunpack.c.l.b16 %v758
    %v4390 = vunpack.c.h.b16 %v758
    %v4391 = vunpack.c.l.b16 %v759
    %v4392 = vunpack.c.h.b16 %v759
    %v4393 = vunpack.c.l.b16 %v760
    %v4394 = vunpack.c.h.b16 %v760
    %v4395 = vunpack.c.l.b16 %v761
    %v4396 = vunpack.c.h.b16 %v761
    %v4397 = vunpack.c.l.b16 %v762
    %v4398 = vunpack.c.h.b16 %v762
    %v4399 = vunpack.c.l.b16 %v763
    %v4400 = vunpack.c.h.b16 %v763
    %v4401 = vunpack.c.l.b16 %v764
    %v4402 = vunpack.c.h.b16 %v764
    %v4403 = vunpack.c.l.b16 %v765
    %v4404 = vunpack.c.h.b16 %v765
    %v4405 = vunpack.c.l.b16 %v766
    %v4406 = vunpack.c.h.b16 %v766
    %v4407 = vunpack.c.l.b16 %v767
    %v4408 = vunpack.c.h.b16 %v767
    %v4409 = vunpack.c.l.b16 %v768
    %v4410 = vunpack.c.h.b16 %v768
    %v4411 = vunpack.c.l.b16 %v769
    %v4412 = vunpack.c.h.b16 %v769
    %v4413 = vunpack.c.l.b16 %v770
    %v4414 = vunpack.c.h.b16 %v770
    %v4415 = vunpack.c.l.b16 %v771
    %v4416 = vunpack.c.h.b16 %v771
    %v4417 = vunpack.c.l.b16 %v772
    %v4418 = vunpack.c.h.b16 %v772
    %v4419 = vunpack.c.l.b16 %v773
    %v4420 = vunpack.c.h.b16 %v773
    %v4421 = vunpack.c.l.b16 %v774
    %v4422 = vunpack.c.h.b16 %v774
    %v4423 = vunpack.c.l.b16 %v775
    %v4424 = vunpack.c.h.b16 %v775
    %v4425 = vunpack.c.l.b16 %v776
    %v4426 = vunpack.c.h.b16 %v776
    %v4427 = vunpack.c.l.b16 %v777
    %v4428 = vunpack.c.h.b16 %v777
    %v4429 = vunpack.c.l.b16 %v778
    %v4430 = vunpack.c.h.b16 %v778
    %v4431 = vunpack.c.l.b16 %v779
    %v4432 = vunpack.c.h.b16 %v779
    %v4433 = vunpack.c.l.b16 %v780
    %v4434 = vunpack.c.h.b16 %v780
    %v4435 = vunpack.c.l.b16 %v781
    %v4436 = vunpack.c.h.b16 %v781
    %v4437 = vunpack.c.l.b16 %v782
    %v4438 = vunpack.c.h.b16 %v782
    %v4439 = vunpack.c.l.b16 %v783
    %v4440 = vunpack.c.h.b16 %v783
    %v4441 = vunpack.c.l.b16 %v784
    %v4442 = vunpack.c.h.b16 %v784
    %v4443 = vunpack.c.l.b16 %v785
    %v4444 = vunpack.c.h.b16 %v785
    %v4445 = vunpack.c.l.b16 %v786
    %v4446 = vunpack.c.h.b16 %v786
    %v4447 = vunpack.c.l.b16 %v787
    %v4448 = vunpack.c.h.b16 %v787
    %v4449 = vunpack.c.l.b16 %v788
    %v4450 = vunpack.c.h.b16 %v788
    %v4451 = vunpack.c.l.b16 %v789
    %v4452 = vunpack.c.h.b16 %v789
    %v4453 = vunpack.c.l.b16 %v790
    %v4454 = vunpack.c.h.b16 %v790
    %v4455 = vunpack.c.l.b16 %v791
    %v4456 = vunpack.c.h.b16 %v791
    %v4457 = vunpack.c.l.b16 %v792
    %v4458 = vunpack.c.h.b16 %v792
    %v4459 = vunpack.c.l.b16 %v793
    %v4460 = vunpack.c.h.b16 %v793
    %v4461 = vunpack.c.l.b16 %v794
    %v4462 = vunpack.c.h.b16 %v794
    %v4463 = vunpack.c.l.b16 %v795
    %v4464 = vunpack.c.h.b16 %v795
    %v4465 = vunpack.c.l.b16 %v796
    %v4466 = vunpack.c.h.b16 %v796
    %v4467 = vunpack.c.l.b16 %v797
    %v4468 = vunpack.c.h.b16 %v797
    %v4469 = vunpack.c.l.b16 %v798
    %v4470 = vunpack.c.h.b16 %v798
    %v4471 = vunpack.c.l.b16 %v799
    %v4472 = vunpack.c.h.b16 %v799
    %v4473 = vunpack.c.l.b16 %v800
    %v4474 = vunpack.c.h.b16 %v800
    %v4475 = vunpack.c.l.b16 %v801
    %v4476 = vunpack.c.h.b16 %v801
    %v4477 = vunpack.c.l.b16 %v802
    %v4478 = vunpack.c.h.b16 %v802
    %v4479 = vunpack.c.l.b16 %v803
    %v4480 = vunpack.c.h.b16 %v803
    %v4481 = vunpack.c.l.b16 %v804
    %v4482 = vunpack.c.h.b16 %v804
    %v4483 = vunpack.c.l.b16 %v805
    %v4484 = vunpack.c.h.b16 %v805
    %v4485 = vunpack.c.l.b16 %v806
    %v4486 = vunpack.c.h.b16 %v806
    %v4487 = vunpack.c.l.b16 %v807
    %v4488 = vunpack.c.h.b16 %v807
    %v4489 = vunpack.c.l.b16 %v808
    %v4490 = vunpack.c.h.b16 %v808
    %v4491 = vunpack.c.l.b16 %v809
    %v4492 = vunpack.c.h.b16 %v809
    %v4493 = vunpack.c.l.b16 %v810
    %v4494 = vunpack.c.h.b16 %v810
    %v4495 = vunpack.c.l.b16 %v811
    %v4496 = vunpack.c.h.b16 %v811
    %v4497 = vunpack.c.l.b16 %v812
    %v4498 = vunpack.c.h.b16 %v812
    %v4499 = vunpack.c.l.b16 %v813
    %v4500 = vunpack.c.h.b16 %v813
    %v4501 = vunpack.c.l.b16 %v814
    %v4502 = vunpack.c.h.b16 %v814
    %v4503 = vunpack.c.l.b16 %v815
    %v4504 = vunpack.c.h.b16 %v815
    %v4505 = vunpack.c.l.b16 %v816
    %v4506 = vunpack.c.h.b16 %v816
    %v4507 = vunpack.c.l.b16 %v817
    %v4508 = vunpack.c.h.b16 %v817
    %v4509 = vunpack.c.l.b16 %v818
    %v4510 = vunpack.c.h.b16 %v818
    %v4511 = vunpack.c.l.b16 %v819
    %v4512 = vunpack.c.h.b16 %v819
    %v4513 = vunpack.c.l.b16 %v820
    %v4514 = vunpack.c.h.b16 %v820
    %v4515 = vunpack.c.l.b16 %v821
    %v4516 = vunpack.c.h.b16 %v821
    %v4517 = vunpack.c.l.b16 %v822
    %v4518 = vunpack.c.h.b16 %v822
    %v4519 = vunpack.c.l.b16 %v823
    %v4520 = vunpack.c.h.b16 %v823
    %v4521 = vunpack.c.l.b16 %v824
    %v4522 = vunpack.c.h.b16 %v824
    %v4523 = vunpack.c.l.b16 %v825
    %v4524 = vunpack.c.h.b16 %v825
    %v4525 = vunpack.c.l.b16 %v826
    %v4526 = vunpack.c.h.b16 %v826
    %v4527 = vunpack.c.l.b16 %v827
    %v4528 = vunpack.c.h.b16 %v827
    %v4529 = vunpack.c.l.b16 %v828
    %v4530 = vunpack.c.h.b16 %v828
    %v4531 = vunpack.c.l.b16 %v829
    %v4532 = vunpack.c.h.b16 %v829
    %v4533 = vunpack.c.l.b16 %v830
    %v4534 = vunpack.c.h.b16 %v830
    %v4535 = vunpack.c.l.b16 %v831
    %v4536 = vunpack.c.h.b16 %v831
    %v4537 = vunpack.c.l.b16 %v832
    %v4538 = vunpack.c.h.b16 %v832
    %v4539 = vunpack.c.l.b16 %v833
    %v4540 = vunpack.c.h.b16 %v833
    %v4541 = vunpack.c.l.b16 %v834
    %v4542 = vunpack.c.h.b16 %v834
    %v4543 = vunpack.c.l.b16 %v835
    %v4544 = vunpack.c.h.b16 %v835
    %v4545 = vunpack.c.l.b16 %v836
    %v4546 = vunpack.c.h.b16 %v836
    %v4547 = vunpack.c.l.b16 %v837
    %v4548 = vunpack.c.h.b16 %v837
    %v4549 = vunpack.c.l.b16 %v838
    %v4550 = vunpack.c.h.b16 %v838
    %v4551 = vunpack.c.l.b16 %v839
    %v4552 = vunpack.c.h.b16 %v839
    %v4553 = vunpack.c.l.b16 %v840
    %v4554 = vunpack.c.h.b16 %v840
    %v4555 = vunpack.c.l.b16 %v841
    %v4556 = vunpack.c.h.b16 %v841
    %v4557 = vunpack.c.l.b16 %v842
    %v4558 = vunpack.c.h.b16 %v842
    %v4559 = vunpack.c.l.b16 %v843
    %v4560 = vunpack.c.h.b16 %v843
    %v4561 = vunpack.c.l.b16 %v844
    %v4562 = vunpack.c.h.b16 %v844
    %v4563 = vunpack.c.l.b16 %v845
    %v4564 = vunpack.c.h.b16 %v845
    %v4565 = vunpack.c.l.b16 %v846
    %v4566 = vunpack.c.h.b16 %v846
    %v4567 = vunpack.c.l.b16 %v847
    %v4568 = vunpack.c.h.b16 %v847
    %v4569 = vunpack.c.l.b16 %v848
    %v4570 = vunpack.c.h.b16 %v848
    %v4571 = vunpack.c.l.b16 %v849
    %v4572 = vunpack.c.h.b16 %v849
    %v4573 = vunpack.c.l.b16 %v850
    %v4574 = vunpack.c.h.b16 %v850
    %v4575 = vunpack.c.l.b16 %v851
    %v4576 = vunpack.c.h.b16 %v851
    %v4577 = vunpack.c.l.b16 %v852
    %v4578 = vunpack.c.h.b16 %v852
    %v4579 = vunpack.c.l.b16 %v853
    %v4580 = vunpack.c.h.b16 %v853
    %v4581 = vunpack.c.l.b16 %v854
    %v4582 = vunpack.c.h.b16 %v854
    %v4583 = vunpack.c.l.b16 %v855
    %v4584 = vunpack.c.h.b16 %v855
    %v4585 = vunpack.c.l.b16 %v856
    %v4586 = vunpack.c.h.b16 %v856
    %v4587 = vunpack.c.l.b16 %v857
    %v4588 = vunpack.c.h.b16 %v857
    %v4589 = vunpack.c.l.b16 %v858
    %v4590 = vunpack.c.h.b16 %v858
    %v4591 = vunpack.c.l.b16 %v859
    %v4592 = vunpack.c.h.b16 %v859
    %v4593 = vunpack.c.l.b16 %v860
    %v4594 = vunpack.c.h.b16 %v860
    %v4595 = vunpack.c.l.b16 %v861
    %v4596 = vunpack.c.h.b16 %v861
    %v4597 = vunpack.c.l.b16 %v862
    %v4598 = vunpack.c.h.b16 %v862
    %v4599 = vunpack.c.l.b16 %v863
    %v4600 = vunpack.c.h.b16 %v863
    %v4601 = vunpack.c.l.b16 %v864
    %v4602 = vunpack.c.h.b16 %v864
    %v4603 = vunpack.c.l.b16 %v865
    %v4604 = vunpack.c.h.b16 %v865
    %v4605 = vunpack.c.l.b16 %v866
    %v4606 = vunpack.c.h.b16 %v866
    %v4607 = vunpack.c.l.b16 %v867
    %v4608 = vunpack.c.h.b16 %v867
    %v4609 = vunpack.c.l.b16 %v868
    %v4610 = vunpack.c.h.b16 %v868
    %v4611 = vunpack.c.l.b16 %v869
    %v4612 = vunpack.c.h.b16 %v869
    %v4613 = vunpack.c.l.b16 %v870
    %v4614 = vunpack.c.h.b16 %v870
    %v4615 = vunpack.c.l.b16 %v871
    %v4616 = vunpack.c.h.b16 %v871
    %v4617 = vunpack.c.l.b16 %v872
    %v4618 = vunpack.c.h.b16 %v872
    %v4619 = vunpack.c.l.b16 %v873
    %v4620 = vunpack.c.h.b16 %v873
    %v4621 = vunpack.c.l.b16 %v874
    %v4622 = vunpack.c.h.b16 %v874
    %v4623 = vunpack.c.l.b16 %v875
    %v4624 = vunpack.c.h.b16 %v875
    %v4625 = vunpack.c.l.b16 %v876
    %v4626 = vunpack.c.h.b16 %v876
    %v4627 = vunpack.c.l.b16 %v877
    %v4628 = vunpack.c.h.b16 %v877
    %v4629 = vunpack.c.l.b16 %v878
    %v4630 = vunpack.c.h.b16 %v878
    %v4631 = vunpack.c.l.b16 %v879
    %v4632 = vunpack.c.h.b16 %v879
    %v4633 = vunpack.c.l.b16 %v880
    %v4634 = vunpack.c.h.b16 %v880
    %v4635 = vunpack.c.l.b16 %v881
    %v4636 = vunpack.c.h.b16 %v881
    %v4637 = vunpack.c.l.b16 %v882
    %v4638 = vunpack.c.h.b16 %v882
    %v4639 = vunpack.c.l.b16 %v883
    %v4640 = vunpack.c.h.b16 %v883
    %v4641 = vunpack.c.l.b16 %v884
    %v4642 = vunpack.c.h.b16 %v884
    %v4643 = vunpack.c.l.b16 %v885
    %v4644 = vunpack.c.h.b16 %v885
    %v4645 = vunpack.c.l.b16 %v886
    %v4646 = vunpack.c.h.b16 %v886
    %v4647 = vunpack.c.l.b16 %v887
    %v4648 = vunpack.c.h.b16 %v887
    %v4649 = vunpack.c.l.b16 %v888
    %v4650 = vunpack.c.h.b16 %v888
    %v4651 = vunpack.c.l.b16 %v889
    %v4652 = vunpack.c.h.b16 %v889
    %v4653 = vunpack.c.l.b16 %v890
    %v4654 = vunpack.c.h.b16 %v890
    %v4655 = vunpack.c.l.b16 %v891
    %v4656 = vunpack.c.h.b16 %v891
    %v4657 = vunpack.c.l.b16 %v892
    %v4658 = vunpack.c.h.b16 %v892
    %v4659 = vunpack.c.l.b16 %v893
    %v4660 = vunpack.c.h.b16 %v893
    %v4661 = vunpack.c.l.b16 %v894
    %v4662 = vunpack.c.h.b16 %v894
    %v4663 = vunpack.c.l.b16 %v895
    %v4664 = vunpack.c.h.b16 %v895
    %v4665 = vunpack.c.l.b16 %v896
    %v4666 = vunpack.c.h.b16 %v896
    %v4667 = vunpack.c.l.b16 %v897
    %v4668 = vunpack.c.h.b16 %v897
    %v4669 = vunpack.c.l.b16 %v898
    %v4670 = vunpack.c.h.b16 %v898
    %v4671 = vunpack.c.l.b16 %v899
    %v4672 = vunpack.c.h.b16 %v899
    %v4673 = vunpack.c.l.b16 %v900
    %v4674 = vunpack.c.h.b16 %v900
    %v4675 = vunpack.c.l.b16 %v901
    %v4676 = vunpack.c.h.b16 %v901
    %v4677 = vunpack.c.l.b16 %v902
    %v4678 = vunpack.c.h.b16 %v902
    %v4679 = vunpack.c.l.b16 %v903
    %v4680 = vunpack.c.h.b16 %v903
    %v4681 = vunpack.c.l.b16 %v904
    %v4682 = vunpack.c.h.b16 %v904
    %v4683 = vunpack.c.l.b16 %v905
    %v4684 = vunpack.c.h.b16 %v905
    %v4685 = vunpack.c.l.b16 %v906
    %v4686 = vunpack.c.h.b16 %v906
    %v4687 = vunpack.c.l.b16 %v907
    %v4688 = vunpack.c.h.b16 %v907
    %v4689 = vunpack.c.l.b16 %v908
    %v4690 = vunpack.c.h.b16 %v908
    %v4691 = vunpack.c.l.b16 %v909
    %v4692 = vunpack.c.h.b16 %v909
    %v4693 = vunpack.c.l.b16 %v910
    %v4694 = vunpack.c.h.b16 %v910
    %v4695 = vunpack.c.l.b16 %v911
    %v4696 = vunpack.c.h.b16 %v911
    %v4697 = vunpack.c.l.b16 %v912
    %v4698 = vunpack.c.h.b16 %v912
    %v4699 = vunpack.c.l.b16 %v913
    %v4700 = vunpack.c.h.b16 %v913
    %v4701 = vunpack.c.l.b16 %v914
    %v4702 = vunpack.c.h.b16 %v914
    %v4703 = vunpack.c.l.b16 %v915
    %v4704 = vunpack.c.h.b16 %v915
    %v4705 = vunpack.c.l.b16 %v916
    %v4706 = vunpack.c.h.b16 %v916
    %v4707 = vunpack.c.l.b16 %v917
    %v4708 = vunpack.c.h.b16 %v917
    %v4709 = vunpack.c.l.b16 %v918
    %v4710 = vunpack.c.h.b16 %v918
    %v4711 = vunpack.c.l.b16 %v919
    %v4712 = vunpack.c.h.b16 %v919
    %v4713 = vunpack.c.l.b16 %v920
    %v4714 = vunpack.c.h.b16 %v920
    %v4715 = vunpack.c.l.b16 %v921
    %v4716 = vunpack.c.h.b16 %v921
    %v4717 = vunpack.c.l.b16 %v922
    %v4718 = vunpack.c.h.b16 %v922
    %v4719 = vunpack.c.l.b16 %v923
    %v4720 = vunpack.c.h.b16 %v923
    %v4721 = vunpack.c.l.b16 %v924
    %v4722 = vunpack.c.h.b16 %v924
    %v4723 = vunpack.c.l.b16 %v925
    %v4724 = vunpack.c.h.b16 %v925
    %v4725 = vunpack.c.l.b16 %v926
    %v4726 = vunpack.c.h.b16 %v926
    %v4727 = vunpack.c.l.b16 %v927
    %v4728 = vunpack.c.h.b16 %v927
    %v4729 = vunpack.c.l.b16 %v928
    %v4730 = vunpack.c.h.b16 %v928
    %v4731 = vunpack.c.l.b16 %v929
    %v4732 = vunpack.c.h.b16 %v929
    %v4733 = vunpack.c.l.b16 %v930
    %v4734 = vunpack.c.h.b16 %v930
    %v4735 = vunpack.c.l.b16 %v931
    %v4736 = vunpack.c.h.b16 %v931
    %v4737 = vunpack.c.l.b16 %v932
    %v4738 = vunpack.c.h.b16 %v932
    %v4739 = vunpack.c.l.b16 %v933
    %v4740 = vunpack.c.h.b16 %v933
    %v4741 = vunpack.c.l.b16 %v934
    %v4742 = vunpack.c.h.b16 %v934
    %v4743 = vunpack.c.l.b16 %v935
    %v4744 = vunpack.c.h.b16 %v935
    %v4745 = vunpack.c.l.b16 %v936
    %v4746 = vunpack.c.h.b16 %v936
    %v4747 = vunpack.c.l.b16 %v937
    %v4748 = vunpack.c.h.b16 %v937
    %v4749 = vunpack.c.l.b16 %v938
    %v4750 = vunpack.c.h.b16 %v938
    %v4751 = vunpack.c.l.b16 %v939
    %v4752 = vunpack.c.h.b16 %v939
    %v4753 = vunpack.c.l.b16 %v940
    %v4754 = vunpack.c.h.b16 %v940
    %v4755 = vunpack.c.l.b16 %v941
    %v4756 = vunpack.c.h.b16 %v941
    %v4757 = vunpack.c.l.b16 %v942
    %v4758 = vunpack.c.h.b16 %v942
    %v4759 = vunpack.c.l.b16 %v943
    %v4760 = vunpack.c.h.b16 %v943
    %v4761 = vunpack.c.l.b16 %v944
    %v4762 = vunpack.c.h.b16 %v944
    %v4763 = vunpack.c.l.b16 %v945
    %v4764 = vunpack.c.h.b16 %v945
    %v4765 = vunpack.c.l.b16 %v946
    %v4766 = vunpack.c.h.b16 %v946
    %v4767 = vunpack.c.l.b16 %v947
    %v4768 = vunpack.c.h.b16 %v947
    %v4769 = vunpack.c.l.b16 %v948
    %v4770 = vunpack.c.h.b16 %v948
    %v4771 = vunpack.c.l.b16 %v949
    %v4772 = vunpack.c.h.b16 %v949
    %v4773 = vunpack.c.l.b16 %v950
    %v4774 = vunpack.c.h.b16 %v950
    %v4775 = vunpack.c.l.b16 %v951
    %v4776 = vunpack.c.h.b16 %v951
    %v4777 = vunpack.c.l.b16 %v952
    %v4778 = vunpack.c.h.b16 %v952
    %v4779 = vunpack.c.l.b16 %v953
    %v4780 = vunpack.c.h.b16 %v953
    %v4781 = vunpack.c.l.b16 %v954
    %v4782 = vunpack.c.h.b16 %v954
    %v4783 = vunpack.c.l.b16 %v955
    %v4784 = vunpack.c.h.b16 %v955
    %v4785 = vunpack.c.l.b16 %v956
    %v4786 = vunpack.c.h.b16 %v956
    %v4787 = vunpack.c.l.b16 %v957
    %v4788 = vunpack.c.h.b16 %v957
    %v4789 = vunpack.c.l.b16 %v958
    %v4790 = vunpack.c.h.b16 %v958
    %v4791 = vunpack.c.l.b16 %v959
    %v4792 = vunpack.c.h.b16 %v959
    %v4793 = vunpack.c.l.b16 %v960
    %v4794 = vunpack.c.h.b16 %v960
    %v4795 = vunpack.c.l.b16 %v961
    %v4796 = vunpack.c.h.b16 %v961
    %v4797 = vunpack.c.l.b16 %v962
    %v4798 = vunpack.c.h.b16 %v962
    %v4799 = vunpack.c.l.b16 %v963
    %v4800 = vunpack.c.h.b16 %v963
    %v4801 = vunpack.c.l.b16 %v964
    %v4802 = vunpack.c.h.b16 %v964
    %v4803 = vunpack.c.l.b16 %v965
    %v4804 = vunpack.c.h.b16 %v965
    %v4805 = vunpack.c.l.b16 %v966
    %v4806 = vunpack.c.h.b16 %v966
    %v4807 = vunpack.c.l.b16 %v967
    %v4808 = vunpack.c.h.b16 %v967
    %v4809 = vunpack.c.l.b16 %v968
    %v4810 = vunpack.c.h.b16 %v968
    %v4811 = vunpack.c.l.b16 %v969
    %v4812 = vunpack.c.h.b16 %v969
    %v4813 = vunpack.c.l.b16 %v970
    %v4814 = vunpack.c.h.b16 %v970
    %v4815 = vunpack.c.l.b16 %v971
    %v4816 = vunpack.c.h.b16 %v971
    %v4817 = vunpack.c.l.b16 %v972
    %v4818 = vunpack.c.h.b16 %v972
    %v4819 = vunpack.c.l.b16 %v973
    %v4820 = vunpack.c.h.b16 %v973
    %v4821 = vunpack.c.l.b16 %v974
    %v4822 = vunpack.c.h.b16 %v974
    %v4823 = vunpack.c.l.b16 %v975
    %v4824 = vunpack.c.h.b16 %v975
    %v4825 = vunpack.c.l.b16 %v976
    %v4826 = vunpack.c.h.b16 %v976
    %v4827 = vunpack.c.l.b16 %v977
    %v4828 = vunpack.c.h.b16 %v977
    %v4829 = vunpack.c.l.b16 %v978
    %v4830 = vunpack.c.h.b16 %v978
    %v4831 = vunpack.c.l.b16 %v979
    %v4832 = vunpack.c.h.b16 %v979
    %v4833 = vunpack.c.l.b16 %v980
    %v4834 = vunpack.c.h.b16 %v980
    %v4835 = vunpack.c.l.b16 %v981
    %v4836 = vunpack.c.h.b16 %v981
    %v4837 = vunpack.c.l.b16 %v982
    %v4838 = vunpack.c.h.b16 %v982
    %v4839 = vunpack.c.l.b16 %v983
    %v4840 = vunpack.c.h.b16 %v983
    %v4841 = vunpack.c.l.b16 %v984
    %v4842 = vunpack.c.h.b16 %v984
    %v4843 = vunpack.c.l.b16 %v985
    %v4844 = vunpack.c.h.b16 %v985
    %v4845 = vunpack.c.l.b16 %v986
    %v4846 = vunpack.c.h.b16 %v986
    %v4847 = vunpack.c.l.b16 %v987
    %v4848 = vunpack.c.h.b16 %v987
    %v4849 = vunpack.c.l.b16 %v988
    %v4850 = vunpack.c.h.b16 %v988
    %v4851 = vunpack.c.l.b16 %v989
    %v4852 = vunpack.c.h.b16 %v989
    %v4853 = vunpack.c.l.b16 %v990
    %v4854 = vunpack.c.h.b16 %v990
    %v4855 = vunpack.c.l.b16 %v991
    %v4856 = vunpack.c.h.b16 %v991
    %v4857 = vunpack.c.l.b16 %v992
    %v4858 = vunpack.c.h.b16 %v992
    %v4859 = vunpack.c.l.b16 %v993
    %v4860 = vunpack.c.h.b16 %v993
    %v4861 = vunpack.c.l.b16 %v994
    %v4862 = vunpack.c.h.b16 %v994
    %v4863 = vunpack.c.l.b16 %v995
    %v4864 = vunpack.c.h.b16 %v995
    %v4865 = vunpack.c.l.b16 %v996
    %v4866 = vunpack.c.h.b16 %v996
    %v4867 = vunpack.c.l.b16 %v997
    %v4868 = vunpack.c.h.b16 %v997
    %v4869 = vunpack.c.l.b16 %v998
    %v4870 = vunpack.c.h.b16 %v998
    %v4871 = vunpack.c.l.b16 %v999
    %v4872 = vunpack.c.h.b16 %v999
    %v4873 = vunpack.c.l.b16 %v1000
    %v4874 = vunpack.c.h.b16 %v1000
    %v4875 = vunpack.c.l.b16 %v1001
    %v4876 = vunpack.c.h.b16 %v1001
    %v4877 = vunpack.c.l.b16 %v1002
    %v4878 = vunpack.c.h.b16 %v1002
    %v4879 = vunpack.c.l.b16 %v1003
    %v4880 = vunpack.c.h.b16 %v1003
    %v4881 = vunpack.c.l.b16 %v1004
    %v4882 = vunpack.c.h.b16 %v1004
    %v4883 = vunpack.c.l.b16 %v1005
    %v4884 = vunpack.c.h.b16 %v1005
    %v4885 = vunpack.c.l.b16 %v1006
    %v4886 = vunpack.c.h.b16 %v1006
    %v4887 = vunpack.c.l.b16 %v1007
    %v4888 = vunpack.c.h.b16 %v1007
    %v4889 = vunpack.c.l.b16 %v1008
    %v4890 = vunpack.c.h.b16 %v1008
    %v4891 = vunpack.c.l.b16 %v1009
    %v4892 = vunpack.c.h.b16 %v1009
    %v4893 = vunpack.c.l.b16 %v1010
    %v4894 = vunpack.c.h.b16 %v1010
    %v4895 = vunpack.c.l.b16 %v1011
    %v4896 = vunpack.c.h.b16 %v1011
    %v4897 = vunpack.c.l.b16 %v1012
    %v4898 = vunpack.c.h.b16 %v1012
    %v4899 = vunpack.c.l.b16 %v1013
    %v4900 = vunpack.c.h.b16 %v1013
    %v4901 = vunpack.c.l.b16 %v1014
    %v4902 = vunpack.c.h.b16 %v1014
    %v4903 = vunpack.c.l.b16 %v1015
    %v4904 = vunpack.c.h.b16 %v1015
    %v4905 = vunpack.c.l.b16 %v1016
    %v4906 = vunpack.c.h.b16 %v1016
    %v4907 = vunpack.c.l.b16 %v1017
    %v4908 = vunpack.c.h.b16 %v1017
    %v4909 = vunpack.c.l.b16 %v1018
    %v4910 = vunpack.c.h.b16 %v1018
    %v4911 = vunpack.c.l.b16 %v1019
    %v4912 = vunpack.c.h.b16 %v1019
    %v4913 = vunpack.c.l.b16 %v1020
    %v4914 = vunpack.c.h.b16 %v1020
    %v4915 = vunpack.c.l.b16 %v1021
    %v4916 = vunpack.c.h.b16 %v1021
    %v4917 = vunpack.c.l.b16 %v1022
    %v4918 = vunpack.c.h.b16 %v1022
    %v4919 = vunpack.c.l.b16 %v1023
    %v4920 = vunpack.c.h.b16 %v1023
    %v4921 = vunpack.c.l.b16 %v1024
    %v4922 = vunpack.c.h.b16 %v1024
    %v4923 = vunpack.c.l.b16 %v1025
    %v4924 = vunpack.c.h.b16 %v1025
    %v4925 = vunpack.c.l.b16 %v1026
    %v4926 = vunpack.c.h.b16 %v1026
    %v4927 = vunpack.c.l.b16 %v1027
    %v4928 = vunpack.c.h.b16 %v1027
    %v4929 = vunpack.c.l.b16 %v1028
    %v4930 = vunpack.c.h.b16 %v1028
    %v4931 = vunpack.c.l.b16 %v1029
    %v4932 = vunpack.c.h.b16 %v1029
    %v4933 = vunpack.c.l.b16 %v1030
    %v4934 = vunpack.c.h.b16 %v1030
    %v4935 = vunpack.c.l.b16 %v1031
    %v4936 = vunpack.c.h.b16 %v1031
    %v4937 = vunpack.c.l.b16 %v1032
    %v4938 = vunpack.c.h.b16 %v1032
    %v4939 = vunpack.c.l.b16 %v1033
    %v4940 = vunpack.c.h.b16 %v1033
    %v4941 = vunpack.c.l.b16 %v1034
    %v4942 = vunpack.c.h.b16 %v1034
    %v4943 = vunpack.c.l.b16 %v1035
    %v4944 = vunpack.c.h.b16 %v1035
    %v4945 = vunpack.c.l.b16 %v1036
    %v4946 = vunpack.c.h.b16 %v1036
    %v4947 = vunpack.c.l.b16 %v1037
    %v4948 = vunpack.c.h.b16 %v1037
    %v4949 = vunpack.c.l.b16 %v1038
    %v4950 = vunpack.c.h.b16 %v1038
    %v4951 = vunpack.c.l.b16 %v1039
    %v4952 = vunpack.c.h.b16 %v1039
    %v4953 = vunpack.c.l.b16 %v1040
    %v4954 = vunpack.c.h.b16 %v1040
    %v4955 = vunpack.c.l.b16 %v1041
    %v4956 = vunpack.c.h.b16 %v1041
    %v4957 = vunpack.c.l.b16 %v1042
    %v4958 = vunpack.c.h.b16 %v1042
    %v4959 = vunpack.c.l.b16 %v1043
    %v4960 = vunpack.c.h.b16 %v1043
    %v4961 = vunpack.c.l.b16 %v1044
    %v4962 = vunpack.c.h.b16 %v1044
    %v4963 = vunpack.c.l.b16 %v1045
    %v4964 = vunpack.c.h.b16 %v1045
    %v4965 = vunpack.c.l.b16 %v1046
    %v4966 = vunpack.c.h.b16 %v1046
    %v4967 = vunpack.c.l.b16 %v1047
    %v4968 = vunpack.c.h.b16 %v1047
    %v4969 = vunpack.c.l.b16 %v1048
    %v4970 = vunpack.c.h.b16 %v1048
    %v4971 = vunpack.c.l.b16 %v1049
    %v4972 = vunpack.c.h.b16 %v1049
    %v4973 = vunpack.c.l.b16 %v1050
    %v4974 = vunpack.c.h.b16 %v1050
    %v4975 = vunpack.c.l.b16 %v1051
    %v4976 = vunpack.c.h.b16 %v1051
    %v4977 = vunpack.c.l.b16 %v1052
    %v4978 = vunpack.c.h.b16 %v1052
    %v4979 = vunpack.c.l.b16 %v1053
    %v4980 = vunpack.c.h.b16 %v1053
    %v4981 = vunpack.c.l.b16 %v1054
    %v4982 = vunpack.c.h.b16 %v1054
    %v4983 = vunpack.c.l.b16 %v1055
    %v4984 = vunpack.c.h.b16 %v1055
    %v4985 = vunpack.c.l.b16 %v1056
    %v4986 = vunpack.c.h.b16 %v1056
    %v4987 = vunpack.c.l.b16 %v1057
    %v4988 = vunpack.c.h.b16 %v1057
    %v4989 = vunpack.c.l.b16 %v1058
    %v4990 = vunpack.c.h.b16 %v1058
    %v4991 = vunpack.c.l.b16 %v1059
    %v4992 = vunpack.c.h.b16 %v1059
    %v4993 = vunpack.c.l.b16 %v1060
    %v4994 = vunpack.c.h.b16 %v1060
    %v4995 = vunpack.c.l.b16 %v1061
    %v4996 = vunpack.c.h.b16 %v1061
    %v4997 = vunpack.c.l.b16 %v1062
    %v4998 = vunpack.c.h.b16 %v1062
    %v4999 = vunpack.c.l.b16 %v1063
    %v5000 = vunpack.c.h.b16 %v1063
    %v5001 = vunpack.c.l.b16 %v1064
    %v5002 = vunpack.c.h.b16 %v1064
    %v5003 = vunpack.c.l.b16 %v1065
    %v5004 = vunpack.c.h.b16 %v1065
    %v5005 = vunpack.c.l.b16 %v1066
    %v5006 = vunpack.c.h.b16 %v1066
    %v5007 = vunpack.c.l.b16 %v1067
    %v5008 = vunpack.c.h.b16 %v1067
    %v5009 = vunpack.c.l.b16 %v1068
    %v5010 = vunpack.c.h.b16 %v1068
    %v5011 = vunpack.c.l.b16 %v1069
    %v5012 = vunpack.c.h.b16 %v1069
    %v5013 = vunpack.c.l.b16 %v1070
    %v5014 = vunpack.c.h.b16 %v1070
    %v5015 = vunpack.c.l.b16 %v1071
    %v5016 = vunpack.c.h.b16 %v1071
    %v5017 = vunpack.c.l.b16 %v1072
    %v5018 = vunpack.c.h.b16 %v1072
    %v5019 = vunpack.c.l.b16 %v1073
    %v5020 = vunpack.c.h.b16 %v1073
    %v5021 = vunpack.c.l.b16 %v1074
    %v5022 = vunpack.c.h.b16 %v1074
    %v5023 = vunpack.c.l.b16 %v1075
    %v5024 = vunpack.c.h.b16 %v1075
    %v5025 = vunpack.c.l.b16 %v1076
    %v5026 = vunpack.c.h.b16 %v1076
    %v5027 = vunpack.c.l.b16 %v1077
    %v5028 = vunpack.c.h.b16 %v1077
    %v5029 = vunpack.c.l.b16 %v1078
    %v5030 = vunpack.c.h.b16 %v1078
    %v5031 = vunpack.c.l.b16 %v1079
    %v5032 = vunpack.c.h.b16 %v1079
    %v5033 = vunpack.c.l.b16 %v1080
    %v5034 = vunpack.c.h.b16 %v1080
    %v5035 = vunpack.c.l.b16 %v1081
    %v5036 = vunpack.c.h.b16 %v1081
    %v5037 = vunpack.c.l.b16 %v1082
    %v5038 = vunpack.c.h.b16 %v1082
    %v5039 = vunpack.c.l.b16 %v1083
    %v5040 = vunpack.c.h.b16 %v1083
    %v5041 = vunpack.c.l.b16 %v1084
    %v5042 = vunpack.c.h.b16 %v1084
    %v5043 = vunpack.c.l.b16 %v1085
    %v5044 = vunpack.c.h.b16 %v1085
    %v5045 = vunpack.c.l.b16 %v1086
    %v5046 = vunpack.c.h.b16 %v1086
    %v5047 = vunpack.c.l.b16 %v1087
    %v5048 = vunpack.c.h.b16 %v1087
    %v5049 = vunpack.c.l.b16 %v1088
    %v5050 = vunpack.c.h.b16 %v1088
    %v5051 = vunpack.c.l.b16 %v1089
    %v5052 = vunpack.c.h.b16 %v1089
    %v5053 = vunpack.c.l.b16 %v1090
    %v5054 = vunpack.c.h.b16 %v1090
    %v5055 = vunpack.c.l.b16 %v1091
    %v5056 = vunpack.c.h.b16 %v1091
    %v5057 = vunpack.c.l.b16 %v1092
    %v5058 = vunpack.c.h.b16 %v1092
    %v5059 = vunpack.c.l.b16 %v1093
    %v5060 = vunpack.c.h.b16 %v1093
    %v5061 = vunpack.c.l.b16 %v1094
    %v5062 = vunpack.c.h.b16 %v1094
    %v5063 = vunpack.c.l.b16 %v1095
    %v5064 = vunpack.c.h.b16 %v1095
    %v5065 = vunpack.c.l.b16 %v1096
    %v5066 = vunpack.c.h.b16 %v1096
    %v5067 = vunpack.c.l.b16 %v1097
    %v5068 = vunpack.c.h.b16 %v1097
    %v5069 = vunpack.c.l.b16 %v1098
    %v5070 = vunpack.c.h.b16 %v1098
    %v5071 = vunpack.c.l.b16 %v1099
    %v5072 = vunpack.c.h.b16 %v1099
    %v5073 = vunpack.c.l.b16 %v1100
    %v5074 = vunpack.c.h.b16 %v1100
    %v5075 = vunpack.c.l.b16 %v1101
    %v5076 = vunpack.c.h.b16 %v1101
    %v5077 = vunpack.c.l.b16 %v1102
    %v5078 = vunpack.c.h.b16 %v1102
    %v5079 = vunpack.c.l.b16 %v1103
    %v5080 = vunpack.c.h.b16 %v1103
    %v5081 = vunpack.c.l.b16 %v1104
    %v5082 = vunpack.c.h.b16 %v1104
    %v5083 = vunpack.c.l.b16 %v1105
    %v5084 = vunpack.c.h.b16 %v1105
    %v5085 = vunpack.c.l.b16 %v1106
    %v5086 = vunpack.c.h.b16 %v1106
    %v5087 = vunpack.c.l.b16 %v1107
    %v5088 = vunpack.c.h.b16 %v1107
    %v5089 = vunpack.c.l.b16 %v1108
    %v5090 = vunpack.c.h.b16 %v1108
    %v5091 = vunpack.c.l.b16 %v1109
    %v5092 = vunpack.c.h.b16 %v1109
    %v5093 = vunpack.c.l.b16 %v1110
    %v5094 = vunpack.c.h.b16 %v1110
    %v5095 = vunpack.c.l.b16 %v1111
    %v5096 = vunpack.c.h.b16 %v1111
    %v5097 = vunpack.c.l.b16 %v1112
    %v5098 = vunpack.c.h.b16 %v1112
    %v5099 = vunpack.c.l.b16 %v1113
    %v5100 = vunpack.c.h.b16 %v1113
    %v5101 = vunpack.c.l.b16 %v1114
    %v5102 = vunpack.c.h.b16 %v1114
    %v5103 = vunpack.c.l.b16 %v1115
    %v5104 = vunpack.c.h.b16 %v1115
    %v5105 = vunpack.c.l.b16 %v1116
    %v5106 = vunpack.c.h.b16 %v1116
    %v5107 = vunpack.c.l.b16 %v1117
    %v5108 = vunpack.c.h.b16 %v1117
    %v5109 = vunpack.c.l.b16 %v1118
    %v5110 = vunpack.c.h.b16 %v1118
    %v5111 = vunpack.c.l.b16 %v1119
    %v5112 = vunpack.c.h.b16 %v1119
    %v5113 = vunpack.c.l.b16 %v1120
    %v5114 = vunpack.c.h.b16 %v1120
    %v5115 = vunpack.c.l.b16 %v1121
    %v5116 = vunpack.c.h.b16 %v1121
    %v5117 = vunpack.c.l.b16 %v1122
    %v5118 = vunpack.c.h.b16 %v1122
    %v5119 = vunpack.c.l.b16 %v1123
    %v5120 = vunpack.c.h.b16 %v1123
    %v5121 = vunpack.c.l.b16 %v1124
    %v5122 = vunpack.c.h.b16 %v1124
    %v5123 = vunpack.c.l.b16 %v1125
    %v5124 = vunpack.c.h.b16 %v1125
    %v5125 = vunpack.c.l.b16 %v1126
    %v5126 = vunpack.c.h.b16 %v1126
    %v5127 = vunpack.c.l.b16 %v1127
    %v5128 = vunpack.c.h.b16 %v1127
    %v5129 = vunpack.c.l.b16 %v1128
    %v5130 = vunpack.c.h.b16 %v1128
    %v5131 = vunpack.c.l.b16 %v1129
    %v5132 = vunpack.c.h.b16 %v1129
    %v5133 = vunpack.c.l.b16 %v1130
    %v5134 = vunpack.c.h.b16 %v1130
    %v5135 = vunpack.c.l.b16 %v1131
    %v5136 = vunpack.c.h.b16 %v1131
    %v5137 = vunpack.c.l.b16 %v1132
    %v5138 = vunpack.c.h.b16 %v1132
    %v5139 = vunpack.c.l.b16 %v1133
    %v5140 = vunpack.c.h.b16 %v1133
    %v5141 = vunpack.c.l.b16 %v1134
    %v5142 = vunpack.c.h.b16 %v1134
    %v5143 = vunpack.c.l.b16 %v1135
    %v5144 = vunpack.c.h.b16 %v1135
    %v5145 = vunpack.c.l.b16 %v1136
    %v5146 = vunpack.c.h.b16 %v1136
    %v5147 = vunpack.c.l.b16 %v1137
    %v5148 = vunpack.c.h.b16 %v1137
    %v5149 = vunpack.c.l.b16 %v1138
    %v5150 = vunpack.c.h.b16 %v1138
    %v5151 = vunpack.c.l.b16 %v1139
    %v5152 = vunpack.c.h.b16 %v1139
    %v5153 = vunpack.c.l.b16 %v1140
    %v5154 = vunpack.c.h.b16 %v1140
    %v5155 = vunpack.c.l.b16 %v1141
    %v5156 = vunpack.c.h.b16 %v1141
    %v5157 = vunpack.c.l.b16 %v1142
    %v5158 = vunpack.c.h.b16 %v1142
    %v5159 = vunpack.c.l.b16 %v1143
    %v5160 = vunpack.c.h.b16 %v1143
    %v5161 = vunpack.c.l.b16 %v1144
    %v5162 = vunpack.c.h.b16 %v1144
    %v5163 = vunpack.c.l.b16 %v1145
    %v5164 = vunpack.c.h.b16 %v1145
    %v5165 = vunpack.c.l.b16 %v1146
    %v5166 = vunpack.c.h.b16 %v1146
    %v5167 = vunpack.c.l.b16 %v1147
    %v5168 = vunpack.c.h.b16 %v1147
    %v5169 = vunpack.c.l.b16 %v1148
    %v5170 = vunpack.c.h.b16 %v1148
    %v5171 = vunpack.c.l.b16 %v1149
    %v5172 = vunpack.c.h.b16 %v1149
    %v5173 = vunpack.c.l.b16 %v1150
    %v5174 = vunpack.c.h.b16 %v1150
    %v5175 = vunpack.c.l.b16 %v1151
    %v5176 = vunpack.c.h.b16 %v1151
    %v5177 = vunpack.c.l.b16 %v1152
    %v5178 = vunpack.c.h.b16 %v1152
    %v5179 = vunpack.c.l.b16 %v1153
    %v5180 = vunpack.c.h.b16 %v1153
    %v5181 = vunpack.c.l.b16 %v1154
    %v5182 = vunpack.c.h.b16 %v1154
    %v5183 = vunpack.c.l.b16 %v1155
    %v5184 = vunpack.c.h.b16 %v1155
    %v5185 = vunpack.c.l.b16 %v1156
    %v5186 = vunpack.c.h.b16 %v1156
    %v5187 = vunpack.c.l.b16 %v1157
    %v5188 = vunpack.c.h.b16 %v1157
    %v5189 = vunpack.c.l.b16 %v1158
    %v5190 = vunpack.c.h.b16 %v1158
    %v5191 = vunpack.c.l.b16 %v1159
    %v5192 = vunpack.c.h.b16 %v1159
    %v5193 = vunpack.c.l.b16 %v1160
    %v5194 = vunpack.c.h.b16 %v1160
    %v5195 = vunpack.c.l.b16 %v1161
    %v5196 = vunpack.c.h.b16 %v1161
    %v5197 = vunpack.c.l.b16 %v1162
    %v5198 = vunpack.c.h.b16 %v1162
    %v5199 = vunpack.c.l.b16 %v1163
    %v5200 = vunpack.c.h.b16 %v1163
    %v5201 = vunpack.c.l.b16 %v1164
    %v5202 = vunpack.c.h.b16 %v1164
    %v5203 = vunpack.c.l.b16 %v1165
    %v5204 = vunpack.c.h.b16 %v1165
    %v5205 = vunpack.c.l.b16 %v1166
    %v5206 = vunpack.c.h.b16 %v1166
    %v5207 = vunpack.c.l.b16 %v1167
    %v5208 = vunpack.c.h.b16 %v1167
    %v5209 = vunpack.c.l.b16 %v1168
    %v5210 = vunpack.c.h.b16 %v1168
    %v5211 = vunpack.c.l.b16 %v1169
    %v5212 = vunpack.c.h.b16 %v1169
    %v5213 = vunpack.c.l.b16 %v1170
    %v5214 = vunpack.c.h.b16 %v1170
    %v5215 = vunpack.c.l.b16 %v1171
    %v5216 = vunpack.c.h.b16 %v1171
    %v5217 = vunpack.c.l.b16 %v1172
    %v5218 = vunpack.c.h.b16 %v1172
    %v5219 = vunpack.c.l.b16 %v1173
    %v5220 = vunpack.c.h.b16 %v1173
    %v5221 = vunpack.c.l.b16 %v1174
    %v5222 = vunpack.c.h.b16 %v1174
    %v5223 = vunpack.c.l.b16 %v1175
    %v5224 = vunpack.c.h.b16 %v1175
    %v5225 = vunpack.c.l.b16 %v1176
    %v5226 = vunpack.c.h.b16 %v1176
    %v5227 = vunpack.c.l.b16 %v1177
    %v5228 = vunpack.c.h.b16 %v1177
    %v5229 = vunpack.c.l.b16 %v1178
    %v5230 = vunpack.c.h.b16 %v1178
    %v5231 = vunpack.c.l.b16 %v1179
    %v5232 = vunpack.c.h.b16 %v1179
    %v5233 = vunpack.c.l.b16 %v1180
    %v5234 = vunpack.c.h.b16 %v1180
    %v5235 = vunpack.c.l.b16 %v1181
    %v5236 = vunpack.c.h.b16 %v1181
    %v5237 = vunpack.c.l.b16 %v1182
    %v5238 = vunpack.c.h.b16 %v1182
    %v5239 = vunpack.c.l.b16 %v1183
    %v5240 = vunpack.c.h.b16 %v1183
    %v5241 = vunpack.c.l.b16 %v1184
    %v5242 = vunpack.c.h.b16 %v1184
    %v5243 = vunpack.c.l.b16 %v1185
    %v5244 = vunpack.c.h.b16 %v1185
    %v5245 = vunpack.c.l.b16 %v1186
    %v5246 = vunpack.c.h.b16 %v1186
    %v5247 = vunpack.c.l.b16 %v1187
    %v5248 = vunpack.c.h.b16 %v1187
    %v5249 = vunpack.c.l.b16 %v1188
    %v5250 = vunpack.c.h.b16 %v1188
    %v5251 = vunpack.c.l.b16 %v1189
    %v5252 = vunpack.c.h.b16 %v1189
    %v5253 = vunpack.c.l.b16 %v1190
    %v5254 = vunpack.c.h.b16 %v1190
    %v5255 = vunpack.c.l.b16 %v1191
    %v5256 = vunpack.c.h.b16 %v1191
    %v5257 = vunpack.c.l.b16 %v1192
    %v5258 = vunpack.c.h.b16 %v1192
    %v5259 = vunpack.c.l.b16 %v1193
    %v5260 = vunpack.c.h.b16 %v1193
    %v5261 = vunpack.c.l.b16 %v1194
    %v5262 = vunpack.c.h.b16 %v1194
    %v5263 = vunpack.c.l.b16 %v1195
    %v5264 = vunpack.c.h.b16 %v1195
    %v5265 = vunpack.c.l.b16 %v1196
    %v5266 = vunpack.c.h.b16 %v1196
    %v5267 = vunpack.c.l.b16 %v1197
    %v5268 = vunpack.c.h.b16 %v1197
    %v5269 = vunpack.c.l.b16 %v1198
    %v5270 = vunpack.c.h.b16 %v1198
    %v5271 = vunpack.c.l.b16 %v1199
    %v5272 = vunpack.c.h.b16 %v1199
    %v5273 = vunpack.c.l.b16 %v1200
    %v5274 = vunpack.c.h.b16 %v1200
    %v5275 = vunpack.c.l.b16 %v1201
    %v5276 = vunpack.c.h.b16 %v1201
    %v5277 = vunpack.c.l.b16 %v1202
    %v5278 = vunpack.c.h.b16 %v1202
    %v5279 = vunpack.c.l.b16 %v1203
    %v5280 = vunpack.c.h.b16 %v1203
    %v5281 = vunpack.c.l.b16 %v1204
    %v5282 = vunpack.c.h.b16 %v1204
    %v5283 = vunpack.c.l.b16 %v1205
    %v5284 = vunpack.c.h.b16 %v1205
    %v5285 = vunpack.c.l.b16 %v1206
    %v5286 = vunpack.c.h.b16 %v1206
    %v5287 = vunpack.c.l.b16 %v1207
    %v5288 = vunpack.c.h.b16 %v1207
    %v5289 = vunpack.c.l.b16 %v1208
    %v5290 = vunpack.c.h.b16 %v1208
    %v5291 = vunpack.c.l.b16 %v1209
    %v5292 = vunpack.c.h.b16 %v1209
    %v5293 = vunpack.c.l.b16 %v1210
    %v5294 = vunpack.c.h.b16 %v1210
    %v5295 = vunpack.c.l.b16 %v1211
    %v5296 = vunpack.c.h.b16 %v1211
    %v5297 = vunpack.c.l.b16 %v1212
    %v5298 = vunpack.c.h.b16 %v1212
    %v5299 = vunpack.c.l.b16 %v1213
    %v5300 = vunpack.c.h.b16 %v1213
    %v5301 = vunpack.c.l.b16 %v1214
    %v5302 = vunpack.c.h.b16 %v1214
    %v5303 = vunpack.c.l.b16 %v1215
    %v5304 = vunpack.c.h.b16 %v1215
    %v5305 = vunpack.c.l.b16 %v1216
    %v5306 = vunpack.c.h.b16 %v1216
    %v5307 = vunpack.c.l.b16 %v1217
    %v5308 = vunpack.c.h.b16 %v1217
    %v5309 = vunpack.c.l.b16 %v1218
    %v5310 = vunpack.c.h.b16 %v1218
    %v5311 = vunpack.c.l.b16 %v1219
    %v5312 = vunpack.c.h.b16 %v1219
    %v5313 = vunpack.c.l.b16 %v1220
    %v5314 = vunpack.c.h.b16 %v1220
    %v5315 = vunpack.c.l.b16 %v1221
    %v5316 = vunpack.c.h.b16 %v1221
    %v5317 = vunpack.c.l.b16 %v1222
    %v5318 = vunpack.c.h.b16 %v1222
    %v5319 = vunpack.c.l.b16 %v1223
    %v5320 = vunpack.c.h.b16 %v1223
    %v5321 = vunpack.c.l.b16 %v1224
    %v5322 = vunpack.c.h.b16 %v1224
    %v5323 = vunpack.c.l.b16 %v1225
    %v5324 = vunpack.c.h.b16 %v1225
    %v5325 = vunpack.c.l.b16 %v1226
    %v5326 = vunpack.c.h.b16 %v1226
    %v5327 = vunpack.c.l.b16 %v1227
    %v5328 = vunpack.c.h.b16 %v1227
    %v5329 = vunpack.c.l.b16 %v1228
    %v5330 = vunpack.c.h.b16 %v1228
    %v5331 = vunpack.c.l.b16 %v1229
    %v5332 = vunpack.c.h.b16 %v1229
    %v5333 = vunpack.c.l.b16 %v1230
    %v5334 = vunpack.c.h.b16 %v1230
    %v5335 = vunpack.c.l.b16 %v1231
    %v5336 = vunpack.c.h.b16 %v1231
    %v5337 = vunpack.c.l.b16 %v1232
    %v5338 = vunpack.c.h.b16 %v1232
    %v5339 = vunpack.c.l.b16 %v1233
    %v5340 = vunpack.c.h.b16 %v1233
    %v5341 = vunpack.c.l.b16 %v1234
    %v5342 = vunpack.c.h.b16 %v1234
    %v5343 = vunpack.c.l.b16 %v1235
    %v5344 = vunpack.c.h.b16 %v1235
    %v5345 = vunpack.c.l.b16 %v1236
    %v5346 = vunpack.c.h.b16 %v1236
    %v5347 = vunpack.c.l.b16 %v1237
    %v5348 = vunpack.c.h.b16 %v1237
    %v5349 = vunpack.c.l.b16 %v1238
    %v5350 = vunpack.c.h.b16 %v1238
    %v5351 = vunpack.c.l.b16 %v1239
    %v5352 = vunpack.c.h.b16 %v1239
    %v5353 = vunpack.c.l.b16 %v1240
    %v5354 = vunpack.c.h.b16 %v1240
    %v5355 = vunpack.c.l.b16 %v1241
    %v5356 = vunpack.c.h.b16 %v1241
    %v5357 = vunpack.c.l.b16 %v1242
    %v5358 = vunpack.c.h.b16 %v1242
    %v5359 = vunpack.c.l.b16 %v1243
    %v5360 = vunpack.c.h.b16 %v1243
    %v5361 = vunpack.c.l.b16 %v1244
    %v5362 = vunpack.c.h.b16 %v1244
    %v5363 = vunpack.c.l.b16 %v1245
    %v5364 = vunpack.c.h.b16 %v1245
    %v5365 = vunpack.c.l.b16 %v1246
    %v5366 = vunpack.c.h.b16 %v1246
    %v5367 = vunpack.c.l.b16 %v1247
    %v5368 = vunpack.c.h.b16 %v1247
    %v5369 = vunpack.c.l.b16 %v1248
    %v5370 = vunpack.c.h.b16 %v1248
    %v5371 = vunpack.c.l.b16 %v1249
    %v5372 = vunpack.c.h.b16 %v1249
    %v5373 = vunpack.c.l.b16 %v1250
    %v5374 = vunpack.c.h.b16 %v1250
    %v5375 = vunpack.c.l.b16 %v1251
    %v5376 = vunpack.c.h.b16 %v1251
    %v5377 = vunpack.c.l.b16 %v1252
    %v5378 = vunpack.c.h.b16 %v1252
    %v5379 = vunpack.c.l.b16 %v1253
    %v5380 = vunpack.c.h.b16 %v1253
    %v5381 = vunpack.c.l.b16 %v1254
    %v5382 = vunpack.c.h.b16 %v1254
    %v5383 = vunpack.c.l.b16 %v1255
    %v5384 = vunpack.c.h.b16 %v1255
    %v5385 = vunpack.c.l.b16 %v1256
    %v5386 = vunpack.c.h.b16 %v1256
    %v5387 = vunpack.c.l.b16 %v1257
    %v5388 = vunpack.c.h.b16 %v1257
    %v5389 = vunpack.c.l.b16 %v1258
    %v5390 = vunpack.c.h.b16 %v1258
    %v5391 = vunpack.c.l.b16 %v1259
    %v5392 = vunpack.c.h.b16 %v1259
    %v5393 = vunpack.c.l.b16 %v1260
    %v5394 = vunpack.c.h.b16 %v1260
    %v5395 = vunpack.c.l.b16 %v1261
    %v5396 = vunpack.c.h.b16 %v1261
    %v5397 = vunpack.c.l.b16 %v1262
    %v5398 = vunpack.c.h.b16 %v1262
    %v5399 = vunpack.c.l.b16 %v1263
    %v5400 = vunpack.c.h.b16 %v1263
    %v5401 = vunpack.c.l.b16 %v1264
    %v5402 = vunpack.c.h.b16 %v1264
    %v5403 = vunpack.c.l.b16 %v1265
    %v5404 = vunpack.c.h.b16 %v1265
    %v5405 = vunpack.c.l.b16 %v1266
    %v5406 = vunpack.c.h.b16 %v1266
    %v5407 = vunpack.c.l.b16 %v1267
    %v5408 = vunpack.c.h.b16 %v1267
    %v5409 = vunpack.c.l.b16 %v1268
    %v5410 = vunpack.c.h.b16 %v1268
    %v5411 = vunpack.c.l.b16 %v1269
    %v5412 = vunpack.c.h.b16 %v1269
    %v5413 = vunpack.c.l.b16 %v1270
    %v5414 = vunpack.c.h.b16 %v1270
    %v5415 = vunpack.c.l.b16 %v1271
    %v5416 = vunpack.c.h.b16 %v1271
    %v5417 = vunpack.c.l.b16 %v1272
    %v5418 = vunpack.c.h.b16 %v1272
    %v5419 = vunpack.c.l.b16 %v1273
    %v5420 = vunpack.c.h.b16 %v1273
    %v5421 = vunpack.c.l.b16 %v1274
    %v5422 = vunpack.c.h.b16 %v1274
    %v5423 = vunpack.c.l.b16 %v1275
    %v5424 = vunpack.c.h.b16 %v1275
    %v5425 = vunpack.c.l.b16 %v1276
    %v5426 = vunpack.c.h.b16 %v1276
    %v5427 = vunpack.c.l.b16 %v1277
    %v5428 = vunpack.c.h.b16 %v1277
    %v5429 = vunpack.c.l.b16 %v1278
    %v5430 = vunpack.c.h.b16 %v1278
    %v5431 = vunpack.c.l.b16 %v1279
    %v5432 = vunpack.c.h.b16 %v1279
    %v5433 = vunpack.c.l.b16 %v1280
    %v5434 = vunpack.c.h.b16 %v1280
    %v5435 = vunpack.c.l.b16 %v1281
    %v5436 = vunpack.c.h.b16 %v1281
    %v5437 = vunpack.c.l.b16 %v1282
    %v5438 = vunpack.c.h.b16 %v1282
    %v5439 = vunpack.c.l.b16 %v1283
    %v5440 = vunpack.c.h.b16 %v1283
    %v5441 = vunpack.c.l.b16 %v1284
    %v5442 = vunpack.c.h.b16 %v1284
    %v5443 = vunpack.c.l.b16 %v1285
    %v5444 = vunpack.c.h.b16 %v1285
    %v5445 = vunpack.c.l.b16 %v1286
    %v5446 = vunpack.c.h.b16 %v1286
    %v5447 = vunpack.c.l.b16 %v1287
    %v5448 = vunpack.c.h.b16 %v1287
    %v5449 = vunpack.c.l.b16 %v1288
    %v5450 = vunpack.c.h.b16 %v1288
    %v5451 = vunpack.c.l.b16 %v1289
    %v5452 = vunpack.c.h.b16 %v1289
    %v5453 = vunpack.c.l.b16 %v1290
    %v5454 = vunpack.c.h.b16 %v1290
    %v5455 = vunpack.c.l.b16 %v1291
    %v5456 = vunpack.c.h.b16 %v1291
    %v5457 = vunpack.c.l.b16 %v1292
    %v5458 = vunpack.c.h.b16 %v1292
    %v5459 = vunpack.c.l.b16 %v1293
    %v5460 = vunpack.c.h.b16 %v1293
    %v5461 = vunpack.c.l.b16 %v1294
    %v5462 = vunpack.c.h.b16 %v1294
    %v5463 = vunpack.c.l.b16 %v1295
    %v5464 = vunpack.c.h.b16 %v1295
    %v5465 = vunpack.c.l.b16 %v1296
    %v5466 = vunpack.c.h.b16 %v1296
    %v5467 = vunpack.c.l.b16 %v1297
    %v5468 = vunpack.c.h.b16 %v1297
    %v5469 = vunpack.c.l.b16 %v1298
    %v5470 = vunpack.c.h.b16 %v1298
    %v5471 = vunpack.c.l.b16 %v1299
    %v5472 = vunpack.c.h.b16 %v1299
    %v5473 = vunpack.c.l.b16 %v1300
    %v5474 = vunpack.c.h.b16 %v1300
    %v5475 = vunpack.c.l.b16 %v1301
    %v5476 = vunpack.c.h.b16 %v1301
    %v5477 = vunpack.c.l.b16 %v1302
    %v5478 = vunpack.c.h.b16 %v1302
    %v5479 = vunpack.c.l.b16 %v1303
    %v5480 = vunpack.c.h.b16 %v1303
    %v5481 = vunpack.c.l.b16 %v1304
    %v5482 = vunpack.c.h.b16 %v1304
    %v5483 = vunpack.c.l.b16 %v1305
    %v5484 = vunpack.c.h.b16 %v1305
    %v5485 = vunpack.c.l.b16 %v1306
    %v5486 = vunpack.c.h.b16 %v1306
    %v5487 = vunpack.c.l.b16 %v1307
    %v5488 = vunpack.c.h.b16 %v1307
    %v5489 = vunpack.c.l.b16 %v1308
    %v5490 = vunpack.c.h.b16 %v1308
    %v5491 = vunpack.c.l.b16 %v1309
    %v5492 = vunpack.c.h.b16 %v1309
    %v5493 = vunpack.c.l.b16 %v1310
    %v5494 = vunpack.c.h.b16 %v1310
    %v5495 = vunpack.c.l.b16 %v1311
    %v5496 = vunpack.c.h.b16 %v1311
    %v5497 = vunpack.c.l.b16 %v1312
    %v5498 = vunpack.c.h.b16 %v1312
    %v5499 = vunpack.c.l.b16 %v1313
    %v5500 = vunpack.c.h.b16 %v1313
    %v5501 = vunpack.c.l.b16 %v1314
    %v5502 = vunpack.c.h.b16 %v1314
    %v5503 = vunpack.c.l.b16 %v1315
    %v5504 = vunpack.c.h.b16 %v1315
    %v5505 = vunpack.c.l.b16 %v1316
    %v5506 = vunpack.c.h.b16 %v1316
    %v5507 = vunpack.c.l.b16 %v1317
    %v5508 = vunpack.c.h.b16 %v1317
    %v5509 = vunpack.c.l.b16 %v1318
    %v5510 = vunpack.c.h.b16 %v1318
    %v5511 = vunpack.c.l.b16 %v1319
    %v5512 = vunpack.c.h.b16 %v1319
    %v5513 = vunpack.c.l.b16 %v1320
    %v5514 = vunpack.c.h.b16 %v1320
    %v5515 = vunpack.c.l.b16 %v1321
    %v5516 = vunpack.c.h.b16 %v1321
    %v5517 = vunpack.c.l.b16 %v1322
    %v5518 = vunpack.c.h.b16 %v1322
    %v5519 = vunpack.c.l.b16 %v1323
    %v5520 = vunpack.c.h.b16 %v1323
    %v5521 = vunpack.c.l.b16 %v1324
    %v5522 = vunpack.c.h.b16 %v1324
    %v5523 = vunpack.c.l.b16 %v1325
    %v5524 = vunpack.c.h.b16 %v1325
    %v5525 = vunpack.c.l.b16 %v1326
    %v5526 = vunpack.c.h.b16 %v1326
    %v5527 = vunpack.c.l.b16 %v1327
    %v5528 = vunpack.c.h.b16 %v1327
    %v5529 = vunpack.c.l.b16 %v1328
    %v5530 = vunpack.c.h.b16 %v1328
    %v5531 = vunpack.c.l.b16 %v1329
    %v5532 = vunpack.c.h.b16 %v1329
    %v5533 = vunpack.c.l.b16 %v1330
    %v5534 = vunpack.c.h.b16 %v1330
    %v5535 = vunpack.c.l.b16 %v1331
    %v5536 = vunpack.c.h.b16 %v1331
    %v5537 = vunpack.c.l.b16 %v1332
    %v5538 = vunpack.c.h.b16 %v1332
    %v5539 = vunpack.c.l.b16 %v1333
    %v5540 = vunpack.c.h.b16 %v1333
    %v5541 = vunpack.c.l.b16 %v1334
    %v5542 = vunpack.c.h.b16 %v1334
    %v5543 = vunpack.c.l.b16 %v1335
    %v5544 = vunpack.c.h.b16 %v1335
    %v5545 = vunpack.c.l.b16 %v1336
    %v5546 = vunpack.c.h.b16 %v1336
    %v5547 = vunpack.c.l.b16 %v1337
    %v5548 = vunpack.c.h.b16 %v1337
    %v5549 = vunpack.c.l.b16 %v1338
    %v5550 = vunpack.c.h.b16 %v1338
    %v5551 = vunpack.c.l.b16 %v1339
    %v5552 = vunpack.c.h.b16 %v1339
    %v5553 = vunpack.c.l.b16 %v1340
    %v5554 = vunpack.c.h.b16 %v1340
    %v5555 = vunpack.c.l.b16 %v1341
    %v5556 = vunpack.c.h.b16 %v1341
    %v5557 = vunpack.c.l.b16 %v1342
    %v5558 = vunpack.c.h.b16 %v1342
    %v5559 = vunpack.c.l.b16 %v1343
    %v5560 = vunpack.c.h.b16 %v1343
    %v5561 = vunpack.c.l.b16 %v1344
    %v5562 = vunpack.c.h.b16 %v1344
    %v5563 = vunpack.c.l.b16 %v1345
    %v5564 = vunpack.c.h.b16 %v1345
    %v5565 = vunpack.c.l.b16 %v1346
    %v5566 = vunpack.c.h.b16 %v1346
    %v5567 = vunpack.c.l.b16 %v1347
    %v5568 = vunpack.c.h.b16 %v1347
    %v5569 = vunpack.c.l.b16 %v1348
    %v5570 = vunpack.c.h.b16 %v1348
    %v5571 = vunpack.c.l.b16 %v1349
    %v5572 = vunpack.c.h.b16 %v1349
    %v5573 = vunpack.c.l.b16 %v1350
    %v5574 = vunpack.c.h.b16 %v1350
    %v5575 = vunpack.c.l.b16 %v1351
    %v5576 = vunpack.c.h.b16 %v1351
    %v5577 = vunpack.c.l.b16 %v1352
    %v5578 = vunpack.c.h.b16 %v1352
    %v5579 = vunpack.c.l.b16 %v1353
    %v5580 = vunpack.c.h.b16 %v1353
    %v5581 = vunpack.c.l.b16 %v1354
    %v5582 = vunpack.c.h.b16 %v1354
    %v5583 = vunpack.c.l.b16 %v1355
    %v5584 = vunpack.c.h.b16 %v1355
    %v5585 = vunpack.c.l.b16 %v1356
    %v5586 = vunpack.c.h.b16 %v1356
    %v5587 = vunpack.c.l.b16 %v1357
    %v5588 = vunpack.c.h.b16 %v1357
    %v5589 = vunpack.c.l.b16 %v1358
    %v5590 = vunpack.c.h.b16 %v1358
    %v5591 = vunpack.c.l.b16 %v1359
    %v5592 = vunpack.c.h.b16 %v1359
    %v5593 = vunpack.c.l.b16 %v1360
    %v5594 = vunpack.c.h.b16 %v1360
    %v5595 = vunpack.c.l.b16 %v1361
    %v5596 = vunpack.c.h.b16 %v1361
    %v5597 = vunpack.c.l.b16 %v1362
    %v5598 = vunpack.c.h.b16 %v1362
    %v5599 = vunpack.c.l.b16 %v1363
    %v5600 = vunpack.c.h.b16 %v1363
    %v5601 = vunpack.c.l.b16 %v1364
    %v5602 = vunpack.c.h.b16 %v1364
    %v5603 = vunpack.c.l.b16 %v1365
    %v5604 = vunpack.c.h.b16 %v1365
    %v5605 = vunpack.c.l.b16 %v1366
    %v5606 = vunpack.c.h.b16 %v1366
    %v5607 = vunpack.c.l.b16 %v1367
    %v5608 = vunpack.c.h.b16 %v1367
    %v5609 = vunpack.c.l.b16 %v1368
    %v5610 = vunpack.c.h.b16 %v1368
    %v5611 = vunpack.c.l.b16 %v1369
    %v5612 = vunpack.c.h.b16 %v1369
    %v5613 = vunpack.c.l.b16 %v1370
    %v5614 = vunpack.c.h.b16 %v1370
    %v5615 = vunpack.c.l.b16 %v1371
    %v5616 = vunpack.c.h.b16 %v1371
    %v5617 = vunpack.c.l.b16 %v1372
    %v5618 = vunpack.c.h.b16 %v1372
    %v5619 = vunpack.c.l.b16 %v1373
    %v5620 = vunpack.c.h.b16 %v1373
    %v5621 = vunpack.c.l.b16 %v1374
    %v5622 = vunpack.c.h.b16 %v1374
    %v5623 = vunpack.c.l.b16 %v1375
    %v5624 = vunpack.c.h.b16 %v1375
    %v5625 = vunpack.c.l.b16 %v1376
    %v5626 = vunpack.c.h.b16 %v1376
    %v5627 = vunpack.c.l.b16 %v1377
    %v5628 = vunpack.c.h.b16 %v1377
    %v5629 = vunpack.c.l.b16 %v1378
    %v5630 = vunpack.c.h.b16 %v1378
    %v5631 = vunpack.c.l.b16 %v1379
    %v5632 = vunpack.c.h.b16 %v1379
    %v5633 = vunpack.c.l.b16 %v1380
    %v5634 = vunpack.c.h.b16 %v1380
    %v5635 = vunpack.c.l.b16 %v1381
    %v5636 = vunpack.c.h.b16 %v1381
    %v5637 = vunpack.c.l.b16 %v1382
    %v5638 = vunpack.c.h.b16 %v1382
    %v5639 = vunpack.c.l.b16 %v1383
    %v5640 = vunpack.c.h.b16 %v1383
    %v5641 = vunpack.c.l.b16 %v1384
    %v5642 = vunpack.c.h.b16 %v1384
    %v5643 = vunpack.c.l.b16 %v1385
    %v5644 = vunpack.c.h.b16 %v1385
    %v5645 = vunpack.c.l.b16 %v1386
    %v5646 = vunpack.c.h.b16 %v1386
    %v5647 = vunpack.c.l.b16 %v1387
    %v5648 = vunpack.c.h.b16 %v1387
    %v5649 = vunpack.c.l.b16 %v1388
    %v5650 = vunpack.c.h.b16 %v1388
    %v5651 = vunpack.c.l.b16 %v1389
    %v5652 = vunpack.c.h.b16 %v1389
    %v5653 = vunpack.c.l.b16 %v1390
    %v5654 = vunpack.c.h.b16 %v1390
    %v5655 = vunpack.c.l.b16 %v1391
    %v5656 = vunpack.c.h.b16 %v1391
    %v5657 = vunpack.c.l.b16 %v1392
    %v5658 = vunpack.c.h.b16 %v1392
    %v5659 = vunpack.c.l.b16 %v1393
    %v5660 = vunpack.c.h.b16 %v1393
    %v5661 = vunpack.c.l.b16 %v1394
    %v5662 = vunpack.c.h.b16 %v1394
    %v5663 = vunpack.c.l.b16 %v1395
    %v5664 = vunpack.c.h.b16 %v1395
    %v5665 = vunpack.c.l.b16 %v1396
    %v5666 = vunpack.c.h.b16 %v1396
    %v5667 = vunpack.c.l.b16 %v1397
    %v5668 = vunpack.c.h.b16 %v1397
    %v5669 = vunpack.c.l.b16 %v1398
    %v5670 = vunpack.c.h.b16 %v1398
    %v5671 = vunpack.c.l.b16 %v1399
    %v5672 = vunpack.c.h.b16 %v1399
    %v5673 = vunpack.c.l.b16 %v1400
    %v5674 = vunpack.c.h.b16 %v1400
    %v5675 = vunpack.c.l.b16 %v1401
    %v5676 = vunpack.c.h.b16 %v1401
    %v5677 = vunpack.c.l.b16 %v1402
    %v5678 = vunpack.c.h.b16 %v1402
    %v5679 = vunpack.c.l.b16 %v1403
    %v5680 = vunpack.c.h.b16 %v1403
    %v5681 = vunpack.c.l.b16 %v1404
    %v5682 = vunpack.c.h.b16 %v1404
    %v5683 = vunpack.c.l.b16 %v1405
    %v5684 = vunpack.c.h.b16 %v1405
    %v5685 = vunpack.c.l.b16 %v1406
    %v5686 = vunpack.c.h.b16 %v1406
    %v5687 = vunpack.c.l.b16 %v1407
    %v5688 = vunpack.c.h.b16 %v1407
    %v5689 = vunpack.c.l.b16 %v1408
    %v5690 = vunpack.c.h.b16 %v1408
    %v5691 = vunpack.c.l.b16 %v1409
    %v5692 = vunpack.c.h.b16 %v1409
    %v5693 = vunpack.c.l.b16 %v1410
    %v5694 = vunpack.c.h.b16 %v1410
    %v5695 = vunpack.c.l.b16 %v1411
    %v5696 = vunpack.c.h.b16 %v1411
    %v5697 = vunpack.c.l.b16 %v1412
    %v5698 = vunpack.c.h.b16 %v1412
    %v5699 = vunpack.c.l.b16 %v1413
    %v5700 = vunpack.c.h.b16 %v1413
    %v5701 = vunpack.c.l.b16 %v1414
    %v5702 = vunpack.c.h.b16 %v1414
    %v5703 = vunpack.c.l.b16 %v1415
    %v5704 = vunpack.c.h.b16 %v1415
    %v5705 = vunpack.c.l.b16 %v1416
    %v5706 = vunpack.c.h.b16 %v1416
    %v5707 = vunpack.c.l.b16 %v1417
    %v5708 = vunpack.c.h.b16 %v1417
    %v5709 = vunpack.c.l.b16 %v1418
    %v5710 = vunpack.c.h.b16 %v1418
    %v5711 = vunpack.c.l.b16 %v1419
    %v5712 = vunpack.c.h.b16 %v1419
    %v5713 = vunpack.c.l.b16 %v1420
    %v5714 = vunpack.c.h.b16 %v1420
    %v5715 = vunpack.c.l.b16 %v1421
    %v5716 = vunpack.c.h.b16 %v1421
    %v5717 = vunpack.c.l.b16 %v1422
    %v5718 = vunpack.c.h.b16 %v1422
    %v5719 = vunpack.c.l.b16 %v1423
    %v5720 = vunpack.c.h.b16 %v1423
    %v5721 = vunpack.c.l.b16 %v1424
    %v5722 = vunpack.c.h.b16 %v1424
    %v5723 = vunpack.c.l.b16 %v1425
    %v5724 = vunpack.c.h.b16 %v1425
    %v5725 = vunpack.c.l.b16 %v1426
    %v5726 = vunpack.c.h.b16 %v1426
    %v5727 = vunpack.c.l.b16 %v1427
    %v5728 = vunpack.c.h.b16 %v1427
    %v5729 = vunpack.c.l.b16 %v1428
    %v5730 = vunpack.c.h.b16 %v1428
    %v5731 = vunpack.c.l.b16 %v1429
    %v5732 = vunpack.c.h.b16 %v1429
    %v5733 = vunpack.c.l.b16 %v1430
    %v5734 = vunpack.c.h.b16 %v1430
    %v5735 = vunpack.c.l.b16 %v1431
    %v5736 = vunpack.c.h.b16 %v1431
    %v5737 = vunpack.c.l.b16 %v1432
    %v5738 = vunpack.c.h.b16 %v1432
    %v5739 = vunpack.c.l.b16 %v1433
    %v5740 = vunpack.c.h.b16 %v1433
    %v5741 = vunpack.c.l.b16 %v1434
    %v5742 = vunpack.c.h.b16 %v1434
    %v5743 = vunpack.c.l.b16 %v1435
    %v5744 = vunpack.c.h.b16 %v1435
    %v5745 = vunpack.c.l.b16 %v1436
    %v5746 = vunpack.c.h.b16 %v1436
    %v5747 = vunpack.c.l.b16 %v1437
    %v5748 = vunpack.c.h.b16 %v1437
    %v5749 = vunpack.c.l.b16 %v1438
    %v5750 = vunpack.c.h.b16 %v1438
    %v5751 = vunpack.c.l.b16 %v1439
    %v5752 = vunpack.c.h.b16 %v1439
    %v5753 = vunpack.c.l.b16 %v1440
    %v5754 = vunpack.c.h.b16 %v1440
    %v5755 = vunpack.c.l.b16 %v1441
    %v5756 = vunpack.c.h.b16 %v1441
    %v5757 = vunpack.c.l.b16 %v1442
    %v5758 = vunpack.c.h.b16 %v1442
    %v5759 = vunpack.c.l.b16 %v1443
    %v5760 = vunpack.c.h.b16 %v1443
    %v5761 = vunpack.c.l.b16 %v1444
    %v5762 = vunpack.c.h.b16 %v1444
    %v5763 = vunpack.c.l.b16 %v1445
    %v5764 = vunpack.c.h.b16 %v1445
    %v5765 = vunpack.c.l.b16 %v1446
    %v5766 = vunpack.c.h.b16 %v1446
    %v5767 = vunpack.c.l.b16 %v1447
    %v5768 = vunpack.c.h.b16 %v1447
    %v5769 = vunpack.c.l.b16 %v1448
    %v5770 = vunpack.c.h.b16 %v1448
    %v5771 = vunpack.c.l.b16 %v1449
    %v5772 = vunpack.c.h.b16 %v1449
    %v5773 = vunpack.c.l.b16 %v1450
    %v5774 = vunpack.c.h.b16 %v1450
    %v5775 = vunpack.c.l.b16 %v1451
    %v5776 = vunpack.c.h.b16 %v1451
    %v5777 = vunpack.c.l.b16 %v1452
    %v5778 = vunpack.c.h.b16 %v1452
    %v5779 = vunpack.c.l.b16 %v1453
    %v5780 = vunpack.c.h.b16 %v1453
    %v5781 = vunpack.c.l.b16 %v1454
    %v5782 = vunpack.c.h.b16 %v1454
    %v5783 = vunpack.c.l.b16 %v1455
    %v5784 = vunpack.c.h.b16 %v1455
    %v5785 = vunpack.c.l.b16 %v1456
    %v5786 = vunpack.c.h.b16 %v1456
    %v5787 = vunpack.c.l.b16 %v1457
    %v5788 = vunpack.c.h.b16 %v1457
    %v5789 = vunpack.c.l.b16 %v1458
    %v5790 = vunpack.c.h.b16 %v1458
    %v5791 = vunpack.c.l.b16 %v1459
    %v5792 = vunpack.c.h.b16 %v1459
    %v5793 = vunpack.c.l.b16 %v1460
    %v5794 = vunpack.c.h.b16 %v1460
    %v5795 = vunpack.c.l.b16 %v1461
    %v5796 = vunpack.c.h.b16 %v1461
    %v5797 = vunpack.c.l.b16 %v1462
    %v5798 = vunpack.c.h.b16 %v1462
    %v5799 = vunpack.c.l.b16 %v1463
    %v5800 = vunpack.c.h.b16 %v1463
    %v5801 = vunpack.c.l.b16 %v1464
    %v5802 = vunpack.c.h.b16 %v1464
    %v5803 = vunpack.c.l.b16 %v1465
    %v5804 = vunpack.c.h.b16 %v1465
    %v5805 = vunpack.c.l.b16 %v1466
    %v5806 = vunpack.c.h.b16 %v1466
    %v5807 = vunpack.c.l.b16 %v1467
    %v5808 = vunpack.c.h.b16 %v1467
    %v5809 = vunpack.c.l.b16 %v1468
    %v5810 = vunpack.c.h.b16 %v1468
    %v5811 = vunpack.c.l.b16 %v1469
    %v5812 = vunpack.c.h.b16 %v1469
    %v5813 = vunpack.c.l.b16 %v1470
    %v5814 = vunpack.c.h.b16 %v1470
    %v5815 = vunpack.c.l.b16 %v1471
    %v5816 = vunpack.c.h.b16 %v1471
    %v5817 = vunpack.c.l.b16 %v1472
    %v5818 = vunpack.c.h.b16 %v1472
    %v5819 = vunpack.c.l.b16 %v1473
    %v5820 = vunpack.c.h.b16 %v1473
    %v5821 = vunpack.c.l.b16 %v1474
    %v5822 = vunpack.c.h.b16 %v1474
    %v5823 = vunpack.c.l.b16 %v1475
    %v5824 = vunpack.c.h.b16 %v1475
    %v5825 = vunpack.c.l.b16 %v1476
    %v5826 = vunpack.c.h.b16 %v1476
    %v5827 = vunpack.c.l.b16 %v1477
    %v5828 = vunpack.c.h.b16 %v1477
    %v5829 = vunpack.c.l.b16 %v1478
    %v5830 = vunpack.c.h.b16 %v1478
    %v5831 = vunpack.c.l.b16 %v1479
    %v5832 = vunpack.c.h.b16 %v1479
    %v5833 = vunpack.c.l.b16 %v1480
    %v5834 = vunpack.c.h.b16 %v1480
    %v5835 = vunpack.c.l.b16 %v1481
    %v5836 = vunpack.c.h.b16 %v1481
    %v5837 = vunpack.c.l.b16 %v1482
    %v5838 = vunpack.c.h.b16 %v1482
    %v5839 = vunpack.c.l.b16 %v1483
    %v5840 = vunpack.c.h.b16 %v1483
    %v5841 = vunpack.c.l.b16 %v1484
    %v5842 = vunpack.c.h.b16 %v1484
    %v5843 = vunpack.c.l.b16 %v1485
    %v5844 = vunpack.c.h.b16 %v1485
    %v5845 = vunpack.c.l.b16 %v1486
    %v5846 = vunpack.c.h.b16 %v1486
    %v5847 = vunpack.c.l.b16 %v1487
    %v5848 = vunpack.c.h.b16 %v1487
    %v5849 = vunpack.c.l.b16 %v1488
    %v5850 = vunpack.c.h.b16 %v1488
    %v5851 = vunpack.c.l.b16 %v1489
    %v5852 = vunpack.c.h.b16 %v1489
    %v5853 = vunpack.c.l.b16 %v1490
    %v5854 = vunpack.c.h.b16 %v1490
    %v5855 = vunpack.c.l.b16 %v1491
    %v5856 = vunpack.c.h.b16 %v1491
    %v5857 = vunpack.c.l.b16 %v1492
    %v5858 = vunpack.c.h.b16 %v1492
    %v5859 = vunpack.c.l.b16 %v1493
    %v5860 = vunpack.c.h.b16 %v1493
    %v5861 = vunpack.c.l.b16 %v1494
    %v5862 = vunpack.c.h.b16 %v1494
    %v5863 = vunpack.c.l.b16 %v1495
    %v5864 = vunpack.c.h.b16 %v1495
    %v5865 = vunpack.c.l.b16 %v1496
    %v5866 = vunpack.c.h.b16 %v1496
    %v5867 = vunpack.c.l.b16 %v1497
    %v5868 = vunpack.c.h.b16 %v1497
    %v5869 = vunpack.c.l.b16 %v1498
    %v5870 = vunpack.c.h.b16 %v1498
    %v5871 = vunpack.c.l.b16 %v1499
    %v5872 = vunpack.c.h.b16 %v1499
    %v5873 = vunpack.c.l.b16 %v1500
    %v5874 = vunpack.c.h.b16 %v1500
    %v5875 = vunpack.c.l.b16 %v1501
    %v5876 = vunpack.c.h.b16 %v1501
    %v5877 = vunpack.c.l.b16 %v1502
    %v5878 = vunpack.c.h.b16 %v1502
    %v5879 = vunpack.c.l.b16 %v1503
    %v5880 = vunpack.c.h.b16 %v1503
    %v5881 = vunpack.c.l.b16 %v1504
    %v5882 = vunpack.c.h.b16 %v1504
    %v5883 = vunpack.c.l.b16 %v1505
    %v5884 = vunpack.c.h.b16 %v1505
    %v5885 = vunpack.c.l.b16 %v1506
    %v5886 = vunpack.c.h.b16 %v1506
    %v5887 = vunpack.c.l.b16 %v1507
    %v5888 = vunpack.c.h.b16 %v1507
    %v5889 = vunpack.c.l.b16 %v1508
    %v5890 = vunpack.c.h.b16 %v1508
    %v5891 = vunpack.c.l.b16 %v1509
    %v5892 = vunpack.c.h.b16 %v1509
    %v5893 = vunpack.c.l.b16 %v1510
    %v5894 = vunpack.c.h.b16 %v1510
    %v5895 = vunpack.c.l.b16 %v1511
    %v5896 = vunpack.c.h.b16 %v1511
    %v5897 = vunpack.c.l.b16 %v1512
    %v5898 = vunpack.c.h.b16 %v1512
    %v5899 = vunpack.c.l.b16 %v1513
    %v5900 = vunpack.c.h.b16 %v1513
    %v5901 = vunpack.c.l.b16 %v1514
    %v5902 = vunpack.c.h.b16 %v1514
    %v5903 = vunpack.c.l.b16 %v1515
    %v5904 = vunpack.c.h.b16 %v1515
    %v5905 = vunpack.c.l.b16 %v1516
    %v5906 = vunpack.c.h.b16 %v1516
    %v5907 = vunpack.c.l.b16 %v1517
    %v5908 = vunpack.c.h.b16 %v1517
    %v5909 = vunpack.c.l.b16 %v1518
    %v5910 = vunpack.c.h.b16 %v1518
    %v5911 = vunpack.c.l.b16 %v1519
    %v5912 = vunpack.c.h.b16 %v1519
    %v5913 = vunpack.c.l.b16 %v1520
    %v5914 = vunpack.c.h.b16 %v1520
    %v5915 = vunpack.c.l.b16 %v1521
    %v5916 = vunpack.c.h.b16 %v1521
    %v5917 = vunpack.c.l.b16 %v1522
    %v5918 = vunpack.c.h.b16 %v1522
    %v5919 = vunpack.c.l.b16 %v1523
    %v5920 = vunpack.c.h.b16 %v1523
    %v5921 = vunpack.c.l.b16 %v1524
    %v5922 = vunpack.c.h.b16 %v1524
    %v5923 = vunpack.c.l.b16 %v1525
    %v5924 = vunpack.c.h.b16 %v1525
    %v5925 = vunpack.c.l.b16 %v1526
    %v5926 = vunpack.c.h.b16 %v1526
    %v5927 = vunpack.c.l.b16 %v1527
    %v5928 = vunpack.c.h.b16 %v1527
    %v5929 = vunpack.c.l.b16 %v1528
    %v5930 = vunpack.c.h.b16 %v1528
    %v5931 = vunpack.c.l.b16 %v1529
    %v5932 = vunpack.c.h.b16 %v1529
    %v5933 = vunpack.c.l.b16 %v1530
    %v5934 = vunpack.c.h.b16 %v1530
    %v5935 = vunpack.c.l.b16 %v1531
    %v5936 = vunpack.c.h.b16 %v1531
    %v5937 = vunpack.c.l.b16 %v1532
    %v5938 = vunpack.c.h.b16 %v1532
    %v5939 = vunpack.c.l.b16 %v1533
    %v5940 = vunpack.c.h.b16 %v1533
    %v5941 = vunpack.c.l.b16 %v1534
    %v5942 = vunpack.c.h.b16 %v1534
    %v5943 = vunpack.c.l.b16 %v1535
    %v5944 = vunpack.c.h.b16 %v1535
    %v5945 = vunpack.c.l.b16 %v1536
    %v5946 = vunpack.c.h.b16 %v1536
    %v5947 = vunpack.c.l.b16 %v1537
    %v5948 = vunpack.c.h.b16 %v1537
    %v5949 = vunpack.c.l.b16 %v1538
    %v5950 = vunpack.c.h.b16 %v1538
    %v5951 = vunpack.c.l.b16 %v1539
    %v5952 = vunpack.c.h.b16 %v1539
    %v5953 = vunpack.c.l.b16 %v1540
    %v5954 = vunpack.c.h.b16 %v1540
    %v5955 = vunpack.c.l.b16 %v1541
    %v5956 = vunpack.c.h.b16 %v1541
    %v5957 = vunpack.c.l.b16 %v1542
    %v5958 = vunpack.c.h.b16 %v1542
    %v5959 = vunpack.c.l.b16 %v1543
    %v5960 = vunpack.c.h.b16 %v1543
    %v5961 = vunpack.c.l.b16 %v1544
    %v5962 = vunpack.c.h.b16 %v1544
    %v5963 = vunpack.c.l.b16 %v1545
    %v5964 = vunpack.c.h.b16 %v1545
    %v5965 = vunpack.c.l.b16 %v1546
    %v5966 = vunpack.c.h.b16 %v1546
    %v5967 = vunpack.c.l.b16 %v1547
    %v5968 = vunpack.c.h.b16 %v1547
    %v5969 = vunpack.c.l.b16 %v1548
    %v5970 = vunpack.c.h.b16 %v1548
    %v5971 = vunpack.c.l.b16 %v1549
    %v5972 = vunpack.c.h.b16 %v1549
    %v5973 = vunpack.c.l.b16 %v1550
    %v5974 = vunpack.c.h.b16 %v1550
    %v5975 = vunpack.c.l.b16 %v1551
    %v5976 = vunpack.c.h.b16 %v1551
    %v5977 = vunpack.c.l.b16 %v1552
    %v5978 = vunpack.c.h.b16 %v1552
    %v5979 = vunpack.c.l.b16 %v1553
    %v5980 = vunpack.c.h.b16 %v1553
    %v5981 = vunpack.c.l.b16 %v1554
    %v5982 = vunpack.c.h.b16 %v1554
    %v5983 = vunpack.c.l.b16 %v1555
    %v5984 = vunpack.c.h.b16 %v1555
    %v5985 = vunpack.c.l.b16 %v1556
    %v5986 = vunpack.c.h.b16 %v1556
    %v5987 = vunpack.c.l.b16 %v1557
    %v5988 = vunpack.c.h.b16 %v1557
    %v5989 = vunpack.c.l.b16 %v1558
    %v5990 = vunpack.c.h.b16 %v1558
    %v5991 = vunpack.c.l.b16 %v1559
    %v5992 = vunpack.c.h.b16 %v1559
    %v5993 = vunpack.c.l.b16 %v1560
    %v5994 = vunpack.c.h.b16 %v1560
    %v5995 = vunpack.c.l.b16 %v1561
    %v5996 = vunpack.c.h.b16 %v1561
    %v5997 = vunpack.c.l.b16 %v1562
    %v5998 = vunpack.c.h.b16 %v1562
    %v5999 = vunpack.c.l.b16 %v1563
    %v6000 = vunpack.c.h.b16 %v1563
    %v6001 = vunpack.c.l.b16 %v1564
    %v6002 = vunpack.c.h.b16 %v1564
    %v6003 = vunpack.c.l.b16 %v1565
    %v6004 = vunpack.c.h.b16 %v1565
    %v6005 = vunpack.c.l.b16 %v1566
    %v6006 = vunpack.c.h.b16 %v1566
    %v6007 = vunpack.c.l.b16 %v1567
    %v6008 = vunpack.c.h.b16 %v1567
    %v6009 = vunpack.c.l.b16 %v1568
    %v6010 = vunpack.c.h.b16 %v1568
    %v6011 = vunpack.c.l.b16 %v1569
    %v6012 = vunpack.c.h.b16 %v1569
    %v6013 = vunpack.c.l.b16 %v1570
    %v6014 = vunpack.c.h.b16 %v1570
    %v6015 = vunpack.c.l.b16 %v1571
    %v6016 = vunpack.c.h.b16 %v1571
    %v6017 = vunpack.c.l.b16 %v1572
    %v6018 = vunpack.c.h.b16 %v1572
    %v6019 = vunpack.c.l.b16 %v1573
    %v6020 = vunpack.c.h.b16 %v1573
    %v6021 = vunpack.c.l.b16 %v1574
    %v6022 = vunpack.c.h.b16 %v1574
    %v6023 = vunpack.c.l.b16 %v1575
    %v6024 = vunpack.c.h.b16 %v1575
    %v6025 = vunpack.c.l.b16 %v1576
    %v6026 = vunpack.c.h.b16 %v1576
    %v6027 = vunpack.c.l.b16 %v1577
    %v6028 = vunpack.c.h.b16 %v1577
    %v6029 = vunpack.c.l.b16 %v1578
    %v6030 = vunpack.c.h.b16 %v1578
    %v6031 = vunpack.c.l.b16 %v1579
    %v6032 = vunpack.c.h.b16 %v1579
    %v6033 = vunpack.c.l.b16 %v1580
    %v6034 = vunpack.c.h.b16 %v1580
    %v6035 = vunpack.c.l.b16 %v1581
    %v6036 = vunpack.c.h.b16 %v1581
    %v6037 = vunpack.c.l.b16 %v1582
    %v6038 = vunpack.c.h.b16 %v1582
    %v6039 = vunpack.c.l.b16 %v1583
    %v6040 = vunpack.c.h.b16 %v1583
    %v6041 = vunpack.c.l.b16 %v1584
    %v6042 = vunpack.c.h.b16 %v1584
    %v6043 = vunpack.c.l.b16 %v1585
    %v6044 = vunpack.c.h.b16 %v1585
    %v6045 = vunpack.c.l.b16 %v1586
    %v6046 = vunpack.c.h.b16 %v1586
    %v6047 = vunpack.c.l.b16 %v1587
    %v6048 = vunpack.c.h.b16 %v1587
    %v6049 = vunpack.c.l.b16 %v1588
    %v6050 = vunpack.c.h.b16 %v1588
    %v6051 = vunpack.c.l.b16 %v1589
    %v6052 = vunpack.c.h.b16 %v1589
    %v6053 = vunpack.c.l.b16 %v1590
    %v6054 = vunpack.c.h.b16 %v1590
    %v6055 = vunpack.c.l.b16 %v1591
    %v6056 = vunpack.c.h.b16 %v1591
    %v6057 = vunpack.c.l.b16 %v1592
    %v6058 = vunpack.c.h.b16 %v1592
    %v6059 = vunpack.c.l.b16 %v1593
    %v6060 = vunpack.c.h.b16 %v1593
    %v6061 = vunpack.c.l.b16 %v1594
    %v6062 = vunpack.c.h.b16 %v1594
    %v6063 = vunpack.c.l.b16 %v1595
    %v6064 = vunpack.c.h.b16 %v1595
    %v6065 = vunpack.c.l.b16 %v1596
    %v6066 = vunpack.c.h.b16 %v1596
    %v6067 = vunpack.c.l.b16 %v1597
    %v6068 = vunpack.c.h.b16 %v1597
    %v6069 = vunpack.c.l.b16 %v1598
    %v6070 = vunpack.c.h.b16 %v1598
    %v6071 = vunpack.c.l.b16 %v1599
    %v6072 = vunpack.c.h.b16 %v1599
    %v6073 = vunpack.c.l.b16 %v1600
    %v6074 = vunpack.c.h.b16 %v1600
    %v6075 = vunpack.c.l.b16 %v1601
    %v6076 = vunpack.c.h.b16 %v1601
    %v6077 = vunpack.c.l.b16 %v1602
    %v6078 = vunpack.c.h.b16 %v1602
    %v6079 = vunpack.c.l.b16 %v1603
    %v6080 = vunpack.c.h.b16 %v1603
    %v6081 = vunpack.c.l.b16 %v1604
    %v6082 = vunpack.c.h.b16 %v1604
    %v6083 = vunpack.c.l.b16 %v1605
    %v6084 = vunpack.c.h.b16 %v1605
    %v6085 = vunpack.c.l.b16 %v1606
    %v6086 = vunpack.c.h.b16 %v1606
    %v6087 = vunpack.c.l.b16 %v1607
    %v6088 = vunpack.c.h.b16 %v1607
    %v6089 = vunpack.c.l.b16 %v1608
    %v6090 = vunpack.c.h.b16 %v1608
    %v6091 = vunpack.c.l.b16 %v1609
    %v6092 = vunpack.c.h.b16 %v1609
    %v6093 = vunpack.c.l.b16 %v1610
    %v6094 = vunpack.c.h.b16 %v1610
    %v6095 = vunpack.c.l.b16 %v1611
    %v6096 = vunpack.c.h.b16 %v1611
    %v6097 = vunpack.c.l.b16 %v1612
    %v6098 = vunpack.c.h.b16 %v1612
    %v6099 = vunpack.c.l.b16 %v1613
    %v6100 = vunpack.c.h.b16 %v1613
    %v6101 = vunpack.c.l.b16 %v1614
    %v6102 = vunpack.c.h.b16 %v1614
    %v6103 = vunpack.c.l.b16 %v1615
    %v6104 = vunpack.c.h.b16 %v1615
    %v6105 = vunpack.c.l.b16 %v1616
    %v6106 = vunpack.c.h.b16 %v1616
    %v6107 = vunpack.c.l.b16 %v1617
    %v6108 = vunpack.c.h.b16 %v1617
    %v6109 = vunpack.c.l.b16 %v1618
    %v6110 = vunpack.c.h.b16 %v1618
    %v6111 = vunpack.c.l.b16 %v1619
    %v6112 = vunpack.c.h.b16 %v1619
    %v6113 = vunpack.c.l.b16 %v1620
    %v6114 = vunpack.c.h.b16 %v1620
    %v6115 = vunpack.c.l.b16 %v1621
    %v6116 = vunpack.c.h.b16 %v1621
    %v6117 = vunpack.c.l.b16 %v1622
    %v6118 = vunpack.c.h.b16 %v1622
    %v6119 = vunpack.c.l.b16 %v1623
    %v6120 = vunpack.c.h.b16 %v1623
    %v6121 = vunpack.c.l.b16 %v1624
    %v6122 = vunpack.c.h.b16 %v1624
    %v6123 = vunpack.c.l.b16 %v1625
    %v6124 = vunpack.c.h.b16 %v1625
    %v6125 = vunpack.c.l.b16 %v1626
    %v6126 = vunpack.c.h.b16 %v1626
    %v6127 = vunpack.c.l.b16 %v1627
    %v6128 = vunpack.c.h.b16 %v1627
    %v6129 = vunpack.c.l.b16 %v1628
    %v6130 = vunpack.c.h.b16 %v1628
    %v6131 = vunpack.c.l.b16 %v1629
    %v6132 = vunpack.c.h.b16 %v1629
    %v6133 = vunpack.c.l.b16 %v1630
    %v6134 = vunpack.c.h.b16 %v1630
    %v6135 = vunpack.c.l.b16 %v1631
    %v6136 = vunpack.c.h.b16 %v1631
    %v6137 = vunpack.c.l.b16 %v1632
    %v6138 = vunpack.c.h.b16 %v1632
    %v6139 = vunpack.c.l.b16 %v1633
    %v6140 = vunpack.c.h.b16 %v1633
    %v6141 = vunpack.c.l.b16 %v1634
    %v6142 = vunpack.c.h.b16 %v1634
    %v6143 = vunpack.c.l.b16 %v1635
    %v6144 = vunpack.c.h.b16 %v1635
    %v6145 = vunpack.c.l.b16 %v1636
    %v6146 = vunpack.c.h.b16 %v1636
    %v6147 = vunpack.c.l.b16 %v1637
    %v6148 = vunpack.c.h.b16 %v1637
    %v6149 = vunpack.c.l.b16 %v1638
    %v6150 = vunpack.c.h.b16 %v1638
    %v6151 = vunpack.c.l.b16 %v1639
    %v6152 = vunpack.c.h.b16 %v1639
    %v6153 = vunpack.c.l.b16 %v1640
    %v6154 = vunpack.c.h.b16 %v1640
    %v6155 = vunpack.c.l.b16 %v1641
    %v6156 = vunpack.c.h.b16 %v1641
    %v6157 = vunpack.c.l.b16 %v1642
    %v6158 = vunpack.c.h.b16 %v1642
    %v6159 = vunpack.c.l.b16 %v1643
    %v6160 = vunpack.c.h.b16 %v1643
    %v6161 = vunpack.c.l.b16 %v1644
    %v6162 = vunpack.c.h.b16 %v1644
    %v6163 = vunpack.c.l.b16 %v1645
    %v6164 = vunpack.c.h.b16 %v1645
    %v6165 = vunpack.c.l.b16 %v1646
    %v6166 = vunpack.c.h.b16 %v1646
    %v6167 = vunpack.c.l.b16 %v1647
    %v6168 = vunpack.c.h.b16 %v1647
    %v6169 = vunpack.c.l.b16 %v1648
    %v6170 = vunpack.c.h.b16 %v1648
    %v6171 = vunpack.c.l.b16 %v1649
    %v6172 = vunpack.c.h.b16 %v1649
    %v6173 = vunpack.c.l.b16 %v1650
    %v6174 = vunpack.c.h.b16 %v1650
    %v6175 = vunpack.c.l.b16 %v1651
    %v6176 = vunpack.c.h.b16 %v1651
    %v6177 = vunpack.c.l.b16 %v1652
    %v6178 = vunpack.c.h.b16 %v1652
    %v6179 = vunpack.c.l.b16 %v1653
    %v6180 = vunpack.c.h.b16 %v1653
    %v6181 = vunpack.c.l.b16 %v1654
    %v6182 = vunpack.c.h.b16 %v1654
    %v6183 = vunpack.c.l.b16 %v1655
    %v6184 = vunpack.c.h.b16 %v1655
    %v6185 = vunpack.c.l.b16 %v1656
    %v6186 = vunpack.c.h.b16 %v1656
    %v6187 = vunpack.c.l.b16 %v1657
    %v6188 = vunpack.c.h.b16 %v1657
    %v6189 = vunpack.c.l.b16 %v1658
    %v6190 = vunpack.c.h.b16 %v1658
    %v6191 = vunpack.c.l.b16 %v1659
    %v6192 = vunpack.c.h.b16 %v1659
    %v6193 = vunpack.c.l.b16 %v1660
    %v6194 = vunpack.c.h.b16 %v1660
    %v6195 = vunpack.c.l.b16 %v1661
    %v6196 = vunpack.c.h.b16 %v1661
    %v6197 = vunpack.c.l.b16 %v1662
    %v6198 = vunpack.c.h.b16 %v1662
    %v6199 = vunpack.c.l.b16 %v1663
    %v6200 = vunpack.c.h.b16 %v1663
    %v6201 = vunpack.c.l.b16 %v1664
    %v6202 = vunpack.c.h.b16 %v1664
    %v6203 = vunpack.c.l.b16 %v1665
    %v6204 = vunpack.c.h.b16 %v1665
    %v6205 = vunpack.c.l.b16 %v1666
    %v6206 = vunpack.c.h.b16 %v1666
    %v6207 = vunpack.c.l.b16 %v1667
    %v6208 = vunpack.c.h.b16 %v1667
    %v6209 = vunpack.c.l.b16 %v1668
    %v6210 = vunpack.c.h.b16 %v1668
    %v6211 = vunpack.c.l.b16 %v1669
    %v6212 = vunpack.c.h.b16 %v1669
    %v6213 = vunpack.c.l.b16 %v1670
    %v6214 = vunpack.c.h.b16 %v1670
    %v6215 = vunpack.c.l.b16 %v1671
    %v6216 = vunpack.c.h.b16 %v1671
    %v6217 = vunpack.c.l.b16 %v1672
    %v6218 = vunpack.c.h.b16 %v1672
    %v6219 = vunpack.c.l.b16 %v1673
    %v6220 = vunpack.c.h.b16 %v1673
    %v6221 = vunpack.c.l.b16 %v1674
    %v6222 = vunpack.c.h.b16 %v1674
    %v6223 = vunpack.c.l.b16 %v1675
    %v6224 = vunpack.c.h.b16 %v1675
    %v6225 = vunpack.c.l.b16 %v1676
    %v6226 = vunpack.c.h.b16 %v1676
    %v6227 = vunpack.c.l.b16 %v1677
    %v6228 = vunpack.c.h.b16 %v1677
    %v6229 = vunpack.c.l.b16 %v1678
    %v6230 = vunpack.c.h.b16 %v1678
    %v6231 = vunpack.c.l.b16 %v1679
    %v6232 = vunpack.c.h.b16 %v1679
    %v6233 = vunpack.c.l.b16 %v1680
    %v6234 = vunpack.c.h.b16 %v1680
    %v6235 = vunpack.c.l.b16 %v1681
    %v6236 = vunpack.c.h.b16 %v1681
    %v6237 = vunpack.c.l.b16 %v1682
    %v6238 = vunpack.c.h.b16 %v1682
    %v6239 = vunpack.c.l.b16 %v1683
    %v6240 = vunpack.c.h.b16 %v1683
    %v6241 = vunpack.c.l.b16 %v1684
    %v6242 = vunpack.c.h.b16 %v1684
    %v6243 = vunpack.c.l.b16 %v1685
    %v6244 = vunpack.c.h.b16 %v1685
    %v6245 = vunpack.c.l.b16 %v1686
    %v6246 = vunpack.c.h.b16 %v1686
    %v6247 = vunpack.c.l.b16 %v1687
    %v6248 = vunpack.c.h.b16 %v1687
    %v6249 = vunpack.c.l.b16 %v1688
    %v6250 = vunpack.c.h.b16 %v1688
    %v6251 = vunpack.c.l.b16 %v1689
    %v6252 = vunpack.c.h.b16 %v1689
    %v6253 = vunpack.c.l.b16 %v1690
    %v6254 = vunpack.c.h.b16 %v1690
    %v6255 = vunpack.c.l.b16 %v1691
    %v6256 = vunpack.c.h.b16 %v1691
    %v6257 = vunpack.c.l.b16 %v1692
    %v6258 = vunpack.c.h.b16 %v1692
    %v6259 = vunpack.c.l.b16 %v1693
    %v6260 = vunpack.c.h.b16 %v1693
    %v6261 = vunpack.c.l.b16 %v1694
    %v6262 = vunpack.c.h.b16 %v1694
    %v6263 = vunpack.c.l.b16 %v1695
    %v6264 = vunpack.c.h.b16 %v1695
    %v6265 = vunpack.c.l.b16 %v1696
    %v6266 = vunpack.c.h.b16 %v1696
    %v6267 = vunpack.c.l.b16 %v1697
    %v6268 = vunpack.c.h.b16 %v1697
    %v6269 = vunpack.c.l.b16 %v1698
    %v6270 = vunpack.c.h.b16 %v1698
    %v6271 = vunpack.c.l.b16 %v1699
    %v6272 = vunpack.c.h.b16 %v1699
    %v6273 = vunpack.c.l.b16 %v1700
    %v6274 = vunpack.c.h.b16 %v1700
    %v6275 = vunpack.c.l.b16 %v1701
    %v6276 = vunpack.c.h.b16 %v1701
    %v6277 = vunpack.c.l.b16 %v1702
    %v6278 = vunpack.c.h.b16 %v1702
    %v6279 = vunpack.c.l.b16 %v1703
    %v6280 = vunpack.c.h.b16 %v1703
    %v6281 = vunpack.c.l.b16 %v1704
    %v6282 = vunpack.c.h.b16 %v1704
    %v6283 = vunpack.c.l.b16 %v1705
    %v6284 = vunpack.c.h.b16 %v1705
    %v6285 = vunpack.c.l.b16 %v1706
    %v6286 = vunpack.c.h.b16 %v1706
    %v6287 = vunpack.c.l.b16 %v1707
    %v6288 = vunpack.c.h.b16 %v1707
    %v6289 = vunpack.c.l.b16 %v1708
    %v6290 = vunpack.c.h.b16 %v1708
    %v6291 = vunpack.c.l.b16 %v1709
    %v6292 = vunpack.c.h.b16 %v1709
    %v6293 = vunpack.c.l.b16 %v1710
    %v6294 = vunpack.c.h.b16 %v1710
    %v6295 = vunpack.c.l.b16 %v1711
    %v6296 = vunpack.c.h.b16 %v1711
    %v6297 = vunpack.c.l.b16 %v1712
    %v6298 = vunpack.c.h.b16 %v1712
    %v6299 = vunpack.c.l.b16 %v1713
    %v6300 = vunpack.c.h.b16 %v1713
    %v6301 = vunpack.c.l.b16 %v1714
    %v6302 = vunpack.c.h.b16 %v1714
    %v6303 = vunpack.c.l.b16 %v1715
    %v6304 = vunpack.c.h.b16 %v1715
    %v6305 = vunpack.c.l.b16 %v1716
    %v6306 = vunpack.c.h.b16 %v1716
    %v6307 = vunpack.c.l.b16 %v1717
    %v6308 = vunpack.c.h.b16 %v1717
    %v6309 = vunpack.c.l.b16 %v1718
    %v6310 = vunpack.c.h.b16 %v1718
    %v6311 = vunpack.c.l.b16 %v1719
    %v6312 = vunpack.c.h.b16 %v1719
    %v6313 = vunpack.c.l.b16 %v1720
    %v6314 = vunpack.c.h.b16 %v1720
    %v6315 = vunpack.c.l.b16 %v1721
    %v6316 = vunpack.c.h.b16 %v1721
    %v6317 = vunpack.c.l.b16 %v1722
    %v6318 = vunpack.c.h.b16 %v1722
    %v6319 = vunpack.c.l.b16 %v1723
    %v6320 = vunpack.c.h.b16 %v1723
    %v6321 = vunpack.c.l.b16 %v1724
    %v6322 = vunpack.c.h.b16 %v1724
    %v6323 = vunpack.c.l.b16 %v1725
    %v6324 = vunpack.c.h.b16 %v1725
    %v6325 = vunpack.c.l.b16 %v1726
    %v6326 = vunpack.c.h.b16 %v1726
    %v6327 = vunpack.c.l.b16 %v1727
    %v6328 = vunpack.c.h.b16 %v1727
    %v6329 = vunpack.c.l.b16 %v1728
    %v6330 = vunpack.c.h.b16 %v1728
    %v6331 = vunpack.c.l.b16 %v1729
    %v6332 = vunpack.c.h.b16 %v1729
    %v6333 = vunpack.c.l.b16 %v1730
    %v6334 = vunpack.c.h.b16 %v1730
    %v6335 = vunpack.c.l.b16 %v1731
    %v6336 = vunpack.c.h.b16 %v1731
    %v6337 = vunpack.c.l.b16 %v1732
    %v6338 = vunpack.c.h.b16 %v1732
    %v6339 = vunpack.c.l.b16 %v1733
    %v6340 = vunpack.c.h.b16 %v1733
    %v6341 = vunpack.c.l.b16 %v1734
    %v6342 = vunpack.c.h.b16 %v1734
    %v6343 = vpack.c.b16 %v3279, %v3271
    %v6344 = vpack.c.b16 %v3280, %v3272
    %v6345 = vpack.c.b16 %v3281, %v3273
    %v6346 = vpack.c.b16 %v3282, %v3274
    %v6347 = vpack.c.b16 %v3283, %v3275
    %v6348 = vpack.c.b16 %v3284, %v3276
    %v6349 = vpack.c.b16 %v3285, %v3277
    %v6350 = vpack.c.b16 %v3286, %v3278
    %v6351 = vpack.c.b16 %v3295, %v3287
    %v6352 = vpack.c.b16 %v3296, %v3288
    %v6353 = vpack.c.b16 %v3297, %v3289
    %v6354 = vpack.c.b16 %v3298, %v3290
    %v6355 = vpack.c.b16 %v3299, %v3291
    %v6356 = vpack.c.b16 %v3300, %v3292
    %v6357 = vpack.c.b16 %v3301, %v3293
    %v6358 = vpack.c.b16 %v3302, %v3294
    %v6359 = vpack.c.b16 %v3311, %v3303
    %v6360 = vpack.c.b16 %v3312, %v3304
    %v6361 = vpack.c.b16 %v3313, %v3305
    %v6362 = vpack.c.b16 %v3314, %v3306
    %v6363 = vpack.c.b16 %v3315, %v3307
    %v6364 = vpack.c.b16 %v3316, %v3308
    %v6365 = vpack.c.b16 %v3317, %v3309
    %v6366 = vpack.c.b16 %v3318, %v3310
    %v6367 = vpack.c.b16 %v3327, %v3319
    %v6368 = vpack.c.b16 %v3328, %v3320
    %v6369 = vpack.c.b16 %v3329, %v3321
    %v6370 = vpack.c.b16 %v3330, %v3322
    %v6371 = vpack.c.b16 %v3331, %v3323
    %v6372 = vpack.c.b16 %v3332, %v3324
    %v6373 = vpack.c.b16 %v3333, %v3325
    %v6374 = vpack.c.b16 %v3334, %v3326
    %v6375 = vpack.c.b16 %v3343, %v3335
    %v6376 = vpack.c.b16 %v3344, %v3336
    %v6377 = vpack.c.b16 %v3345, %v3337
    %v6378 = vpack.c.b16 %v3346, %v3338
    %v6379 = vpack.c.b16 %v3347, %v3339
    %v6380 = vpack.c.b16 %v3348, %v3340
    %v6381 = vpack.c.b16 %v3349, %v3341
    %v6382 = vpack.c.b16 %v3350, %v3342
    %v6383 = vpack.c.b16 %v3359, %v3351
    %v6384 = vpack.c.b16 %v3360, %v3352
    %v6385 = vpack.c.b16 %v3361, %v3353
    %v6386 = vpack.c.b16 %v3362, %v3354
    %v6387 = vpack.c.b16 %v3363, %v3355
    %v6388 = vpack.c.b16 %v3364, %v3356
    %v6389 = vpack.c.b16 %v3365, %v3357
    %v6390 = vpack.c.b16 %v3366, %v3358
    %v6391 = vpack.c.b16 %v3375, %v3367
    %v6392 = vpack.c.b16 %v3376, %v3368
    %v6393 = vpack.c.b16 %v3377, %v3369
    %v6394 = vpack.c.b16 %v3378, %v3370
    %v6395 = vpack.c.b16 %v3379, %v3371
    %v6396 = vpack.c.b16 %v3380, %v3372
    %v6397 = vpack.c.b16 %v3381, %v3373
    %v6398 = vpack.c.b16 %v3382, %v3374
    %v6399 = vpack.c.b16 %v3391, %v3383
    %v6400 = vpack.c.b16 %v3392, %v3384
    %v6401 = vpack.c.b16 %v3393, %v3385
    %v6402 = vpack.c.b16 %v3394, %v3386
    %v6403 = vpack.c.b16 %v3395, %v3387
    %v6404 = vpack.c.b16 %v3396, %v3388
    %v6405 = vpack.c.b16 %v3397, %v3389
    %v6406 = vpack.c.b16 %v3398, %v3390
    %v6407 = vpack.c.b16 %v3407, %v3399
    %v6408 = vpack.c.b16 %v3408, %v3400
    %v6409 = vpack.c.b16 %v3409, %v3401
    %v6410 = vpack.c.b16 %v3410, %v3402
    %v6411 = vpack.c.b16 %v3411, %v3403
    %v6412 = vpack.c.b16 %v3412, %v3404
    %v6413 = vpack.c.b16 %v3413, %v3405
    %v6414 = vpack.c.b16 %v3414, %v3406
    %v6415 = vpack.c.b16 %v3423, %v3415
    %v6416 = vpack.c.b16 %v3424, %v3416
    %v6417 = vpack.c.b16 %v3425, %v3417
    %v6418 = vpack.c.b16 %v3426, %v3418
    %v6419 = vpack.c.b16 %v3427, %v3419
    %v6420 = vpack.c.b16 %v3428, %v3420
    %v6421 = vpack.c.b16 %v3429, %v3421
    %v6422 = vpack.c.b16 %v3430, %v3422
    %v6423 = vpack.c.b16 %v3439, %v3431
    %v6424 = vpack.c.b16 %v3440, %v3432
    %v6425 = vpack.c.b16 %v3441, %v3433
    %v6426 = vpack.c.b16 %v3442, %v3434
    %v6427 = vpack.c.b16 %v3443, %v3435
    %v6428 = vpack.c.b16 %v3444, %v3436
    %v6429 = vpack.c.b16 %v3445, %v3437
    %v6430 = vpack.c.b16 %v3446, %v3438
    %v6431 = vpack.c.b16 %v3455, %v3447
    %v6432 = vpack.c.b16 %v3456, %v3448
    %v6433 = vpack.c.b16 %v3457, %v3449
    %v6434 = vpack.c.b16 %v3458, %v3450
    %v6435 = vpack.c.b16 %v3459, %v3451
    %v6436 = vpack.c.b16 %v3460, %v3452
    %v6437 = vpack.c.b16 %v3461, %v3453
    %v6438 = vpack.c.b16 %v3462, %v3454
    %v6439 = vpack.c.b16 %v3471, %v3463
    %v6440 = vpack.c.b16 %v3472, %v3464
    %v6441 = vpack.c.b16 %v3473, %v3465
    %v6442 = vpack.c.b16 %v3474, %v3466
    %v6443 = vpack.c.b16 %v3475, %v3467
    %v6444 = vpack.c.b16 %v3476, %v3468
    %v6445 = vpack.c.b16 %v3477, %v3469
    %v6446 = vpack.c.b16 %v3478, %v3470
    %v6447 = vpack.c.b16 %v3487, %v3479
    %v6448 = vpack.c.b16 %v3488, %v3480
    %v6449 = vpack.c.b16 %v3489, %v3481
    %v6450 = vpack.c.b16 %v3490, %v3482
    %v6451 = vpack.c.b16 %v3491, %v3483
    %v6452 = vpack.c.b16 %v3492, %v3484
    %v6453 = vpack.c.b16 %v3493, %v3485
    %v6454 = vpack.c.b16 %v3494, %v3486
    %v6455 = vpack.c.b16 %v3503, %v3495
    %v6456 = vpack.c.b16 %v3504, %v3496
    %v6457 = vpack.c.b16 %v3505, %v3497
    %v6458 = vpack.c.b16 %v3506, %v3498
    %v6459 = vpack.c.b16 %v3507, %v3499
    %v6460 = vpack.c.b16 %v3508, %v3500
    %v6461 = vpack.c.b16 %v3509, %v3501
    %v6462 = vpack.c.b16 %v3510, %v3502
    %v6463 = vpack.c.b16 %v3519, %v3511
    %v6464 = vpack.c.b16 %v3520, %v3512
    %v6465 = vpack.c.b16 %v3521, %v3513
    %v6466 = vpack.c.b16 %v3522, %v3514
    %v6467 = vpack.c.b16 %v3523, %v3515
    %v6468 = vpack.c.b16 %v3524, %v3516
    %v6469 = vpack.c.b16 %v3525, %v3517
    %v6470 = vpack.c.b16 %v3526, %v3518
    %v6471 = vpack.c.b16 %v3535, %v3527
    %v6472 = vpack.c.b16 %v3536, %v3528
    %v6473 = vpack.c.b16 %v3537, %v3529
    %v6474 = vpack.c.b16 %v3538, %v3530
    %v6475 = vpack.c.b16 %v3539, %v3531
    %v6476 = vpack.c.b16 %v3540, %v3532
    %v6477 = vpack.c.b16 %v3541, %v3533
    %v6478 = vpack.c.b16 %v3542, %v3534
    %v6479 = vpack.c.b16 %v3551, %v3543
    %v6480 = vpack.c.b16 %v3552, %v3544
    %v6481 = vpack.c.b16 %v3553, %v3545
    %v6482 = vpack.c.b16 %v3554, %v3546
    %v6483 = vpack.c.b16 %v3555, %v3547
    %v6484 = vpack.c.b16 %v3556, %v3548
    %v6485 = vpack.c.b16 %v3557, %v3549
    %v6486 = vpack.c.b16 %v3558, %v3550
    %v6487 = vpack.c.b16 %v3567, %v3559
    %v6488 = vpack.c.b16 %v3568, %v3560
    %v6489 = vpack.c.b16 %v3569, %v3561
    %v6490 = vpack.c.b16 %v3570, %v3562
    %v6491 = vpack.c.b16 %v3571, %v3563
    %v6492 = vpack.c.b16 %v3572, %v3564
    %v6493 = vpack.c.b16 %v3573, %v3565
    %v6494 = vpack.c.b16 %v3574, %v3566
    %v6495 = vpack.c.b16 %v3583, %v3575
    %v6496 = vpack.c.b16 %v3584, %v3576
    %v6497 = vpack.c.b16 %v3585, %v3577
    %v6498 = vpack.c.b16 %v3586, %v3578
    %v6499 = vpack.c.b16 %v3587, %v3579
    %v6500 = vpack.c.b16 %v3588, %v3580
    %v6501 = vpack.c.b16 %v3589, %v3581
    %v6502 = vpack.c.b16 %v3590, %v3582
    %v6503 = vpack.c.b16 %v3599, %v3591
    %v6504 = vpack.c.b16 %v3600, %v3592
    %v6505 = vpack.c.b16 %v3601, %v3593
    %v6506 = vpack.c.b16 %v3602, %v3594
    %v6507 = vpack.c.b16 %v3603, %v3595
    %v6508 = vpack.c.b16 %v3604, %v3596
    %v6509 = vpack.c.b16 %v3605, %v3597
    %v6510 = vpack.c.b16 %v3606, %v3598
    %v6511 = vpack.c.b16 %v3615, %v3607
    %v6512 = vpack.c.b16 %v3616, %v3608
    %v6513 = vpack.c.b16 %v3617, %v3609
    %v6514 = vpack.c.b16 %v3618, %v3610
    %v6515 = vpack.c.b16 %v3619, %v3611
    %v6516 = vpack.c.b16 %v3620, %v3612
    %v6517 = vpack.c.b16 %v3621, %v3613
    %v6518 = vpack.c.b16 %v3622, %v3614
    %v6519 = vpack.c.b16 %v3631, %v3623
    %v6520 = vpack.c.b16 %v3632, %v3624
    %v6521 = vpack.c.b16 %v3633, %v3625
    %v6522 = vpack.c.b16 %v3634, %v3626
    %v6523 = vpack.c.b16 %v3635, %v3627
    %v6524 = vpack.c.b16 %v3636, %v3628
    %v6525 = vpack.c.b16 %v3637, %v3629
    %v6526 = vpack.c.b16 %v3638, %v3630
    %v6527 = vpack.c.b16 %v3647, %v3639
    %v6528 = vpack.c.b16 %v3648, %v3640
    %v6529 = vpack.c.b16 %v3649, %v3641
    %v6530 = vpack.c.b16 %v3650, %v3642
    %v6531 = vpack.c.b16 %v3651, %v3643
    %v6532 = vpack.c.b16 %v3652, %v3644
    %v6533 = vpack.c.b16 %v3653, %v3645
    %v6534 = vpack.c.b16 %v3654, %v3646
    %v6535 = vpack.c.b16 %v3663, %v3655
    %v6536 = vpack.c.b16 %v3664, %v3656
    %v6537 = vpack.c.b16 %v3665, %v3657
    %v6538 = vpack.c.b16 %v3666, %v3658
    %v6539 = vpack.c.b16 %v3667, %v3659
    %v6540 = vpack.c.b16 %v3668, %v3660
    %v6541 = vpack.c.b16 %v3669, %v3661
    %v6542 = vpack.c.b16 %v3670, %v3662
    %v6543 = vpack.c.b16 %v3679, %v3671
    %v6544 = vpack.c.b16 %v3680, %v3672
    %v6545 = vpack.c.b16 %v3681, %v3673
    %v6546 = vpack.c.b16 %v3682, %v3674
    %v6547 = vpack.c.b16 %v3683, %v3675
    %v6548 = vpack.c.b16 %v3684, %v3676
    %v6549 = vpack.c.b16 %v3685, %v3677
    %v6550 = vpack.c.b16 %v3686, %v3678
    %v6551 = vpack.c.b16 %v3695, %v3687
    %v6552 = vpack.c.b16 %v3696, %v3688
    %v6553 = vpack.c.b16 %v3697, %v3689
    %v6554 = vpack.c.b16 %v3698, %v3690
    %v6555 = vpack.c.b16 %v3699, %v3691
    %v6556 = vpack.c.b16 %v3700, %v3692
    %v6557 = vpack.c.b16 %v3701, %v3693
    %v6558 = vpack.c.b16 %v3702, %v3694
    %v6559 = vpack.c.b16 %v3711, %v3703
    %v6560 = vpack.c.b16 %v3712, %v3704
    %v6561 = vpack.c.b16 %v3713, %v3705
    %v6562 = vpack.c.b16 %v3714, %v3706
    %v6563 = vpack.c.b16 %v3715, %v3707
    %v6564 = vpack.c.b16 %v3716, %v3708
    %v6565 = vpack.c.b16 %v3717, %v3709
    %v6566 = vpack.c.b16 %v3718, %v3710
    %v6567 = vpack.c.b16 %v3727, %v3719
    %v6568 = vpack.c.b16 %v3728, %v3720
    %v6569 = vpack.c.b16 %v3729, %v3721
    %v6570 = vpack.c.b16 %v3730, %v3722
    %v6571 = vpack.c.b16 %v3731, %v3723
    %v6572 = vpack.c.b16 %v3732, %v3724
    %v6573 = vpack.c.b16 %v3733, %v3725
    %v6574 = vpack.c.b16 %v3734, %v3726
    %v6575 = vpack.c.b16 %v3743, %v3735
    %v6576 = vpack.c.b16 %v3744, %v3736
    %v6577 = vpack.c.b16 %v3745, %v3737
    %v6578 = vpack.c.b16 %v3746, %v3738
    %v6579 = vpack.c.b16 %v3747, %v3739
    %v6580 = vpack.c.b16 %v3748, %v3740
    %v6581 = vpack.c.b16 %v3749, %v3741
    %v6582 = vpack.c.b16 %v3750, %v3742
    %v6583 = vpack.c.b16 %v3759, %v3751
    %v6584 = vpack.c.b16 %v3760, %v3752
    %v6585 = vpack.c.b16 %v3761, %v3753
    %v6586 = vpack.c.b16 %v3762, %v3754
    %v6587 = vpack.c.b16 %v3763, %v3755
    %v6588 = vpack.c.b16 %v3764, %v3756
    %v6589 = vpack.c.b16 %v3765, %v3757
    %v6590 = vpack.c.b16 %v3766, %v3758
    %v6591 = vpack.c.b16 %v3775, %v3767
    %v6592 = vpack.c.b16 %v3776, %v3768
    %v6593 = vpack.c.b16 %v3777, %v3769
    %v6594 = vpack.c.b16 %v3778, %v3770
    %v6595 = vpack.c.b16 %v3779, %v3771
    %v6596 = vpack.c.b16 %v3780, %v3772
    %v6597 = vpack.c.b16 %v3781, %v3773
    %v6598 = vpack.c.b16 %v3782, %v3774
    %v6599 = vpack.c.b16 %v3791, %v3783
    %v6600 = vpack.c.b16 %v3792, %v3784
    %v6601 = vpack.c.b16 %v3793, %v3785
    %v6602 = vpack.c.b16 %v3794, %v3786
    %v6603 = vpack.c.b16 %v3795, %v3787
    %v6604 = vpack.c.b16 %v3796, %v3788
    %v6605 = vpack.c.b16 %v3797, %v3789
    %v6606 = vpack.c.b16 %v3798, %v3790
    %v6607 = vpack.c.b16 %v3807, %v3799
    %v6608 = vpack.c.b16 %v3808, %v3800
    %v6609 = vpack.c.b16 %v3809, %v3801
    %v6610 = vpack.c.b16 %v3810, %v3802
    %v6611 = vpack.c.b16 %v3811, %v3803
    %v6612 = vpack.c.b16 %v3812, %v3804
    %v6613 = vpack.c.b16 %v3813, %v3805
    %v6614 = vpack.c.b16 %v3814, %v3806
    %v6615 = vpack.c.b16 %v3823, %v3815
    %v6616 = vpack.c.b16 %v3824, %v3816
    %v6617 = vpack.c.b16 %v3825, %v3817
    %v6618 = vpack.c.b16 %v3826, %v3818
    %v6619 = vpack.c.b16 %v3827, %v3819
    %v6620 = vpack.c.b16 %v3828, %v3820
    %v6621 = vpack.c.b16 %v3829, %v3821
    %v6622 = vpack.c.b16 %v3830, %v3822
    %v6623 = vpack.c.b16 %v3839, %v3831
    %v6624 = vpack.c.b16 %v3840, %v3832
    %v6625 = vpack.c.b16 %v3841, %v3833
    %v6626 = vpack.c.b16 %v3842, %v3834
    %v6627 = vpack.c.b16 %v3843, %v3835
    %v6628 = vpack.c.b16 %v3844, %v3836
    %v6629 = vpack.c.b16 %v3845, %v3837
    %v6630 = vpack.c.b16 %v3846, %v3838
    %v6631 = vpack.c.b16 %v3855, %v3847
    %v6632 = vpack.c.b16 %v3856, %v3848
    %v6633 = vpack.c.b16 %v3857, %v3849
    %v6634 = vpack.c.b16 %v3858, %v3850
    %v6635 = vpack.c.b16 %v3859, %v3851
    %v6636 = vpack.c.b16 %v3860, %v3852
    %v6637 = vpack.c.b16 %v3861, %v3853
    %v6638 = vpack.c.b16 %v3862, %v3854
    %v6639 = vpack.c.b16 %v3871, %v3863
    %v6640 = vpack.c.b16 %v3872, %v3864
    %v6641 = vpack.c.b16 %v3873, %v3865
    %v6642 = vpack.c.b16 %v3874, %v3866
    %v6643 = vpack.c.b16 %v3875, %v3867
    %v6644 = vpack.c.b16 %v3876, %v3868
    %v6645 = vpack.c.b16 %v3877, %v3869
    %v6646 = vpack.c.b16 %v3878, %v3870
    %v6647 = vpack.c.b16 %v3887, %v3879
    %v6648 = vpack.c.b16 %v3888, %v3880
    %v6649 = vpack.c.b16 %v3889, %v3881
    %v6650 = vpack.c.b16 %v3890, %v3882
    %v6651 = vpack.c.b16 %v3891, %v3883
    %v6652 = vpack.c.b16 %v3892, %v3884
    %v6653 = vpack.c.b16 %v3893, %v3885
    %v6654 = vpack.c.b16 %v3894, %v3886
    %v6655 = vpack.c.b16 %v3903, %v3895
    %v6656 = vpack.c.b16 %v3904, %v3896
    %v6657 = vpack.c.b16 %v3905, %v3897
    %v6658 = vpack.c.b16 %v3906, %v3898
    %v6659 = vpack.c.b16 %v3907, %v3899
    %v6660 = vpack.c.b16 %v3908, %v3900
    %v6661 = vpack.c.b16 %v3909, %v3901
    %v6662 = vpack.c.b16 %v3910, %v3902
    %v6663 = vpack.c.b16 %v3919, %v3911
    %v6664 = vpack.c.b16 %v3920, %v3912
    %v6665 = vpack.c.b16 %v3921, %v3913
    %v6666 = vpack.c.b16 %v3922, %v3914
    %v6667 = vpack.c.b16 %v3923, %v3915
    %v6668 = vpack.c.b16 %v3924, %v3916
    %v6669 = vpack.c.b16 %v3925, %v3917
    %v6670 = vpack.c.b16 %v3926, %v3918
    %v6671 = vpack.c.b16 %v3935, %v3927
    %v6672 = vpack.c.b16 %v3936, %v3928
    %v6673 = vpack.c.b16 %v3937, %v3929
    %v6674 = vpack.c.b16 %v3938, %v3930
    %v6675 = vpack.c.b16 %v3939, %v3931
    %v6676 = vpack.c.b16 %v3940, %v3932
    %v6677 = vpack.c.b16 %v3941, %v3933
    %v6678 = vpack.c.b16 %v3942, %v3934
    %v6679 = vpack.c.b16 %v3951, %v3943
    %v6680 = vpack.c.b16 %v3952, %v3944
    %v6681 = vpack.c.b16 %v3953, %v3945
    %v6682 = vpack.c.b16 %v3954, %v3946
    %v6683 = vpack.c.b16 %v3955, %v3947
    %v6684 = vpack.c.b16 %v3956, %v3948
    %v6685 = vpack.c.b16 %v3957, %v3949
    %v6686 = vpack.c.b16 %v3958, %v3950
    %v6687 = vpack.c.b16 %v3967, %v3959
    %v6688 = vpack.c.b16 %v3968, %v3960
    %v6689 = vpack.c.b16 %v3969, %v3961
    %v6690 = vpack.c.b16 %v3970, %v3962
    %v6691 = vpack.c.b16 %v3971, %v3963
    %v6692 = vpack.c.b16 %v3972, %v3964
    %v6693 = vpack.c.b16 %v3973, %v3965
    %v6694 = vpack.c.b16 %v3974, %v3966
    %v6695 = vpack.c.b16 %v3983, %v3975
    %v6696 = vpack.c.b16 %v3984, %v3976
    %v6697 = vpack.c.b16 %v3985, %v3977
    %v6698 = vpack.c.b16 %v3986, %v3978
    %v6699 = vpack.c.b16 %v3987, %v3979
    %v6700 = vpack.c.b16 %v3988, %v3980
    %v6701 = vpack.c.b16 %v3989, %v3981
    %v6702 = vpack.c.b16 %v3990, %v3982
    %v6703 = vpack.c.b16 %v3999, %v3991
    %v6704 = vpack.c.b16 %v4000, %v3992
    %v6705 = vpack.c.b16 %v4001, %v3993
    %v6706 = vpack.c.b16 %v4002, %v3994
    %v6707 = vpack.c.b16 %v4003, %v3995
    %v6708 = vpack.c.b16 %v4004, %v3996
    %v6709 = vpack.c.b16 %v4005, %v3997
    %v6710 = vpack.c.b16 %v4006, %v3998
    %v6711 = vpack.c.b16 %v4015, %v4007
    %v6712 = vpack.c.b16 %v4016, %v4008
    %v6713 = vpack.c.b16 %v4017, %v4009
    %v6714 = vpack.c.b16 %v4018, %v4010
    %v6715 = vpack.c.b16 %v4019, %v4011
    %v6716 = vpack.c.b16 %v4020, %v4012
    %v6717 = vpack.c.b16 %v4021, %v4013
    %v6718 = vpack.c.b16 %v4022, %v4014
    %v6719 = vpack.c.b16 %v4031, %v4023
    %v6720 = vpack.c.b16 %v4032, %v4024
    %v6721 = vpack.c.b16 %v4033, %v4025
    %v6722 = vpack.c.b16 %v4034, %v4026
    %v6723 = vpack.c.b16 %v4035, %v4027
    %v6724 = vpack.c.b16 %v4036, %v4028
    %v6725 = vpack.c.b16 %v4037, %v4029
    %v6726 = vpack.c.b16 %v4038, %v4030
    %v6727 = vpack.c.b16 %v4047, %v4039
    %v6728 = vpack.c.b16 %v4048, %v4040
    %v6729 = vpack.c.b16 %v4049, %v4041
    %v6730 = vpack.c.b16 %v4050, %v4042
    %v6731 = vpack.c.b16 %v4051, %v4043
    %v6732 = vpack.c.b16 %v4052, %v4044
    %v6733 = vpack.c.b16 %v4053, %v4045
    %v6734 = vpack.c.b16 %v4054, %v4046
    %v6735 = vpack.c.b16 %v4063, %v4055
    %v6736 = vpack.c.b16 %v4064, %v4056
    %v6737 = vpack.c.b16 %v4065, %v4057
    %v6738 = vpack.c.b16 %v4066, %v4058
    %v6739 = vpack.c.b16 %v4067, %v4059
    %v6740 = vpack.c.b16 %v4068, %v4060
    %v6741 = vpack.c.b16 %v4069, %v4061
    %v6742 = vpack.c.b16 %v4070, %v4062
    %v6743 = vpack.c.b16 %v4079, %v4071
    %v6744 = vpack.c.b16 %v4080, %v4072
    %v6745 = vpack.c.b16 %v4081, %v4073
    %v6746 = vpack.c.b16 %v4082, %v4074
    %v6747 = vpack.c.b16 %v4083, %v4075
    %v6748 = vpack.c.b16 %v4084, %v4076
    %v6749 = vpack.c.b16 %v4085, %v4077
    %v6750 = vpack.c.b16 %v4086, %v4078
    %v6751 = vpack.c.b16 %v4095, %v4087
    %v6752 = vpack.c.b16 %v4096, %v4088
    %v6753 = vpack.c.b16 %v4097, %v4089
    %v6754 = vpack.c.b16 %v4098, %v4090
    %v6755 = vpack.c.b16 %v4099, %v4091
    %v6756 = vpack.c.b16 %v4100, %v4092
    %v6757 = vpack.c.b16 %v4101, %v4093
    %v6758 = vpack.c.b16 %v4102, %v4094
    %v6759 = vpack.c.b16 %v4111, %v4103
    %v6760 = vpack.c.b16 %v4112, %v4104
    %v6761 = vpack.c.b16 %v4113, %v4105
    %v6762 = vpack.c.b16 %v4114, %v4106
    %v6763 = vpack.c.b16 %v4115, %v4107
    %v6764 = vpack.c.b16 %v4116, %v4108
    %v6765 = vpack.c.b16 %v4117, %v4109
    %v6766 = vpack.c.b16 %v4118, %v4110
    %v6767 = vpack.c.b16 %v4127, %v4119
    %v6768 = vpack.c.b16 %v4128, %v4120
    %v6769 = vpack.c.b16 %v4129, %v4121
    %v6770 = vpack.c.b16 %v4130, %v4122
    %v6771 = vpack.c.b16 %v4131, %v4123
    %v6772 = vpack.c.b16 %v4132, %v4124
    %v6773 = vpack.c.b16 %v4133, %v4125
    %v6774 = vpack.c.b16 %v4134, %v4126
    %v6775 = vpack.c.b16 %v4143, %v4135
    %v6776 = vpack.c.b16 %v4144, %v4136
    %v6777 = vpack.c.b16 %v4145, %v4137
    %v6778 = vpack.c.b16 %v4146, %v4138
    %v6779 = vpack.c.b16 %v4147, %v4139
    %v6780 = vpack.c.b16 %v4148, %v4140
    %v6781 = vpack.c.b16 %v4149, %v4141
    %v6782 = vpack.c.b16 %v4150, %v4142
    %v6783 = vpack.c.b16 %v4159, %v4151
    %v6784 = vpack.c.b16 %v4160, %v4152
    %v6785 = vpack.c.b16 %v4161, %v4153
    %v6786 = vpack.c.b16 %v4162, %v4154
    %v6787 = vpack.c.b16 %v4163, %v4155
    %v6788 = vpack.c.b16 %v4164, %v4156
    %v6789 = vpack.c.b16 %v4165, %v4157
    %v6790 = vpack.c.b16 %v4166, %v4158
    %v6791 = vpack.c.b16 %v4175, %v4167
    %v6792 = vpack.c.b16 %v4176, %v4168
    %v6793 = vpack.c.b16 %v4177, %v4169
    %v6794 = vpack.c.b16 %v4178, %v4170
    %v6795 = vpack.c.b16 %v4179, %v4171
    %v6796 = vpack.c.b16 %v4180, %v4172
    %v6797 = vpack.c.b16 %v4181, %v4173
    %v6798 = vpack.c.b16 %v4182, %v4174
    %v6799 = vpack.c.b16 %v4191, %v4183
    %v6800 = vpack.c.b16 %v4192, %v4184
    %v6801 = vpack.c.b16 %v4193, %v4185
    %v6802 = vpack.c.b16 %v4194, %v4186
    %v6803 = vpack.c.b16 %v4195, %v4187
    %v6804 = vpack.c.b16 %v4196, %v4188
    %v6805 = vpack.c.b16 %v4197, %v4189
    %v6806 = vpack.c.b16 %v4198, %v4190
    %v6807 = vpack.c.b16 %v4207, %v4199
    %v6808 = vpack.c.b16 %v4208, %v4200
    %v6809 = vpack.c.b16 %v4209, %v4201
    %v6810 = vpack.c.b16 %v4210, %v4202
    %v6811 = vpack.c.b16 %v4211, %v4203
    %v6812 = vpack.c.b16 %v4212, %v4204
    %v6813 = vpack.c.b16 %v4213, %v4205
    %v6814 = vpack.c.b16 %v4214, %v4206
    %v6815 = vpack.c.b16 %v4223, %v4215
    %v6816 = vpack.c.b16 %v4224, %v4216
    %v6817 = vpack.c.b16 %v4225, %v4217
    %v6818 = vpack.c.b16 %v4226, %v4218
    %v6819 = vpack.c.b16 %v4227, %v4219
    %v6820 = vpack.c.b16 %v4228, %v4220
    %v6821 = vpack.c.b16 %v4229, %v4221
    %v6822 = vpack.c.b16 %v4230, %v4222
    %v6823 = vpack.c.b16 %v4239, %v4231
    %v6824 = vpack.c.b16 %v4240, %v4232
    %v6825 = vpack.c.b16 %v4241, %v4233
    %v6826 = vpack.c.b16 %v4242, %v4234
    %v6827 = vpack.c.b16 %v4243, %v4235
    %v6828 = vpack.c.b16 %v4244, %v4236
    %v6829 = vpack.c.b16 %v4245, %v4237
    %v6830 = vpack.c.b16 %v4246, %v4238
    %v6831 = vpack.c.b16 %v4255, %v4247
    %v6832 = vpack.c.b16 %v4256, %v4248
    %v6833 = vpack.c.b16 %v4257, %v4249
    %v6834 = vpack.c.b16 %v4258, %v4250
    %v6835 = vpack.c.b16 %v4259, %v4251
    %v6836 = vpack.c.b16 %v4260, %v4252
    %v6837 = vpack.c.b16 %v4261, %v4253
    %v6838 = vpack.c.b16 %v4262, %v4254
    %v6839 = vpack.c.b16 %v4271, %v4263
    %v6840 = vpack.c.b16 %v4272, %v4264
    %v6841 = vpack.c.b16 %v4273, %v4265
    %v6842 = vpack.c.b16 %v4274, %v4266
    %v6843 = vpack.c.b16 %v4275, %v4267
    %v6844 = vpack.c.b16 %v4276, %v4268
    %v6845 = vpack.c.b16 %v4277, %v4269
    %v6846 = vpack.c.b16 %v4278, %v4270
    %v6847 = vpack.c.b16 %v4287, %v4279
    %v6848 = vpack.c.b16 %v4288, %v4280
    %v6849 = vpack.c.b16 %v4289, %v4281
    %v6850 = vpack.c.b16 %v4290, %v4282
    %v6851 = vpack.c.b16 %v4291, %v4283
    %v6852 = vpack.c.b16 %v4292, %v4284
    %v6853 = vpack.c.b16 %v4293, %v4285
    %v6854 = vpack.c.b16 %v4294, %v4286
    %v6855 = vpack.c.b16 %v4303, %v4295
    %v6856 = vpack.c.b16 %v4304, %v4296
    %v6857 = vpack.c.b16 %v4305, %v4297
    %v6858 = vpack.c.b16 %v4306, %v4298
    %v6859 = vpack.c.b16 %v4307, %v4299
    %v6860 = vpack.c.b16 %v4308, %v4300
    %v6861 = vpack.c.b16 %v4309, %v4301
    %v6862 = vpack.c.b16 %v4310, %v4302
    %v6863 = vpack.c.b16 %v4319, %v4311
    %v6864 = vpack.c.b16 %v4320, %v4312
    %v6865 = vpack.c.b16 %v4321, %v4313
    %v6866 = vpack.c.b16 %v4322, %v4314
    %v6867 = vpack.c.b16 %v4323, %v4315
    %v6868 = vpack.c.b16 %v4324, %v4316
    %v6869 = vpack.c.b16 %v4325, %v4317
    %v6870 = vpack.c.b16 %v4326, %v4318
    %v6871 = vpack.c.b16 %v4335, %v4327
    %v6872 = vpack.c.b16 %v4336, %v4328
    %v6873 = vpack.c.b16 %v4337, %v4329
    %v6874 = vpack.c.b16 %v4338, %v4330
    %v6875 = vpack.c.b16 %v4339, %v4331
    %v6876 = vpack.c.b16 %v4340, %v4332
    %v6877 = vpack.c.b16 %v4341, %v4333
    %v6878 = vpack.c.b16 %v4342, %v4334
    %v6879 = vpack.c.b16 %v4351, %v4343
    %v6880 = vpack.c.b16 %v4352, %v4344
    %v6881 = vpack.c.b16 %v4353, %v4345
    %v6882 = vpack.c.b16 %v4354, %v4346
    %v6883 = vpack.c.b16 %v4355, %v4347
    %v6884 = vpack.c.b16 %v4356, %v4348
    %v6885 = vpack.c.b16 %v4357, %v4349
    %v6886 = vpack.c.b16 %v4358, %v4350
    %v6887 = vpack.c.b16 %v4367, %v4359
    %v6888 = vpack.c.b16 %v4368, %v4360
    %v6889 = vpack.c.b16 %v4369, %v4361
    %v6890 = vpack.c.b16 %v4370, %v4362
    %v6891 = vpack.c.b16 %v4371, %v4363
    %v6892 = vpack.c.b16 %v4372, %v4364
    %v6893 = vpack.c.b16 %v4373, %v4365
    %v6894 = vpack.c.b16 %v4374, %v4366
    %v6895 = vpack.c.b16 %v4383, %v4375
    %v6896 = vpack.c.b16 %v4384, %v4376
    %v6897 = vpack.c.b16 %v4385, %v4377
    %v6898 = vpack.c.b16 %v4386, %v4378
    %v6899 = vpack.c.b16 %v4387, %v4379
    %v6900 = vpack.c.b16 %v4388, %v4380
    %v6901 = vpack.c.b16 %v4389, %v4381
    %v6902 = vpack.c.b16 %v4390, %v4382
    %v6903 = vpack.c.b16 %v4399, %v4391
    %v6904 = vpack.c.b16 %v4400, %v4392
    %v6905 = vpack.c.b16 %v4401, %v4393
    %v6906 = vpack.c.b16 %v4402, %v4394
    %v6907 = vpack.c.b16 %v4403, %v4395
    %v6908 = vpack.c.b16 %v4404, %v4396
    %v6909 = vpack.c.b16 %v4405, %v4397
    %v6910 = vpack.c.b16 %v4406, %v4398
    %v6911 = vpack.c.b16 %v4415, %v4407
    %v6912 = vpack.c.b16 %v4416, %v4408
    %v6913 = vpack.c.b16 %v4417, %v4409
    %v6914 = vpack.c.b16 %v4418, %v4410
    %v6915 = vpack.c.b16 %v4419, %v4411
    %v6916 = vpack.c.b16 %v4420, %v4412
    %v6917 = vpack.c.b16 %v4421, %v4413
    %v6918 = vpack.c.b16 %v4422, %v4414
    %v6919 = vpack.c.b16 %v4431, %v4423
    %v6920 = vpack.c.b16 %v4432, %v4424
    %v6921 = vpack.c.b16 %v4433, %v4425
    %v6922 = vpack.c.b16 %v4434, %v4426
    %v6923 = vpack.c.b16 %v4435, %v4427
    %v6924 = vpack.c.b16 %v4436, %v4428
    %v6925 = vpack.c.b16 %v4437, %v4429
    %v6926 = vpack.c.b16 %v4438, %v4430
    %v6927 = vpack.c.b16 %v4447, %v4439
    %v6928 = vpack.c.b16 %v4448, %v4440
    %v6929 = vpack.c.b16 %v4449, %v4441
    %v6930 = vpack.c.b16 %v4450, %v4442
    %v6931 = vpack.c.b16 %v4451, %v4443
    %v6932 = vpack.c.b16 %v4452, %v4444
    %v6933 = vpack.c.b16 %v4453, %v4445
    %v6934 = vpack.c.b16 %v4454, %v4446
    %v6935 = vpack.c.b16 %v4463, %v4455
    %v6936 = vpack.c.b16 %v4464, %v4456
    %v6937 = vpack.c.b16 %v4465, %v4457
    %v6938 = vpack.c.b16 %v4466, %v4458
    %v6939 = vpack.c.b16 %v4467, %v4459
    %v6940 = vpack.c.b16 %v4468, %v4460
    %v6941 = vpack.c.b16 %v4469, %v4461
    %v6942 = vpack.c.b16 %v4470, %v4462
    %v6943 = vpack.c.b16 %v4479, %v4471
    %v6944 = vpack.c.b16 %v4480, %v4472
    %v6945 = vpack.c.b16 %v4481, %v4473
    %v6946 = vpack.c.b16 %v4482, %v4474
    %v6947 = vpack.c.b16 %v4483, %v4475
    %v6948 = vpack.c.b16 %v4484, %v4476
    %v6949 = vpack.c.b16 %v4485, %v4477
    %v6950 = vpack.c.b16 %v4486, %v4478
    %v6951 = vpack.c.b16 %v4495, %v4487
    %v6952 = vpack.c.b16 %v4496, %v4488
    %v6953 = vpack.c.b16 %v4497, %v4489
    %v6954 = vpack.c.b16 %v4498, %v4490
    %v6955 = vpack.c.b16 %v4499, %v4491
    %v6956 = vpack.c.b16 %v4500, %v4492
    %v6957 = vpack.c.b16 %v4501, %v4493
    %v6958 = vpack.c.b16 %v4502, %v4494
    %v6959 = vpack.c.b16 %v4511, %v4503
    %v6960 = vpack.c.b16 %v4512, %v4504
    %v6961 = vpack.c.b16 %v4513, %v4505
    %v6962 = vpack.c.b16 %v4514, %v4506
    %v6963 = vpack.c.b16 %v4515, %v4507
    %v6964 = vpack.c.b16 %v4516, %v4508
    %v6965 = vpack.c.b16 %v4517, %v4509
    %v6966 = vpack.c.b16 %v4518, %v4510
    %v6967 = vpack.c.b16 %v4527, %v4519
    %v6968 = vpack.c.b16 %v4528, %v4520
    %v6969 = vpack.c.b16 %v4529, %v4521
    %v6970 = vpack.c.b16 %v4530, %v4522
    %v6971 = vpack.c.b16 %v4531, %v4523
    %v6972 = vpack.c.b16 %v4532, %v4524
    %v6973 = vpack.c.b16 %v4533, %v4525
    %v6974 = vpack.c.b16 %v4534, %v4526
    %v6975 = vpack.c.b16 %v4543, %v4535
    %v6976 = vpack.c.b16 %v4544, %v4536
    %v6977 = vpack.c.b16 %v4545, %v4537
    %v6978 = vpack.c.b16 %v4546, %v4538
    %v6979 = vpack.c.b16 %v4547, %v4539
    %v6980 = vpack.c.b16 %v4548, %v4540
    %v6981 = vpack.c.b16 %v4549, %v4541
    %v6982 = vpack.c.b16 %v4550, %v4542
    %v6983 = vpack.c.b16 %v4559, %v4551
    %v6984 = vpack.c.b16 %v4560, %v4552
    %v6985 = vpack.c.b16 %v4561, %v4553
    %v6986 = vpack.c.b16 %v4562, %v4554
    %v6987 = vpack.c.b16 %v4563, %v4555
    %v6988 = vpack.c.b16 %v4564, %v4556
    %v6989 = vpack.c.b16 %v4565, %v4557
    %v6990 = vpack.c.b16 %v4566, %v4558
    %v6991 = vpack.c.b16 %v4575, %v4567
    %v6992 = vpack.c.b16 %v4576, %v4568
    %v6993 = vpack.c.b16 %v4577, %v4569
    %v6994 = vpack.c.b16 %v4578, %v4570
    %v6995 = vpack.c.b16 %v4579, %v4571
    %v6996 = vpack.c.b16 %v4580, %v4572
    %v6997 = vpack.c.b16 %v4581, %v4573
    %v6998 = vpack.c.b16 %v4582, %v4574
    %v6999 = vpack.c.b16 %v4591, %v4583
    %v7000 = vpack.c.b16 %v4592, %v4584
    %v7001 = vpack.c.b16 %v4593, %v4585
    %v7002 = vpack.c.b16 %v4594, %v4586
    %v7003 = vpack.c.b16 %v4595, %v4587
    %v7004 = vpack.c.b16 %v4596, %v4588
    %v7005 = vpack.c.b16 %v4597, %v4589
    %v7006 = vpack.c.b16 %v4598, %v4590
    %v7007 = vpack.c.b16 %v4607, %v4599
    %v7008 = vpack.c.b16 %v4608, %v4600
    %v7009 = vpack.c.b16 %v4609, %v4601
    %v7010 = vpack.c.b16 %v4610, %v4602
    %v7011 = vpack.c.b16 %v4611, %v4603
    %v7012 = vpack.c.b16 %v4612, %v4604
    %v7013 = vpack.c.b16 %v4613, %v4605
    %v7014 = vpack.c.b16 %v4614, %v4606
    %v7015 = vpack.c.b16 %v4623, %v4615
    %v7016 = vpack.c.b16 %v4624, %v4616
    %v7017 = vpack.c.b16 %v4625, %v4617
    %v7018 = vpack.c.b16 %v4626, %v4618
    %v7019 = vpack.c.b16 %v4627, %v4619
    %v7020 = vpack.c.b16 %v4628, %v4620
    %v7021 = vpack.c.b16 %v4629, %v4621
    %v7022 = vpack.c.b16 %v4630, %v4622
    %v7023 = vpack.c.b16 %v4639, %v4631
    %v7024 = vpack.c.b16 %v4640, %v4632
    %v7025 = vpack.c.b16 %v4641, %v4633
    %v7026 = vpack.c.b16 %v4642, %v4634
    %v7027 = vpack.c.b16 %v4643, %v4635
    %v7028 = vpack.c.b16 %v4644, %v4636
    %v7029 = vpack.c.b16 %v4645, %v4637
    %v7030 = vpack.c.b16 %v4646, %v4638
    %v7031 = vpack.c.b16 %v4655, %v4647
    %v7032 = vpack.c.b16 %v4656, %v4648
    %v7033 = vpack.c.b16 %v4657, %v4649
    %v7034 = vpack.c.b16 %v4658, %v4650
    %v7035 = vpack.c.b16 %v4659, %v4651
    %v7036 = vpack.c.b16 %v4660, %v4652
    %v7037 = vpack.c.b16 %v4661, %v4653
    %v7038 = vpack.c.b16 %v4662, %v4654
    %v7039 = vpack.c.b16 %v4671, %v4663
    %v7040 = vpack.c.b16 %v4672, %v4664
    %v7041 = vpack.c.b16 %v4673, %v4665
    %v7042 = vpack.c.b16 %v4674, %v4666
    %v7043 = vpack.c.b16 %v4675, %v4667
    %v7044 = vpack.c.b16 %v4676, %v4668
    %v7045 = vpack.c.b16 %v4677, %v4669
    %v7046 = vpack.c.b16 %v4678, %v4670
    %v7047 = vpack.c.b16 %v4687, %v4679
    %v7048 = vpack.c.b16 %v4688, %v4680
    %v7049 = vpack.c.b16 %v4689, %v4681
    %v7050 = vpack.c.b16 %v4690, %v4682
    %v7051 = vpack.c.b16 %v4691, %v4683
    %v7052 = vpack.c.b16 %v4692, %v4684
    %v7053 = vpack.c.b16 %v4693, %v4685
    %v7054 = vpack.c.b16 %v4694, %v4686
    %v7055 = vpack.c.b16 %v4703, %v4695
    %v7056 = vpack.c.b16 %v4704, %v4696
    %v7057 = vpack.c.b16 %v4705, %v4697
    %v7058 = vpack.c.b16 %v4706, %v4698
    %v7059 = vpack.c.b16 %v4707, %v4699
    %v7060 = vpack.c.b16 %v4708, %v4700
    %v7061 = vpack.c.b16 %v4709, %v4701
    %v7062 = vpack.c.b16 %v4710, %v4702
    %v7063 = vpack.c.b16 %v4719, %v4711
    %v7064 = vpack.c.b16 %v4720, %v4712
    %v7065 = vpack.c.b16 %v4721, %v4713
    %v7066 = vpack.c.b16 %v4722, %v4714
    %v7067 = vpack.c.b16 %v4723, %v4715
    %v7068 = vpack.c.b16 %v4724, %v4716
    %v7069 = vpack.c.b16 %v4725, %v4717
    %v7070 = vpack.c.b16 %v4726, %v4718
    %v7071 = vpack.c.b16 %v4735, %v4727
    %v7072 = vpack.c.b16 %v4736, %v4728
    %v7073 = vpack.c.b16 %v4737, %v4729
    %v7074 = vpack.c.b16 %v4738, %v4730
    %v7075 = vpack.c.b16 %v4739, %v4731
    %v7076 = vpack.c.b16 %v4740, %v4732
    %v7077 = vpack.c.b16 %v4741, %v4733
    %v7078 = vpack.c.b16 %v4742, %v4734
    %v7079 = vpack.c.b16 %v4751, %v4743
    %v7080 = vpack.c.b16 %v4752, %v4744
    %v7081 = vpack.c.b16 %v4753, %v4745
    %v7082 = vpack.c.b16 %v4754, %v4746
    %v7083 = vpack.c.b16 %v4755, %v4747
    %v7084 = vpack.c.b16 %v4756, %v4748
    %v7085 = vpack.c.b16 %v4757, %v4749
    %v7086 = vpack.c.b16 %v4758, %v4750
    %v7087 = vpack.c.b16 %v4767, %v4759
    %v7088 = vpack.c.b16 %v4768, %v4760
    %v7089 = vpack.c.b16 %v4769, %v4761
    %v7090 = vpack.c.b16 %v4770, %v4762
    %v7091 = vpack.c.b16 %v4771, %v4763
    %v7092 = vpack.c.b16 %v4772, %v4764
    %v7093 = vpack.c.b16 %v4773, %v4765
    %v7094 = vpack.c.b16 %v4774, %v4766
    %v7095 = vpack.c.b16 %v4783, %v4775
    %v7096 = vpack.c.b16 %v4784, %v4776
    %v7097 = vpack.c.b16 %v4785, %v4777
    %v7098 = vpack.c.b16 %v4786, %v4778
    %v7099 = vpack.c.b16 %v4787, %v4779
    %v7100 = vpack.c.b16 %v4788, %v4780
    %v7101 = vpack.c.b16 %v4789, %v4781
    %v7102 = vpack.c.b16 %v4790, %v4782
    %v7103 = vpack.c.b16 %v4799, %v4791
    %v7104 = vpack.c.b16 %v4800, %v4792
    %v7105 = vpack.c.b16 %v4801, %v4793
    %v7106 = vpack.c.b16 %v4802, %v4794
    %v7107 = vpack.c.b16 %v4803, %v4795
    %v7108 = vpack.c.b16 %v4804, %v4796
    %v7109 = vpack.c.b16 %v4805, %v4797
    %v7110 = vpack.c.b16 %v4806, %v4798
    %v7111 = vpack.c.b16 %v4815, %v4807
    %v7112 = vpack.c.b16 %v4816, %v4808
    %v7113 = vpack.c.b16 %v4817, %v4809
    %v7114 = vpack.c.b16 %v4818, %v4810
    %v7115 = vpack.c.b16 %v4819, %v4811
    %v7116 = vpack.c.b16 %v4820, %v4812
    %v7117 = vpack.c.b16 %v4821, %v4813
    %v7118 = vpack.c.b16 %v4822, %v4814
    %v7119 = vpack.c.b16 %v4831, %v4823
    %v7120 = vpack.c.b16 %v4832, %v4824
    %v7121 = vpack.c.b16 %v4833, %v4825
    %v7122 = vpack.c.b16 %v4834, %v4826
    %v7123 = vpack.c.b16 %v4835, %v4827
    %v7124 = vpack.c.b16 %v4836, %v4828
    %v7125 = vpack.c.b16 %v4837, %v4829
    %v7126 = vpack.c.b16 %v4838, %v4830
    %v7127 = vpack.c.b16 %v4847, %v4839
    %v7128 = vpack.c.b16 %v4848, %v4840
    %v7129 = vpack.c.b16 %v4849, %v4841
    %v7130 = vpack.c.b16 %v4850, %v4842
    %v7131 = vpack.c.b16 %v4851, %v4843
    %v7132 = vpack.c.b16 %v4852, %v4844
    %v7133 = vpack.c.b16 %v4853, %v4845
    %v7134 = vpack.c.b16 %v4854, %v4846
    %v7135 = vpack.c.b16 %v4863, %v4855
    %v7136 = vpack.c.b16 %v4864, %v4856
    %v7137 = vpack.c.b16 %v4865, %v4857
    %v7138 = vpack.c.b16 %v4866, %v4858
    %v7139 = vpack.c.b16 %v4867, %v4859
    %v7140 = vpack.c.b16 %v4868, %v4860
    %v7141 = vpack.c.b16 %v4869, %v4861
    %v7142 = vpack.c.b16 %v4870, %v4862
    %v7143 = vpack.c.b16 %v4879, %v4871
    %v7144 = vpack.c.b16 %v4880, %v4872
    %v7145 = vpack.c.b16 %v4881, %v4873
    %v7146 = vpack.c.b16 %v4882, %v4874
    %v7147 = vpack.c.b16 %v4883, %v4875
    %v7148 = vpack.c.b16 %v4884, %v4876
    %v7149 = vpack.c.b16 %v4885, %v4877
    %v7150 = vpack.c.b16 %v4886, %v4878
    %v7151 = vpack.c.b16 %v4895, %v4887
    %v7152 = vpack.c.b16 %v4896, %v4888
    %v7153 = vpack.c.b16 %v4897, %v4889
    %v7154 = vpack.c.b16 %v4898, %v4890
    %v7155 = vpack.c.b16 %v4899, %v4891
    %v7156 = vpack.c.b16 %v4900, %v4892
    %v7157 = vpack.c.b16 %v4901, %v4893
    %v7158 = vpack.c.b16 %v4902, %v4894
    %v7159 = vpack.c.b16 %v4911, %v4903
    %v7160 = vpack.c.b16 %v4912, %v4904
    %v7161 = vpack.c.b16 %v4913, %v4905
    %v7162 = vpack.c.b16 %v4914, %v4906
    %v7163 = vpack.c.b16 %v4915, %v4907
    %v7164 = vpack.c.b16 %v4916, %v4908
    %v7165 = vpack.c.b16 %v4917, %v4909
    %v7166 = vpack.c.b16 %v4918, %v4910
    %v7167 = vpack.c.b16 %v4927, %v4919
    %v7168 = vpack.c.b16 %v4928, %v4920
    %v7169 = vpack.c.b16 %v4929, %v4921
    %v7170 = vpack.c.b16 %v4930, %v4922
    %v7171 = vpack.c.b16 %v4931, %v4923
    %v7172 = vpack.c.b16 %v4932, %v4924
    %v7173 = vpack.c.b16 %v4933, %v4925
    %v7174 = vpack.c.b16 %v4934, %v4926
    %v7175 = vpack.c.b16 %v4943, %v4935
    %v7176 = vpack.c.b16 %v4944, %v4936
    %v7177 = vpack.c.b16 %v4945, %v4937
    %v7178 = vpack.c.b16 %v4946, %v4938
    %v7179 = vpack.c.b16 %v4947, %v4939
    %v7180 = vpack.c.b16 %v4948, %v4940
    %v7181 = vpack.c.b16 %v4949, %v4941
    %v7182 = vpack.c.b16 %v4950, %v4942
    %v7183 = vpack.c.b16 %v4959, %v4951
    %v7184 = vpack.c.b16 %v4960, %v4952
    %v7185 = vpack.c.b16 %v4961, %v4953
    %v7186 = vpack.c.b16 %v4962, %v4954
    %v7187 = vpack.c.b16 %v4963, %v4955
    %v7188 = vpack.c.b16 %v4964, %v4956
    %v7189 = vpack.c.b16 %v4965, %v4957
    %v7190 = vpack.c.b16 %v4966, %v4958
    %v7191 = vpack.c.b16 %v4975, %v4967
    %v7192 = vpack.c.b16 %v4976, %v4968
    %v7193 = vpack.c.b16 %v4977, %v4969
    %v7194 = vpack.c.b16 %v4978, %v4970
    %v7195 = vpack.c.b16 %v4979, %v4971
    %v7196 = vpack.c.b16 %v4980, %v4972
    %v7197 = vpack.c.b16 %v4981, %v4973
    %v7198 = vpack.c.b16 %v4982, %v4974
    %v7199 = vpack.c.b16 %v4991, %v4983
    %v7200 = vpack.c.b16 %v4992, %v4984
    %v7201 = vpack.c.b16 %v4993, %v4985
    %v7202 = vpack.c.b16 %v4994, %v4986
    %v7203 = vpack.c.b16 %v4995, %v4987
    %v7204 = vpack.c.b16 %v4996, %v4988
    %v7205 = vpack.c.b16 %v4997, %v4989
    %v7206 = vpack.c.b16 %v4998, %v4990
    %v7207 = vpack.c.b16 %v5007, %v4999
    %v7208 = vpack.c.b16 %v5008, %v5000
    %v7209 = vpack.c.b16 %v5009, %v5001
    %v7210 = vpack.c.b16 %v5010, %v5002
    %v7211 = vpack.c.b16 %v5011, %v5003
    %v7212 = vpack.c.b16 %v5012, %v5004
    %v7213 = vpack.c.b16 %v5013, %v5005
    %v7214 = vpack.c.b16 %v5014, %v5006
    %v7215 = vpack.c.b16 %v5023, %v5015
    %v7216 = vpack.c.b16 %v5024, %v5016
    %v7217 = vpack.c.b16 %v5025, %v5017
    %v7218 = vpack.c.b16 %v5026, %v5018
    %v7219 = vpack.c.b16 %v5027, %v5019
    %v7220 = vpack.c.b16 %v5028, %v5020
    %v7221 = vpack.c.b16 %v5029, %v5021
    %v7222 = vpack.c.b16 %v5030, %v5022
    %v7223 = vpack.c.b16 %v5039, %v5031
    %v7224 = vpack.c.b16 %v5040, %v5032
    %v7225 = vpack.c.b16 %v5041, %v5033
    %v7226 = vpack.c.b16 %v5042, %v5034
    %v7227 = vpack.c.b16 %v5043, %v5035
    %v7228 = vpack.c.b16 %v5044, %v5036
    %v7229 = vpack.c.b16 %v5045, %v5037
    %v7230 = vpack.c.b16 %v5046, %v5038
    %v7231 = vpack.c.b16 %v5055, %v5047
    %v7232 = vpack.c.b16 %v5056, %v5048
    %v7233 = vpack.c.b16 %v5057, %v5049
    %v7234 = vpack.c.b16 %v5058, %v5050
    %v7235 = vpack.c.b16 %v5059, %v5051
    %v7236 = vpack.c.b16 %v5060, %v5052
    %v7237 = vpack.c.b16 %v5061, %v5053
    %v7238 = vpack.c.b16 %v5062, %v5054
    %v7239 = vpack.c.b16 %v5071, %v5063
    %v7240 = vpack.c.b16 %v5072, %v5064
    %v7241 = vpack.c.b16 %v5073, %v5065
    %v7242 = vpack.c.b16 %v5074, %v5066
    %v7243 = vpack.c.b16 %v5075, %v5067
    %v7244 = vpack.c.b16 %v5076, %v5068
    %v7245 = vpack.c.b16 %v5077, %v5069
    %v7246 = vpack.c.b16 %v5078, %v5070
    %v7247 = vpack.c.b16 %v5087, %v5079
    %v7248 = vpack.c.b16 %v5088, %v5080
    %v7249 = vpack.c.b16 %v5089, %v5081
    %v7250 = vpack.c.b16 %v5090, %v5082
    %v7251 = vpack.c.b16 %v5091, %v5083
    %v7252 = vpack.c.b16 %v5092, %v5084
    %v7253 = vpack.c.b16 %v5093, %v5085
    %v7254 = vpack.c.b16 %v5094, %v5086
    %v7255 = vpack.c.b16 %v5103, %v5095
    %v7256 = vpack.c.b16 %v5104, %v5096
    %v7257 = vpack.c.b16 %v5105, %v5097
    %v7258 = vpack.c.b16 %v5106, %v5098
    %v7259 = vpack.c.b16 %v5107, %v5099
    %v7260 = vpack.c.b16 %v5108, %v5100
    %v7261 = vpack.c.b16 %v5109, %v5101
    %v7262 = vpack.c.b16 %v5110, %v5102
    %v7263 = vpack.c.b16 %v5119, %v5111
    %v7264 = vpack.c.b16 %v5120, %v5112
    %v7265 = vpack.c.b16 %v5121, %v5113
    %v7266 = vpack.c.b16 %v5122, %v5114
    %v7267 = vpack.c.b16 %v5123, %v5115
    %v7268 = vpack.c.b16 %v5124, %v5116
    %v7269 = vpack.c.b16 %v5125, %v5117
    %v7270 = vpack.c.b16 %v5126, %v5118
    %v7271 = vpack.c.b16 %v5135, %v5127
    %v7272 = vpack.c.b16 %v5136, %v5128
    %v7273 = vpack.c.b16 %v5137, %v5129
    %v7274 = vpack.c.b16 %v5138, %v5130
    %v7275 = vpack.c.b16 %v5139, %v5131
    %v7276 = vpack.c.b16 %v5140, %v5132
    %v7277 = vpack.c.b16 %v5141, %v5133
    %v7278 = vpack.c.b16 %v5142, %v5134
    %v7279 = vpack.c.b16 %v5151, %v5143
    %v7280 = vpack.c.b16 %v5152, %v5144
    %v7281 = vpack.c.b16 %v5153, %v5145
    %v7282 = vpack.c.b16 %v5154, %v5146
    %v7283 = vpack.c.b16 %v5155, %v5147
    %v7284 = vpack.c.b16 %v5156, %v5148
    %v7285 = vpack.c.b16 %v5157, %v5149
    %v7286 = vpack.c.b16 %v5158, %v5150
    %v7287 = vpack.c.b16 %v5167, %v5159
    %v7288 = vpack.c.b16 %v5168, %v5160
    %v7289 = vpack.c.b16 %v5169, %v5161
    %v7290 = vpack.c.b16 %v5170, %v5162
    %v7291 = vpack.c.b16 %v5171, %v5163
    %v7292 = vpack.c.b16 %v5172, %v5164
    %v7293 = vpack.c.b16 %v5173, %v5165
    %v7294 = vpack.c.b16 %v5174, %v5166
    %v7295 = vpack.c.b16 %v5183, %v5175
    %v7296 = vpack.c.b16 %v5184, %v5176
    %v7297 = vpack.c.b16 %v5185, %v5177
    %v7298 = vpack.c.b16 %v5186, %v5178
    %v7299 = vpack.c.b16 %v5187, %v5179
    %v7300 = vpack.c.b16 %v5188, %v5180
    %v7301 = vpack.c.b16 %v5189, %v5181
    %v7302 = vpack.c.b16 %v5190, %v5182
    %v7303 = vpack.c.b16 %v5199, %v5191
    %v7304 = vpack.c.b16 %v5200, %v5192
    %v7305 = vpack.c.b16 %v5201, %v5193
    %v7306 = vpack.c.b16 %v5202, %v5194
    %v7307 = vpack.c.b16 %v5203, %v5195
    %v7308 = vpack.c.b16 %v5204, %v5196
    %v7309 = vpack.c.b16 %v5205, %v5197
    %v7310 = vpack.c.b16 %v5206, %v5198
    %v7311 = vpack.c.b16 %v5215, %v5207
    %v7312 = vpack.c.b16 %v5216, %v5208
    %v7313 = vpack.c.b16 %v5217, %v5209
    %v7314 = vpack.c.b16 %v5218, %v5210
    %v7315 = vpack.c.b16 %v5219, %v5211
    %v7316 = vpack.c.b16 %v5220, %v5212
    %v7317 = vpack.c.b16 %v5221, %v5213
    %v7318 = vpack.c.b16 %v5222, %v5214
    %v7319 = vpack.c.b16 %v5231, %v5223
    %v7320 = vpack.c.b16 %v5232, %v5224
    %v7321 = vpack.c.b16 %v5233, %v5225
    %v7322 = vpack.c.b16 %v5234, %v5226
    %v7323 = vpack.c.b16 %v5235, %v5227
    %v7324 = vpack.c.b16 %v5236, %v5228
    %v7325 = vpack.c.b16 %v5237, %v5229
    %v7326 = vpack.c.b16 %v5238, %v5230
    %v7327 = vpack.c.b16 %v5247, %v5239
    %v7328 = vpack.c.b16 %v5248, %v5240
    %v7329 = vpack.c.b16 %v5249, %v5241
    %v7330 = vpack.c.b16 %v5250, %v5242
    %v7331 = vpack.c.b16 %v5251, %v5243
    %v7332 = vpack.c.b16 %v5252, %v5244
    %v7333 = vpack.c.b16 %v5253, %v5245
    %v7334 = vpack.c.b16 %v5254, %v5246
    %v7335 = vpack.c.b16 %v5263, %v5255
    %v7336 = vpack.c.b16 %v5264, %v5256
    %v7337 = vpack.c.b16 %v5265, %v5257
    %v7338 = vpack.c.b16 %v5266, %v5258
    %v7339 = vpack.c.b16 %v5267, %v5259
    %v7340 = vpack.c.b16 %v5268, %v5260
    %v7341 = vpack.c.b16 %v5269, %v5261
    %v7342 = vpack.c.b16 %v5270, %v5262
    %v7343 = vpack.c.b16 %v5279, %v5271
    %v7344 = vpack.c.b16 %v5280, %v5272
    %v7345 = vpack.c.b16 %v5281, %v5273
    %v7346 = vpack.c.b16 %v5282, %v5274
    %v7347 = vpack.c.b16 %v5283, %v5275
    %v7348 = vpack.c.b16 %v5284, %v5276
    %v7349 = vpack.c.b16 %v5285, %v5277
    %v7350 = vpack.c.b16 %v5286, %v5278
    %v7351 = vpack.c.b16 %v5295, %v5287
    %v7352 = vpack.c.b16 %v5296, %v5288
    %v7353 = vpack.c.b16 %v5297, %v5289
    %v7354 = vpack.c.b16 %v5298, %v5290
    %v7355 = vpack.c.b16 %v5299, %v5291
    %v7356 = vpack.c.b16 %v5300, %v5292
    %v7357 = vpack.c.b16 %v5301, %v5293
    %v7358 = vpack.c.b16 %v5302, %v5294
    %v7359 = vpack.c.b16 %v5311, %v5303
    %v7360 = vpack.c.b16 %v5312, %v5304
    %v7361 = vpack.c.b16 %v5313, %v5305
    %v7362 = vpack.c.b16 %v5314, %v5306
    %v7363 = vpack.c.b16 %v5315, %v5307
    %v7364 = vpack.c.b16 %v5316, %v5308
    %v7365 = vpack.c.b16 %v5317, %v5309
    %v7366 = vpack.c.b16 %v5318, %v5310
    %v7367 = vpack.c.b16 %v5327, %v5319
    %v7368 = vpack.c.b16 %v5328, %v5320
    %v7369 = vpack.c.b16 %v5329, %v5321
    %v7370 = vpack.c.b16 %v5330, %v5322
    %v7371 = vpack.c.b16 %v5331, %v5323
    %v7372 = vpack.c.b16 %v5332, %v5324
    %v7373 = vpack.c.b16 %v5333, %v5325
    %v7374 = vpack.c.b16 %v5334, %v5326
    %v7375 = vpack.c.b16 %v5343, %v5335
    %v7376 = vpack.c.b16 %v5344, %v5336
    %v7377 = vpack.c.b16 %v5345, %v5337
    %v7378 = vpack.c.b16 %v5346, %v5338
    %v7379 = vpack.c.b16 %v5347, %v5339
    %v7380 = vpack.c.b16 %v5348, %v5340
    %v7381 = vpack.c.b16 %v5349, %v5341
    %v7382 = vpack.c.b16 %v5350, %v5342
    %v7383 = vpack.c.b16 %v5359, %v5351
    %v7384 = vpack.c.b16 %v5360, %v5352
    %v7385 = vpack.c.b16 %v5361, %v5353
    %v7386 = vpack.c.b16 %v5362, %v5354
    %v7387 = vpack.c.b16 %v5363, %v5355
    %v7388 = vpack.c.b16 %v5364, %v5356
    %v7389 = vpack.c.b16 %v5365, %v5357
    %v7390 = vpack.c.b16 %v5366, %v5358
    %v7391 = vpack.c.b16 %v5375, %v5367
    %v7392 = vpack.c.b16 %v5376, %v5368
    %v7393 = vpack.c.b16 %v5377, %v5369
    %v7394 = vpack.c.b16 %v5378, %v5370
    %v7395 = vpack.c.b16 %v5379, %v5371
    %v7396 = vpack.c.b16 %v5380, %v5372
    %v7397 = vpack.c.b16 %v5381, %v5373
    %v7398 = vpack.c.b16 %v5382, %v5374
    %v7399 = vpack.c.b16 %v5391, %v5383
    %v7400 = vpack.c.b16 %v5392, %v5384
    %v7401 = vpack.c.b16 %v5393, %v5385
    %v7402 = vpack.c.b16 %v5394, %v5386
    %v7403 = vpack.c.b16 %v5395, %v5387
    %v7404 = vpack.c.b16 %v5396, %v5388
    %v7405 = vpack.c.b16 %v5397, %v5389
    %v7406 = vpack.c.b16 %v5398, %v5390
    %v7407 = vpack.c.b16 %v5407, %v5399
    %v7408 = vpack.c.b16 %v5408, %v5400
    %v7409 = vpack.c.b16 %v5409, %v5401
    %v7410 = vpack.c.b16 %v5410, %v5402
    %v7411 = vpack.c.b16 %v5411, %v5403
    %v7412 = vpack.c.b16 %v5412, %v5404
    %v7413 = vpack.c.b16 %v5413, %v5405
    %v7414 = vpack.c.b16 %v5414, %v5406
    %v7415 = vpack.c.b16 %v5423, %v5415
    %v7416 = vpack.c.b16 %v5424, %v5416
    %v7417 = vpack.c.b16 %v5425, %v5417
    %v7418 = vpack.c.b16 %v5426, %v5418
    %v7419 = vpack.c.b16 %v5427, %v5419
    %v7420 = vpack.c.b16 %v5428, %v5420
    %v7421 = vpack.c.b16 %v5429, %v5421
    %v7422 = vpack.c.b16 %v5430, %v5422
    %v7423 = vpack.c.b16 %v5439, %v5431
    %v7424 = vpack.c.b16 %v5440, %v5432
    %v7425 = vpack.c.b16 %v5441, %v5433
    %v7426 = vpack.c.b16 %v5442, %v5434
    %v7427 = vpack.c.b16 %v5443, %v5435
    %v7428 = vpack.c.b16 %v5444, %v5436
    %v7429 = vpack.c.b16 %v5445, %v5437
    %v7430 = vpack.c.b16 %v5446, %v5438
    %v7431 = vpack.c.b16 %v5455, %v5447
    %v7432 = vpack.c.b16 %v5456, %v5448
    %v7433 = vpack.c.b16 %v5457, %v5449
    %v7434 = vpack.c.b16 %v5458, %v5450
    %v7435 = vpack.c.b16 %v5459, %v5451
    %v7436 = vpack.c.b16 %v5460, %v5452
    %v7437 = vpack.c.b16 %v5461, %v5453
    %v7438 = vpack.c.b16 %v5462, %v5454
    %v7439 = vpack.c.b16 %v5471, %v5463
    %v7440 = vpack.c.b16 %v5472, %v5464
    %v7441 = vpack.c.b16 %v5473, %v5465
    %v7442 = vpack.c.b16 %v5474, %v5466
    %v7443 = vpack.c.b16 %v5475, %v5467
    %v7444 = vpack.c.b16 %v5476, %v5468
    %v7445 = vpack.c.b16 %v5477, %v5469
    %v7446 = vpack.c.b16 %v5478, %v5470
    %v7447 = vpack.c.b16 %v5487, %v5479
    %v7448 = vpack.c.b16 %v5488, %v5480
    %v7449 = vpack.c.b16 %v5489, %v5481
    %v7450 = vpack.c.b16 %v5490, %v5482
    %v7451 = vpack.c.b16 %v5491, %v5483
    %v7452 = vpack.c.b16 %v5492, %v5484
    %v7453 = vpack.c.b16 %v5493, %v5485
    %v7454 = vpack.c.b16 %v5494, %v5486
    %v7455 = vpack.c.b16 %v5503, %v5495
    %v7456 = vpack.c.b16 %v5504, %v5496
    %v7457 = vpack.c.b16 %v5505, %v5497
    %v7458 = vpack.c.b16 %v5506, %v5498
    %v7459 = vpack.c.b16 %v5507, %v5499
    %v7460 = vpack.c.b16 %v5508, %v5500
    %v7461 = vpack.c.b16 %v5509, %v5501
    %v7462 = vpack.c.b16 %v5510, %v5502
    %v7463 = vpack.c.b16 %v5519, %v5511
    %v7464 = vpack.c.b16 %v5520, %v5512
    %v7465 = vpack.c.b16 %v5521, %v5513
    %v7466 = vpack.c.b16 %v5522, %v5514
    %v7467 = vpack.c.b16 %v5523, %v5515
    %v7468 = vpack.c.b16 %v5524, %v5516
    %v7469 = vpack.c.b16 %v5525, %v5517
    %v7470 = vpack.c.b16 %v5526, %v5518
    %v7471 = vpack.c.b16 %v5535, %v5527
    %v7472 = vpack.c.b16 %v5536, %v5528
    %v7473 = vpack.c.b16 %v5537, %v5529
    %v7474 = vpack.c.b16 %v5538, %v5530
    %v7475 = vpack.c.b16 %v5539, %v5531
    %v7476 = vpack.c.b16 %v5540, %v5532
    %v7477 = vpack.c.b16 %v5541, %v5533
    %v7478 = vpack.c.b16 %v5542, %v5534
    %v7479 = vpack.c.b16 %v5551, %v5543
    %v7480 = vpack.c.b16 %v5552, %v5544
    %v7481 = vpack.c.b16 %v5553, %v5545
    %v7482 = vpack.c.b16 %v5554, %v5546
    %v7483 = vpack.c.b16 %v5555, %v5547
    %v7484 = vpack.c.b16 %v5556, %v5548
    %v7485 = vpack.c.b16 %v5557, %v5549
    %v7486 = vpack.c.b16 %v5558, %v5550
    %v7487 = vpack.c.b16 %v5567, %v5559
    %v7488 = vpack.c.b16 %v5568, %v5560
    %v7489 = vpack.c.b16 %v5569, %v5561
    %v7490 = vpack.c.b16 %v5570, %v5562
    %v7491 = vpack.c.b16 %v5571, %v5563
    %v7492 = vpack.c.b16 %v5572, %v5564
    %v7493 = vpack.c.b16 %v5573, %v5565
    %v7494 = vpack.c.b16 %v5574, %v5566
    %v7495 = vpack.c.b16 %v5583, %v5575
    %v7496 = vpack.c.b16 %v5584, %v5576
    %v7497 = vpack.c.b16 %v5585, %v5577
    %v7498 = vpack.c.b16 %v5586, %v5578
    %v7499 = vpack.c.b16 %v5587, %v5579
    %v7500 = vpack.c.b16 %v5588, %v5580
    %v7501 = vpack.c.b16 %v5589, %v5581
    %v7502 = vpack.c.b16 %v5590, %v5582
    %v7503 = vpack.c.b16 %v5599, %v5591
    %v7504 = vpack.c.b16 %v5600, %v5592
    %v7505 = vpack.c.b16 %v5601, %v5593
    %v7506 = vpack.c.b16 %v5602, %v5594
    %v7507 = vpack.c.b16 %v5603, %v5595
    %v7508 = vpack.c.b16 %v5604, %v5596
    %v7509 = vpack.c.b16 %v5605, %v5597
    %v7510 = vpack.c.b16 %v5606, %v5598
    %v7511 = vpack.c.b16 %v5615, %v5607
    %v7512 = vpack.c.b16 %v5616, %v5608
    %v7513 = vpack.c.b16 %v5617, %v5609
    %v7514 = vpack.c.b16 %v5618, %v5610
    %v7515 = vpack.c.b16 %v5619, %v5611
    %v7516 = vpack.c.b16 %v5620, %v5612
    %v7517 = vpack.c.b16 %v5621, %v5613
    %v7518 = vpack.c.b16 %v5622, %v5614
    %v7519 = vpack.c.b16 %v5631, %v5623
    %v7520 = vpack.c.b16 %v5632, %v5624
    %v7521 = vpack.c.b16 %v5633, %v5625
    %v7522 = vpack.c.b16 %v5634, %v5626
    %v7523 = vpack.c.b16 %v5635, %v5627
    %v7524 = vpack.c.b16 %v5636, %v5628
    %v7525 = vpack.c.b16 %v5637, %v5629
    %v7526 = vpack.c.b16 %v5638, %v5630
    %v7527 = vpack.c.b16 %v5647, %v5639
    %v7528 = vpack.c.b16 %v5648, %v5640
    %v7529 = vpack.c.b16 %v5649, %v5641
    %v7530 = vpack.c.b16 %v5650, %v5642
    %v7531 = vpack.c.b16 %v5651, %v5643
    %v7532 = vpack.c.b16 %v5652, %v5644
    %v7533 = vpack.c.b16 %v5653, %v5645
    %v7534 = vpack.c.b16 %v5654, %v5646
    %v7535 = vpack.c.b16 %v5663, %v5655
    %v7536 = vpack.c.b16 %v5664, %v5656
    %v7537 = vpack.c.b16 %v5665, %v5657
    %v7538 = vpack.c.b16 %v5666, %v5658
    %v7539 = vpack.c.b16 %v5667, %v5659
    %v7540 = vpack.c.b16 %v5668, %v5660
    %v7541 = vpack.c.b16 %v5669, %v5661
    %v7542 = vpack.c.b16 %v5670, %v5662
    %v7543 = vpack.c.b16 %v5679, %v5671
    %v7544 = vpack.c.b16 %v5680, %v5672
    %v7545 = vpack.c.b16 %v5681, %v5673
    %v7546 = vpack.c.b16 %v5682, %v5674
    %v7547 = vpack.c.b16 %v5683, %v5675
    %v7548 = vpack.c.b16 %v5684, %v5676
    %v7549 = vpack.c.b16 %v5685, %v5677
    %v7550 = vpack.c.b16 %v5686, %v5678
    %v7551 = vpack.c.b16 %v5695, %v5687
    %v7552 = vpack.c.b16 %v5696, %v5688
    %v7553 = vpack.c.b16 %v5697, %v5689
    %v7554 = vpack.c.b16 %v5698, %v5690
    %v7555 = vpack.c.b16 %v5699, %v5691
    %v7556 = vpack.c.b16 %v5700, %v5692
    %v7557 = vpack.c.b16 %v5701, %v5693
    %v7558 = vpack.c.b16 %v5702, %v5694
    %v7559 = vpack.c.b16 %v5711, %v5703
    %v7560 = vpack.c.b16 %v5712, %v5704
    %v7561 = vpack.c.b16 %v5713, %v5705
    %v7562 = vpack.c.b16 %v5714, %v5706
    %v7563 = vpack.c.b16 %v5715, %v5707
    %v7564 = vpack.c.b16 %v5716, %v5708
    %v7565 = vpack.c.b16 %v5717, %v5709
    %v7566 = vpack.c.b16 %v5718, %v5710
    %v7567 = vpack.c.b16 %v5727, %v5719
    %v7568 = vpack.c.b16 %v5728, %v5720
    %v7569 = vpack.c.b16 %v5729, %v5721
    %v7570 = vpack.c.b16 %v5730, %v5722
    %v7571 = vpack.c.b16 %v5731, %v5723
    %v7572 = vpack.c.b16 %v5732, %v5724
    %v7573 = vpack.c.b16 %v5733, %v5725
    %v7574 = vpack.c.b16 %v5734, %v5726
    %v7575 = vpack.c.b16 %v5743, %v5735
    %v7576 = vpack.c.b16 %v5744, %v5736
    %v7577 = vpack.c.b16 %v5745, %v5737
    %v7578 = vpack.c.b16 %v5746, %v5738
    %v7579 = vpack.c.b16 %v5747, %v5739
    %v7580 = vpack.c.b16 %v5748, %v5740
    %v7581 = vpack.c.b16 %v5749, %v5741
    %v7582 = vpack.c.b16 %v5750, %v5742
    %v7583 = vpack.c.b16 %v5759, %v5751
    %v7584 = vpack.c.b16 %v5760, %v5752
    %v7585 = vpack.c.b16 %v5761, %v5753
    %v7586 = vpack.c.b16 %v5762, %v5754
    %v7587 = vpack.c.b16 %v5763, %v5755
    %v7588 = vpack.c.b16 %v5764, %v5756
    %v7589 = vpack.c.b16 %v5765, %v5757
    %v7590 = vpack.c.b16 %v5766, %v5758
    %v7591 = vpack.c.b16 %v5775, %v5767
    %v7592 = vpack.c.b16 %v5776, %v5768
    %v7593 = vpack.c.b16 %v5777, %v5769
    %v7594 = vpack.c.b16 %v5778, %v5770
    %v7595 = vpack.c.b16 %v5779, %v5771
    %v7596 = vpack.c.b16 %v5780, %v5772
    %v7597 = vpack.c.b16 %v5781, %v5773
    %v7598 = vpack.c.b16 %v5782, %v5774
    %v7599 = vpack.c.b16 %v5791, %v5783
    %v7600 = vpack.c.b16 %v5792, %v5784
    %v7601 = vpack.c.b16 %v5793, %v5785
    %v7602 = vpack.c.b16 %v5794, %v5786
    %v7603 = vpack.c.b16 %v5795, %v5787
    %v7604 = vpack.c.b16 %v5796, %v5788
    %v7605 = vpack.c.b16 %v5797, %v5789
    %v7606 = vpack.c.b16 %v5798, %v5790
    %v7607 = vpack.c.b16 %v5807, %v5799
    %v7608 = vpack.c.b16 %v5808, %v5800
    %v7609 = vpack.c.b16 %v5809, %v5801
    %v7610 = vpack.c.b16 %v5810, %v5802
    %v7611 = vpack.c.b16 %v5811, %v5803
    %v7612 = vpack.c.b16 %v5812, %v5804
    %v7613 = vpack.c.b16 %v5813, %v5805
    %v7614 = vpack.c.b16 %v5814, %v5806
    %v7615 = vpack.c.b16 %v5823, %v5815
    %v7616 = vpack.c.b16 %v5824, %v5816
    %v7617 = vpack.c.b16 %v5825, %v5817
    %v7618 = vpack.c.b16 %v5826, %v5818
    %v7619 = vpack.c.b16 %v5827, %v5819
    %v7620 = vpack.c.b16 %v5828, %v5820
    %v7621 = vpack.c.b16 %v5829, %v5821
    %v7622 = vpack.c.b16 %v5830, %v5822
    %v7623 = vpack.c.b16 %v5839, %v5831
    %v7624 = vpack.c.b16 %v5840, %v5832
    %v7625 = vpack.c.b16 %v5841, %v5833
    %v7626 = vpack.c.b16 %v5842, %v5834
    %v7627 = vpack.c.b16 %v5843, %v5835
    %v7628 = vpack.c.b16 %v5844, %v5836
    %v7629 = vpack.c.b16 %v5845, %v5837
    %v7630 = vpack.c.b16 %v5846, %v5838
    %v7631 = vpack.c.b16 %v5855, %v5847
    %v7632 = vpack.c.b16 %v5856, %v5848
    %v7633 = vpack.c.b16 %v5857, %v5849
    %v7634 = vpack.c.b16 %v5858, %v5850
    %v7635 = vpack.c.b16 %v5859, %v5851
    %v7636 = vpack.c.b16 %v5860, %v5852
    %v7637 = vpack.c.b16 %v5861, %v5853
    %v7638 = vpack.c.b16 %v5862, %v5854
    %v7639 = vpack.c.b16 %v5871, %v5863
    %v7640 = vpack.c.b16 %v5872, %v5864
    %v7641 = vpack.c.b16 %v5873, %v5865
    %v7642 = vpack.c.b16 %v5874, %v5866
    %v7643 = vpack.c.b16 %v5875, %v5867
    %v7644 = vpack.c.b16 %v5876, %v5868
    %v7645 = vpack.c.b16 %v5877, %v5869
    %v7646 = vpack.c.b16 %v5878, %v5870
    %v7647 = vpack.c.b16 %v5887, %v5879
    %v7648 = vpack.c.b16 %v5888, %v5880
    %v7649 = vpack.c.b16 %v5889, %v5881
    %v7650 = vpack.c.b16 %v5890, %v5882
    %v7651 = vpack.c.b16 %v5891, %v5883
    %v7652 = vpack.c.b16 %v5892, %v5884
    %v7653 = vpack.c.b16 %v5893, %v5885
    %v7654 = vpack.c.b16 %v5894, %v5886
    %v7655 = vpack.c.b16 %v5903, %v5895
    %v7656 = vpack.c.b16 %v5904, %v5896
    %v7657 = vpack.c.b16 %v5905, %v5897
    %v7658 = vpack.c.b16 %v5906, %v5898
    %v7659 = vpack.c.b16 %v5907, %v5899
    %v7660 = vpack.c.b16 %v5908, %v5900
    %v7661 = vpack.c.b16 %v5909, %v5901
    %v7662 = vpack.c.b16 %v5910, %v5902
    %v7663 = vpack.c.b16 %v5919, %v5911
    %v7664 = vpack.c.b16 %v5920, %v5912
    %v7665 = vpack.c.b16 %v5921, %v5913
    %v7666 = vpack.c.b16 %v5922, %v5914
    %v7667 = vpack.c.b16 %v5923, %v5915
    %v7668 = vpack.c.b16 %v5924, %v5916
    %v7669 = vpack.c.b16 %v5925, %v5917
    %v7670 = vpack.c.b16 %v5926, %v5918
    %v7671 = vpack.c.b16 %v5935, %v5927
    %v7672 = vpack.c.b16 %v5936, %v5928
    %v7673 = vpack.c.b16 %v5937, %v5929
    %v7674 = vpack.c.b16 %v5938, %v5930
    %v7675 = vpack.c.b16 %v5939, %v5931
    %v7676 = vpack.c.b16 %v5940, %v5932
    %v7677 = vpack.c.b16 %v5941, %v5933
    %v7678 = vpack.c.b16 %v5942, %v5934
    %v7679 = vpack.c.b16 %v5951, %v5943
    %v7680 = vpack.c.b16 %v5952, %v5944
    %v7681 = vpack.c.b16 %v5953, %v5945
    %v7682 = vpack.c.b16 %v5954, %v5946
    %v7683 = vpack.c.b16 %v5955, %v5947
    %v7684 = vpack.c.b16 %v5956, %v5948
    %v7685 = vpack.c.b16 %v5957, %v5949
    %v7686 = vpack.c.b16 %v5958, %v5950
    %v7687 = vpack.c.b16 %v5967, %v5959
    %v7688 = vpack.c.b16 %v5968, %v5960
    %v7689 = vpack.c.b16 %v5969, %v5961
    %v7690 = vpack.c.b16 %v5970, %v5962
    %v7691 = vpack.c.b16 %v5971, %v5963
    %v7692 = vpack.c.b16 %v5972, %v5964
    %v7693 = vpack.c.b16 %v5973, %v5965
    %v7694 = vpack.c.b16 %v5974, %v5966
    %v7695 = vpack.c.b16 %v5983, %v5975
    %v7696 = vpack.c.b16 %v5984, %v5976
    %v7697 = vpack.c.b16 %v5985, %v5977
    %v7698 = vpack.c.b16 %v5986, %v5978
    %v7699 = vpack.c.b16 %v5987, %v5979
    %v7700 = vpack.c.b16 %v5988, %v5980
    %v7701 = vpack.c.b16 %v5989, %v5981
    %v7702 = vpack.c.b16 %v5990, %v5982
    %v7703 = vpack.c.b16 %v5999, %v5991
    %v7704 = vpack.c.b16 %v6000, %v5992
    %v7705 = vpack.c.b16 %v6001, %v5993
    %v7706 = vpack.c.b16 %v6002, %v5994
    %v7707 = vpack.c.b16 %v6003, %v5995
    %v7708 = vpack.c.b16 %v6004, %v5996
    %v7709 = vpack.c.b16 %v6005, %v5997
    %v7710 = vpack.c.b16 %v6006, %v5998
    %v7711 = vpack.c.b16 %v6015, %v6007
    %v7712 = vpack.c.b16 %v6016, %v6008
    %v7713 = vpack.c.b16 %v6017, %v6009
    %v7714 = vpack.c.b16 %v6018, %v6010
    %v7715 = vpack.c.b16 %v6019, %v6011
    %v7716 = vpack.c.b16 %v6020, %v6012
    %v7717 = vpack.c.b16 %v6021, %v6013
    %v7718 = vpack.c.b16 %v6022, %v6014
    %v7719 = vpack.c.b16 %v6031, %v6023
    %v7720 = vpack.c.b16 %v6032, %v6024
    %v7721 = vpack.c.b16 %v6033, %v6025
    %v7722 = vpack.c.b16 %v6034, %v6026
    %v7723 = vpack.c.b16 %v6035, %v6027
    %v7724 = vpack.c.b16 %v6036, %v6028
    %v7725 = vpack.c.b16 %v6037, %v6029
    %v7726 = vpack.c.b16 %v6038, %v6030
    %v7727 = vpack.c.b16 %v6047, %v6039
    %v7728 = vpack.c.b16 %v6048, %v6040
    %v7729 = vpack.c.b16 %v6049, %v6041
    %v7730 = vpack.c.b16 %v6050, %v6042
    %v7731 = vpack.c.b16 %v6051, %v6043
    %v7732 = vpack.c.b16 %v6052, %v6044
    %v7733 = vpack.c.b16 %v6053, %v6045
    %v7734 = vpack.c.b16 %v6054, %v6046
    %v7735 = vpack.c.b16 %v6063, %v6055
    %v7736 = vpack.c.b16 %v6064, %v6056
    %v7737 = vpack.c.b16 %v6065, %v6057
    %v7738 = vpack.c.b16 %v6066, %v6058
    %v7739 = vpack.c.b16 %v6067, %v6059
    %v7740 = vpack.c.b16 %v6068, %v6060
    %v7741 = vpack.c.b16 %v6069, %v6061
    %v7742 = vpack.c.b16 %v6070, %v6062
    %v7743 = vpack.c.b16 %v6079, %v6071
    %v7744 = vpack.c.b16 %v6080, %v6072
    %v7745 = vpack.c.b16 %v6081, %v6073
    %v7746 = vpack.c.b16 %v6082, %v6074
    %v7747 = vpack.c.b16 %v6083, %v6075
    %v7748 = vpack.c.b16 %v6084, %v6076
    %v7749 = vpack.c.b16 %v6085, %v6077
    %v7750 = vpack.c.b16 %v6086, %v6078
    %v7751 = vpack.c.b16 %v6095, %v6087
    %v7752 = vpack.c.b16 %v6096, %v6088
    %v7753 = vpack.c.b16 %v6097, %v6089
    %v7754 = vpack.c.b16 %v6098, %v6090
    %v7755 = vpack.c.b16 %v6099, %v6091
    %v7756 = vpack.c.b16 %v6100, %v6092
    %v7757 = vpack.c.b16 %v6101, %v6093
    %v7758 = vpack.c.b16 %v6102, %v6094
    %v7759 = vpack.c.b16 %v6111, %v6103
    %v7760 = vpack.c.b16 %v6112, %v6104
    %v7761 = vpack.c.b16 %v6113, %v6105
    %v7762 = vpack.c.b16 %v6114, %v6106
    %v7763 = vpack.c.b16 %v6115, %v6107
    %v7764 = vpack.c.b16 %v6116, %v6108
    %v7765 = vpack.c.b16 %v6117, %v6109
    %v7766 = vpack.c.b16 %v6118, %v6110
    %v7767 = vpack.c.b16 %v6127, %v6119
    %v7768 = vpack.c.b16 %v6128, %v6120
    %v7769 = vpack.c.b16 %v6129, %v6121
    %v7770 = vpack.c.b16 %v6130, %v6122
    %v7771 = vpack.c.b16 %v6131, %v6123
    %v7772 = vpack.c.b16 %v6132, %v6124
    %v7773 = vpack.c.b16 %v6133, %v6125
    %v7774 = vpack.c.b16 %v6134, %v6126
    %v7775 = vpack.c.b16 %v6143, %v6135
    %v7776 = vpack.c.b16 %v6144, %v6136
    %v7777 = vpack.c.b16 %v6145, %v6137
    %v7778 = vpack.c.b16 %v6146, %v6138
    %v7779 = vpack.c.b16 %v6147, %v6139
    %v7780 = vpack.c.b16 %v6148, %v6140
    %v7781 = vpack.c.b16 %v6149, %v6141
    %v7782 = vpack.c.b16 %v6150, %v6142
    %v7783 = vpack.c.b16 %v6159, %v6151
    %v7784 = vpack.c.b16 %v6160, %v6152
    %v7785 = vpack.c.b16 %v6161, %v6153
    %v7786 = vpack.c.b16 %v6162, %v6154
    %v7787 = vpack.c.b16 %v6163, %v6155
    %v7788 = vpack.c.b16 %v6164, %v6156
    %v7789 = vpack.c.b16 %v6165, %v6157
    %v7790 = vpack.c.b16 %v6166, %v6158
    %v7791 = vpack.c.b16 %v6175, %v6167
    %v7792 = vpack.c.b16 %v6176, %v6168
    %v7793 = vpack.c.b16 %v6177, %v6169
    %v7794 = vpack.c.b16 %v6178, %v6170
    %v7795 = vpack.c.b16 %v6179, %v6171
    %v7796 = vpack.c.b16 %v6180, %v6172
    %v7797 = vpack.c.b16 %v6181, %v6173
    %v7798 = vpack.c.b16 %v6182, %v6174
    %v7799 = vpack.c.b16 %v6191, %v6183
    %v7800 = vpack.c.b16 %v6192, %v6184
    %v7801 = vpack.c.b16 %v6193, %v6185
    %v7802 = vpack.c.b16 %v6194, %v6186
    %v7803 = vpack.c.b16 %v6195, %v6187
    %v7804 = vpack.c.b16 %v6196, %v6188
    %v7805 = vpack.c.b16 %v6197, %v6189
    %v7806 = vpack.c.b16 %v6198, %v6190
    %v7807 = vpack.c.b16 %v6207, %v6199
    %v7808 = vpack.c.b16 %v6208, %v6200
    %v7809 = vpack.c.b16 %v6209, %v6201
    %v7810 = vpack.c.b16 %v6210, %v6202
    %v7811 = vpack.c.b16 %v6211, %v6203
    %v7812 = vpack.c.b16 %v6212, %v6204
    %v7813 = vpack.c.b16 %v6213, %v6205
    %v7814 = vpack.c.b16 %v6214, %v6206
    %v7815 = vpack.c.b16 %v6223, %v6215
    %v7816 = vpack.c.b16 %v6224, %v6216
    %v7817 = vpack.c.b16 %v6225, %v6217
    %v7818 = vpack.c.b16 %v6226, %v6218
    %v7819 = vpack.c.b16 %v6227, %v6219
    %v7820 = vpack.c.b16 %v6228, %v6220
    %v7821 = vpack.c.b16 %v6229, %v6221
    %v7822 = vpack.c.b16 %v6230, %v6222
    %v7823 = vpack.c.b16 %v6239, %v6231
    %v7824 = vpack.c.b16 %v6240, %v6232
    %v7825 = vpack.c.b16 %v6241, %v6233
    %v7826 = vpack.c.b16 %v6242, %v6234
    %v7827 = vpack.c.b16 %v6243, %v6235
    %v7828 = vpack.c.b16 %v6244, %v6236
    %v7829 = vpack.c.b16 %v6245, %v6237
    %v7830 = vpack.c.b16 %v6246, %v6238
    %v7831 = vpack.c.b16 %v6255, %v6247
    %v7832 = vpack.c.b16 %v6256, %v6248
    %v7833 = vpack.c.b16 %v6257, %v6249
    %v7834 = vpack.c.b16 %v6258, %v6250
    %v7835 = vpack.c.b16 %v6259, %v6251
    %v7836 = vpack.c.b16 %v6260, %v6252
    %v7837 = vpack.c.b16 %v6261, %v6253
    %v7838 = vpack.c.b16 %v6262, %v6254
    %v7839 = vpack.c.b16 %v6271, %v6263
    %v7840 = vpack.c.b16 %v6272, %v6264
    %v7841 = vpack.c.b16 %v6273, %v6265
    %v7842 = vpack.c.b16 %v6274, %v6266
    %v7843 = vpack.c.b16 %v6275, %v6267
    %v7844 = vpack.c.b16 %v6276, %v6268
    %v7845 = vpack.c.b16 %v6277, %v6269
    %v7846 = vpack.c.b16 %v6278, %v6270
    %v7847 = vpack.c.b16 %v6287, %v6279
    %v7848 = vpack.c.b16 %v6288, %v6280
    %v7849 = vpack.c.b16 %v6289, %v6281
    %v7850 = vpack.c.b16 %v6290, %v6282
    %v7851 = vpack.c.b16 %v6291, %v6283
    %v7852 = vpack.c.b16 %v6292, %v6284
    %v7853 = vpack.c.b16 %v6293, %v6285
    %v7854 = vpack.c.b16 %v6294, %v6286
    %v7855 = vpack.c.b16 %v6303, %v6295
    %v7856 = vpack.c.b16 %v6304, %v6296
    %v7857 = vpack.c.b16 %v6305, %v6297
    %v7858 = vpack.c.b16 %v6306, %v6298
    %v7859 = vpack.c.b16 %v6307, %v6299
    %v7860 = vpack.c.b16 %v6308, %v6300
    %v7861 = vpack.c.b16 %v6309, %v6301
    %v7862 = vpack.c.b16 %v6310, %v6302
    %v7863 = vpack.c.b16 %v6319, %v6311
    %v7864 = vpack.c.b16 %v6320, %v6312
    %v7865 = vpack.c.b16 %v6321, %v6313
    %v7866 = vpack.c.b16 %v6322, %v6314
    %v7867 = vpack.c.b16 %v6323, %v6315
    %v7868 = vpack.c.b16 %v6324, %v6316
    %v7869 = vpack.c.b16 %v6325, %v6317
    %v7870 = vpack.c.b16 %v6326, %v6318
    %v7871 = vpack.c.b16 %v6335, %v6327
    %v7872 = vpack.c.b16 %v6336, %v6328
    %v7873 = vpack.c.b16 %v6337, %v6329
    %v7874 = vpack.c.b16 %v6338, %v6330
    %v7875 = vpack.c.b16 %v6339, %v6331
    %v7876 = vpack.c.b16 %v6340, %v6332
    %v7877 = vpack.c.b16 %v6341, %v6333
    %v7878 = vpack.c.b16 %v6342, %v6334
    %9415 = vmatpush.bf16.msra.mxu0 %v6399
    %9416 = vmatpush.bf16.msra.mxu0 %v6391
    %9417 = vmatpush.bf16.msra.mxu0 %v6383
    %9418 = vmatpush.bf16.msra.mxu0 %v6375
    %9419 = vmatpush.bf16.msra.mxu0 %v6367
    %9420 = vmatpush.bf16.msra.mxu0 %v6359
    %9421 = vmatpush.bf16.msra.mxu0 %v6351
    %9422 = vmatpush.bf16.msra.mxu0 %v6343
    %9423 = vmatmul.bf16.gmra.mxu0 %v167
    %v9424 = vpop.f32.mrf.mxu0
    %v9425 = vadd.f32 0.0, %v9424
    %v9426 = vpop.f32.mrf.mxu0
    %9427 = vdwg.mxu0
    %9428 = vmatpush.bf16.msra.mxu0 %v6463
    %9429 = vmatpush.bf16.msra.mxu0 %v6455
    %9430 = vmatpush.bf16.msra.mxu0 %v6447
    %9431 = vmatpush.bf16.msra.mxu0 %v6439
    %9432 = vmatpush.bf16.msra.mxu0 %v6431
    %9433 = vmatpush.bf16.msra.mxu0 %v6423
    %9434 = vmatpush.bf16.msra.mxu0 %v6415
    %9435 = vmatpush.bf16.msra.mxu0 %v6407
    %9436 = vmatmul.bf16.gmra.mxu0 %v168
    %v9437 = vpop.f32.mrf.mxu0
    %v9438 = vadd.f32 %v9425, %v9437
    %v9439 = vpop.f32.mrf.mxu0
    %9440 = vdwg.mxu0
    %9441 = vmatpush.bf16.msra.mxu0 %v6527
    %9442 = vmatpush.bf16.msra.mxu0 %v6519
    %9443 = vmatpush.bf16.msra.mxu0 %v6511
    %9444 = vmatpush.bf16.msra.mxu0 %v6503
    %9445 = vmatpush.bf16.msra.mxu0 %v6495
    %9446 = vmatpush.bf16.msra.mxu0 %v6487
    %9447 = vmatpush.bf16.msra.mxu0 %v6479
    %9448 = vmatpush.bf16.msra.mxu0 %v6471
    %9449 = vmatmul.bf16.gmra.mxu0 %v169
    %v9450 = vpop.f32.mrf.mxu0
    %v9451 = vadd.f32 %v9438, %v9450
    %v9452 = vpop.f32.mrf.mxu0
    %9453 = vdwg.mxu0
    %9454 = vmatpush.bf16.msra.mxu0 %v6591
    %9455 = vmatpush.bf16.msra.mxu0 %v6583
    %9456 = vmatpush.bf16.msra.mxu0 %v6575
    %9457 = vmatpush.bf16.msra.mxu0 %v6567
    %9458 = vmatpush.bf16.msra.mxu0 %v6559
    %9459 = vmatpush.bf16.msra.mxu0 %v6551
    %9460 = vmatpush.bf16.msra.mxu0 %v6543
    %9461 = vmatpush.bf16.msra.mxu0 %v6535
    %9462 = vmatmul.bf16.gmra.mxu0 %v170
    %v9463 = vpop.f32.mrf.mxu0
    %v9464 = vadd.f32 %v9451, %v9463
    %v9465 = vpop.f32.mrf.mxu0
    %9466 = vdwg.mxu0
    %9467 = vmatpush.bf16.msra.mxu0 %v6655
    %9468 = vmatpush.bf16.msra.mxu0 %v6647
    %9469 = vmatpush.bf16.msra.mxu0 %v6639
    %9470 = vmatpush.bf16.msra.mxu0 %v6631
    %9471 = vmatpush.bf16.msra.mxu0 %v6623
    %9472 = vmatpush.bf16.msra.mxu0 %v6615
    %9473 = vmatpush.bf16.msra.mxu0 %v6607
    %9474 = vmatpush.bf16.msra.mxu0 %v6599
    %9475 = vmatmul.bf16.gmra.mxu0 %v171
    %v9476 = vpop.f32.mrf.mxu0
    %v9477 = vadd.f32 %v9464, %v9476
    %v9478 = vpop.f32.mrf.mxu0
    %9479 = vdwg.mxu0
    %9480 = vmatpush.bf16.msra.mxu0 %v6719
    %9481 = vmatpush.bf16.msra.mxu0 %v6711
    %9482 = vmatpush.bf16.msra.mxu0 %v6703
    %9483 = vmatpush.bf16.msra.mxu0 %v6695
    %9484 = vmatpush.bf16.msra.mxu0 %v6687
    %9485 = vmatpush.bf16.msra.mxu0 %v6679
    %9486 = vmatpush.bf16.msra.mxu0 %v6671
    %9487 = vmatpush.bf16.msra.mxu0 %v6663
    %9488 = vmatmul.bf16.gmra.mxu0 %v172
    %v9489 = vpop.f32.mrf.mxu0
    %v9490 = vadd.f32 %v9477, %v9489
    %v9491 = vpop.f32.mrf.mxu0
    %9492 = vdwg.mxu0
    %9493 = vmatpush.bf16.msra.mxu0 %v6783
    %9494 = vmatpush.bf16.msra.mxu0 %v6775
    %9495 = vmatpush.bf16.msra.mxu0 %v6767
    %9496 = vmatpush.bf16.msra.mxu0 %v6759
    %9497 = vmatpush.bf16.msra.mxu0 %v6751
    %9498 = vmatpush.bf16.msra.mxu0 %v6743
    %9499 = vmatpush.bf16.msra.mxu0 %v6735
    %9500 = vmatpush.bf16.msra.mxu0 %v6727
    %9501 = vmatmul.bf16.gmra.mxu0 %v173
    %v9502 = vpop.f32.mrf.mxu0
    %v9503 = vadd.f32 %v9490, %v9502
    %v9504 = vpop.f32.mrf.mxu0
    %9505 = vdwg.mxu0
    %9506 = vmatpush.bf16.msra.mxu0 %v6847
    %9507 = vmatpush.bf16.msra.mxu0 %v6839
    %9508 = vmatpush.bf16.msra.mxu0 %v6831
    %9509 = vmatpush.bf16.msra.mxu0 %v6823
    %9510 = vmatpush.bf16.msra.mxu0 %v6815
    %9511 = vmatpush.bf16.msra.mxu0 %v6807
    %9512 = vmatpush.bf16.msra.mxu0 %v6799
    %9513 = vmatpush.bf16.msra.mxu0 %v6791
    %9514 = vmatmul.bf16.gmra.mxu0 %v174
    %v9515 = vpop.f32.mrf.mxu0
    %v9516 = vadd.f32 %v9503, %v9515
    %v9517 = vpop.f32.mrf.mxu0
    %9518 = vdwg.mxu0
    %9519 = vmatpush.bf16.msra.mxu0 %v6911
    %9520 = vmatpush.bf16.msra.mxu0 %v6903
    %9521 = vmatpush.bf16.msra.mxu0 %v6895
    %9522 = vmatpush.bf16.msra.mxu0 %v6887
    %9523 = vmatpush.bf16.msra.mxu0 %v6879
    %9524 = vmatpush.bf16.msra.mxu0 %v6871
    %9525 = vmatpush.bf16.msra.mxu0 %v6863
    %9526 = vmatpush.bf16.msra.mxu0 %v6855
    %9527 = vmatmul.bf16.gmra.mxu0 %v175
    %v9528 = vpop.f32.mrf.mxu0
    %v9529 = vadd.f32 %v9516, %v9528
    %v9530 = vpop.f32.mrf.mxu0
    %9531 = vdwg.mxu0
    %9532 = vmatpush.bf16.msra.mxu0 %v6975
    %9533 = vmatpush.bf16.msra.mxu0 %v6967
    %9534 = vmatpush.bf16.msra.mxu0 %v6959
    %9535 = vmatpush.bf16.msra.mxu0 %v6951
    %9536 = vmatpush.bf16.msra.mxu0 %v6943
    %9537 = vmatpush.bf16.msra.mxu0 %v6935
    %9538 = vmatpush.bf16.msra.mxu0 %v6927
    %9539 = vmatpush.bf16.msra.mxu0 %v6919
    %9540 = vmatmul.bf16.gmra.mxu0 %v176
    %v9541 = vpop.f32.mrf.mxu0
    %v9542 = vadd.f32 %v9529, %v9541
    %v9543 = vpop.f32.mrf.mxu0
    %9544 = vdwg.mxu0
    %9545 = vmatpush.bf16.msra.mxu0 %v7039
    %9546 = vmatpush.bf16.msra.mxu0 %v7031
    %9547 = vmatpush.bf16.msra.mxu0 %v7023
    %9548 = vmatpush.bf16.msra.mxu0 %v7015
    %9549 = vmatpush.bf16.msra.mxu0 %v7007
    %9550 = vmatpush.bf16.msra.mxu0 %v6999
    %9551 = vmatpush.bf16.msra.mxu0 %v6991
    %9552 = vmatpush.bf16.msra.mxu0 %v6983
    %9553 = vmatmul.bf16.gmra.mxu0 %v177
    %v9554 = vpop.f32.mrf.mxu0
    %v9555 = vadd.f32 %v9542, %v9554
    %v9556 = vpop.f32.mrf.mxu0
    %9557 = vdwg.mxu0
    %9558 = vmatpush.bf16.msra.mxu0 %v7103
    %9559 = vmatpush.bf16.msra.mxu0 %v7095
    %9560 = vmatpush.bf16.msra.mxu0 %v7087
    %9561 = vmatpush.bf16.msra.mxu0 %v7079
    %9562 = vmatpush.bf16.msra.mxu0 %v7071
    %9563 = vmatpush.bf16.msra.mxu0 %v7063
    %9564 = vmatpush.bf16.msra.mxu0 %v7055
    %9565 = vmatpush.bf16.msra.mxu0 %v7047
    %9566 = vmatmul.bf16.gmra.mxu0 %v178
    %v9567 = vpop.f32.mrf.mxu0
    %v9568 = vadd.f32 %v9555, %v9567
    %v9569 = vpop.f32.mrf.mxu0
    %9570 = vdwg.mxu0
    %9571 = vmatpush.bf16.msra.mxu0 %v7167
    %9572 = vmatpush.bf16.msra.mxu0 %v7159
    %9573 = vmatpush.bf16.msra.mxu0 %v7151
    %9574 = vmatpush.bf16.msra.mxu0 %v7143
    %9575 = vmatpush.bf16.msra.mxu0 %v7135
    %9576 = vmatpush.bf16.msra.mxu0 %v7127
    %9577 = vmatpush.bf16.msra.mxu0 %v7119
    %9578 = vmatpush.bf16.msra.mxu0 %v7111
    %9579 = vmatmul.bf16.gmra.mxu0 %v179
    %v9580 = vpop.f32.mrf.mxu0
    %v9581 = vadd.f32 %v9568, %v9580
    %v9582 = vpop.f32.mrf.mxu0
    %9583 = vdwg.mxu0
    %9584 = vmatpush.bf16.msra.mxu0 %v7231
    %9585 = vmatpush.bf16.msra.mxu0 %v7223
    %9586 = vmatpush.bf16.msra.mxu0 %v7215
    %9587 = vmatpush.bf16.msra.mxu0 %v7207
    %9588 = vmatpush.bf16.msra.mxu0 %v7199
    %9589 = vmatpush.bf16.msra.mxu0 %v7191
    %9590 = vmatpush.bf16.msra.mxu0 %v7183
    %9591 = vmatpush.bf16.msra.mxu0 %v7175
    %9592 = vmatmul.bf16.gmra.mxu0 %v180
    %v9593 = vpop.f32.mrf.mxu0
    %v9594 = vadd.f32 %v9581, %v9593
    %v9595 = vpop.f32.mrf.mxu0
    %9596 = vdwg.mxu0
    %9597 = vmatpush.bf16.msra.mxu0 %v7295
    %9598 = vmatpush.bf16.msra.mxu0 %v7287
    %9599 = vmatpush.bf16.msra.mxu0 %v7279
    %9600 = vmatpush.bf16.msra.mxu0 %v7271
    %9601 = vmatpush.bf16.msra.mxu0 %v7263
    %9602 = vmatpush.bf16.msra.mxu0 %v7255
    %9603 = vmatpush.bf16.msra.mxu0 %v7247
    %9604 = vmatpush.bf16.msra.mxu0 %v7239
    %9605 = vmatmul.bf16.gmra.mxu0 %v181
    %v9606 = vpop.f32.mrf.mxu0
    %v9607 = vadd.f32 %v9594, %v9606
    %v9608 = vpop.f32.mrf.mxu0
    %9609 = vdwg.mxu0
    %9610 = vmatpush.bf16.msra.mxu0 %v7359
    %9611 = vmatpush.bf16.msra.mxu0 %v7351
    %9612 = vmatpush.bf16.msra.mxu0 %v7343
    %9613 = vmatpush.bf16.msra.mxu0 %v7335
    %9614 = vmatpush.bf16.msra.mxu0 %v7327
    %9615 = vmatpush.bf16.msra.mxu0 %v7319
    %9616 = vmatpush.bf16.msra.mxu0 %v7311
    %9617 = vmatpush.bf16.msra.mxu0 %v7303
    %9618 = vmatmul.bf16.gmra.mxu0 %v182
    %v9619 = vpop.f32.mrf.mxu0
    %v9620 = vadd.f32 %v9607, %v9619
    %v9621 = vpop.f32.mrf.mxu0
    %9622 = vdwg.mxu0
    %9623 = vmatpush.bf16.msra.mxu0 %v7423
    %9624 = vmatpush.bf16.msra.mxu0 %v7415
    %9625 = vmatpush.bf16.msra.mxu0 %v7407
    %9626 = vmatpush.bf16.msra.mxu0 %v7399
    %9627 = vmatpush.bf16.msra.mxu0 %v7391
    %9628 = vmatpush.bf16.msra.mxu0 %v7383
    %9629 = vmatpush.bf16.msra.mxu0 %v7375
    %9630 = vmatpush.bf16.msra.mxu0 %v7367
    %9631 = vmatmul.bf16.gmra.mxu0 %v183
    %v9632 = vpop.f32.mrf.mxu0
    %v9633 = vadd.f32 %v9620, %v9632
    %v9634 = vpop.f32.mrf.mxu0
    %9635 = vdwg.mxu0
    %9636 = vmatpush.bf16.msra.mxu0 %v7487
    %9637 = vmatpush.bf16.msra.mxu0 %v7479
    %9638 = vmatpush.bf16.msra.mxu0 %v7471
    %9639 = vmatpush.bf16.msra.mxu0 %v7463
    %9640 = vmatpush.bf16.msra.mxu0 %v7455
    %9641 = vmatpush.bf16.msra.mxu0 %v7447
    %9642 = vmatpush.bf16.msra.mxu0 %v7439
    %9643 = vmatpush.bf16.msra.mxu0 %v7431
    %9644 = vmatmul.bf16.gmra.mxu0 %v184
    %v9645 = vpop.f32.mrf.mxu0
    %v9646 = vadd.f32 %v9633, %v9645
    %v9647 = vpop.f32.mrf.mxu0
    %9648 = vdwg.mxu0
    %9649 = vmatpush.bf16.msra.mxu0 %v7551
    %9650 = vmatpush.bf16.msra.mxu0 %v7543
    %9651 = vmatpush.bf16.msra.mxu0 %v7535
    %9652 = vmatpush.bf16.msra.mxu0 %v7527
    %9653 = vmatpush.bf16.msra.mxu0 %v7519
    %9654 = vmatpush.bf16.msra.mxu0 %v7511
    %9655 = vmatpush.bf16.msra.mxu0 %v7503
    %9656 = vmatpush.bf16.msra.mxu0 %v7495
    %9657 = vmatmul.bf16.gmra.mxu0 %v185
    %v9658 = vpop.f32.mrf.mxu0
    %v9659 = vadd.f32 %v9646, %v9658
    %v9660 = vpop.f32.mrf.mxu0
    %9661 = vdwg.mxu0
    %9662 = vmatpush.bf16.msra.mxu0 %v7615
    %9663 = vmatpush.bf16.msra.mxu0 %v7607
    %9664 = vmatpush.bf16.msra.mxu0 %v7599
    %9665 = vmatpush.bf16.msra.mxu0 %v7591
    %9666 = vmatpush.bf16.msra.mxu0 %v7583
    %9667 = vmatpush.bf16.msra.mxu0 %v7575
    %9668 = vmatpush.bf16.msra.mxu0 %v7567
    %9669 = vmatpush.bf16.msra.mxu0 %v7559
    %9670 = vmatmul.bf16.gmra.mxu0 %v186
    %v9671 = vpop.f32.mrf.mxu0
    %v9672 = vadd.f32 %v9659, %v9671
    %v9673 = vpop.f32.mrf.mxu0
    %9674 = vdwg.mxu0
    %9675 = vmatpush.bf16.msra.mxu0 %v7679
    %9676 = vmatpush.bf16.msra.mxu0 %v7671
    %9677 = vmatpush.bf16.msra.mxu0 %v7663
    %9678 = vmatpush.bf16.msra.mxu0 %v7655
    %9679 = vmatpush.bf16.msra.mxu0 %v7647
    %9680 = vmatpush.bf16.msra.mxu0 %v7639
    %9681 = vmatpush.bf16.msra.mxu0 %v7631
    %9682 = vmatpush.bf16.msra.mxu0 %v7623
    %9683 = vmatmul.bf16.gmra.mxu0 %v187
    %v9684 = vpop.f32.mrf.mxu0
    %v9685 = vadd.f32 %v9672, %v9684
    %v9686 = vpop.f32.mrf.mxu0
    %9687 = vdwg.mxu0
    %9688 = vmatpush.bf16.msra.mxu0 %v7743
    %9689 = vmatpush.bf16.msra.mxu0 %v7735
    %9690 = vmatpush.bf16.msra.mxu0 %v7727
    %9691 = vmatpush.bf16.msra.mxu0 %v7719
    %9692 = vmatpush.bf16.msra.mxu0 %v7711
    %9693 = vmatpush.bf16.msra.mxu0 %v7703
    %9694 = vmatpush.bf16.msra.mxu0 %v7695
    %9695 = vmatpush.bf16.msra.mxu0 %v7687
    %9696 = vmatmul.bf16.gmra.mxu0 %v188
    %v9697 = vpop.f32.mrf.mxu0
    %v9698 = vadd.f32 %v9685, %v9697
    %v9699 = vpop.f32.mrf.mxu0
    %9700 = vdwg.mxu0
    %9701 = vmatpush.bf16.msra.mxu0 %v7807
    %9702 = vmatpush.bf16.msra.mxu0 %v7799
    %9703 = vmatpush.bf16.msra.mxu0 %v7791
    %9704 = vmatpush.bf16.msra.mxu0 %v7783
    %9705 = vmatpush.bf16.msra.mxu0 %v7775
    %9706 = vmatpush.bf16.msra.mxu0 %v7767
    %9707 = vmatpush.bf16.msra.mxu0 %v7759
    %9708 = vmatpush.bf16.msra.mxu0 %v7751
    %9709 = vmatmul.bf16.gmra.mxu0 %v189
    %v9710 = vpop.f32.mrf.mxu0
    %v9711 = vadd.f32 %v9698, %v9710
    %v9712 = vpop.f32.mrf.mxu0
    %9713 = vdwg.mxu0
    %9714 = vmatpush.bf16.msra.mxu0 %v7871
    %9715 = vmatpush.bf16.msra.mxu0 %v7863
    %9716 = vmatpush.bf16.msra.mxu0 %v7855
    %9717 = vmatpush.bf16.msra.mxu0 %v7847
    %9718 = vmatpush.bf16.msra.mxu0 %v7839
    %9719 = vmatpush.bf16.msra.mxu0 %v7831
    %9720 = vmatpush.bf16.msra.mxu0 %v7823
    %9721 = vmatpush.bf16.msra.mxu0 %v7815
    %9722 = vmatmul.bf16.gmra.mxu0 %v190
    %v9723 = vpop.f32.mrf.mxu0
    %v9724 = vadd.f32 %v9711, %v9723
    %v9725 = vpop.f32.mrf.mxu0
    %9726 = vdwg.mxu0
    %9727 = vmatpush.bf16.msra.mxu0 %v6400
    %9728 = vmatpush.bf16.msra.mxu0 %v6392
    %9729 = vmatpush.bf16.msra.mxu0 %v6384
    %9730 = vmatpush.bf16.msra.mxu0 %v6376
    %9731 = vmatpush.bf16.msra.mxu0 %v6368
    %9732 = vmatpush.bf16.msra.mxu0 %v6360
    %9733 = vmatpush.bf16.msra.mxu0 %v6352
    %9734 = vmatpush.bf16.msra.mxu0 %v6344
    %9735 = vmatmul.bf16.gmra.mxu0 %v167
    %v9736 = vpop.f32.mrf.mxu0
    %v9737 = vadd.f32 0.0, %v9736
    %v9738 = vpop.f32.mrf.mxu0
    %9739 = vdwg.mxu0
    %9740 = vmatpush.bf16.msra.mxu0 %v6464
    %9741 = vmatpush.bf16.msra.mxu0 %v6456
    %9742 = vmatpush.bf16.msra.mxu0 %v6448
    %9743 = vmatpush.bf16.msra.mxu0 %v6440
    %9744 = vmatpush.bf16.msra.mxu0 %v6432
    %9745 = vmatpush.bf16.msra.mxu0 %v6424
    %9746 = vmatpush.bf16.msra.mxu0 %v6416
    %9747 = vmatpush.bf16.msra.mxu0 %v6408
    %9748 = vmatmul.bf16.gmra.mxu0 %v168
    %v9749 = vpop.f32.mrf.mxu0
    %v9750 = vadd.f32 %v9737, %v9749
    %v9751 = vpop.f32.mrf.mxu0
    %9752 = vdwg.mxu0
    %9753 = vmatpush.bf16.msra.mxu0 %v6528
    %9754 = vmatpush.bf16.msra.mxu0 %v6520
    %9755 = vmatpush.bf16.msra.mxu0 %v6512
    %9756 = vmatpush.bf16.msra.mxu0 %v6504
    %9757 = vmatpush.bf16.msra.mxu0 %v6496
    %9758 = vmatpush.bf16.msra.mxu0 %v6488
    %9759 = vmatpush.bf16.msra.mxu0 %v6480
    %9760 = vmatpush.bf16.msra.mxu0 %v6472
    %9761 = vmatmul.bf16.gmra.mxu0 %v169
    %v9762 = vpop.f32.mrf.mxu0
    %v9763 = vadd.f32 %v9750, %v9762
    %v9764 = vpop.f32.mrf.mxu0
    %9765 = vdwg.mxu0
    %9766 = vmatpush.bf16.msra.mxu0 %v6592
    %9767 = vmatpush.bf16.msra.mxu0 %v6584
    %9768 = vmatpush.bf16.msra.mxu0 %v6576
    %9769 = vmatpush.bf16.msra.mxu0 %v6568
    %9770 = vmatpush.bf16.msra.mxu0 %v6560
    %9771 = vmatpush.bf16.msra.mxu0 %v6552
    %9772 = vmatpush.bf16.msra.mxu0 %v6544
    %9773 = vmatpush.bf16.msra.mxu0 %v6536
    %9774 = vmatmul.bf16.gmra.mxu0 %v170
    %v9775 = vpop.f32.mrf.mxu0
    %v9776 = vadd.f32 %v9763, %v9775
    %v9777 = vpop.f32.mrf.mxu0
    %9778 = vdwg.mxu0
    %9779 = vmatpush.bf16.msra.mxu0 %v6656
    %9780 = vmatpush.bf16.msra.mxu0 %v6648
    %9781 = vmatpush.bf16.msra.mxu0 %v6640
    %9782 = vmatpush.bf16.msra.mxu0 %v6632
    %9783 = vmatpush.bf16.msra.mxu0 %v6624
    %9784 = vmatpush.bf16.msra.mxu0 %v6616
    %9785 = vmatpush.bf16.msra.mxu0 %v6608
    %9786 = vmatpush.bf16.msra.mxu0 %v6600
    %9787 = vmatmul.bf16.gmra.mxu0 %v171
    %v9788 = vpop.f32.mrf.mxu0
    %v9789 = vadd.f32 %v9776, %v9788
    %v9790 = vpop.f32.mrf.mxu0
    %9791 = vdwg.mxu0
    %9792 = vmatpush.bf16.msra.mxu0 %v6720
    %9793 = vmatpush.bf16.msra.mxu0 %v6712
    %9794 = vmatpush.bf16.msra.mxu0 %v6704
    %9795 = vmatpush.bf16.msra.mxu0 %v6696
    %9796 = vmatpush.bf16.msra.mxu0 %v6688
    %9797 = vmatpush.bf16.msra.mxu0 %v6680
    %9798 = vmatpush.bf16.msra.mxu0 %v6672
    %9799 = vmatpush.bf16.msra.mxu0 %v6664
    %9800 = vmatmul.bf16.gmra.mxu0 %v172
    %v9801 = vpop.f32.mrf.mxu0
    %v9802 = vadd.f32 %v9789, %v9801
    %v9803 = vpop.f32.mrf.mxu0
    %9804 = vdwg.mxu0
    %9805 = vmatpush.bf16.msra.mxu0 %v6784
    %9806 = vmatpush.bf16.msra.mxu0 %v6776
    %9807 = vmatpush.bf16.msra.mxu0 %v6768
    %9808 = vmatpush.bf16.msra.mxu0 %v6760
    %9809 = vmatpush.bf16.msra.mxu0 %v6752
    %9810 = vmatpush.bf16.msra.mxu0 %v6744
    %9811 = vmatpush.bf16.msra.mxu0 %v6736
    %9812 = vmatpush.bf16.msra.mxu0 %v6728
    %9813 = vmatmul.bf16.gmra.mxu0 %v173
    %v9814 = vpop.f32.mrf.mxu0
    %v9815 = vadd.f32 %v9802, %v9814
    %v9816 = vpop.f32.mrf.mxu0
    %9817 = vdwg.mxu0
    %9818 = vmatpush.bf16.msra.mxu0 %v6848
    %9819 = vmatpush.bf16.msra.mxu0 %v6840
    %9820 = vmatpush.bf16.msra.mxu0 %v6832
    %9821 = vmatpush.bf16.msra.mxu0 %v6824
    %9822 = vmatpush.bf16.msra.mxu0 %v6816
    %9823 = vmatpush.bf16.msra.mxu0 %v6808
    %9824 = vmatpush.bf16.msra.mxu0 %v6800
    %9825 = vmatpush.bf16.msra.mxu0 %v6792
    %9826 = vmatmul.bf16.gmra.mxu0 %v174
    %v9827 = vpop.f32.mrf.mxu0
    %v9828 = vadd.f32 %v9815, %v9827
    %v9829 = vpop.f32.mrf.mxu0
    %9830 = vdwg.mxu0
    %9831 = vmatpush.bf16.msra.mxu0 %v6912
    %9832 = vmatpush.bf16.msra.mxu0 %v6904
    %9833 = vmatpush.bf16.msra.mxu0 %v6896
    %9834 = vmatpush.bf16.msra.mxu0 %v6888
    %9835 = vmatpush.bf16.msra.mxu0 %v6880
    %9836 = vmatpush.bf16.msra.mxu0 %v6872
    %9837 = vmatpush.bf16.msra.mxu0 %v6864
    %9838 = vmatpush.bf16.msra.mxu0 %v6856
    %9839 = vmatmul.bf16.gmra.mxu0 %v175
    %v9840 = vpop.f32.mrf.mxu0
    %v9841 = vadd.f32 %v9828, %v9840
    %v9842 = vpop.f32.mrf.mxu0
    %9843 = vdwg.mxu0
    %9844 = vmatpush.bf16.msra.mxu0 %v6976
    %9845 = vmatpush.bf16.msra.mxu0 %v6968
    %9846 = vmatpush.bf16.msra.mxu0 %v6960
    %9847 = vmatpush.bf16.msra.mxu0 %v6952
    %9848 = vmatpush.bf16.msra.mxu0 %v6944
    %9849 = vmatpush.bf16.msra.mxu0 %v6936
    %9850 = vmatpush.bf16.msra.mxu0 %v6928
    %9851 = vmatpush.bf16.msra.mxu0 %v6920
    %9852 = vmatmul.bf16.gmra.mxu0 %v176
    %v9853 = vpop.f32.mrf.mxu0
    %v9854 = vadd.f32 %v9841, %v9853
    %v9855 = vpop.f32.mrf.mxu0
    %9856 = vdwg.mxu0
    %9857 = vmatpush.bf16.msra.mxu0 %v7040
    %9858 = vmatpush.bf16.msra.mxu0 %v7032
    %9859 = vmatpush.bf16.msra.mxu0 %v7024
    %9860 = vmatpush.bf16.msra.mxu0 %v7016
    %9861 = vmatpush.bf16.msra.mxu0 %v7008
    %9862 = vmatpush.bf16.msra.mxu0 %v7000
    %9863 = vmatpush.bf16.msra.mxu0 %v6992
    %9864 = vmatpush.bf16.msra.mxu0 %v6984
    %9865 = vmatmul.bf16.gmra.mxu0 %v177
    %v9866 = vpop.f32.mrf.mxu0
    %v9867 = vadd.f32 %v9854, %v9866
    %v9868 = vpop.f32.mrf.mxu0
    %9869 = vdwg.mxu0
    %9870 = vmatpush.bf16.msra.mxu0 %v7104
    %9871 = vmatpush.bf16.msra.mxu0 %v7096
    %9872 = vmatpush.bf16.msra.mxu0 %v7088
    %9873 = vmatpush.bf16.msra.mxu0 %v7080
    %9874 = vmatpush.bf16.msra.mxu0 %v7072
    %9875 = vmatpush.bf16.msra.mxu0 %v7064
    %9876 = vmatpush.bf16.msra.mxu0 %v7056
    %9877 = vmatpush.bf16.msra.mxu0 %v7048
    %9878 = vmatmul.bf16.gmra.mxu0 %v178
    %v9879 = vpop.f32.mrf.mxu0
    %v9880 = vadd.f32 %v9867, %v9879
    %v9881 = vpop.f32.mrf.mxu0
    %9882 = vdwg.mxu0
    %9883 = vmatpush.bf16.msra.mxu0 %v7168
    %9884 = vmatpush.bf16.msra.mxu0 %v7160
    %9885 = vmatpush.bf16.msra.mxu0 %v7152
    %9886 = vmatpush.bf16.msra.mxu0 %v7144
    %9887 = vmatpush.bf16.msra.mxu0 %v7136
    %9888 = vmatpush.bf16.msra.mxu0 %v7128
    %9889 = vmatpush.bf16.msra.mxu0 %v7120
    %9890 = vmatpush.bf16.msra.mxu0 %v7112
    %9891 = vmatmul.bf16.gmra.mxu0 %v179
    %v9892 = vpop.f32.mrf.mxu0
    %v9893 = vadd.f32 %v9880, %v9892
    %v9894 = vpop.f32.mrf.mxu0
    %9895 = vdwg.mxu0
    %9896 = vmatpush.bf16.msra.mxu0 %v7232
    %9897 = vmatpush.bf16.msra.mxu0 %v7224
    %9898 = vmatpush.bf16.msra.mxu0 %v7216
    %9899 = vmatpush.bf16.msra.mxu0 %v7208
    %9900 = vmatpush.bf16.msra.mxu0 %v7200
    %9901 = vmatpush.bf16.msra.mxu0 %v7192
    %9902 = vmatpush.bf16.msra.mxu0 %v7184
    %9903 = vmatpush.bf16.msra.mxu0 %v7176
    %9904 = vmatmul.bf16.gmra.mxu0 %v180
    %v9905 = vpop.f32.mrf.mxu0
    %v9906 = vadd.f32 %v9893, %v9905
    %v9907 = vpop.f32.mrf.mxu0
    %9908 = vdwg.mxu0
    %9909 = vmatpush.bf16.msra.mxu0 %v7296
    %9910 = vmatpush.bf16.msra.mxu0 %v7288
    %9911 = vmatpush.bf16.msra.mxu0 %v7280
    %9912 = vmatpush.bf16.msra.mxu0 %v7272
    %9913 = vmatpush.bf16.msra.mxu0 %v7264
    %9914 = vmatpush.bf16.msra.mxu0 %v7256
    %9915 = vmatpush.bf16.msra.mxu0 %v7248
    %9916 = vmatpush.bf16.msra.mxu0 %v7240
    %9917 = vmatmul.bf16.gmra.mxu0 %v181
    %v9918 = vpop.f32.mrf.mxu0
    %v9919 = vadd.f32 %v9906, %v9918
    %v9920 = vpop.f32.mrf.mxu0
    %9921 = vdwg.mxu0
    %9922 = vmatpush.bf16.msra.mxu0 %v7360
    %9923 = vmatpush.bf16.msra.mxu0 %v7352
    %9924 = vmatpush.bf16.msra.mxu0 %v7344
    %9925 = vmatpush.bf16.msra.mxu0 %v7336
    %9926 = vmatpush.bf16.msra.mxu0 %v7328
    %9927 = vmatpush.bf16.msra.mxu0 %v7320
    %9928 = vmatpush.bf16.msra.mxu0 %v7312
    %9929 = vmatpush.bf16.msra.mxu0 %v7304
    %9930 = vmatmul.bf16.gmra.mxu0 %v182
    %v9931 = vpop.f32.mrf.mxu0
    %v9932 = vadd.f32 %v9919, %v9931
    %v9933 = vpop.f32.mrf.mxu0
    %9934 = vdwg.mxu0
    %9935 = vmatpush.bf16.msra.mxu0 %v7424
    %9936 = vmatpush.bf16.msra.mxu0 %v7416
    %9937 = vmatpush.bf16.msra.mxu0 %v7408
    %9938 = vmatpush.bf16.msra.mxu0 %v7400
    %9939 = vmatpush.bf16.msra.mxu0 %v7392
    %9940 = vmatpush.bf16.msra.mxu0 %v7384
    %9941 = vmatpush.bf16.msra.mxu0 %v7376
    %9942 = vmatpush.bf16.msra.mxu0 %v7368
    %9943 = vmatmul.bf16.gmra.mxu0 %v183
    %v9944 = vpop.f32.mrf.mxu0
    %v9945 = vadd.f32 %v9932, %v9944
    %v9946 = vpop.f32.mrf.mxu0
    %9947 = vdwg.mxu0
    %9948 = vmatpush.bf16.msra.mxu0 %v7488
    %9949 = vmatpush.bf16.msra.mxu0 %v7480
    %9950 = vmatpush.bf16.msra.mxu0 %v7472
    %9951 = vmatpush.bf16.msra.mxu0 %v7464
    %9952 = vmatpush.bf16.msra.mxu0 %v7456
    %9953 = vmatpush.bf16.msra.mxu0 %v7448
    %9954 = vmatpush.bf16.msra.mxu0 %v7440
    %9955 = vmatpush.bf16.msra.mxu0 %v7432
    %9956 = vmatmul.bf16.gmra.mxu0 %v184
    %v9957 = vpop.f32.mrf.mxu0
    %v9958 = vadd.f32 %v9945, %v9957
    %v9959 = vpop.f32.mrf.mxu0
    %9960 = vdwg.mxu0
    %9961 = vmatpush.bf16.msra.mxu0 %v7552
    %9962 = vmatpush.bf16.msra.mxu0 %v7544
    %9963 = vmatpush.bf16.msra.mxu0 %v7536
    %9964 = vmatpush.bf16.msra.mxu0 %v7528
    %9965 = vmatpush.bf16.msra.mxu0 %v7520
    %9966 = vmatpush.bf16.msra.mxu0 %v7512
    %9967 = vmatpush.bf16.msra.mxu0 %v7504
    %9968 = vmatpush.bf16.msra.mxu0 %v7496
    %9969 = vmatmul.bf16.gmra.mxu0 %v185
    %v9970 = vpop.f32.mrf.mxu0
    %v9971 = vadd.f32 %v9958, %v9970
    %v9972 = vpop.f32.mrf.mxu0
    %9973 = vdwg.mxu0
    %9974 = vmatpush.bf16.msra.mxu0 %v7616
    %9975 = vmatpush.bf16.msra.mxu0 %v7608
    %9976 = vmatpush.bf16.msra.mxu0 %v7600
    %9977 = vmatpush.bf16.msra.mxu0 %v7592
    %9978 = vmatpush.bf16.msra.mxu0 %v7584
    %9979 = vmatpush.bf16.msra.mxu0 %v7576
    %9980 = vmatpush.bf16.msra.mxu0 %v7568
    %9981 = vmatpush.bf16.msra.mxu0 %v7560
    %9982 = vmatmul.bf16.gmra.mxu0 %v186
    %v9983 = vpop.f32.mrf.mxu0
    %v9984 = vadd.f32 %v9971, %v9983
    %v9985 = vpop.f32.mrf.mxu0
    %9986 = vdwg.mxu0
    %9987 = vmatpush.bf16.msra.mxu0 %v7680
    %9988 = vmatpush.bf16.msra.mxu0 %v7672
    %9989 = vmatpush.bf16.msra.mxu0 %v7664
    %9990 = vmatpush.bf16.msra.mxu0 %v7656
    %9991 = vmatpush.bf16.msra.mxu0 %v7648
    %9992 = vmatpush.bf16.msra.mxu0 %v7640
    %9993 = vmatpush.bf16.msra.mxu0 %v7632
    %9994 = vmatpush.bf16.msra.mxu0 %v7624
    %9995 = vmatmul.bf16.gmra.mxu0 %v187
    %v9996 = vpop.f32.mrf.mxu0
    %v9997 = vadd.f32 %v9984, %v9996
    %v9998 = vpop.f32.mrf.mxu0
    %9999 = vdwg.mxu0
    %10000 = vmatpush.bf16.msra.mxu0 %v7744
    %10001 = vmatpush.bf16.msra.mxu0 %v7736
    %10002 = vmatpush.bf16.msra.mxu0 %v7728
    %10003 = vmatpush.bf16.msra.mxu0 %v7720
    %10004 = vmatpush.bf16.msra.mxu0 %v7712
    %10005 = vmatpush.bf16.msra.mxu0 %v7704
    %10006 = vmatpush.bf16.msra.mxu0 %v7696
    %10007 = vmatpush.bf16.msra.mxu0 %v7688
    %10008 = vmatmul.bf16.gmra.mxu0 %v188
    %v10009 = vpop.f32.mrf.mxu0
    %v10010 = vadd.f32 %v9997, %v10009
    %v10011 = vpop.f32.mrf.mxu0
    %10012 = vdwg.mxu0
    %10013 = vmatpush.bf16.msra.mxu0 %v7808
    %10014 = vmatpush.bf16.msra.mxu0 %v7800
    %10015 = vmatpush.bf16.msra.mxu0 %v7792
    %10016 = vmatpush.bf16.msra.mxu0 %v7784
    %10017 = vmatpush.bf16.msra.mxu0 %v7776
    %10018 = vmatpush.bf16.msra.mxu0 %v7768
    %10019 = vmatpush.bf16.msra.mxu0 %v7760
    %10020 = vmatpush.bf16.msra.mxu0 %v7752
    %10021 = vmatmul.bf16.gmra.mxu0 %v189
    %v10022 = vpop.f32.mrf.mxu0
    %v10023 = vadd.f32 %v10010, %v10022
    %v10024 = vpop.f32.mrf.mxu0
    %10025 = vdwg.mxu0
    %10026 = vmatpush.bf16.msra.mxu0 %v7872
    %10027 = vmatpush.bf16.msra.mxu0 %v7864
    %10028 = vmatpush.bf16.msra.mxu0 %v7856
    %10029 = vmatpush.bf16.msra.mxu0 %v7848
    %10030 = vmatpush.bf16.msra.mxu0 %v7840
    %10031 = vmatpush.bf16.msra.mxu0 %v7832
    %10032 = vmatpush.bf16.msra.mxu0 %v7824
    %10033 = vmatpush.bf16.msra.mxu0 %v7816
    %10034 = vmatmul.bf16.gmra.mxu0 %v190
    %v10035 = vpop.f32.mrf.mxu0
    %v10036 = vadd.f32 %v10023, %v10035
    %v10037 = vpop.f32.mrf.mxu0
    %10038 = vdwg.mxu0
    %10039 = vmatpush.bf16.msra.mxu0 %v6401
    %10040 = vmatpush.bf16.msra.mxu0 %v6393
    %10041 = vmatpush.bf16.msra.mxu0 %v6385
    %10042 = vmatpush.bf16.msra.mxu0 %v6377
    %10043 = vmatpush.bf16.msra.mxu0 %v6369
    %10044 = vmatpush.bf16.msra.mxu0 %v6361
    %10045 = vmatpush.bf16.msra.mxu0 %v6353
    %10046 = vmatpush.bf16.msra.mxu0 %v6345
    %10047 = vmatmul.bf16.gmra.mxu0 %v167
    %v10048 = vpop.f32.mrf.mxu0
    %v10049 = vadd.f32 0.0, %v10048
    %v10050 = vpop.f32.mrf.mxu0
    %10051 = vdwg.mxu0
    %10052 = vmatpush.bf16.msra.mxu0 %v6465
    %10053 = vmatpush.bf16.msra.mxu0 %v6457
    %10054 = vmatpush.bf16.msra.mxu0 %v6449
    %10055 = vmatpush.bf16.msra.mxu0 %v6441
    %10056 = vmatpush.bf16.msra.mxu0 %v6433
    %10057 = vmatpush.bf16.msra.mxu0 %v6425
    %10058 = vmatpush.bf16.msra.mxu0 %v6417
    %10059 = vmatpush.bf16.msra.mxu0 %v6409
    %10060 = vmatmul.bf16.gmra.mxu0 %v168
    %v10061 = vpop.f32.mrf.mxu0
    %v10062 = vadd.f32 %v10049, %v10061
    %v10063 = vpop.f32.mrf.mxu0
    %10064 = vdwg.mxu0
    %10065 = vmatpush.bf16.msra.mxu0 %v6529
    %10066 = vmatpush.bf16.msra.mxu0 %v6521
    %10067 = vmatpush.bf16.msra.mxu0 %v6513
    %10068 = vmatpush.bf16.msra.mxu0 %v6505
    %10069 = vmatpush.bf16.msra.mxu0 %v6497
    %10070 = vmatpush.bf16.msra.mxu0 %v6489
    %10071 = vmatpush.bf16.msra.mxu0 %v6481
    %10072 = vmatpush.bf16.msra.mxu0 %v6473
    %10073 = vmatmul.bf16.gmra.mxu0 %v169
    %v10074 = vpop.f32.mrf.mxu0
    %v10075 = vadd.f32 %v10062, %v10074
    %v10076 = vpop.f32.mrf.mxu0
    %10077 = vdwg.mxu0
    %10078 = vmatpush.bf16.msra.mxu0 %v6593
    %10079 = vmatpush.bf16.msra.mxu0 %v6585
    %10080 = vmatpush.bf16.msra.mxu0 %v6577
    %10081 = vmatpush.bf16.msra.mxu0 %v6569
    %10082 = vmatpush.bf16.msra.mxu0 %v6561
    %10083 = vmatpush.bf16.msra.mxu0 %v6553
    %10084 = vmatpush.bf16.msra.mxu0 %v6545
    %10085 = vmatpush.bf16.msra.mxu0 %v6537
    %10086 = vmatmul.bf16.gmra.mxu0 %v170
    %v10087 = vpop.f32.mrf.mxu0
    %v10088 = vadd.f32 %v10075, %v10087
    %v10089 = vpop.f32.mrf.mxu0
    %10090 = vdwg.mxu0
    %10091 = vmatpush.bf16.msra.mxu0 %v6657
    %10092 = vmatpush.bf16.msra.mxu0 %v6649
    %10093 = vmatpush.bf16.msra.mxu0 %v6641
    %10094 = vmatpush.bf16.msra.mxu0 %v6633
    %10095 = vmatpush.bf16.msra.mxu0 %v6625
    %10096 = vmatpush.bf16.msra.mxu0 %v6617
    %10097 = vmatpush.bf16.msra.mxu0 %v6609
    %10098 = vmatpush.bf16.msra.mxu0 %v6601
    %10099 = vmatmul.bf16.gmra.mxu0 %v171
    %v10100 = vpop.f32.mrf.mxu0
    %v10101 = vadd.f32 %v10088, %v10100
    %v10102 = vpop.f32.mrf.mxu0
    %10103 = vdwg.mxu0
    %10104 = vmatpush.bf16.msra.mxu0 %v6721
    %10105 = vmatpush.bf16.msra.mxu0 %v6713
    %10106 = vmatpush.bf16.msra.mxu0 %v6705
    %10107 = vmatpush.bf16.msra.mxu0 %v6697
    %10108 = vmatpush.bf16.msra.mxu0 %v6689
    %10109 = vmatpush.bf16.msra.mxu0 %v6681
    %10110 = vmatpush.bf16.msra.mxu0 %v6673
    %10111 = vmatpush.bf16.msra.mxu0 %v6665
    %10112 = vmatmul.bf16.gmra.mxu0 %v172
    %v10113 = vpop.f32.mrf.mxu0
    %v10114 = vadd.f32 %v10101, %v10113
    %v10115 = vpop.f32.mrf.mxu0
    %10116 = vdwg.mxu0
    %10117 = vmatpush.bf16.msra.mxu0 %v6785
    %10118 = vmatpush.bf16.msra.mxu0 %v6777
    %10119 = vmatpush.bf16.msra.mxu0 %v6769
    %10120 = vmatpush.bf16.msra.mxu0 %v6761
    %10121 = vmatpush.bf16.msra.mxu0 %v6753
    %10122 = vmatpush.bf16.msra.mxu0 %v6745
    %10123 = vmatpush.bf16.msra.mxu0 %v6737
    %10124 = vmatpush.bf16.msra.mxu0 %v6729
    %10125 = vmatmul.bf16.gmra.mxu0 %v173
    %v10126 = vpop.f32.mrf.mxu0
    %v10127 = vadd.f32 %v10114, %v10126
    %v10128 = vpop.f32.mrf.mxu0
    %10129 = vdwg.mxu0
    %10130 = vmatpush.bf16.msra.mxu0 %v6849
    %10131 = vmatpush.bf16.msra.mxu0 %v6841
    %10132 = vmatpush.bf16.msra.mxu0 %v6833
    %10133 = vmatpush.bf16.msra.mxu0 %v6825
    %10134 = vmatpush.bf16.msra.mxu0 %v6817
    %10135 = vmatpush.bf16.msra.mxu0 %v6809
    %10136 = vmatpush.bf16.msra.mxu0 %v6801
    %10137 = vmatpush.bf16.msra.mxu0 %v6793
    %10138 = vmatmul.bf16.gmra.mxu0 %v174
    %v10139 = vpop.f32.mrf.mxu0
    %v10140 = vadd.f32 %v10127, %v10139
    %v10141 = vpop.f32.mrf.mxu0
    %10142 = vdwg.mxu0
    %10143 = vmatpush.bf16.msra.mxu0 %v6913
    %10144 = vmatpush.bf16.msra.mxu0 %v6905
    %10145 = vmatpush.bf16.msra.mxu0 %v6897
    %10146 = vmatpush.bf16.msra.mxu0 %v6889
    %10147 = vmatpush.bf16.msra.mxu0 %v6881
    %10148 = vmatpush.bf16.msra.mxu0 %v6873
    %10149 = vmatpush.bf16.msra.mxu0 %v6865
    %10150 = vmatpush.bf16.msra.mxu0 %v6857
    %10151 = vmatmul.bf16.gmra.mxu0 %v175
    %v10152 = vpop.f32.mrf.mxu0
    %v10153 = vadd.f32 %v10140, %v10152
    %v10154 = vpop.f32.mrf.mxu0
    %10155 = vdwg.mxu0
    %10156 = vmatpush.bf16.msra.mxu0 %v6977
    %10157 = vmatpush.bf16.msra.mxu0 %v6969
    %10158 = vmatpush.bf16.msra.mxu0 %v6961
    %10159 = vmatpush.bf16.msra.mxu0 %v6953
    %10160 = vmatpush.bf16.msra.mxu0 %v6945
    %10161 = vmatpush.bf16.msra.mxu0 %v6937
    %10162 = vmatpush.bf16.msra.mxu0 %v6929
    %10163 = vmatpush.bf16.msra.mxu0 %v6921
    %10164 = vmatmul.bf16.gmra.mxu0 %v176
    %v10165 = vpop.f32.mrf.mxu0
    %v10166 = vadd.f32 %v10153, %v10165
    %v10167 = vpop.f32.mrf.mxu0
    %10168 = vdwg.mxu0
    %10169 = vmatpush.bf16.msra.mxu0 %v7041
    %10170 = vmatpush.bf16.msra.mxu0 %v7033
    %10171 = vmatpush.bf16.msra.mxu0 %v7025
    %10172 = vmatpush.bf16.msra.mxu0 %v7017
    %10173 = vmatpush.bf16.msra.mxu0 %v7009
    %10174 = vmatpush.bf16.msra.mxu0 %v7001
    %10175 = vmatpush.bf16.msra.mxu0 %v6993
    %10176 = vmatpush.bf16.msra.mxu0 %v6985
    %10177 = vmatmul.bf16.gmra.mxu0 %v177
    %v10178 = vpop.f32.mrf.mxu0
    %v10179 = vadd.f32 %v10166, %v10178
    %v10180 = vpop.f32.mrf.mxu0
    %10181 = vdwg.mxu0
    %10182 = vmatpush.bf16.msra.mxu0 %v7105
    %10183 = vmatpush.bf16.msra.mxu0 %v7097
    %10184 = vmatpush.bf16.msra.mxu0 %v7089
    %10185 = vmatpush.bf16.msra.mxu0 %v7081
    %10186 = vmatpush.bf16.msra.mxu0 %v7073
    %10187 = vmatpush.bf16.msra.mxu0 %v7065
    %10188 = vmatpush.bf16.msra.mxu0 %v7057
    %10189 = vmatpush.bf16.msra.mxu0 %v7049
    %10190 = vmatmul.bf16.gmra.mxu0 %v178
    %v10191 = vpop.f32.mrf.mxu0
    %v10192 = vadd.f32 %v10179, %v10191
    %v10193 = vpop.f32.mrf.mxu0
    %10194 = vdwg.mxu0
    %10195 = vmatpush.bf16.msra.mxu0 %v7169
    %10196 = vmatpush.bf16.msra.mxu0 %v7161
    %10197 = vmatpush.bf16.msra.mxu0 %v7153
    %10198 = vmatpush.bf16.msra.mxu0 %v7145
    %10199 = vmatpush.bf16.msra.mxu0 %v7137
    %10200 = vmatpush.bf16.msra.mxu0 %v7129
    %10201 = vmatpush.bf16.msra.mxu0 %v7121
    %10202 = vmatpush.bf16.msra.mxu0 %v7113
    %10203 = vmatmul.bf16.gmra.mxu0 %v179
    %v10204 = vpop.f32.mrf.mxu0
    %v10205 = vadd.f32 %v10192, %v10204
    %v10206 = vpop.f32.mrf.mxu0
    %10207 = vdwg.mxu0
    %10208 = vmatpush.bf16.msra.mxu0 %v7233
    %10209 = vmatpush.bf16.msra.mxu0 %v7225
    %10210 = vmatpush.bf16.msra.mxu0 %v7217
    %10211 = vmatpush.bf16.msra.mxu0 %v7209
    %10212 = vmatpush.bf16.msra.mxu0 %v7201
    %10213 = vmatpush.bf16.msra.mxu0 %v7193
    %10214 = vmatpush.bf16.msra.mxu0 %v7185
    %10215 = vmatpush.bf16.msra.mxu0 %v7177
    %10216 = vmatmul.bf16.gmra.mxu0 %v180
    %v10217 = vpop.f32.mrf.mxu0
    %v10218 = vadd.f32 %v10205, %v10217
    %v10219 = vpop.f32.mrf.mxu0
    %10220 = vdwg.mxu0
    %10221 = vmatpush.bf16.msra.mxu0 %v7297
    %10222 = vmatpush.bf16.msra.mxu0 %v7289
    %10223 = vmatpush.bf16.msra.mxu0 %v7281
    %10224 = vmatpush.bf16.msra.mxu0 %v7273
    %10225 = vmatpush.bf16.msra.mxu0 %v7265
    %10226 = vmatpush.bf16.msra.mxu0 %v7257
    %10227 = vmatpush.bf16.msra.mxu0 %v7249
    %10228 = vmatpush.bf16.msra.mxu0 %v7241
    %10229 = vmatmul.bf16.gmra.mxu0 %v181
    %v10230 = vpop.f32.mrf.mxu0
    %v10231 = vadd.f32 %v10218, %v10230
    %v10232 = vpop.f32.mrf.mxu0
    %10233 = vdwg.mxu0
    %10234 = vmatpush.bf16.msra.mxu0 %v7361
    %10235 = vmatpush.bf16.msra.mxu0 %v7353
    %10236 = vmatpush.bf16.msra.mxu0 %v7345
    %10237 = vmatpush.bf16.msra.mxu0 %v7337
    %10238 = vmatpush.bf16.msra.mxu0 %v7329
    %10239 = vmatpush.bf16.msra.mxu0 %v7321
    %10240 = vmatpush.bf16.msra.mxu0 %v7313
    %10241 = vmatpush.bf16.msra.mxu0 %v7305
    %10242 = vmatmul.bf16.gmra.mxu0 %v182
    %v10243 = vpop.f32.mrf.mxu0
    %v10244 = vadd.f32 %v10231, %v10243
    %v10245 = vpop.f32.mrf.mxu0
    %10246 = vdwg.mxu0
    %10247 = vmatpush.bf16.msra.mxu0 %v7425
    %10248 = vmatpush.bf16.msra.mxu0 %v7417
    %10249 = vmatpush.bf16.msra.mxu0 %v7409
    %10250 = vmatpush.bf16.msra.mxu0 %v7401
    %10251 = vmatpush.bf16.msra.mxu0 %v7393
    %10252 = vmatpush.bf16.msra.mxu0 %v7385
    %10253 = vmatpush.bf16.msra.mxu0 %v7377
    %10254 = vmatpush.bf16.msra.mxu0 %v7369
    %10255 = vmatmul.bf16.gmra.mxu0 %v183
    %v10256 = vpop.f32.mrf.mxu0
    %v10257 = vadd.f32 %v10244, %v10256
    %v10258 = vpop.f32.mrf.mxu0
    %10259 = vdwg.mxu0
    %10260 = vmatpush.bf16.msra.mxu0 %v7489
    %10261 = vmatpush.bf16.msra.mxu0 %v7481
    %10262 = vmatpush.bf16.msra.mxu0 %v7473
    %10263 = vmatpush.bf16.msra.mxu0 %v7465
    %10264 = vmatpush.bf16.msra.mxu0 %v7457
    %10265 = vmatpush.bf16.msra.mxu0 %v7449
    %10266 = vmatpush.bf16.msra.mxu0 %v7441
    %10267 = vmatpush.bf16.msra.mxu0 %v7433
    %10268 = vmatmul.bf16.gmra.mxu0 %v184
    %v10269 = vpop.f32.mrf.mxu0
    %v10270 = vadd.f32 %v10257, %v10269
    %v10271 = vpop.f32.mrf.mxu0
    %10272 = vdwg.mxu0
    %10273 = vmatpush.bf16.msra.mxu0 %v7553
    %10274 = vmatpush.bf16.msra.mxu0 %v7545
    %10275 = vmatpush.bf16.msra.mxu0 %v7537
    %10276 = vmatpush.bf16.msra.mxu0 %v7529
    %10277 = vmatpush.bf16.msra.mxu0 %v7521
    %10278 = vmatpush.bf16.msra.mxu0 %v7513
    %10279 = vmatpush.bf16.msra.mxu0 %v7505
    %10280 = vmatpush.bf16.msra.mxu0 %v7497
    %10281 = vmatmul.bf16.gmra.mxu0 %v185
    %v10282 = vpop.f32.mrf.mxu0
    %v10283 = vadd.f32 %v10270, %v10282
    %v10284 = vpop.f32.mrf.mxu0
    %10285 = vdwg.mxu0
    %10286 = vmatpush.bf16.msra.mxu0 %v7617
    %10287 = vmatpush.bf16.msra.mxu0 %v7609
    %10288 = vmatpush.bf16.msra.mxu0 %v7601
    %10289 = vmatpush.bf16.msra.mxu0 %v7593
    %10290 = vmatpush.bf16.msra.mxu0 %v7585
    %10291 = vmatpush.bf16.msra.mxu0 %v7577
    %10292 = vmatpush.bf16.msra.mxu0 %v7569
    %10293 = vmatpush.bf16.msra.mxu0 %v7561
    %10294 = vmatmul.bf16.gmra.mxu0 %v186
    %v10295 = vpop.f32.mrf.mxu0
    %v10296 = vadd.f32 %v10283, %v10295
    %v10297 = vpop.f32.mrf.mxu0
    %10298 = vdwg.mxu0
    %10299 = vmatpush.bf16.msra.mxu0 %v7681
    %10300 = vmatpush.bf16.msra.mxu0 %v7673
    %10301 = vmatpush.bf16.msra.mxu0 %v7665
    %10302 = vmatpush.bf16.msra.mxu0 %v7657
    %10303 = vmatpush.bf16.msra.mxu0 %v7649
    %10304 = vmatpush.bf16.msra.mxu0 %v7641
    %10305 = vmatpush.bf16.msra.mxu0 %v7633
    %10306 = vmatpush.bf16.msra.mxu0 %v7625
    %10307 = vmatmul.bf16.gmra.mxu0 %v187
    %v10308 = vpop.f32.mrf.mxu0
    %v10309 = vadd.f32 %v10296, %v10308
    %v10310 = vpop.f32.mrf.mxu0
    %10311 = vdwg.mxu0
    %10312 = vmatpush.bf16.msra.mxu0 %v7745
    %10313 = vmatpush.bf16.msra.mxu0 %v7737
    %10314 = vmatpush.bf16.msra.mxu0 %v7729
    %10315 = vmatpush.bf16.msra.mxu0 %v7721
    %10316 = vmatpush.bf16.msra.mxu0 %v7713
    %10317 = vmatpush.bf16.msra.mxu0 %v7705
    %10318 = vmatpush.bf16.msra.mxu0 %v7697
    %10319 = vmatpush.bf16.msra.mxu0 %v7689
    %10320 = vmatmul.bf16.gmra.mxu0 %v188
    %v10321 = vpop.f32.mrf.mxu0
    %v10322 = vadd.f32 %v10309, %v10321
    %v10323 = vpop.f32.mrf.mxu0
    %10324 = vdwg.mxu0
    %10325 = vmatpush.bf16.msra.mxu0 %v7809
    %10326 = vmatpush.bf16.msra.mxu0 %v7801
    %10327 = vmatpush.bf16.msra.mxu0 %v7793
    %10328 = vmatpush.bf16.msra.mxu0 %v7785
    %10329 = vmatpush.bf16.msra.mxu0 %v7777
    %10330 = vmatpush.bf16.msra.mxu0 %v7769
    %10331 = vmatpush.bf16.msra.mxu0 %v7761
    %10332 = vmatpush.bf16.msra.mxu0 %v7753
    %10333 = vmatmul.bf16.gmra.mxu0 %v189
    %v10334 = vpop.f32.mrf.mxu0
    %v10335 = vadd.f32 %v10322, %v10334
    %v10336 = vpop.f32.mrf.mxu0
    %10337 = vdwg.mxu0
    %10338 = vmatpush.bf16.msra.mxu0 %v7873
    %10339 = vmatpush.bf16.msra.mxu0 %v7865
    %10340 = vmatpush.bf16.msra.mxu0 %v7857
    %10341 = vmatpush.bf16.msra.mxu0 %v7849
    %10342 = vmatpush.bf16.msra.mxu0 %v7841
    %10343 = vmatpush.bf16.msra.mxu0 %v7833
    %10344 = vmatpush.bf16.msra.mxu0 %v7825
    %10345 = vmatpush.bf16.msra.mxu0 %v7817
    %10346 = vmatmul.bf16.gmra.mxu0 %v190
    %v10347 = vpop.f32.mrf.mxu0
    %v10348 = vadd.f32 %v10335, %v10347
    %v10349 = vpop.f32.mrf.mxu0
    %10350 = vdwg.mxu0
    %10351 = vmatpush.bf16.msra.mxu0 %v6402
    %10352 = vmatpush.bf16.msra.mxu0 %v6394
    %10353 = vmatpush.bf16.msra.mxu0 %v6386
    %10354 = vmatpush.bf16.msra.mxu0 %v6378
    %10355 = vmatpush.bf16.msra.mxu0 %v6370
    %10356 = vmatpush.bf16.msra.mxu0 %v6362
    %10357 = vmatpush.bf16.msra.mxu0 %v6354
    %10358 = vmatpush.bf16.msra.mxu0 %v6346
    %10359 = vmatmul.bf16.gmra.mxu0 %v167
    %v10360 = vpop.f32.mrf.mxu0
    %v10361 = vadd.f32 0.0, %v10360
    %v10362 = vpop.f32.mrf.mxu0
    %10363 = vdwg.mxu0
    %10364 = vmatpush.bf16.msra.mxu0 %v6466
    %10365 = vmatpush.bf16.msra.mxu0 %v6458
    %10366 = vmatpush.bf16.msra.mxu0 %v6450
    %10367 = vmatpush.bf16.msra.mxu0 %v6442
    %10368 = vmatpush.bf16.msra.mxu0 %v6434
    %10369 = vmatpush.bf16.msra.mxu0 %v6426
    %10370 = vmatpush.bf16.msra.mxu0 %v6418
    %10371 = vmatpush.bf16.msra.mxu0 %v6410
    %10372 = vmatmul.bf16.gmra.mxu0 %v168
    %v10373 = vpop.f32.mrf.mxu0
    %v10374 = vadd.f32 %v10361, %v10373
    %v10375 = vpop.f32.mrf.mxu0
    %10376 = vdwg.mxu0
    %10377 = vmatpush.bf16.msra.mxu0 %v6530
    %10378 = vmatpush.bf16.msra.mxu0 %v6522
    %10379 = vmatpush.bf16.msra.mxu0 %v6514
    %10380 = vmatpush.bf16.msra.mxu0 %v6506
    %10381 = vmatpush.bf16.msra.mxu0 %v6498
    %10382 = vmatpush.bf16.msra.mxu0 %v6490
    %10383 = vmatpush.bf16.msra.mxu0 %v6482
    %10384 = vmatpush.bf16.msra.mxu0 %v6474
    %10385 = vmatmul.bf16.gmra.mxu0 %v169
    %v10386 = vpop.f32.mrf.mxu0
    %v10387 = vadd.f32 %v10374, %v10386
    %v10388 = vpop.f32.mrf.mxu0
    %10389 = vdwg.mxu0
    %10390 = vmatpush.bf16.msra.mxu0 %v6594
    %10391 = vmatpush.bf16.msra.mxu0 %v6586
    %10392 = vmatpush.bf16.msra.mxu0 %v6578
    %10393 = vmatpush.bf16.msra.mxu0 %v6570
    %10394 = vmatpush.bf16.msra.mxu0 %v6562
    %10395 = vmatpush.bf16.msra.mxu0 %v6554
    %10396 = vmatpush.bf16.msra.mxu0 %v6546
    %10397 = vmatpush.bf16.msra.mxu0 %v6538
    %10398 = vmatmul.bf16.gmra.mxu0 %v170
    %v10399 = vpop.f32.mrf.mxu0
    %v10400 = vadd.f32 %v10387, %v10399
    %v10401 = vpop.f32.mrf.mxu0
    %10402 = vdwg.mxu0
    %10403 = vmatpush.bf16.msra.mxu0 %v6658
    %10404 = vmatpush.bf16.msra.mxu0 %v6650
    %10405 = vmatpush.bf16.msra.mxu0 %v6642
    %10406 = vmatpush.bf16.msra.mxu0 %v6634
    %10407 = vmatpush.bf16.msra.mxu0 %v6626
    %10408 = vmatpush.bf16.msra.mxu0 %v6618
    %10409 = vmatpush.bf16.msra.mxu0 %v6610
    %10410 = vmatpush.bf16.msra.mxu0 %v6602
    %10411 = vmatmul.bf16.gmra.mxu0 %v171
    %v10412 = vpop.f32.mrf.mxu0
    %v10413 = vadd.f32 %v10400, %v10412
    %v10414 = vpop.f32.mrf.mxu0
    %10415 = vdwg.mxu0
    %10416 = vmatpush.bf16.msra.mxu0 %v6722
    %10417 = vmatpush.bf16.msra.mxu0 %v6714
    %10418 = vmatpush.bf16.msra.mxu0 %v6706
    %10419 = vmatpush.bf16.msra.mxu0 %v6698
    %10420 = vmatpush.bf16.msra.mxu0 %v6690
    %10421 = vmatpush.bf16.msra.mxu0 %v6682
    %10422 = vmatpush.bf16.msra.mxu0 %v6674
    %10423 = vmatpush.bf16.msra.mxu0 %v6666
    %10424 = vmatmul.bf16.gmra.mxu0 %v172
    %v10425 = vpop.f32.mrf.mxu0
    %v10426 = vadd.f32 %v10413, %v10425
    %v10427 = vpop.f32.mrf.mxu0
    %10428 = vdwg.mxu0
    %10429 = vmatpush.bf16.msra.mxu0 %v6786
    %10430 = vmatpush.bf16.msra.mxu0 %v6778
    %10431 = vmatpush.bf16.msra.mxu0 %v6770
    %10432 = vmatpush.bf16.msra.mxu0 %v6762
    %10433 = vmatpush.bf16.msra.mxu0 %v6754
    %10434 = vmatpush.bf16.msra.mxu0 %v6746
    %10435 = vmatpush.bf16.msra.mxu0 %v6738
    %10436 = vmatpush.bf16.msra.mxu0 %v6730
    %10437 = vmatmul.bf16.gmra.mxu0 %v173
    %v10438 = vpop.f32.mrf.mxu0
    %v10439 = vadd.f32 %v10426, %v10438
    %v10440 = vpop.f32.mrf.mxu0
    %10441 = vdwg.mxu0
    %10442 = vmatpush.bf16.msra.mxu0 %v6850
    %10443 = vmatpush.bf16.msra.mxu0 %v6842
    %10444 = vmatpush.bf16.msra.mxu0 %v6834
    %10445 = vmatpush.bf16.msra.mxu0 %v6826
    %10446 = vmatpush.bf16.msra.mxu0 %v6818
    %10447 = vmatpush.bf16.msra.mxu0 %v6810
    %10448 = vmatpush.bf16.msra.mxu0 %v6802
    %10449 = vmatpush.bf16.msra.mxu0 %v6794
    %10450 = vmatmul.bf16.gmra.mxu0 %v174
    %v10451 = vpop.f32.mrf.mxu0
    %v10452 = vadd.f32 %v10439, %v10451
    %v10453 = vpop.f32.mrf.mxu0
    %10454 = vdwg.mxu0
    %10455 = vmatpush.bf16.msra.mxu0 %v6914
    %10456 = vmatpush.bf16.msra.mxu0 %v6906
    %10457 = vmatpush.bf16.msra.mxu0 %v6898
    %10458 = vmatpush.bf16.msra.mxu0 %v6890
    %10459 = vmatpush.bf16.msra.mxu0 %v6882
    %10460 = vmatpush.bf16.msra.mxu0 %v6874
    %10461 = vmatpush.bf16.msra.mxu0 %v6866
    %10462 = vmatpush.bf16.msra.mxu0 %v6858
    %10463 = vmatmul.bf16.gmra.mxu0 %v175
    %v10464 = vpop.f32.mrf.mxu0
    %v10465 = vadd.f32 %v10452, %v10464
    %v10466 = vpop.f32.mrf.mxu0
    %10467 = vdwg.mxu0
    %10468 = vmatpush.bf16.msra.mxu0 %v6978
    %10469 = vmatpush.bf16.msra.mxu0 %v6970
    %10470 = vmatpush.bf16.msra.mxu0 %v6962
    %10471 = vmatpush.bf16.msra.mxu0 %v6954
    %10472 = vmatpush.bf16.msra.mxu0 %v6946
    %10473 = vmatpush.bf16.msra.mxu0 %v6938
    %10474 = vmatpush.bf16.msra.mxu0 %v6930
    %10475 = vmatpush.bf16.msra.mxu0 %v6922
    %10476 = vmatmul.bf16.gmra.mxu0 %v176
    %v10477 = vpop.f32.mrf.mxu0
    %v10478 = vadd.f32 %v10465, %v10477
    %v10479 = vpop.f32.mrf.mxu0
    %10480 = vdwg.mxu0
    %10481 = vmatpush.bf16.msra.mxu0 %v7042
    %10482 = vmatpush.bf16.msra.mxu0 %v7034
    %10483 = vmatpush.bf16.msra.mxu0 %v7026
    %10484 = vmatpush.bf16.msra.mxu0 %v7018
    %10485 = vmatpush.bf16.msra.mxu0 %v7010
    %10486 = vmatpush.bf16.msra.mxu0 %v7002
    %10487 = vmatpush.bf16.msra.mxu0 %v6994
    %10488 = vmatpush.bf16.msra.mxu0 %v6986
    %10489 = vmatmul.bf16.gmra.mxu0 %v177
    %v10490 = vpop.f32.mrf.mxu0
    %v10491 = vadd.f32 %v10478, %v10490
    %v10492 = vpop.f32.mrf.mxu0
    %10493 = vdwg.mxu0
    %10494 = vmatpush.bf16.msra.mxu0 %v7106
    %10495 = vmatpush.bf16.msra.mxu0 %v7098
    %10496 = vmatpush.bf16.msra.mxu0 %v7090
    %10497 = vmatpush.bf16.msra.mxu0 %v7082
    %10498 = vmatpush.bf16.msra.mxu0 %v7074
    %10499 = vmatpush.bf16.msra.mxu0 %v7066
    %10500 = vmatpush.bf16.msra.mxu0 %v7058
    %10501 = vmatpush.bf16.msra.mxu0 %v7050
    %10502 = vmatmul.bf16.gmra.mxu0 %v178
    %v10503 = vpop.f32.mrf.mxu0
    %v10504 = vadd.f32 %v10491, %v10503
    %v10505 = vpop.f32.mrf.mxu0
    %10506 = vdwg.mxu0
    %10507 = vmatpush.bf16.msra.mxu0 %v7170
    %10508 = vmatpush.bf16.msra.mxu0 %v7162
    %10509 = vmatpush.bf16.msra.mxu0 %v7154
    %10510 = vmatpush.bf16.msra.mxu0 %v7146
    %10511 = vmatpush.bf16.msra.mxu0 %v7138
    %10512 = vmatpush.bf16.msra.mxu0 %v7130
    %10513 = vmatpush.bf16.msra.mxu0 %v7122
    %10514 = vmatpush.bf16.msra.mxu0 %v7114
    %10515 = vmatmul.bf16.gmra.mxu0 %v179
    %v10516 = vpop.f32.mrf.mxu0
    %v10517 = vadd.f32 %v10504, %v10516
    %v10518 = vpop.f32.mrf.mxu0
    %10519 = vdwg.mxu0
    %10520 = vmatpush.bf16.msra.mxu0 %v7234
    %10521 = vmatpush.bf16.msra.mxu0 %v7226
    %10522 = vmatpush.bf16.msra.mxu0 %v7218
    %10523 = vmatpush.bf16.msra.mxu0 %v7210
    %10524 = vmatpush.bf16.msra.mxu0 %v7202
    %10525 = vmatpush.bf16.msra.mxu0 %v7194
    %10526 = vmatpush.bf16.msra.mxu0 %v7186
    %10527 = vmatpush.bf16.msra.mxu0 %v7178
    %10528 = vmatmul.bf16.gmra.mxu0 %v180
    %v10529 = vpop.f32.mrf.mxu0
    %v10530 = vadd.f32 %v10517, %v10529
    %v10531 = vpop.f32.mrf.mxu0
    %10532 = vdwg.mxu0
    %10533 = vmatpush.bf16.msra.mxu0 %v7298
    %10534 = vmatpush.bf16.msra.mxu0 %v7290
    %10535 = vmatpush.bf16.msra.mxu0 %v7282
    %10536 = vmatpush.bf16.msra.mxu0 %v7274
    %10537 = vmatpush.bf16.msra.mxu0 %v7266
    %10538 = vmatpush.bf16.msra.mxu0 %v7258
    %10539 = vmatpush.bf16.msra.mxu0 %v7250
    %10540 = vmatpush.bf16.msra.mxu0 %v7242
    %10541 = vmatmul.bf16.gmra.mxu0 %v181
    %v10542 = vpop.f32.mrf.mxu0
    %v10543 = vadd.f32 %v10530, %v10542
    %v10544 = vpop.f32.mrf.mxu0
    %10545 = vdwg.mxu0
    %10546 = vmatpush.bf16.msra.mxu0 %v7362
    %10547 = vmatpush.bf16.msra.mxu0 %v7354
    %10548 = vmatpush.bf16.msra.mxu0 %v7346
    %10549 = vmatpush.bf16.msra.mxu0 %v7338
    %10550 = vmatpush.bf16.msra.mxu0 %v7330
    %10551 = vmatpush.bf16.msra.mxu0 %v7322
    %10552 = vmatpush.bf16.msra.mxu0 %v7314
    %10553 = vmatpush.bf16.msra.mxu0 %v7306
    %10554 = vmatmul.bf16.gmra.mxu0 %v182
    %v10555 = vpop.f32.mrf.mxu0
    %v10556 = vadd.f32 %v10543, %v10555
    %v10557 = vpop.f32.mrf.mxu0
    %10558 = vdwg.mxu0
    %10559 = vmatpush.bf16.msra.mxu0 %v7426
    %10560 = vmatpush.bf16.msra.mxu0 %v7418
    %10561 = vmatpush.bf16.msra.mxu0 %v7410
    %10562 = vmatpush.bf16.msra.mxu0 %v7402
    %10563 = vmatpush.bf16.msra.mxu0 %v7394
    %10564 = vmatpush.bf16.msra.mxu0 %v7386
    %10565 = vmatpush.bf16.msra.mxu0 %v7378
    %10566 = vmatpush.bf16.msra.mxu0 %v7370
    %10567 = vmatmul.bf16.gmra.mxu0 %v183
    %v10568 = vpop.f32.mrf.mxu0
    %v10569 = vadd.f32 %v10556, %v10568
    %v10570 = vpop.f32.mrf.mxu0
    %10571 = vdwg.mxu0
    %10572 = vmatpush.bf16.msra.mxu0 %v7490
    %10573 = vmatpush.bf16.msra.mxu0 %v7482
    %10574 = vmatpush.bf16.msra.mxu0 %v7474
    %10575 = vmatpush.bf16.msra.mxu0 %v7466
    %10576 = vmatpush.bf16.msra.mxu0 %v7458
    %10577 = vmatpush.bf16.msra.mxu0 %v7450
    %10578 = vmatpush.bf16.msra.mxu0 %v7442
    %10579 = vmatpush.bf16.msra.mxu0 %v7434
    %10580 = vmatmul.bf16.gmra.mxu0 %v184
    %v10581 = vpop.f32.mrf.mxu0
    %v10582 = vadd.f32 %v10569, %v10581
    %v10583 = vpop.f32.mrf.mxu0
    %10584 = vdwg.mxu0
    %10585 = vmatpush.bf16.msra.mxu0 %v7554
    %10586 = vmatpush.bf16.msra.mxu0 %v7546
    %10587 = vmatpush.bf16.msra.mxu0 %v7538
    %10588 = vmatpush.bf16.msra.mxu0 %v7530
    %10589 = vmatpush.bf16.msra.mxu0 %v7522
    %10590 = vmatpush.bf16.msra.mxu0 %v7514
    %10591 = vmatpush.bf16.msra.mxu0 %v7506
    %10592 = vmatpush.bf16.msra.mxu0 %v7498
    %10593 = vmatmul.bf16.gmra.mxu0 %v185
    %v10594 = vpop.f32.mrf.mxu0
    %v10595 = vadd.f32 %v10582, %v10594
    %v10596 = vpop.f32.mrf.mxu0
    %10597 = vdwg.mxu0
    %10598 = vmatpush.bf16.msra.mxu0 %v7618
    %10599 = vmatpush.bf16.msra.mxu0 %v7610
    %10600 = vmatpush.bf16.msra.mxu0 %v7602
    %10601 = vmatpush.bf16.msra.mxu0 %v7594
    %10602 = vmatpush.bf16.msra.mxu0 %v7586
    %10603 = vmatpush.bf16.msra.mxu0 %v7578
    %10604 = vmatpush.bf16.msra.mxu0 %v7570
    %10605 = vmatpush.bf16.msra.mxu0 %v7562
    %10606 = vmatmul.bf16.gmra.mxu0 %v186
    %v10607 = vpop.f32.mrf.mxu0
    %v10608 = vadd.f32 %v10595, %v10607
    %v10609 = vpop.f32.mrf.mxu0
    %10610 = vdwg.mxu0
    %10611 = vmatpush.bf16.msra.mxu0 %v7682
    %10612 = vmatpush.bf16.msra.mxu0 %v7674
    %10613 = vmatpush.bf16.msra.mxu0 %v7666
    %10614 = vmatpush.bf16.msra.mxu0 %v7658
    %10615 = vmatpush.bf16.msra.mxu0 %v7650
    %10616 = vmatpush.bf16.msra.mxu0 %v7642
    %10617 = vmatpush.bf16.msra.mxu0 %v7634
    %10618 = vmatpush.bf16.msra.mxu0 %v7626
    %10619 = vmatmul.bf16.gmra.mxu0 %v187
    %v10620 = vpop.f32.mrf.mxu0
    %v10621 = vadd.f32 %v10608, %v10620
    %v10622 = vpop.f32.mrf.mxu0
    %10623 = vdwg.mxu0
    %10624 = vmatpush.bf16.msra.mxu0 %v7746
    %10625 = vmatpush.bf16.msra.mxu0 %v7738
    %10626 = vmatpush.bf16.msra.mxu0 %v7730
    %10627 = vmatpush.bf16.msra.mxu0 %v7722
    %10628 = vmatpush.bf16.msra.mxu0 %v7714
    %10629 = vmatpush.bf16.msra.mxu0 %v7706
    %10630 = vmatpush.bf16.msra.mxu0 %v7698
    %10631 = vmatpush.bf16.msra.mxu0 %v7690
    %10632 = vmatmul.bf16.gmra.mxu0 %v188
    %v10633 = vpop.f32.mrf.mxu0
    %v10634 = vadd.f32 %v10621, %v10633
    %v10635 = vpop.f32.mrf.mxu0
    %10636 = vdwg.mxu0
    %10637 = vmatpush.bf16.msra.mxu0 %v7810
    %10638 = vmatpush.bf16.msra.mxu0 %v7802
    %10639 = vmatpush.bf16.msra.mxu0 %v7794
    %10640 = vmatpush.bf16.msra.mxu0 %v7786
    %10641 = vmatpush.bf16.msra.mxu0 %v7778
    %10642 = vmatpush.bf16.msra.mxu0 %v7770
    %10643 = vmatpush.bf16.msra.mxu0 %v7762
    %10644 = vmatpush.bf16.msra.mxu0 %v7754
    %10645 = vmatmul.bf16.gmra.mxu0 %v189
    %v10646 = vpop.f32.mrf.mxu0
    %v10647 = vadd.f32 %v10634, %v10646
    %v10648 = vpop.f32.mrf.mxu0
    %10649 = vdwg.mxu0
    %10650 = vmatpush.bf16.msra.mxu0 %v7874
    %10651 = vmatpush.bf16.msra.mxu0 %v7866
    %10652 = vmatpush.bf16.msra.mxu0 %v7858
    %10653 = vmatpush.bf16.msra.mxu0 %v7850
    %10654 = vmatpush.bf16.msra.mxu0 %v7842
    %10655 = vmatpush.bf16.msra.mxu0 %v7834
    %10656 = vmatpush.bf16.msra.mxu0 %v7826
    %10657 = vmatpush.bf16.msra.mxu0 %v7818
    %10658 = vmatmul.bf16.gmra.mxu0 %v190
    %v10659 = vpop.f32.mrf.mxu0
    %v10660 = vadd.f32 %v10647, %v10659
    %v10661 = vpop.f32.mrf.mxu0
    %10662 = vdwg.mxu0
    %10663 = vmatpush.bf16.msra.mxu0 %v6403
    %10664 = vmatpush.bf16.msra.mxu0 %v6395
    %10665 = vmatpush.bf16.msra.mxu0 %v6387
    %10666 = vmatpush.bf16.msra.mxu0 %v6379
    %10667 = vmatpush.bf16.msra.mxu0 %v6371
    %10668 = vmatpush.bf16.msra.mxu0 %v6363
    %10669 = vmatpush.bf16.msra.mxu0 %v6355
    %10670 = vmatpush.bf16.msra.mxu0 %v6347
    %10671 = vmatmul.bf16.gmra.mxu0 %v167
    %v10672 = vpop.f32.mrf.mxu0
    %v10673 = vadd.f32 0.0, %v10672
    %v10674 = vpop.f32.mrf.mxu0
    %10675 = vdwg.mxu0
    %10676 = vmatpush.bf16.msra.mxu0 %v6467
    %10677 = vmatpush.bf16.msra.mxu0 %v6459
    %10678 = vmatpush.bf16.msra.mxu0 %v6451
    %10679 = vmatpush.bf16.msra.mxu0 %v6443
    %10680 = vmatpush.bf16.msra.mxu0 %v6435
    %10681 = vmatpush.bf16.msra.mxu0 %v6427
    %10682 = vmatpush.bf16.msra.mxu0 %v6419
    %10683 = vmatpush.bf16.msra.mxu0 %v6411
    %10684 = vmatmul.bf16.gmra.mxu0 %v168
    %v10685 = vpop.f32.mrf.mxu0
    %v10686 = vadd.f32 %v10673, %v10685
    %v10687 = vpop.f32.mrf.mxu0
    %10688 = vdwg.mxu0
    %10689 = vmatpush.bf16.msra.mxu0 %v6531
    %10690 = vmatpush.bf16.msra.mxu0 %v6523
    %10691 = vmatpush.bf16.msra.mxu0 %v6515
    %10692 = vmatpush.bf16.msra.mxu0 %v6507
    %10693 = vmatpush.bf16.msra.mxu0 %v6499
    %10694 = vmatpush.bf16.msra.mxu0 %v6491
    %10695 = vmatpush.bf16.msra.mxu0 %v6483
    %10696 = vmatpush.bf16.msra.mxu0 %v6475
    %10697 = vmatmul.bf16.gmra.mxu0 %v169
    %v10698 = vpop.f32.mrf.mxu0
    %v10699 = vadd.f32 %v10686, %v10698
    %v10700 = vpop.f32.mrf.mxu0
    %10701 = vdwg.mxu0
    %10702 = vmatpush.bf16.msra.mxu0 %v6595
    %10703 = vmatpush.bf16.msra.mxu0 %v6587
    %10704 = vmatpush.bf16.msra.mxu0 %v6579
    %10705 = vmatpush.bf16.msra.mxu0 %v6571
    %10706 = vmatpush.bf16.msra.mxu0 %v6563
    %10707 = vmatpush.bf16.msra.mxu0 %v6555
    %10708 = vmatpush.bf16.msra.mxu0 %v6547
    %10709 = vmatpush.bf16.msra.mxu0 %v6539
    %10710 = vmatmul.bf16.gmra.mxu0 %v170
    %v10711 = vpop.f32.mrf.mxu0
    %v10712 = vadd.f32 %v10699, %v10711
    %v10713 = vpop.f32.mrf.mxu0
    %10714 = vdwg.mxu0
    %10715 = vmatpush.bf16.msra.mxu0 %v6659
    %10716 = vmatpush.bf16.msra.mxu0 %v6651
    %10717 = vmatpush.bf16.msra.mxu0 %v6643
    %10718 = vmatpush.bf16.msra.mxu0 %v6635
    %10719 = vmatpush.bf16.msra.mxu0 %v6627
    %10720 = vmatpush.bf16.msra.mxu0 %v6619
    %10721 = vmatpush.bf16.msra.mxu0 %v6611
    %10722 = vmatpush.bf16.msra.mxu0 %v6603
    %10723 = vmatmul.bf16.gmra.mxu0 %v171
    %v10724 = vpop.f32.mrf.mxu0
    %v10725 = vadd.f32 %v10712, %v10724
    %v10726 = vpop.f32.mrf.mxu0
    %10727 = vdwg.mxu0
    %10728 = vmatpush.bf16.msra.mxu0 %v6723
    %10729 = vmatpush.bf16.msra.mxu0 %v6715
    %10730 = vmatpush.bf16.msra.mxu0 %v6707
    %10731 = vmatpush.bf16.msra.mxu0 %v6699
    %10732 = vmatpush.bf16.msra.mxu0 %v6691
    %10733 = vmatpush.bf16.msra.mxu0 %v6683
    %10734 = vmatpush.bf16.msra.mxu0 %v6675
    %10735 = vmatpush.bf16.msra.mxu0 %v6667
    %10736 = vmatmul.bf16.gmra.mxu0 %v172
    %v10737 = vpop.f32.mrf.mxu0
    %v10738 = vadd.f32 %v10725, %v10737
    %v10739 = vpop.f32.mrf.mxu0
    %10740 = vdwg.mxu0
    %10741 = vmatpush.bf16.msra.mxu0 %v6787
    %10742 = vmatpush.bf16.msra.mxu0 %v6779
    %10743 = vmatpush.bf16.msra.mxu0 %v6771
    %10744 = vmatpush.bf16.msra.mxu0 %v6763
    %10745 = vmatpush.bf16.msra.mxu0 %v6755
    %10746 = vmatpush.bf16.msra.mxu0 %v6747
    %10747 = vmatpush.bf16.msra.mxu0 %v6739
    %10748 = vmatpush.bf16.msra.mxu0 %v6731
    %10749 = vmatmul.bf16.gmra.mxu0 %v173
    %v10750 = vpop.f32.mrf.mxu0
    %v10751 = vadd.f32 %v10738, %v10750
    %v10752 = vpop.f32.mrf.mxu0
    %10753 = vdwg.mxu0
    %10754 = vmatpush.bf16.msra.mxu0 %v6851
    %10755 = vmatpush.bf16.msra.mxu0 %v6843
    %10756 = vmatpush.bf16.msra.mxu0 %v6835
    %10757 = vmatpush.bf16.msra.mxu0 %v6827
    %10758 = vmatpush.bf16.msra.mxu0 %v6819
    %10759 = vmatpush.bf16.msra.mxu0 %v6811
    %10760 = vmatpush.bf16.msra.mxu0 %v6803
    %10761 = vmatpush.bf16.msra.mxu0 %v6795
    %10762 = vmatmul.bf16.gmra.mxu0 %v174
    %v10763 = vpop.f32.mrf.mxu0
    %v10764 = vadd.f32 %v10751, %v10763
    %v10765 = vpop.f32.mrf.mxu0
    %10766 = vdwg.mxu0
    %10767 = vmatpush.bf16.msra.mxu0 %v6915
    %10768 = vmatpush.bf16.msra.mxu0 %v6907
    %10769 = vmatpush.bf16.msra.mxu0 %v6899
    %10770 = vmatpush.bf16.msra.mxu0 %v6891
    %10771 = vmatpush.bf16.msra.mxu0 %v6883
    %10772 = vmatpush.bf16.msra.mxu0 %v6875
    %10773 = vmatpush.bf16.msra.mxu0 %v6867
    %10774 = vmatpush.bf16.msra.mxu0 %v6859
    %10775 = vmatmul.bf16.gmra.mxu0 %v175
    %v10776 = vpop.f32.mrf.mxu0
    %v10777 = vadd.f32 %v10764, %v10776
    %v10778 = vpop.f32.mrf.mxu0
    %10779 = vdwg.mxu0
    %10780 = vmatpush.bf16.msra.mxu0 %v6979
    %10781 = vmatpush.bf16.msra.mxu0 %v6971
    %10782 = vmatpush.bf16.msra.mxu0 %v6963
    %10783 = vmatpush.bf16.msra.mxu0 %v6955
    %10784 = vmatpush.bf16.msra.mxu0 %v6947
    %10785 = vmatpush.bf16.msra.mxu0 %v6939
    %10786 = vmatpush.bf16.msra.mxu0 %v6931
    %10787 = vmatpush.bf16.msra.mxu0 %v6923
    %10788 = vmatmul.bf16.gmra.mxu0 %v176
    %v10789 = vpop.f32.mrf.mxu0
    %v10790 = vadd.f32 %v10777, %v10789
    %v10791 = vpop.f32.mrf.mxu0
    %10792 = vdwg.mxu0
    %10793 = vmatpush.bf16.msra.mxu0 %v7043
    %10794 = vmatpush.bf16.msra.mxu0 %v7035
    %10795 = vmatpush.bf16.msra.mxu0 %v7027
    %10796 = vmatpush.bf16.msra.mxu0 %v7019
    %10797 = vmatpush.bf16.msra.mxu0 %v7011
    %10798 = vmatpush.bf16.msra.mxu0 %v7003
    %10799 = vmatpush.bf16.msra.mxu0 %v6995
    %10800 = vmatpush.bf16.msra.mxu0 %v6987
    %10801 = vmatmul.bf16.gmra.mxu0 %v177
    %v10802 = vpop.f32.mrf.mxu0
    %v10803 = vadd.f32 %v10790, %v10802
    %v10804 = vpop.f32.mrf.mxu0
    %10805 = vdwg.mxu0
    %10806 = vmatpush.bf16.msra.mxu0 %v7107
    %10807 = vmatpush.bf16.msra.mxu0 %v7099
    %10808 = vmatpush.bf16.msra.mxu0 %v7091
    %10809 = vmatpush.bf16.msra.mxu0 %v7083
    %10810 = vmatpush.bf16.msra.mxu0 %v7075
    %10811 = vmatpush.bf16.msra.mxu0 %v7067
    %10812 = vmatpush.bf16.msra.mxu0 %v7059
    %10813 = vmatpush.bf16.msra.mxu0 %v7051
    %10814 = vmatmul.bf16.gmra.mxu0 %v178
    %v10815 = vpop.f32.mrf.mxu0
    %v10816 = vadd.f32 %v10803, %v10815
    %v10817 = vpop.f32.mrf.mxu0
    %10818 = vdwg.mxu0
    %10819 = vmatpush.bf16.msra.mxu0 %v7171
    %10820 = vmatpush.bf16.msra.mxu0 %v7163
    %10821 = vmatpush.bf16.msra.mxu0 %v7155
    %10822 = vmatpush.bf16.msra.mxu0 %v7147
    %10823 = vmatpush.bf16.msra.mxu0 %v7139
    %10824 = vmatpush.bf16.msra.mxu0 %v7131
    %10825 = vmatpush.bf16.msra.mxu0 %v7123
    %10826 = vmatpush.bf16.msra.mxu0 %v7115
    %10827 = vmatmul.bf16.gmra.mxu0 %v179
    %v10828 = vpop.f32.mrf.mxu0
    %v10829 = vadd.f32 %v10816, %v10828
    %v10830 = vpop.f32.mrf.mxu0
    %10831 = vdwg.mxu0
    %10832 = vmatpush.bf16.msra.mxu0 %v7235
    %10833 = vmatpush.bf16.msra.mxu0 %v7227
    %10834 = vmatpush.bf16.msra.mxu0 %v7219
    %10835 = vmatpush.bf16.msra.mxu0 %v7211
    %10836 = vmatpush.bf16.msra.mxu0 %v7203
    %10837 = vmatpush.bf16.msra.mxu0 %v7195
    %10838 = vmatpush.bf16.msra.mxu0 %v7187
    %10839 = vmatpush.bf16.msra.mxu0 %v7179
    %10840 = vmatmul.bf16.gmra.mxu0 %v180
    %v10841 = vpop.f32.mrf.mxu0
    %v10842 = vadd.f32 %v10829, %v10841
    %v10843 = vpop.f32.mrf.mxu0
    %10844 = vdwg.mxu0
    %10845 = vmatpush.bf16.msra.mxu0 %v7299
    %10846 = vmatpush.bf16.msra.mxu0 %v7291
    %10847 = vmatpush.bf16.msra.mxu0 %v7283
    %10848 = vmatpush.bf16.msra.mxu0 %v7275
    %10849 = vmatpush.bf16.msra.mxu0 %v7267
    %10850 = vmatpush.bf16.msra.mxu0 %v7259
    %10851 = vmatpush.bf16.msra.mxu0 %v7251
    %10852 = vmatpush.bf16.msra.mxu0 %v7243
    %10853 = vmatmul.bf16.gmra.mxu0 %v181
    %v10854 = vpop.f32.mrf.mxu0
    %v10855 = vadd.f32 %v10842, %v10854
    %v10856 = vpop.f32.mrf.mxu0
    %10857 = vdwg.mxu0
    %10858 = vmatpush.bf16.msra.mxu0 %v7363
    %10859 = vmatpush.bf16.msra.mxu0 %v7355
    %10860 = vmatpush.bf16.msra.mxu0 %v7347
    %10861 = vmatpush.bf16.msra.mxu0 %v7339
    %10862 = vmatpush.bf16.msra.mxu0 %v7331
    %10863 = vmatpush.bf16.msra.mxu0 %v7323
    %10864 = vmatpush.bf16.msra.mxu0 %v7315
    %10865 = vmatpush.bf16.msra.mxu0 %v7307
    %10866 = vmatmul.bf16.gmra.mxu0 %v182
    %v10867 = vpop.f32.mrf.mxu0
    %v10868 = vadd.f32 %v10855, %v10867
    %v10869 = vpop.f32.mrf.mxu0
    %10870 = vdwg.mxu0
    %10871 = vmatpush.bf16.msra.mxu0 %v7427
    %10872 = vmatpush.bf16.msra.mxu0 %v7419
    %10873 = vmatpush.bf16.msra.mxu0 %v7411
    %10874 = vmatpush.bf16.msra.mxu0 %v7403
    %10875 = vmatpush.bf16.msra.mxu0 %v7395
    %10876 = vmatpush.bf16.msra.mxu0 %v7387
    %10877 = vmatpush.bf16.msra.mxu0 %v7379
    %10878 = vmatpush.bf16.msra.mxu0 %v7371
    %10879 = vmatmul.bf16.gmra.mxu0 %v183
    %v10880 = vpop.f32.mrf.mxu0
    %v10881 = vadd.f32 %v10868, %v10880
    %v10882 = vpop.f32.mrf.mxu0
    %10883 = vdwg.mxu0
    %10884 = vmatpush.bf16.msra.mxu0 %v7491
    %10885 = vmatpush.bf16.msra.mxu0 %v7483
    %10886 = vmatpush.bf16.msra.mxu0 %v7475
    %10887 = vmatpush.bf16.msra.mxu0 %v7467
    %10888 = vmatpush.bf16.msra.mxu0 %v7459
    %10889 = vmatpush.bf16.msra.mxu0 %v7451
    %10890 = vmatpush.bf16.msra.mxu0 %v7443
    %10891 = vmatpush.bf16.msra.mxu0 %v7435
    %10892 = vmatmul.bf16.gmra.mxu0 %v184
    %v10893 = vpop.f32.mrf.mxu0
    %v10894 = vadd.f32 %v10881, %v10893
    %v10895 = vpop.f32.mrf.mxu0
    %10896 = vdwg.mxu0
    %10897 = vmatpush.bf16.msra.mxu0 %v7555
    %10898 = vmatpush.bf16.msra.mxu0 %v7547
    %10899 = vmatpush.bf16.msra.mxu0 %v7539
    %10900 = vmatpush.bf16.msra.mxu0 %v7531
    %10901 = vmatpush.bf16.msra.mxu0 %v7523
    %10902 = vmatpush.bf16.msra.mxu0 %v7515
    %10903 = vmatpush.bf16.msra.mxu0 %v7507
    %10904 = vmatpush.bf16.msra.mxu0 %v7499
    %10905 = vmatmul.bf16.gmra.mxu0 %v185
    %v10906 = vpop.f32.mrf.mxu0
    %v10907 = vadd.f32 %v10894, %v10906
    %v10908 = vpop.f32.mrf.mxu0
    %10909 = vdwg.mxu0
    %10910 = vmatpush.bf16.msra.mxu0 %v7619
    %10911 = vmatpush.bf16.msra.mxu0 %v7611
    %10912 = vmatpush.bf16.msra.mxu0 %v7603
    %10913 = vmatpush.bf16.msra.mxu0 %v7595
    %10914 = vmatpush.bf16.msra.mxu0 %v7587
    %10915 = vmatpush.bf16.msra.mxu0 %v7579
    %10916 = vmatpush.bf16.msra.mxu0 %v7571
    %10917 = vmatpush.bf16.msra.mxu0 %v7563
    %10918 = vmatmul.bf16.gmra.mxu0 %v186
    %v10919 = vpop.f32.mrf.mxu0
    %v10920 = vadd.f32 %v10907, %v10919
    %v10921 = vpop.f32.mrf.mxu0
    %10922 = vdwg.mxu0
    %10923 = vmatpush.bf16.msra.mxu0 %v7683
    %10924 = vmatpush.bf16.msra.mxu0 %v7675
    %10925 = vmatpush.bf16.msra.mxu0 %v7667
    %10926 = vmatpush.bf16.msra.mxu0 %v7659
    %10927 = vmatpush.bf16.msra.mxu0 %v7651
    %10928 = vmatpush.bf16.msra.mxu0 %v7643
    %10929 = vmatpush.bf16.msra.mxu0 %v7635
    %10930 = vmatpush.bf16.msra.mxu0 %v7627
    %10931 = vmatmul.bf16.gmra.mxu0 %v187
    %v10932 = vpop.f32.mrf.mxu0
    %v10933 = vadd.f32 %v10920, %v10932
    %v10934 = vpop.f32.mrf.mxu0
    %10935 = vdwg.mxu0
    %10936 = vmatpush.bf16.msra.mxu0 %v7747
    %10937 = vmatpush.bf16.msra.mxu0 %v7739
    %10938 = vmatpush.bf16.msra.mxu0 %v7731
    %10939 = vmatpush.bf16.msra.mxu0 %v7723
    %10940 = vmatpush.bf16.msra.mxu0 %v7715
    %10941 = vmatpush.bf16.msra.mxu0 %v7707
    %10942 = vmatpush.bf16.msra.mxu0 %v7699
    %10943 = vmatpush.bf16.msra.mxu0 %v7691
    %10944 = vmatmul.bf16.gmra.mxu0 %v188
    %v10945 = vpop.f32.mrf.mxu0
    %v10946 = vadd.f32 %v10933, %v10945
    %v10947 = vpop.f32.mrf.mxu0
    %10948 = vdwg.mxu0
    %10949 = vmatpush.bf16.msra.mxu0 %v7811
    %10950 = vmatpush.bf16.msra.mxu0 %v7803
    %10951 = vmatpush.bf16.msra.mxu0 %v7795
    %10952 = vmatpush.bf16.msra.mxu0 %v7787
    %10953 = vmatpush.bf16.msra.mxu0 %v7779
    %10954 = vmatpush.bf16.msra.mxu0 %v7771
    %10955 = vmatpush.bf16.msra.mxu0 %v7763
    %10956 = vmatpush.bf16.msra.mxu0 %v7755
    %10957 = vmatmul.bf16.gmra.mxu0 %v189
    %v10958 = vpop.f32.mrf.mxu0
    %v10959 = vadd.f32 %v10946, %v10958
    %v10960 = vpop.f32.mrf.mxu0
    %10961 = vdwg.mxu0
    %10962 = vmatpush.bf16.msra.mxu0 %v7875
    %10963 = vmatpush.bf16.msra.mxu0 %v7867
    %10964 = vmatpush.bf16.msra.mxu0 %v7859
    %10965 = vmatpush.bf16.msra.mxu0 %v7851
    %10966 = vmatpush.bf16.msra.mxu0 %v7843
    %10967 = vmatpush.bf16.msra.mxu0 %v7835
    %10968 = vmatpush.bf16.msra.mxu0 %v7827
    %10969 = vmatpush.bf16.msra.mxu0 %v7819
    %10970 = vmatmul.bf16.gmra.mxu0 %v190
    %v10971 = vpop.f32.mrf.mxu0
    %v10972 = vadd.f32 %v10959, %v10971
    %v10973 = vpop.f32.mrf.mxu0
    %10974 = vdwg.mxu0
    %10975 = vmatpush.bf16.msra.mxu0 %v6404
    %10976 = vmatpush.bf16.msra.mxu0 %v6396
    %10977 = vmatpush.bf16.msra.mxu0 %v6388
    %10978 = vmatpush.bf16.msra.mxu0 %v6380
    %10979 = vmatpush.bf16.msra.mxu0 %v6372
    %10980 = vmatpush.bf16.msra.mxu0 %v6364
    %10981 = vmatpush.bf16.msra.mxu0 %v6356
    %10982 = vmatpush.bf16.msra.mxu0 %v6348
    %10983 = vmatmul.bf16.gmra.mxu0 %v167
    %v10984 = vpop.f32.mrf.mxu0
    %v10985 = vadd.f32 0.0, %v10984
    %v10986 = vpop.f32.mrf.mxu0
    %10987 = vdwg.mxu0
    %10988 = vmatpush.bf16.msra.mxu0 %v6468
    %10989 = vmatpush.bf16.msra.mxu0 %v6460
    %10990 = vmatpush.bf16.msra.mxu0 %v6452
    %10991 = vmatpush.bf16.msra.mxu0 %v6444
    %10992 = vmatpush.bf16.msra.mxu0 %v6436
    %10993 = vmatpush.bf16.msra.mxu0 %v6428
    %10994 = vmatpush.bf16.msra.mxu0 %v6420
    %10995 = vmatpush.bf16.msra.mxu0 %v6412
    %10996 = vmatmul.bf16.gmra.mxu0 %v168
    %v10997 = vpop.f32.mrf.mxu0
    %v10998 = vadd.f32 %v10985, %v10997
    %v10999 = vpop.f32.mrf.mxu0
    %11000 = vdwg.mxu0
    %11001 = vmatpush.bf16.msra.mxu0 %v6532
    %11002 = vmatpush.bf16.msra.mxu0 %v6524
    %11003 = vmatpush.bf16.msra.mxu0 %v6516
    %11004 = vmatpush.bf16.msra.mxu0 %v6508
    %11005 = vmatpush.bf16.msra.mxu0 %v6500
    %11006 = vmatpush.bf16.msra.mxu0 %v6492
    %11007 = vmatpush.bf16.msra.mxu0 %v6484
    %11008 = vmatpush.bf16.msra.mxu0 %v6476
    %11009 = vmatmul.bf16.gmra.mxu0 %v169
    %v11010 = vpop.f32.mrf.mxu0
    %v11011 = vadd.f32 %v10998, %v11010
    %v11012 = vpop.f32.mrf.mxu0
    %11013 = vdwg.mxu0
    %11014 = vmatpush.bf16.msra.mxu0 %v6596
    %11015 = vmatpush.bf16.msra.mxu0 %v6588
    %11016 = vmatpush.bf16.msra.mxu0 %v6580
    %11017 = vmatpush.bf16.msra.mxu0 %v6572
    %11018 = vmatpush.bf16.msra.mxu0 %v6564
    %11019 = vmatpush.bf16.msra.mxu0 %v6556
    %11020 = vmatpush.bf16.msra.mxu0 %v6548
    %11021 = vmatpush.bf16.msra.mxu0 %v6540
    %11022 = vmatmul.bf16.gmra.mxu0 %v170
    %v11023 = vpop.f32.mrf.mxu0
    %v11024 = vadd.f32 %v11011, %v11023
    %v11025 = vpop.f32.mrf.mxu0
    %11026 = vdwg.mxu0
    %11027 = vmatpush.bf16.msra.mxu0 %v6660
    %11028 = vmatpush.bf16.msra.mxu0 %v6652
    %11029 = vmatpush.bf16.msra.mxu0 %v6644
    %11030 = vmatpush.bf16.msra.mxu0 %v6636
    %11031 = vmatpush.bf16.msra.mxu0 %v6628
    %11032 = vmatpush.bf16.msra.mxu0 %v6620
    %11033 = vmatpush.bf16.msra.mxu0 %v6612
    %11034 = vmatpush.bf16.msra.mxu0 %v6604
    %11035 = vmatmul.bf16.gmra.mxu0 %v171
    %v11036 = vpop.f32.mrf.mxu0
    %v11037 = vadd.f32 %v11024, %v11036
    %v11038 = vpop.f32.mrf.mxu0
    %11039 = vdwg.mxu0
    %11040 = vmatpush.bf16.msra.mxu0 %v6724
    %11041 = vmatpush.bf16.msra.mxu0 %v6716
    %11042 = vmatpush.bf16.msra.mxu0 %v6708
    %11043 = vmatpush.bf16.msra.mxu0 %v6700
    %11044 = vmatpush.bf16.msra.mxu0 %v6692
    %11045 = vmatpush.bf16.msra.mxu0 %v6684
    %11046 = vmatpush.bf16.msra.mxu0 %v6676
    %11047 = vmatpush.bf16.msra.mxu0 %v6668
    %11048 = vmatmul.bf16.gmra.mxu0 %v172
    %v11049 = vpop.f32.mrf.mxu0
    %v11050 = vadd.f32 %v11037, %v11049
    %v11051 = vpop.f32.mrf.mxu0
    %11052 = vdwg.mxu0
    %11053 = vmatpush.bf16.msra.mxu0 %v6788
    %11054 = vmatpush.bf16.msra.mxu0 %v6780
    %11055 = vmatpush.bf16.msra.mxu0 %v6772
    %11056 = vmatpush.bf16.msra.mxu0 %v6764
    %11057 = vmatpush.bf16.msra.mxu0 %v6756
    %11058 = vmatpush.bf16.msra.mxu0 %v6748
    %11059 = vmatpush.bf16.msra.mxu0 %v6740
    %11060 = vmatpush.bf16.msra.mxu0 %v6732
    %11061 = vmatmul.bf16.gmra.mxu0 %v173
    %v11062 = vpop.f32.mrf.mxu0
    %v11063 = vadd.f32 %v11050, %v11062
    %v11064 = vpop.f32.mrf.mxu0
    %11065 = vdwg.mxu0
    %11066 = vmatpush.bf16.msra.mxu0 %v6852
    %11067 = vmatpush.bf16.msra.mxu0 %v6844
    %11068 = vmatpush.bf16.msra.mxu0 %v6836
    %11069 = vmatpush.bf16.msra.mxu0 %v6828
    %11070 = vmatpush.bf16.msra.mxu0 %v6820
    %11071 = vmatpush.bf16.msra.mxu0 %v6812
    %11072 = vmatpush.bf16.msra.mxu0 %v6804
    %11073 = vmatpush.bf16.msra.mxu0 %v6796
    %11074 = vmatmul.bf16.gmra.mxu0 %v174
    %v11075 = vpop.f32.mrf.mxu0
    %v11076 = vadd.f32 %v11063, %v11075
    %v11077 = vpop.f32.mrf.mxu0
    %11078 = vdwg.mxu0
    %11079 = vmatpush.bf16.msra.mxu0 %v6916
    %11080 = vmatpush.bf16.msra.mxu0 %v6908
    %11081 = vmatpush.bf16.msra.mxu0 %v6900
    %11082 = vmatpush.bf16.msra.mxu0 %v6892
    %11083 = vmatpush.bf16.msra.mxu0 %v6884
    %11084 = vmatpush.bf16.msra.mxu0 %v6876
    %11085 = vmatpush.bf16.msra.mxu0 %v6868
    %11086 = vmatpush.bf16.msra.mxu0 %v6860
    %11087 = vmatmul.bf16.gmra.mxu0 %v175
    %v11088 = vpop.f32.mrf.mxu0
    %v11089 = vadd.f32 %v11076, %v11088
    %v11090 = vpop.f32.mrf.mxu0
    %11091 = vdwg.mxu0
    %11092 = vmatpush.bf16.msra.mxu0 %v6980
    %11093 = vmatpush.bf16.msra.mxu0 %v6972
    %11094 = vmatpush.bf16.msra.mxu0 %v6964
    %11095 = vmatpush.bf16.msra.mxu0 %v6956
    %11096 = vmatpush.bf16.msra.mxu0 %v6948
    %11097 = vmatpush.bf16.msra.mxu0 %v6940
    %11098 = vmatpush.bf16.msra.mxu0 %v6932
    %11099 = vmatpush.bf16.msra.mxu0 %v6924
    %11100 = vmatmul.bf16.gmra.mxu0 %v176
    %v11101 = vpop.f32.mrf.mxu0
    %v11102 = vadd.f32 %v11089, %v11101
    %v11103 = vpop.f32.mrf.mxu0
    %11104 = vdwg.mxu0
    %11105 = vmatpush.bf16.msra.mxu0 %v7044
    %11106 = vmatpush.bf16.msra.mxu0 %v7036
    %11107 = vmatpush.bf16.msra.mxu0 %v7028
    %11108 = vmatpush.bf16.msra.mxu0 %v7020
    %11109 = vmatpush.bf16.msra.mxu0 %v7012
    %11110 = vmatpush.bf16.msra.mxu0 %v7004
    %11111 = vmatpush.bf16.msra.mxu0 %v6996
    %11112 = vmatpush.bf16.msra.mxu0 %v6988
    %11113 = vmatmul.bf16.gmra.mxu0 %v177
    %v11114 = vpop.f32.mrf.mxu0
    %v11115 = vadd.f32 %v11102, %v11114
    %v11116 = vpop.f32.mrf.mxu0
    %11117 = vdwg.mxu0
    %11118 = vmatpush.bf16.msra.mxu0 %v7108
    %11119 = vmatpush.bf16.msra.mxu0 %v7100
    %11120 = vmatpush.bf16.msra.mxu0 %v7092
    %11121 = vmatpush.bf16.msra.mxu0 %v7084
    %11122 = vmatpush.bf16.msra.mxu0 %v7076
    %11123 = vmatpush.bf16.msra.mxu0 %v7068
    %11124 = vmatpush.bf16.msra.mxu0 %v7060
    %11125 = vmatpush.bf16.msra.mxu0 %v7052
    %11126 = vmatmul.bf16.gmra.mxu0 %v178
    %v11127 = vpop.f32.mrf.mxu0
    %v11128 = vadd.f32 %v11115, %v11127
    %v11129 = vpop.f32.mrf.mxu0
    %11130 = vdwg.mxu0
    %11131 = vmatpush.bf16.msra.mxu0 %v7172
    %11132 = vmatpush.bf16.msra.mxu0 %v7164
    %11133 = vmatpush.bf16.msra.mxu0 %v7156
    %11134 = vmatpush.bf16.msra.mxu0 %v7148
    %11135 = vmatpush.bf16.msra.mxu0 %v7140
    %11136 = vmatpush.bf16.msra.mxu0 %v7132
    %11137 = vmatpush.bf16.msra.mxu0 %v7124
    %11138 = vmatpush.bf16.msra.mxu0 %v7116
    %11139 = vmatmul.bf16.gmra.mxu0 %v179
    %v11140 = vpop.f32.mrf.mxu0
    %v11141 = vadd.f32 %v11128, %v11140
    %v11142 = vpop.f32.mrf.mxu0
    %11143 = vdwg.mxu0
    %11144 = vmatpush.bf16.msra.mxu0 %v7236
    %11145 = vmatpush.bf16.msra.mxu0 %v7228
    %11146 = vmatpush.bf16.msra.mxu0 %v7220
    %11147 = vmatpush.bf16.msra.mxu0 %v7212
    %11148 = vmatpush.bf16.msra.mxu0 %v7204
    %11149 = vmatpush.bf16.msra.mxu0 %v7196
    %11150 = vmatpush.bf16.msra.mxu0 %v7188
    %11151 = vmatpush.bf16.msra.mxu0 %v7180
    %11152 = vmatmul.bf16.gmra.mxu0 %v180
    %v11153 = vpop.f32.mrf.mxu0
    %v11154 = vadd.f32 %v11141, %v11153
    %v11155 = vpop.f32.mrf.mxu0
    %11156 = vdwg.mxu0
    %11157 = vmatpush.bf16.msra.mxu0 %v7300
    %11158 = vmatpush.bf16.msra.mxu0 %v7292
    %11159 = vmatpush.bf16.msra.mxu0 %v7284
    %11160 = vmatpush.bf16.msra.mxu0 %v7276
    %11161 = vmatpush.bf16.msra.mxu0 %v7268
    %11162 = vmatpush.bf16.msra.mxu0 %v7260
    %11163 = vmatpush.bf16.msra.mxu0 %v7252
    %11164 = vmatpush.bf16.msra.mxu0 %v7244
    %11165 = vmatmul.bf16.gmra.mxu0 %v181
    %v11166 = vpop.f32.mrf.mxu0
    %v11167 = vadd.f32 %v11154, %v11166
    %v11168 = vpop.f32.mrf.mxu0
    %11169 = vdwg.mxu0
    %11170 = vmatpush.bf16.msra.mxu0 %v7364
    %11171 = vmatpush.bf16.msra.mxu0 %v7356
    %11172 = vmatpush.bf16.msra.mxu0 %v7348
    %11173 = vmatpush.bf16.msra.mxu0 %v7340
    %11174 = vmatpush.bf16.msra.mxu0 %v7332
    %11175 = vmatpush.bf16.msra.mxu0 %v7324
    %11176 = vmatpush.bf16.msra.mxu0 %v7316
    %11177 = vmatpush.bf16.msra.mxu0 %v7308
    %11178 = vmatmul.bf16.gmra.mxu0 %v182
    %v11179 = vpop.f32.mrf.mxu0
    %v11180 = vadd.f32 %v11167, %v11179
    %v11181 = vpop.f32.mrf.mxu0
    %11182 = vdwg.mxu0
    %11183 = vmatpush.bf16.msra.mxu0 %v7428
    %11184 = vmatpush.bf16.msra.mxu0 %v7420
    %11185 = vmatpush.bf16.msra.mxu0 %v7412
    %11186 = vmatpush.bf16.msra.mxu0 %v7404
    %11187 = vmatpush.bf16.msra.mxu0 %v7396
    %11188 = vmatpush.bf16.msra.mxu0 %v7388
    %11189 = vmatpush.bf16.msra.mxu0 %v7380
    %11190 = vmatpush.bf16.msra.mxu0 %v7372
    %11191 = vmatmul.bf16.gmra.mxu0 %v183
    %v11192 = vpop.f32.mrf.mxu0
    %v11193 = vadd.f32 %v11180, %v11192
    %v11194 = vpop.f32.mrf.mxu0
    %11195 = vdwg.mxu0
    %11196 = vmatpush.bf16.msra.mxu0 %v7492
    %11197 = vmatpush.bf16.msra.mxu0 %v7484
    %11198 = vmatpush.bf16.msra.mxu0 %v7476
    %11199 = vmatpush.bf16.msra.mxu0 %v7468
    %11200 = vmatpush.bf16.msra.mxu0 %v7460
    %11201 = vmatpush.bf16.msra.mxu0 %v7452
    %11202 = vmatpush.bf16.msra.mxu0 %v7444
    %11203 = vmatpush.bf16.msra.mxu0 %v7436
    %11204 = vmatmul.bf16.gmra.mxu0 %v184
    %v11205 = vpop.f32.mrf.mxu0
    %v11206 = vadd.f32 %v11193, %v11205
    %v11207 = vpop.f32.mrf.mxu0
    %11208 = vdwg.mxu0
    %11209 = vmatpush.bf16.msra.mxu0 %v7556
    %11210 = vmatpush.bf16.msra.mxu0 %v7548
    %11211 = vmatpush.bf16.msra.mxu0 %v7540
    %11212 = vmatpush.bf16.msra.mxu0 %v7532
    %11213 = vmatpush.bf16.msra.mxu0 %v7524
    %11214 = vmatpush.bf16.msra.mxu0 %v7516
    %11215 = vmatpush.bf16.msra.mxu0 %v7508
    %11216 = vmatpush.bf16.msra.mxu0 %v7500
    %11217 = vmatmul.bf16.gmra.mxu0 %v185
    %v11218 = vpop.f32.mrf.mxu0
    %v11219 = vadd.f32 %v11206, %v11218
    %v11220 = vpop.f32.mrf.mxu0
    %11221 = vdwg.mxu0
    %11222 = vmatpush.bf16.msra.mxu0 %v7620
    %11223 = vmatpush.bf16.msra.mxu0 %v7612
    %11224 = vmatpush.bf16.msra.mxu0 %v7604
    %11225 = vmatpush.bf16.msra.mxu0 %v7596
    %11226 = vmatpush.bf16.msra.mxu0 %v7588
    %11227 = vmatpush.bf16.msra.mxu0 %v7580
    %11228 = vmatpush.bf16.msra.mxu0 %v7572
    %11229 = vmatpush.bf16.msra.mxu0 %v7564
    %11230 = vmatmul.bf16.gmra.mxu0 %v186
    %v11231 = vpop.f32.mrf.mxu0
    %v11232 = vadd.f32 %v11219, %v11231
    %v11233 = vpop.f32.mrf.mxu0
    %11234 = vdwg.mxu0
    %11235 = vmatpush.bf16.msra.mxu0 %v7684
    %11236 = vmatpush.bf16.msra.mxu0 %v7676
    %11237 = vmatpush.bf16.msra.mxu0 %v7668
    %11238 = vmatpush.bf16.msra.mxu0 %v7660
    %11239 = vmatpush.bf16.msra.mxu0 %v7652
    %11240 = vmatpush.bf16.msra.mxu0 %v7644
    %11241 = vmatpush.bf16.msra.mxu0 %v7636
    %11242 = vmatpush.bf16.msra.mxu0 %v7628
    %11243 = vmatmul.bf16.gmra.mxu0 %v187
    %v11244 = vpop.f32.mrf.mxu0
    %v11245 = vadd.f32 %v11232, %v11244
    %v11246 = vpop.f32.mrf.mxu0
    %11247 = vdwg.mxu0
    %11248 = vmatpush.bf16.msra.mxu0 %v7748
    %11249 = vmatpush.bf16.msra.mxu0 %v7740
    %11250 = vmatpush.bf16.msra.mxu0 %v7732
    %11251 = vmatpush.bf16.msra.mxu0 %v7724
    %11252 = vmatpush.bf16.msra.mxu0 %v7716
    %11253 = vmatpush.bf16.msra.mxu0 %v7708
    %11254 = vmatpush.bf16.msra.mxu0 %v7700
    %11255 = vmatpush.bf16.msra.mxu0 %v7692
    %11256 = vmatmul.bf16.gmra.mxu0 %v188
    %v11257 = vpop.f32.mrf.mxu0
    %v11258 = vadd.f32 %v11245, %v11257
    %v11259 = vpop.f32.mrf.mxu0
    %11260 = vdwg.mxu0
    %11261 = vmatpush.bf16.msra.mxu0 %v7812
    %11262 = vmatpush.bf16.msra.mxu0 %v7804
    %11263 = vmatpush.bf16.msra.mxu0 %v7796
    %11264 = vmatpush.bf16.msra.mxu0 %v7788
    %11265 = vmatpush.bf16.msra.mxu0 %v7780
    %11266 = vmatpush.bf16.msra.mxu0 %v7772
    %11267 = vmatpush.bf16.msra.mxu0 %v7764
    %11268 = vmatpush.bf16.msra.mxu0 %v7756
    %11269 = vmatmul.bf16.gmra.mxu0 %v189
    %v11270 = vpop.f32.mrf.mxu0
    %v11271 = vadd.f32 %v11258, %v11270
    %v11272 = vpop.f32.mrf.mxu0
    %11273 = vdwg.mxu0
    %11274 = vmatpush.bf16.msra.mxu0 %v7876
    %11275 = vmatpush.bf16.msra.mxu0 %v7868
    %11276 = vmatpush.bf16.msra.mxu0 %v7860
    %11277 = vmatpush.bf16.msra.mxu0 %v7852
    %11278 = vmatpush.bf16.msra.mxu0 %v7844
    %11279 = vmatpush.bf16.msra.mxu0 %v7836
    %11280 = vmatpush.bf16.msra.mxu0 %v7828
    %11281 = vmatpush.bf16.msra.mxu0 %v7820
    %11282 = vmatmul.bf16.gmra.mxu0 %v190
    %v11283 = vpop.f32.mrf.mxu0
    %v11284 = vadd.f32 %v11271, %v11283
    %v11285 = vpop.f32.mrf.mxu0
    %11286 = vdwg.mxu0
    %11287 = vmatpush.bf16.msra.mxu0 %v6405
    %11288 = vmatpush.bf16.msra.mxu0 %v6397
    %11289 = vmatpush.bf16.msra.mxu0 %v6389
    %11290 = vmatpush.bf16.msra.mxu0 %v6381
    %11291 = vmatpush.bf16.msra.mxu0 %v6373
    %11292 = vmatpush.bf16.msra.mxu0 %v6365
    %11293 = vmatpush.bf16.msra.mxu0 %v6357
    %11294 = vmatpush.bf16.msra.mxu0 %v6349
    %11295 = vmatmul.bf16.gmra.mxu0 %v167
    %v11296 = vpop.f32.mrf.mxu0
    %v11297 = vadd.f32 0.0, %v11296
    %v11298 = vpop.f32.mrf.mxu0
    %11299 = vdwg.mxu0
    %11300 = vmatpush.bf16.msra.mxu0 %v6469
    %11301 = vmatpush.bf16.msra.mxu0 %v6461
    %11302 = vmatpush.bf16.msra.mxu0 %v6453
    %11303 = vmatpush.bf16.msra.mxu0 %v6445
    %11304 = vmatpush.bf16.msra.mxu0 %v6437
    %11305 = vmatpush.bf16.msra.mxu0 %v6429
    %11306 = vmatpush.bf16.msra.mxu0 %v6421
    %11307 = vmatpush.bf16.msra.mxu0 %v6413
    %11308 = vmatmul.bf16.gmra.mxu0 %v168
    %v11309 = vpop.f32.mrf.mxu0
    %v11310 = vadd.f32 %v11297, %v11309
    %v11311 = vpop.f32.mrf.mxu0
    %11312 = vdwg.mxu0
    %11313 = vmatpush.bf16.msra.mxu0 %v6533
    %11314 = vmatpush.bf16.msra.mxu0 %v6525
    %11315 = vmatpush.bf16.msra.mxu0 %v6517
    %11316 = vmatpush.bf16.msra.mxu0 %v6509
    %11317 = vmatpush.bf16.msra.mxu0 %v6501
    %11318 = vmatpush.bf16.msra.mxu0 %v6493
    %11319 = vmatpush.bf16.msra.mxu0 %v6485
    %11320 = vmatpush.bf16.msra.mxu0 %v6477
    %11321 = vmatmul.bf16.gmra.mxu0 %v169
    %v11322 = vpop.f32.mrf.mxu0
    %v11323 = vadd.f32 %v11310, %v11322
    %v11324 = vpop.f32.mrf.mxu0
    %11325 = vdwg.mxu0
    %11326 = vmatpush.bf16.msra.mxu0 %v6597
    %11327 = vmatpush.bf16.msra.mxu0 %v6589
    %11328 = vmatpush.bf16.msra.mxu0 %v6581
    %11329 = vmatpush.bf16.msra.mxu0 %v6573
    %11330 = vmatpush.bf16.msra.mxu0 %v6565
    %11331 = vmatpush.bf16.msra.mxu0 %v6557
    %11332 = vmatpush.bf16.msra.mxu0 %v6549
    %11333 = vmatpush.bf16.msra.mxu0 %v6541
    %11334 = vmatmul.bf16.gmra.mxu0 %v170
    %v11335 = vpop.f32.mrf.mxu0
    %v11336 = vadd.f32 %v11323, %v11335
    %v11337 = vpop.f32.mrf.mxu0
    %11338 = vdwg.mxu0
    %11339 = vmatpush.bf16.msra.mxu0 %v6661
    %11340 = vmatpush.bf16.msra.mxu0 %v6653
    %11341 = vmatpush.bf16.msra.mxu0 %v6645
    %11342 = vmatpush.bf16.msra.mxu0 %v6637
    %11343 = vmatpush.bf16.msra.mxu0 %v6629
    %11344 = vmatpush.bf16.msra.mxu0 %v6621
    %11345 = vmatpush.bf16.msra.mxu0 %v6613
    %11346 = vmatpush.bf16.msra.mxu0 %v6605
    %11347 = vmatmul.bf16.gmra.mxu0 %v171
    %v11348 = vpop.f32.mrf.mxu0
    %v11349 = vadd.f32 %v11336, %v11348
    %v11350 = vpop.f32.mrf.mxu0
    %11351 = vdwg.mxu0
    %11352 = vmatpush.bf16.msra.mxu0 %v6725
    %11353 = vmatpush.bf16.msra.mxu0 %v6717
    %11354 = vmatpush.bf16.msra.mxu0 %v6709
    %11355 = vmatpush.bf16.msra.mxu0 %v6701
    %11356 = vmatpush.bf16.msra.mxu0 %v6693
    %11357 = vmatpush.bf16.msra.mxu0 %v6685
    %11358 = vmatpush.bf16.msra.mxu0 %v6677
    %11359 = vmatpush.bf16.msra.mxu0 %v6669
    %11360 = vmatmul.bf16.gmra.mxu0 %v172
    %v11361 = vpop.f32.mrf.mxu0
    %v11362 = vadd.f32 %v11349, %v11361
    %v11363 = vpop.f32.mrf.mxu0
    %11364 = vdwg.mxu0
    %11365 = vmatpush.bf16.msra.mxu0 %v6789
    %11366 = vmatpush.bf16.msra.mxu0 %v6781
    %11367 = vmatpush.bf16.msra.mxu0 %v6773
    %11368 = vmatpush.bf16.msra.mxu0 %v6765
    %11369 = vmatpush.bf16.msra.mxu0 %v6757
    %11370 = vmatpush.bf16.msra.mxu0 %v6749
    %11371 = vmatpush.bf16.msra.mxu0 %v6741
    %11372 = vmatpush.bf16.msra.mxu0 %v6733
    %11373 = vmatmul.bf16.gmra.mxu0 %v173
    %v11374 = vpop.f32.mrf.mxu0
    %v11375 = vadd.f32 %v11362, %v11374
    %v11376 = vpop.f32.mrf.mxu0
    %11377 = vdwg.mxu0
    %11378 = vmatpush.bf16.msra.mxu0 %v6853
    %11379 = vmatpush.bf16.msra.mxu0 %v6845
    %11380 = vmatpush.bf16.msra.mxu0 %v6837
    %11381 = vmatpush.bf16.msra.mxu0 %v6829
    %11382 = vmatpush.bf16.msra.mxu0 %v6821
    %11383 = vmatpush.bf16.msra.mxu0 %v6813
    %11384 = vmatpush.bf16.msra.mxu0 %v6805
    %11385 = vmatpush.bf16.msra.mxu0 %v6797
    %11386 = vmatmul.bf16.gmra.mxu0 %v174
    %v11387 = vpop.f32.mrf.mxu0
    %v11388 = vadd.f32 %v11375, %v11387
    %v11389 = vpop.f32.mrf.mxu0
    %11390 = vdwg.mxu0
    %11391 = vmatpush.bf16.msra.mxu0 %v6917
    %11392 = vmatpush.bf16.msra.mxu0 %v6909
    %11393 = vmatpush.bf16.msra.mxu0 %v6901
    %11394 = vmatpush.bf16.msra.mxu0 %v6893
    %11395 = vmatpush.bf16.msra.mxu0 %v6885
    %11396 = vmatpush.bf16.msra.mxu0 %v6877
    %11397 = vmatpush.bf16.msra.mxu0 %v6869
    %11398 = vmatpush.bf16.msra.mxu0 %v6861
    %11399 = vmatmul.bf16.gmra.mxu0 %v175
    %v11400 = vpop.f32.mrf.mxu0
    %v11401 = vadd.f32 %v11388, %v11400
    %v11402 = vpop.f32.mrf.mxu0
    %11403 = vdwg.mxu0
    %11404 = vmatpush.bf16.msra.mxu0 %v6981
    %11405 = vmatpush.bf16.msra.mxu0 %v6973
    %11406 = vmatpush.bf16.msra.mxu0 %v6965
    %11407 = vmatpush.bf16.msra.mxu0 %v6957
    %11408 = vmatpush.bf16.msra.mxu0 %v6949
    %11409 = vmatpush.bf16.msra.mxu0 %v6941
    %11410 = vmatpush.bf16.msra.mxu0 %v6933
    %11411 = vmatpush.bf16.msra.mxu0 %v6925
    %11412 = vmatmul.bf16.gmra.mxu0 %v176
    %v11413 = vpop.f32.mrf.mxu0
    %v11414 = vadd.f32 %v11401, %v11413
    %v11415 = vpop.f32.mrf.mxu0
    %11416 = vdwg.mxu0
    %11417 = vmatpush.bf16.msra.mxu0 %v7045
    %11418 = vmatpush.bf16.msra.mxu0 %v7037
    %11419 = vmatpush.bf16.msra.mxu0 %v7029
    %11420 = vmatpush.bf16.msra.mxu0 %v7021
    %11421 = vmatpush.bf16.msra.mxu0 %v7013
    %11422 = vmatpush.bf16.msra.mxu0 %v7005
    %11423 = vmatpush.bf16.msra.mxu0 %v6997
    %11424 = vmatpush.bf16.msra.mxu0 %v6989
    %11425 = vmatmul.bf16.gmra.mxu0 %v177
    %v11426 = vpop.f32.mrf.mxu0
    %v11427 = vadd.f32 %v11414, %v11426
    %v11428 = vpop.f32.mrf.mxu0
    %11429 = vdwg.mxu0
    %11430 = vmatpush.bf16.msra.mxu0 %v7109
    %11431 = vmatpush.bf16.msra.mxu0 %v7101
    %11432 = vmatpush.bf16.msra.mxu0 %v7093
    %11433 = vmatpush.bf16.msra.mxu0 %v7085
    %11434 = vmatpush.bf16.msra.mxu0 %v7077
    %11435 = vmatpush.bf16.msra.mxu0 %v7069
    %11436 = vmatpush.bf16.msra.mxu0 %v7061
    %11437 = vmatpush.bf16.msra.mxu0 %v7053
    %11438 = vmatmul.bf16.gmra.mxu0 %v178
    %v11439 = vpop.f32.mrf.mxu0
    %v11440 = vadd.f32 %v11427, %v11439
    %v11441 = vpop.f32.mrf.mxu0
    %11442 = vdwg.mxu0
    %11443 = vmatpush.bf16.msra.mxu0 %v7173
    %11444 = vmatpush.bf16.msra.mxu0 %v7165
    %11445 = vmatpush.bf16.msra.mxu0 %v7157
    %11446 = vmatpush.bf16.msra.mxu0 %v7149
    %11447 = vmatpush.bf16.msra.mxu0 %v7141
    %11448 = vmatpush.bf16.msra.mxu0 %v7133
    %11449 = vmatpush.bf16.msra.mxu0 %v7125
    %11450 = vmatpush.bf16.msra.mxu0 %v7117
    %11451 = vmatmul.bf16.gmra.mxu0 %v179
    %v11452 = vpop.f32.mrf.mxu0
    %v11453 = vadd.f32 %v11440, %v11452
    %v11454 = vpop.f32.mrf.mxu0
    %11455 = vdwg.mxu0
    %11456 = vmatpush.bf16.msra.mxu0 %v7237
    %11457 = vmatpush.bf16.msra.mxu0 %v7229
    %11458 = vmatpush.bf16.msra.mxu0 %v7221
    %11459 = vmatpush.bf16.msra.mxu0 %v7213
    %11460 = vmatpush.bf16.msra.mxu0 %v7205
    %11461 = vmatpush.bf16.msra.mxu0 %v7197
    %11462 = vmatpush.bf16.msra.mxu0 %v7189
    %11463 = vmatpush.bf16.msra.mxu0 %v7181
    %11464 = vmatmul.bf16.gmra.mxu0 %v180
    %v11465 = vpop.f32.mrf.mxu0
    %v11466 = vadd.f32 %v11453, %v11465
    %v11467 = vpop.f32.mrf.mxu0
    %11468 = vdwg.mxu0
    %11469 = vmatpush.bf16.msra.mxu0 %v7301
    %11470 = vmatpush.bf16.msra.mxu0 %v7293
    %11471 = vmatpush.bf16.msra.mxu0 %v7285
    %11472 = vmatpush.bf16.msra.mxu0 %v7277
    %11473 = vmatpush.bf16.msra.mxu0 %v7269
    %11474 = vmatpush.bf16.msra.mxu0 %v7261
    %11475 = vmatpush.bf16.msra.mxu0 %v7253
    %11476 = vmatpush.bf16.msra.mxu0 %v7245
    %11477 = vmatmul.bf16.gmra.mxu0 %v181
    %v11478 = vpop.f32.mrf.mxu0
    %v11479 = vadd.f32 %v11466, %v11478
    %v11480 = vpop.f32.mrf.mxu0
    %11481 = vdwg.mxu0
    %11482 = vmatpush.bf16.msra.mxu0 %v7365
    %11483 = vmatpush.bf16.msra.mxu0 %v7357
    %11484 = vmatpush.bf16.msra.mxu0 %v7349
    %11485 = vmatpush.bf16.msra.mxu0 %v7341
    %11486 = vmatpush.bf16.msra.mxu0 %v7333
    %11487 = vmatpush.bf16.msra.mxu0 %v7325
    %11488 = vmatpush.bf16.msra.mxu0 %v7317
    %11489 = vmatpush.bf16.msra.mxu0 %v7309
    %11490 = vmatmul.bf16.gmra.mxu0 %v182
    %v11491 = vpop.f32.mrf.mxu0
    %v11492 = vadd.f32 %v11479, %v11491
    %v11493 = vpop.f32.mrf.mxu0
    %11494 = vdwg.mxu0
    %11495 = vmatpush.bf16.msra.mxu0 %v7429
    %11496 = vmatpush.bf16.msra.mxu0 %v7421
    %11497 = vmatpush.bf16.msra.mxu0 %v7413
    %11498 = vmatpush.bf16.msra.mxu0 %v7405
    %11499 = vmatpush.bf16.msra.mxu0 %v7397
    %11500 = vmatpush.bf16.msra.mxu0 %v7389
    %11501 = vmatpush.bf16.msra.mxu0 %v7381
    %11502 = vmatpush.bf16.msra.mxu0 %v7373
    %11503 = vmatmul.bf16.gmra.mxu0 %v183
    %v11504 = vpop.f32.mrf.mxu0
    %v11505 = vadd.f32 %v11492, %v11504
    %v11506 = vpop.f32.mrf.mxu0
    %11507 = vdwg.mxu0
    %11508 = vmatpush.bf16.msra.mxu0 %v7493
    %11509 = vmatpush.bf16.msra.mxu0 %v7485
    %11510 = vmatpush.bf16.msra.mxu0 %v7477
    %11511 = vmatpush.bf16.msra.mxu0 %v7469
    %11512 = vmatpush.bf16.msra.mxu0 %v7461
    %11513 = vmatpush.bf16.msra.mxu0 %v7453
    %11514 = vmatpush.bf16.msra.mxu0 %v7445
    %11515 = vmatpush.bf16.msra.mxu0 %v7437
    %11516 = vmatmul.bf16.gmra.mxu0 %v184
    %v11517 = vpop.f32.mrf.mxu0
    %v11518 = vadd.f32 %v11505, %v11517
    %v11519 = vpop.f32.mrf.mxu0
    %11520 = vdwg.mxu0
    %11521 = vmatpush.bf16.msra.mxu0 %v7557
    %11522 = vmatpush.bf16.msra.mxu0 %v7549
    %11523 = vmatpush.bf16.msra.mxu0 %v7541
    %11524 = vmatpush.bf16.msra.mxu0 %v7533
    %11525 = vmatpush.bf16.msra.mxu0 %v7525
    %11526 = vmatpush.bf16.msra.mxu0 %v7517
    %11527 = vmatpush.bf16.msra.mxu0 %v7509
    %11528 = vmatpush.bf16.msra.mxu0 %v7501
    %11529 = vmatmul.bf16.gmra.mxu0 %v185
    %v11530 = vpop.f32.mrf.mxu0
    %v11531 = vadd.f32 %v11518, %v11530
    %v11532 = vpop.f32.mrf.mxu0
    %11533 = vdwg.mxu0
    %11534 = vmatpush.bf16.msra.mxu0 %v7621
    %11535 = vmatpush.bf16.msra.mxu0 %v7613
    %11536 = vmatpush.bf16.msra.mxu0 %v7605
    %11537 = vmatpush.bf16.msra.mxu0 %v7597
    %11538 = vmatpush.bf16.msra.mxu0 %v7589
    %11539 = vmatpush.bf16.msra.mxu0 %v7581
    %11540 = vmatpush.bf16.msra.mxu0 %v7573
    %11541 = vmatpush.bf16.msra.mxu0 %v7565
    %11542 = vmatmul.bf16.gmra.mxu0 %v186
    %v11543 = vpop.f32.mrf.mxu0
    %v11544 = vadd.f32 %v11531, %v11543
    %v11545 = vpop.f32.mrf.mxu0
    %11546 = vdwg.mxu0
    %11547 = vmatpush.bf16.msra.mxu0 %v7685
    %11548 = vmatpush.bf16.msra.mxu0 %v7677
    %11549 = vmatpush.bf16.msra.mxu0 %v7669
    %11550 = vmatpush.bf16.msra.mxu0 %v7661
    %11551 = vmatpush.bf16.msra.mxu0 %v7653
    %11552 = vmatpush.bf16.msra.mxu0 %v7645
    %11553 = vmatpush.bf16.msra.mxu0 %v7637
    %11554 = vmatpush.bf16.msra.mxu0 %v7629
    %11555 = vmatmul.bf16.gmra.mxu0 %v187
    %v11556 = vpop.f32.mrf.mxu0
    %v11557 = vadd.f32 %v11544, %v11556
    %v11558 = vpop.f32.mrf.mxu0
    %11559 = vdwg.mxu0
    %11560 = vmatpush.bf16.msra.mxu0 %v7749
    %11561 = vmatpush.bf16.msra.mxu0 %v7741
    %11562 = vmatpush.bf16.msra.mxu0 %v7733
    %11563 = vmatpush.bf16.msra.mxu0 %v7725
    %11564 = vmatpush.bf16.msra.mxu0 %v7717
    %11565 = vmatpush.bf16.msra.mxu0 %v7709
    %11566 = vmatpush.bf16.msra.mxu0 %v7701
    %11567 = vmatpush.bf16.msra.mxu0 %v7693
    %11568 = vmatmul.bf16.gmra.mxu0 %v188
    %v11569 = vpop.f32.mrf.mxu0
    %v11570 = vadd.f32 %v11557, %v11569
    %v11571 = vpop.f32.mrf.mxu0
    %11572 = vdwg.mxu0
    %11573 = vmatpush.bf16.msra.mxu0 %v7813
    %11574 = vmatpush.bf16.msra.mxu0 %v7805
    %11575 = vmatpush.bf16.msra.mxu0 %v7797
    %11576 = vmatpush.bf16.msra.mxu0 %v7789
    %11577 = vmatpush.bf16.msra.mxu0 %v7781
    %11578 = vmatpush.bf16.msra.mxu0 %v7773
    %11579 = vmatpush.bf16.msra.mxu0 %v7765
    %11580 = vmatpush.bf16.msra.mxu0 %v7757
    %11581 = vmatmul.bf16.gmra.mxu0 %v189
    %v11582 = vpop.f32.mrf.mxu0
    %v11583 = vadd.f32 %v11570, %v11582
    %v11584 = vpop.f32.mrf.mxu0
    %11585 = vdwg.mxu0
    %11586 = vmatpush.bf16.msra.mxu0 %v7877
    %11587 = vmatpush.bf16.msra.mxu0 %v7869
    %11588 = vmatpush.bf16.msra.mxu0 %v7861
    %11589 = vmatpush.bf16.msra.mxu0 %v7853
    %11590 = vmatpush.bf16.msra.mxu0 %v7845
    %11591 = vmatpush.bf16.msra.mxu0 %v7837
    %11592 = vmatpush.bf16.msra.mxu0 %v7829
    %11593 = vmatpush.bf16.msra.mxu0 %v7821
    %11594 = vmatmul.bf16.gmra.mxu0 %v190
    %v11595 = vpop.f32.mrf.mxu0
    %v11596 = vadd.f32 %v11583, %v11595
    %v11597 = vpop.f32.mrf.mxu0
    %11598 = vdwg.mxu0
    %11599 = vmatpush.bf16.msra.mxu0 %v6406
    %11600 = vmatpush.bf16.msra.mxu0 %v6398
    %11601 = vmatpush.bf16.msra.mxu0 %v6390
    %11602 = vmatpush.bf16.msra.mxu0 %v6382
    %11603 = vmatpush.bf16.msra.mxu0 %v6374
    %11604 = vmatpush.bf16.msra.mxu0 %v6366
    %11605 = vmatpush.bf16.msra.mxu0 %v6358
    %11606 = vmatpush.bf16.msra.mxu0 %v6350
    %11607 = vmatmul.bf16.gmra.mxu0 %v167
    %v11608 = vpop.f32.mrf.mxu0
    %v11609 = vadd.f32 0.0, %v11608
    %v11610 = vpop.f32.mrf.mxu0
    %11611 = vdwg.mxu0
    %11612 = vmatpush.bf16.msra.mxu0 %v6470
    %11613 = vmatpush.bf16.msra.mxu0 %v6462
    %11614 = vmatpush.bf16.msra.mxu0 %v6454
    %11615 = vmatpush.bf16.msra.mxu0 %v6446
    %11616 = vmatpush.bf16.msra.mxu0 %v6438
    %11617 = vmatpush.bf16.msra.mxu0 %v6430
    %11618 = vmatpush.bf16.msra.mxu0 %v6422
    %11619 = vmatpush.bf16.msra.mxu0 %v6414
    %11620 = vmatmul.bf16.gmra.mxu0 %v168
    %v11621 = vpop.f32.mrf.mxu0
    %v11622 = vadd.f32 %v11609, %v11621
    %v11623 = vpop.f32.mrf.mxu0
    %11624 = vdwg.mxu0
    %11625 = vmatpush.bf16.msra.mxu0 %v6534
    %11626 = vmatpush.bf16.msra.mxu0 %v6526
    %11627 = vmatpush.bf16.msra.mxu0 %v6518
    %11628 = vmatpush.bf16.msra.mxu0 %v6510
    %11629 = vmatpush.bf16.msra.mxu0 %v6502
    %11630 = vmatpush.bf16.msra.mxu0 %v6494
    %11631 = vmatpush.bf16.msra.mxu0 %v6486
    %11632 = vmatpush.bf16.msra.mxu0 %v6478
    %11633 = vmatmul.bf16.gmra.mxu0 %v169
    %v11634 = vpop.f32.mrf.mxu0
    %v11635 = vadd.f32 %v11622, %v11634
    %v11636 = vpop.f32.mrf.mxu0
    %11637 = vdwg.mxu0
    %11638 = vmatpush.bf16.msra.mxu0 %v6598
    %11639 = vmatpush.bf16.msra.mxu0 %v6590
    %11640 = vmatpush.bf16.msra.mxu0 %v6582
    %11641 = vmatpush.bf16.msra.mxu0 %v6574
    %11642 = vmatpush.bf16.msra.mxu0 %v6566
    %11643 = vmatpush.bf16.msra.mxu0 %v6558
    %11644 = vmatpush.bf16.msra.mxu0 %v6550
    %11645 = vmatpush.bf16.msra.mxu0 %v6542
    %11646 = vmatmul.bf16.gmra.mxu0 %v170
    %v11647 = vpop.f32.mrf.mxu0
    %v11648 = vadd.f32 %v11635, %v11647
    %v11649 = vpop.f32.mrf.mxu0
    %11650 = vdwg.mxu0
    %11651 = vmatpush.bf16.msra.mxu0 %v6662
    %11652 = vmatpush.bf16.msra.mxu0 %v6654
    %11653 = vmatpush.bf16.msra.mxu0 %v6646
    %11654 = vmatpush.bf16.msra.mxu0 %v6638
    %11655 = vmatpush.bf16.msra.mxu0 %v6630
    %11656 = vmatpush.bf16.msra.mxu0 %v6622
    %11657 = vmatpush.bf16.msra.mxu0 %v6614
    %11658 = vmatpush.bf16.msra.mxu0 %v6606
    %11659 = vmatmul.bf16.gmra.mxu0 %v171
    %v11660 = vpop.f32.mrf.mxu0
    %v11661 = vadd.f32 %v11648, %v11660
    %v11662 = vpop.f32.mrf.mxu0
    %11663 = vdwg.mxu0
    %11664 = vmatpush.bf16.msra.mxu0 %v6726
    %11665 = vmatpush.bf16.msra.mxu0 %v6718
    %11666 = vmatpush.bf16.msra.mxu0 %v6710
    %11667 = vmatpush.bf16.msra.mxu0 %v6702
    %11668 = vmatpush.bf16.msra.mxu0 %v6694
    %11669 = vmatpush.bf16.msra.mxu0 %v6686
    %11670 = vmatpush.bf16.msra.mxu0 %v6678
    %11671 = vmatpush.bf16.msra.mxu0 %v6670
    %11672 = vmatmul.bf16.gmra.mxu0 %v172
    %v11673 = vpop.f32.mrf.mxu0
    %v11674 = vadd.f32 %v11661, %v11673
    %v11675 = vpop.f32.mrf.mxu0
    %11676 = vdwg.mxu0
    %11677 = vmatpush.bf16.msra.mxu0 %v6790
    %11678 = vmatpush.bf16.msra.mxu0 %v6782
    %11679 = vmatpush.bf16.msra.mxu0 %v6774
    %11680 = vmatpush.bf16.msra.mxu0 %v6766
    %11681 = vmatpush.bf16.msra.mxu0 %v6758
    %11682 = vmatpush.bf16.msra.mxu0 %v6750
    %11683 = vmatpush.bf16.msra.mxu0 %v6742
    %11684 = vmatpush.bf16.msra.mxu0 %v6734
    %11685 = vmatmul.bf16.gmra.mxu0 %v173
    %v11686 = vpop.f32.mrf.mxu0
    %v11687 = vadd.f32 %v11674, %v11686
    %v11688 = vpop.f32.mrf.mxu0
    %11689 = vdwg.mxu0
    %11690 = vmatpush.bf16.msra.mxu0 %v6854
    %11691 = vmatpush.bf16.msra.mxu0 %v6846
    %11692 = vmatpush.bf16.msra.mxu0 %v6838
    %11693 = vmatpush.bf16.msra.mxu0 %v6830
    %11694 = vmatpush.bf16.msra.mxu0 %v6822
    %11695 = vmatpush.bf16.msra.mxu0 %v6814
    %11696 = vmatpush.bf16.msra.mxu0 %v6806
    %11697 = vmatpush.bf16.msra.mxu0 %v6798
    %11698 = vmatmul.bf16.gmra.mxu0 %v174
    %v11699 = vpop.f32.mrf.mxu0
    %v11700 = vadd.f32 %v11687, %v11699
    %v11701 = vpop.f32.mrf.mxu0
    %11702 = vdwg.mxu0
    %11703 = vmatpush.bf16.msra.mxu0 %v6918
    %11704 = vmatpush.bf16.msra.mxu0 %v6910
    %11705 = vmatpush.bf16.msra.mxu0 %v6902
    %11706 = vmatpush.bf16.msra.mxu0 %v6894
    %11707 = vmatpush.bf16.msra.mxu0 %v6886
    %11708 = vmatpush.bf16.msra.mxu0 %v6878
    %11709 = vmatpush.bf16.msra.mxu0 %v6870
    %11710 = vmatpush.bf16.msra.mxu0 %v6862
    %11711 = vmatmul.bf16.gmra.mxu0 %v175
    %v11712 = vpop.f32.mrf.mxu0
    %v11713 = vadd.f32 %v11700, %v11712
    %v11714 = vpop.f32.mrf.mxu0
    %11715 = vdwg.mxu0
    %11716 = vmatpush.bf16.msra.mxu0 %v6982
    %11717 = vmatpush.bf16.msra.mxu0 %v6974
    %11718 = vmatpush.bf16.msra.mxu0 %v6966
    %11719 = vmatpush.bf16.msra.mxu0 %v6958
    %11720 = vmatpush.bf16.msra.mxu0 %v6950
    %11721 = vmatpush.bf16.msra.mxu0 %v6942
    %11722 = vmatpush.bf16.msra.mxu0 %v6934
    %11723 = vmatpush.bf16.msra.mxu0 %v6926
    %11724 = vmatmul.bf16.gmra.mxu0 %v176
    %v11725 = vpop.f32.mrf.mxu0
    %v11726 = vadd.f32 %v11713, %v11725
    %v11727 = vpop.f32.mrf.mxu0
    %11728 = vdwg.mxu0
    %11729 = vmatpush.bf16.msra.mxu0 %v7046
    %11730 = vmatpush.bf16.msra.mxu0 %v7038
    %11731 = vmatpush.bf16.msra.mxu0 %v7030
    %11732 = vmatpush.bf16.msra.mxu0 %v7022
    %11733 = vmatpush.bf16.msra.mxu0 %v7014
    %11734 = vmatpush.bf16.msra.mxu0 %v7006
    %11735 = vmatpush.bf16.msra.mxu0 %v6998
    %11736 = vmatpush.bf16.msra.mxu0 %v6990
    %11737 = vmatmul.bf16.gmra.mxu0 %v177
    %v11738 = vpop.f32.mrf.mxu0
    %v11739 = vadd.f32 %v11726, %v11738
    %v11740 = vpop.f32.mrf.mxu0
    %11741 = vdwg.mxu0
    %11742 = vmatpush.bf16.msra.mxu0 %v7110
    %11743 = vmatpush.bf16.msra.mxu0 %v7102
    %11744 = vmatpush.bf16.msra.mxu0 %v7094
    %11745 = vmatpush.bf16.msra.mxu0 %v7086
    %11746 = vmatpush.bf16.msra.mxu0 %v7078
    %11747 = vmatpush.bf16.msra.mxu0 %v7070
    %11748 = vmatpush.bf16.msra.mxu0 %v7062
    %11749 = vmatpush.bf16.msra.mxu0 %v7054
    %11750 = vmatmul.bf16.gmra.mxu0 %v178
    %v11751 = vpop.f32.mrf.mxu0
    %v11752 = vadd.f32 %v11739, %v11751
    %v11753 = vpop.f32.mrf.mxu0
    %11754 = vdwg.mxu0
    %11755 = vmatpush.bf16.msra.mxu0 %v7174
    %11756 = vmatpush.bf16.msra.mxu0 %v7166
    %11757 = vmatpush.bf16.msra.mxu0 %v7158
    %11758 = vmatpush.bf16.msra.mxu0 %v7150
    %11759 = vmatpush.bf16.msra.mxu0 %v7142
    %11760 = vmatpush.bf16.msra.mxu0 %v7134
    %11761 = vmatpush.bf16.msra.mxu0 %v7126
    %11762 = vmatpush.bf16.msra.mxu0 %v7118
    %11763 = vmatmul.bf16.gmra.mxu0 %v179
    %v11764 = vpop.f32.mrf.mxu0
    %v11765 = vadd.f32 %v11752, %v11764
    %v11766 = vpop.f32.mrf.mxu0
    %11767 = vdwg.mxu0
    %11768 = vmatpush.bf16.msra.mxu0 %v7238
    %11769 = vmatpush.bf16.msra.mxu0 %v7230
    %11770 = vmatpush.bf16.msra.mxu0 %v7222
    %11771 = vmatpush.bf16.msra.mxu0 %v7214
    %11772 = vmatpush.bf16.msra.mxu0 %v7206
    %11773 = vmatpush.bf16.msra.mxu0 %v7198
    %11774 = vmatpush.bf16.msra.mxu0 %v7190
    %11775 = vmatpush.bf16.msra.mxu0 %v7182
    %11776 = vmatmul.bf16.gmra.mxu0 %v180
    %v11777 = vpop.f32.mrf.mxu0
    %v11778 = vadd.f32 %v11765, %v11777
    %v11779 = vpop.f32.mrf.mxu0
    %11780 = vdwg.mxu0
    %11781 = vmatpush.bf16.msra.mxu0 %v7302
    %11782 = vmatpush.bf16.msra.mxu0 %v7294
    %11783 = vmatpush.bf16.msra.mxu0 %v7286
    %11784 = vmatpush.bf16.msra.mxu0 %v7278
    %11785 = vmatpush.bf16.msra.mxu0 %v7270
    %11786 = vmatpush.bf16.msra.mxu0 %v7262
    %11787 = vmatpush.bf16.msra.mxu0 %v7254
    %11788 = vmatpush.bf16.msra.mxu0 %v7246
    %11789 = vmatmul.bf16.gmra.mxu0 %v181
    %v11790 = vpop.f32.mrf.mxu0
    %v11791 = vadd.f32 %v11778, %v11790
    %v11792 = vpop.f32.mrf.mxu0
    %11793 = vdwg.mxu0
    %11794 = vmatpush.bf16.msra.mxu0 %v7366
    %11795 = vmatpush.bf16.msra.mxu0 %v7358
    %11796 = vmatpush.bf16.msra.mxu0 %v7350
    %11797 = vmatpush.bf16.msra.mxu0 %v7342
    %11798 = vmatpush.bf16.msra.mxu0 %v7334
    %11799 = vmatpush.bf16.msra.mxu0 %v7326
    %11800 = vmatpush.bf16.msra.mxu0 %v7318
    %11801 = vmatpush.bf16.msra.mxu0 %v7310
    %11802 = vmatmul.bf16.gmra.mxu0 %v182
    %v11803 = vpop.f32.mrf.mxu0
    %v11804 = vadd.f32 %v11791, %v11803
    %v11805 = vpop.f32.mrf.mxu0
    %11806 = vdwg.mxu0
    %11807 = vmatpush.bf16.msra.mxu0 %v7430
    %11808 = vmatpush.bf16.msra.mxu0 %v7422
    %11809 = vmatpush.bf16.msra.mxu0 %v7414
    %11810 = vmatpush.bf16.msra.mxu0 %v7406
    %11811 = vmatpush.bf16.msra.mxu0 %v7398
    %11812 = vmatpush.bf16.msra.mxu0 %v7390
    %11813 = vmatpush.bf16.msra.mxu0 %v7382
    %11814 = vmatpush.bf16.msra.mxu0 %v7374
    %11815 = vmatmul.bf16.gmra.mxu0 %v183
    %v11816 = vpop.f32.mrf.mxu0
    %v11817 = vadd.f32 %v11804, %v11816
    %v11818 = vpop.f32.mrf.mxu0
    %11819 = vdwg.mxu0
    %11820 = vmatpush.bf16.msra.mxu0 %v7494
    %11821 = vmatpush.bf16.msra.mxu0 %v7486
    %11822 = vmatpush.bf16.msra.mxu0 %v7478
    %11823 = vmatpush.bf16.msra.mxu0 %v7470
    %11824 = vmatpush.bf16.msra.mxu0 %v7462
    %11825 = vmatpush.bf16.msra.mxu0 %v7454
    %11826 = vmatpush.bf16.msra.mxu0 %v7446
    %11827 = vmatpush.bf16.msra.mxu0 %v7438
    %11828 = vmatmul.bf16.gmra.mxu0 %v184
    %v11829 = vpop.f32.mrf.mxu0
    %v11830 = vadd.f32 %v11817, %v11829
    %v11831 = vpop.f32.mrf.mxu0
    %11832 = vdwg.mxu0
    %11833 = vmatpush.bf16.msra.mxu0 %v7558
    %11834 = vmatpush.bf16.msra.mxu0 %v7550
    %11835 = vmatpush.bf16.msra.mxu0 %v7542
    %11836 = vmatpush.bf16.msra.mxu0 %v7534
    %11837 = vmatpush.bf16.msra.mxu0 %v7526
    %11838 = vmatpush.bf16.msra.mxu0 %v7518
    %11839 = vmatpush.bf16.msra.mxu0 %v7510
    %11840 = vmatpush.bf16.msra.mxu0 %v7502
    %11841 = vmatmul.bf16.gmra.mxu0 %v185
    %v11842 = vpop.f32.mrf.mxu0
    %v11843 = vadd.f32 %v11830, %v11842
    %v11844 = vpop.f32.mrf.mxu0
    %11845 = vdwg.mxu0
    %11846 = vmatpush.bf16.msra.mxu0 %v7622
    %11847 = vmatpush.bf16.msra.mxu0 %v7614
    %11848 = vmatpush.bf16.msra.mxu0 %v7606
    %11849 = vmatpush.bf16.msra.mxu0 %v7598
    %11850 = vmatpush.bf16.msra.mxu0 %v7590
    %11851 = vmatpush.bf16.msra.mxu0 %v7582
    %11852 = vmatpush.bf16.msra.mxu0 %v7574
    %11853 = vmatpush.bf16.msra.mxu0 %v7566
    %11854 = vmatmul.bf16.gmra.mxu0 %v186
    %v11855 = vpop.f32.mrf.mxu0
    %v11856 = vadd.f32 %v11843, %v11855
    %v11857 = vpop.f32.mrf.mxu0
    %11858 = vdwg.mxu0
    %11859 = vmatpush.bf16.msra.mxu0 %v7686
    %11860 = vmatpush.bf16.msra.mxu0 %v7678
    %11861 = vmatpush.bf16.msra.mxu0 %v7670
    %11862 = vmatpush.bf16.msra.mxu0 %v7662
    %11863 = vmatpush.bf16.msra.mxu0 %v7654
    %11864 = vmatpush.bf16.msra.mxu0 %v7646
    %11865 = vmatpush.bf16.msra.mxu0 %v7638
    %11866 = vmatpush.bf16.msra.mxu0 %v7630
    %11867 = vmatmul.bf16.gmra.mxu0 %v187
    %v11868 = vpop.f32.mrf.mxu0
    %v11869 = vadd.f32 %v11856, %v11868
    %v11870 = vpop.f32.mrf.mxu0
    %11871 = vdwg.mxu0
    %11872 = vmatpush.bf16.msra.mxu0 %v7750
    %11873 = vmatpush.bf16.msra.mxu0 %v7742
    %11874 = vmatpush.bf16.msra.mxu0 %v7734
    %11875 = vmatpush.bf16.msra.mxu0 %v7726
    %11876 = vmatpush.bf16.msra.mxu0 %v7718
    %11877 = vmatpush.bf16.msra.mxu0 %v7710
    %11878 = vmatpush.bf16.msra.mxu0 %v7702
    %11879 = vmatpush.bf16.msra.mxu0 %v7694
    %11880 = vmatmul.bf16.gmra.mxu0 %v188
    %v11881 = vpop.f32.mrf.mxu0
    %v11882 = vadd.f32 %v11869, %v11881
    %v11883 = vpop.f32.mrf.mxu0
    %11884 = vdwg.mxu0
    %11885 = vmatpush.bf16.msra.mxu0 %v7814
    %11886 = vmatpush.bf16.msra.mxu0 %v7806
    %11887 = vmatpush.bf16.msra.mxu0 %v7798
    %11888 = vmatpush.bf16.msra.mxu0 %v7790
    %11889 = vmatpush.bf16.msra.mxu0 %v7782
    %11890 = vmatpush.bf16.msra.mxu0 %v7774
    %11891 = vmatpush.bf16.msra.mxu0 %v7766
    %11892 = vmatpush.bf16.msra.mxu0 %v7758
    %11893 = vmatmul.bf16.gmra.mxu0 %v189
    %v11894 = vpop.f32.mrf.mxu0
    %v11895 = vadd.f32 %v11882, %v11894
    %v11896 = vpop.f32.mrf.mxu0
    %11897 = vdwg.mxu0
    %11898 = vmatpush.bf16.msra.mxu0 %v7878
    %11899 = vmatpush.bf16.msra.mxu0 %v7870
    %11900 = vmatpush.bf16.msra.mxu0 %v7862
    %11901 = vmatpush.bf16.msra.mxu0 %v7854
    %11902 = vmatpush.bf16.msra.mxu0 %v7846
    %11903 = vmatpush.bf16.msra.mxu0 %v7838
    %11904 = vmatpush.bf16.msra.mxu0 %v7830
    %11905 = vmatpush.bf16.msra.mxu0 %v7822
    %11906 = vmatmul.bf16.gmra.mxu0 %v190
    %v11907 = vpop.f32.mrf.mxu0
    %v11908 = vadd.f32 %v11895, %v11907
    %v11909 = vpop.f32.mrf.mxu0
    %11910 = vdwg.mxu0
    %v11911 = vadd.f32 %v191, %v9724
    %v11912 = vadd.f32 %v192, %v10036
    %v11913 = vadd.f32 %v193, %v10348
    %v11914 = vadd.f32 %v194, %v10660
    %v11915 = vadd.f32 %v195, %v10972
    %v11916 = vadd.f32 %v196, %v11284
    %v11917 = vadd.f32 %v197, %v11596
    %v11918 = vadd.f32 %v198, %v11908
    %11919 = vst [vmem:[#allocation14] sm:$0xff] %v11911
    %11920 = vst [vmem:[#allocation14 + $0x8] sm:$0xff] %v11912
    %11921 = vst [vmem:[#allocation14 + $0x10] sm:$0xff] %v11913
    %11922 = vst [vmem:[#allocation14 + $0x18] sm:$0xff] %v11914
    %11923 = vst [vmem:[#allocation14 + $0x20] sm:$0xff] %v11915
    %11924 = vst [vmem:[#allocation14 + $0x28] sm:$0xff] %v11916
    %11925 = vst [vmem:[#allocation14 + $0x30] sm:$0xff] %v11917
    %11926 = vst [vmem:[#allocation14 + $0x38] sm:$0xff] %v11918
    // Predicated region
    $region62: #{tpu_custom_call.1} parent=1 // pred_check
      %p11927 = pneg %p131
    $region63: #{tpu_custom_call.1} parent=1 // pred_check_branch
      %11929 = sbr.rel (%p11927) target = $region65
    $region64: #{tpu_custom_call.1} parent=1 // pred_region
      %v11930 = vld [vmem:[#allocation14] sm:$0xff]
      %v11931 = vld [vmem:[#allocation14 + $0x8] sm:$0xff]
      %v11932 = vld [vmem:[#allocation14 + $0x10] sm:$0xff]
      %v11933 = vld [vmem:[#allocation14 + $0x18] sm:$0xff]
      %v11934 = vld [vmem:[#allocation14 + $0x20] sm:$0xff]
      %v11935 = vld [vmem:[#allocation14 + $0x28] sm:$0xff]
      %v11936 = vld [vmem:[#allocation14 + $0x30] sm:$0xff]
      %v11937 = vld [vmem:[#allocation14 + $0x38] sm:$0xff]
      %v11938 = vld [vmem:[#allocation7] sm:$0xff]
      %v11940 = vperm.slane %v11938, 0
      %v11941 = vperm.slane %v11938, 1
      %v11942 = vperm.slane %v11938, 2
      %v11943 = vperm.slane %v11938, 3
      %v11944 = vperm.slane %v11938, 4
      %v11945 = vperm.slane %v11938, 5
      %v11946 = vperm.slane %v11938, 6
      %v11947 = vperm.slane %v11938, 7
      %v11956 = vadd.f32 %v11930, %v11940
      %v11957 = vadd.f32 %v11931, %v11941
      %v11958 = vadd.f32 %v11932, %v11942
      %v11959 = vadd.f32 %v11933, %v11943
      %v11960 = vadd.f32 %v11934, %v11944
      %v11961 = vadd.f32 %v11935, %v11945
      %v11962 = vadd.f32 %v11936, %v11946
      %v11963 = vadd.f32 %v11937, %v11947
      %v11964 = vmax.f32 %v11956, 0.0
      %v11965 = vmax.f32 %v11957, 0.0
      %v11966 = vmax.f32 %v11958, 0.0
      %v11967 = vmax.f32 %v11959, 0.0
      %v11968 = vmax.f32 %v11960, 0.0
      %v11969 = vmax.f32 %v11961, 0.0
      %v11970 = vmax.f32 %v11962, 0.0
      %v11971 = vmax.f32 %v11963, 0.0
      %11972 = vst [vmem:[#allocation14] sm:$0xff] %v11964
      %11973 = vst [vmem:[#allocation14 + $0x8] sm:$0xff] %v11965
      %11974 = vst [vmem:[#allocation14 + $0x10] sm:$0xff] %v11966
      %11975 = vst [vmem:[#allocation14 + $0x18] sm:$0xff] %v11967
      %11976 = vst [vmem:[#allocation14 + $0x20] sm:$0xff] %v11968
      %11977 = vst [vmem:[#allocation14 + $0x28] sm:$0xff] %v11969
      %11978 = vst [vmem:[#allocation14 + $0x30] sm:$0xff] %v11970
      %11979 = vst [vmem:[#allocation14 + $0x38] sm:$0xff] %v11971
      %v11980 = vpack.c.bf16 %v11964, %v11964
      %v11981 = vpack.c.bf16 %v11965, %v11965
      %v11982 = vpack.c.bf16 %v11966, %v11966
      %v11983 = vpack.c.bf16 %v11967, %v11967
      %v11984 = vpack.c.bf16 %v11968, %v11968
      %v11985 = vpack.c.bf16 %v11969, %v11969
      %v11986 = vpack.c.bf16 %v11970, %v11970
      %v11987 = vpack.c.bf16 %v11971, %v11971
      %v11988 = vld [vmem:[#allocation8] sm:$0xff]
      %v11989 = vld [vmem:[#allocation8 + $0x8] sm:$0xff]
      %v11990 = vld [vmem:[#allocation8 + $0x10] sm:$0xff]
      %v11991 = vld [vmem:[#allocation8 + $0x18] sm:$0xff]
      %v11992 = vld [vmem:[#allocation8 + $0x20] sm:$0xff]
      %v11993 = vld [vmem:[#allocation8 + $0x28] sm:$0xff]
      %v11994 = vld [vmem:[#allocation8 + $0x30] sm:$0xff]
      %v11995 = vld [vmem:[#allocation8 + $0x38] sm:$0xff]
      %v11996 = vld [vmem:[#allocation8 + $0x40] sm:$0xff]
      %v11997 = vld [vmem:[#allocation8 + $0x48] sm:$0xff]
      %v11998 = vld [vmem:[#allocation8 + $0x50] sm:$0xff]
      %v11999 = vld [vmem:[#allocation8 + $0x58] sm:$0xff]
      %v12000 = vld [vmem:[#allocation8 + $0x60] sm:$0xff]
      %v12001 = vld [vmem:[#allocation8 + $0x68] sm:$0xff]
      %v12002 = vld [vmem:[#allocation8 + $0x70] sm:$0xff]
      %v12003 = vld [vmem:[#allocation8 + $0x78] sm:$0xff]
      %v12004 = vld [vmem:[#allocation8 + $0x80] sm:$0xff]
      %v12005 = vld [vmem:[#allocation8 + $0x88] sm:$0xff]
      %v12006 = vld [vmem:[#allocation8 + $0x90] sm:$0xff]
      %v12007 = vld [vmem:[#allocation8 + $0x98] sm:$0xff]
      %v12008 = vld [vmem:[#allocation8 + $0xa0] sm:$0xff]
      %v12009 = vld [vmem:[#allocation8 + $0xa8] sm:$0xff]
      %v12010 = vld [vmem:[#allocation8 + $0xb0] sm:$0xff]
      %v12011 = vld [vmem:[#allocation8 + $0xb8] sm:$0xff]
      %v12012 = vld [vmem:[#allocation8 + $0xc0] sm:$0xff]
      %v12013 = vld [vmem:[#allocation8 + $0xc8] sm:$0xff]
      %v12014 = vld [vmem:[#allocation8 + $0xd0] sm:$0xff]
      %v12015 = vld [vmem:[#allocation8 + $0xd8] sm:$0xff]
      %v12016 = vld [vmem:[#allocation8 + $0xe0] sm:$0xff]
      %v12017 = vld [vmem:[#allocation8 + $0xe8] sm:$0xff]
      %v12018 = vld [vmem:[#allocation8 + $0xf0] sm:$0xff]
      %v12019 = vld [vmem:[#allocation8 + $0xf8] sm:$0xff]
      %v12020 = vld [vmem:[#allocation8 + $0x100] sm:$0xff]
      %v12021 = vld [vmem:[#allocation8 + $0x108] sm:$0xff]
      %v12022 = vld [vmem:[#allocation8 + $0x110] sm:$0xff]
      %v12023 = vld [vmem:[#allocation8 + $0x118] sm:$0xff]
      %v12024 = vld [vmem:[#allocation8 + $0x120] sm:$0xff]
      %v12025 = vld [vmem:[#allocation8 + $0x128] sm:$0xff]
      %v12026 = vld [vmem:[#allocation8 + $0x130] sm:$0xff]
      %v12027 = vld [vmem:[#allocation8 + $0x138] sm:$0xff]
      %v12028 = vld [vmem:[#allocation8 + $0x140] sm:$0xff]
      %v12029 = vld [vmem:[#allocation8 + $0x148] sm:$0xff]
      %v12030 = vld [vmem:[#allocation8 + $0x150] sm:$0xff]
      %v12031 = vld [vmem:[#allocation8 + $0x158] sm:$0xff]
      %v12032 = vld [vmem:[#allocation8 + $0x160] sm:$0xff]
      %v12033 = vld [vmem:[#allocation8 + $0x168] sm:$0xff]
      %v12034 = vld [vmem:[#allocation8 + $0x170] sm:$0xff]
      %v12035 = vld [vmem:[#allocation8 + $0x178] sm:$0xff]
      %v12036 = vld [vmem:[#allocation8 + $0x180] sm:$0xff]
      %v12037 = vld [vmem:[#allocation8 + $0x188] sm:$0xff]
      %v12038 = vld [vmem:[#allocation8 + $0x190] sm:$0xff]
      %v12039 = vld [vmem:[#allocation8 + $0x198] sm:$0xff]
      %v12040 = vld [vmem:[#allocation8 + $0x1a0] sm:$0xff]
      %v12041 = vld [vmem:[#allocation8 + $0x1a8] sm:$0xff]
      %v12042 = vld [vmem:[#allocation8 + $0x1b0] sm:$0xff]
      %v12043 = vld [vmem:[#allocation8 + $0x1b8] sm:$0xff]
      %v12044 = vld [vmem:[#allocation8 + $0x1c0] sm:$0xff]
      %v12045 = vld [vmem:[#allocation8 + $0x1c8] sm:$0xff]
      %v12046 = vld [vmem:[#allocation8 + $0x1d0] sm:$0xff]
      %v12047 = vld [vmem:[#allocation8 + $0x1d8] sm:$0xff]
      %v12048 = vld [vmem:[#allocation8 + $0x1e0] sm:$0xff]
      %v12049 = vld [vmem:[#allocation8 + $0x1e8] sm:$0xff]
      %v12050 = vld [vmem:[#allocation8 + $0x1f0] sm:$0xff]
      %v12051 = vld [vmem:[#allocation8 + $0x1f8] sm:$0xff]
      %v12052 = vld [vmem:[#allocation8 + $0x200] sm:$0xff]
      %v12053 = vld [vmem:[#allocation8 + $0x208] sm:$0xff]
      %v12054 = vld [vmem:[#allocation8 + $0x210] sm:$0xff]
      %v12055 = vld [vmem:[#allocation8 + $0x218] sm:$0xff]
      %v12056 = vld [vmem:[#allocation8 + $0x220] sm:$0xff]
      %v12057 = vld [vmem:[#allocation8 + $0x228] sm:$0xff]
      %v12058 = vld [vmem:[#allocation8 + $0x230] sm:$0xff]
      %v12059 = vld [vmem:[#allocation8 + $0x238] sm:$0xff]
      %v12060 = vld [vmem:[#allocation8 + $0x240] sm:$0xff]
      %v12061 = vld [vmem:[#allocation8 + $0x248] sm:$0xff]
      %v12062 = vld [vmem:[#allocation8 + $0x250] sm:$0xff]
      %v12063 = vld [vmem:[#allocation8 + $0x258] sm:$0xff]
      %v12064 = vld [vmem:[#allocation8 + $0x260] sm:$0xff]
      %v12065 = vld [vmem:[#allocation8 + $0x268] sm:$0xff]
      %v12066 = vld [vmem:[#allocation8 + $0x270] sm:$0xff]
      %v12067 = vld [vmem:[#allocation8 + $0x278] sm:$0xff]
      %v12068 = vld [vmem:[#allocation8 + $0x280] sm:$0xff]
      %v12069 = vld [vmem:[#allocation8 + $0x288] sm:$0xff]
      %v12070 = vld [vmem:[#allocation8 + $0x290] sm:$0xff]
      %v12071 = vld [vmem:[#allocation8 + $0x298] sm:$0xff]
      %v12072 = vld [vmem:[#allocation8 + $0x2a0] sm:$0xff]
      %v12073 = vld [vmem:[#allocation8 + $0x2a8] sm:$0xff]
      %v12074 = vld [vmem:[#allocation8 + $0x2b0] sm:$0xff]
      %v12075 = vld [vmem:[#allocation8 + $0x2b8] sm:$0xff]
      %v12076 = vld [vmem:[#allocation8 + $0x2c0] sm:$0xff]
      %v12077 = vld [vmem:[#allocation8 + $0x2c8] sm:$0xff]
      %v12078 = vld [vmem:[#allocation8 + $0x2d0] sm:$0xff]
      %v12079 = vld [vmem:[#allocation8 + $0x2d8] sm:$0xff]
      %v12080 = vld [vmem:[#allocation8 + $0x2e0] sm:$0xff]
      %v12081 = vld [vmem:[#allocation8 + $0x2e8] sm:$0xff]
      %v12082 = vld [vmem:[#allocation8 + $0x2f0] sm:$0xff]
      %v12083 = vld [vmem:[#allocation8 + $0x2f8] sm:$0xff]
      %v12084 = vld [vmem:[#allocation8 + $0x300] sm:$0xff]
      %v12085 = vld [vmem:[#allocation8 + $0x308] sm:$0xff]
      %v12086 = vld [vmem:[#allocation8 + $0x310] sm:$0xff]
      %v12087 = vld [vmem:[#allocation8 + $0x318] sm:$0xff]
      %v12088 = vld [vmem:[#allocation8 + $0x320] sm:$0xff]
      %v12089 = vld [vmem:[#allocation8 + $0x328] sm:$0xff]
      %v12090 = vld [vmem:[#allocation8 + $0x330] sm:$0xff]
      %v12091 = vld [vmem:[#allocation8 + $0x338] sm:$0xff]
      %v12092 = vld [vmem:[#allocation8 + $0x340] sm:$0xff]
      %v12093 = vld [vmem:[#allocation8 + $0x348] sm:$0xff]
      %v12094 = vld [vmem:[#allocation8 + $0x350] sm:$0xff]
      %v12095 = vld [vmem:[#allocation8 + $0x358] sm:$0xff]
      %v12096 = vld [vmem:[#allocation8 + $0x360] sm:$0xff]
      %v12097 = vld [vmem:[#allocation8 + $0x368] sm:$0xff]
      %v12098 = vld [vmem:[#allocation8 + $0x370] sm:$0xff]
      %v12099 = vld [vmem:[#allocation8 + $0x378] sm:$0xff]
      %v12100 = vld [vmem:[#allocation8 + $0x380] sm:$0xff]
      %v12101 = vld [vmem:[#allocation8 + $0x388] sm:$0xff]
      %v12102 = vld [vmem:[#allocation8 + $0x390] sm:$0xff]
      %v12103 = vld [vmem:[#allocation8 + $0x398] sm:$0xff]
      %v12104 = vld [vmem:[#allocation8 + $0x3a0] sm:$0xff]
      %v12105 = vld [vmem:[#allocation8 + $0x3a8] sm:$0xff]
      %v12106 = vld [vmem:[#allocation8 + $0x3b0] sm:$0xff]
      %v12107 = vld [vmem:[#allocation8 + $0x3b8] sm:$0xff]
      %v12108 = vld [vmem:[#allocation8 + $0x3c0] sm:$0xff]
      %v12109 = vld [vmem:[#allocation8 + $0x3c8] sm:$0xff]
      %v12110 = vld [vmem:[#allocation8 + $0x3d0] sm:$0xff]
      %v12111 = vld [vmem:[#allocation8 + $0x3d8] sm:$0xff]
      %v12112 = vld [vmem:[#allocation8 + $0x3e0] sm:$0xff]
      %v12113 = vld [vmem:[#allocation8 + $0x3e8] sm:$0xff]
      %v12114 = vld [vmem:[#allocation8 + $0x3f0] sm:$0xff]
      %v12115 = vld [vmem:[#allocation8 + $0x3f8] sm:$0xff]
      %v12116 = vld [vmem:[#allocation10] sm:$0x3]
      %v12118 = vperm.slane %v12116, 0
      %v12119 = vperm.slane %v12116, 1
      %v12250 = vunpack.c.l.b16 %v11988
      %v12251 = vunpack.c.h.b16 %v11988
      %v12252 = vunpack.c.l.b16 %v11989
      %v12253 = vunpack.c.h.b16 %v11989
      %v12254 = vunpack.c.l.b16 %v11990
      %v12255 = vunpack.c.h.b16 %v11990
      %v12256 = vunpack.c.l.b16 %v11991
      %v12257 = vunpack.c.h.b16 %v11991
      %v12258 = vunpack.c.l.b16 %v11992
      %v12259 = vunpack.c.h.b16 %v11992
      %v12260 = vunpack.c.l.b16 %v11993
      %v12261 = vunpack.c.h.b16 %v11993
      %v12262 = vunpack.c.l.b16 %v11994
      %v12263 = vunpack.c.h.b16 %v11994
      %v12264 = vunpack.c.l.b16 %v11995
      %v12265 = vunpack.c.h.b16 %v11995
      %v12266 = vunpack.c.l.b16 %v11996
      %v12267 = vunpack.c.h.b16 %v11996
      %v12268 = vunpack.c.l.b16 %v11997
      %v12269 = vunpack.c.h.b16 %v11997
      %v12270 = vunpack.c.l.b16 %v11998
      %v12271 = vunpack.c.h.b16 %v11998
      %v12272 = vunpack.c.l.b16 %v11999
      %v12273 = vunpack.c.h.b16 %v11999
      %v12274 = vunpack.c.l.b16 %v12000
      %v12275 = vunpack.c.h.b16 %v12000
      %v12276 = vunpack.c.l.b16 %v12001
      %v12277 = vunpack.c.h.b16 %v12001
      %v12278 = vunpack.c.l.b16 %v12002
      %v12279 = vunpack.c.h.b16 %v12002
      %v12280 = vunpack.c.l.b16 %v12003
      %v12281 = vunpack.c.h.b16 %v12003
      %v12282 = vunpack.c.l.b16 %v12004
      %v12283 = vunpack.c.h.b16 %v12004
      %v12284 = vunpack.c.l.b16 %v12005
      %v12285 = vunpack.c.h.b16 %v12005
      %v12286 = vunpack.c.l.b16 %v12006
      %v12287 = vunpack.c.h.b16 %v12006
      %v12288 = vunpack.c.l.b16 %v12007
      %v12289 = vunpack.c.h.b16 %v12007
      %v12290 = vunpack.c.l.b16 %v12008
      %v12291 = vunpack.c.h.b16 %v12008
      %v12292 = vunpack.c.l.b16 %v12009
      %v12293 = vunpack.c.h.b16 %v12009
      %v12294 = vunpack.c.l.b16 %v12010
      %v12295 = vunpack.c.h.b16 %v12010
      %v12296 = vunpack.c.l.b16 %v12011
      %v12297 = vunpack.c.h.b16 %v12011
      %v12298 = vunpack.c.l.b16 %v12012
      %v12299 = vunpack.c.h.b16 %v12012
      %v12300 = vunpack.c.l.b16 %v12013
      %v12301 = vunpack.c.h.b16 %v12013
      %v12302 = vunpack.c.l.b16 %v12014
      %v12303 = vunpack.c.h.b16 %v12014
      %v12304 = vunpack.c.l.b16 %v12015
      %v12305 = vunpack.c.h.b16 %v12015
      %v12306 = vunpack.c.l.b16 %v12016
      %v12307 = vunpack.c.h.b16 %v12016
      %v12308 = vunpack.c.l.b16 %v12017
      %v12309 = vunpack.c.h.b16 %v12017
      %v12310 = vunpack.c.l.b16 %v12018
      %v12311 = vunpack.c.h.b16 %v12018
      %v12312 = vunpack.c.l.b16 %v12019
      %v12313 = vunpack.c.h.b16 %v12019
      %v12314 = vunpack.c.l.b16 %v12020
      %v12315 = vunpack.c.h.b16 %v12020
      %v12316 = vunpack.c.l.b16 %v12021
      %v12317 = vunpack.c.h.b16 %v12021
      %v12318 = vunpack.c.l.b16 %v12022
      %v12319 = vunpack.c.h.b16 %v12022
      %v12320 = vunpack.c.l.b16 %v12023
      %v12321 = vunpack.c.h.b16 %v12023
      %v12322 = vunpack.c.l.b16 %v12024
      %v12323 = vunpack.c.h.b16 %v12024
      %v12324 = vunpack.c.l.b16 %v12025
      %v12325 = vunpack.c.h.b16 %v12025
      %v12326 = vunpack.c.l.b16 %v12026
      %v12327 = vunpack.c.h.b16 %v12026
      %v12328 = vunpack.c.l.b16 %v12027
      %v12329 = vunpack.c.h.b16 %v12027
      %v12330 = vunpack.c.l.b16 %v12028
      %v12331 = vunpack.c.h.b16 %v12028
      %v12332 = vunpack.c.l.b16 %v12029
      %v12333 = vunpack.c.h.b16 %v12029
      %v12334 = vunpack.c.l.b16 %v12030
      %v12335 = vunpack.c.h.b16 %v12030
      %v12336 = vunpack.c.l.b16 %v12031
      %v12337 = vunpack.c.h.b16 %v12031
      %v12338 = vunpack.c.l.b16 %v12032
      %v12339 = vunpack.c.h.b16 %v12032
      %v12340 = vunpack.c.l.b16 %v12033
      %v12341 = vunpack.c.h.b16 %v12033
      %v12342 = vunpack.c.l.b16 %v12034
      %v12343 = vunpack.c.h.b16 %v12034
      %v12344 = vunpack.c.l.b16 %v12035
      %v12345 = vunpack.c.h.b16 %v12035
      %v12346 = vunpack.c.l.b16 %v12036
      %v12347 = vunpack.c.h.b16 %v12036
      %v12348 = vunpack.c.l.b16 %v12037
      %v12349 = vunpack.c.h.b16 %v12037
      %v12350 = vunpack.c.l.b16 %v12038
      %v12351 = vunpack.c.h.b16 %v12038
      %v12352 = vunpack.c.l.b16 %v12039
      %v12353 = vunpack.c.h.b16 %v12039
      %v12354 = vunpack.c.l.b16 %v12040
      %v12355 = vunpack.c.h.b16 %v12040
      %v12356 = vunpack.c.l.b16 %v12041
      %v12357 = vunpack.c.h.b16 %v12041
      %v12358 = vunpack.c.l.b16 %v12042
      %v12359 = vunpack.c.h.b16 %v12042
      %v12360 = vunpack.c.l.b16 %v12043
      %v12361 = vunpack.c.h.b16 %v12043
      %v12362 = vunpack.c.l.b16 %v12044
      %v12363 = vunpack.c.h.b16 %v12044
      %v12364 = vunpack.c.l.b16 %v12045
      %v12365 = vunpack.c.h.b16 %v12045
      %v12366 = vunpack.c.l.b16 %v12046
      %v12367 = vunpack.c.h.b16 %v12046
      %v12368 = vunpack.c.l.b16 %v12047
      %v12369 = vunpack.c.h.b16 %v12047
      %v12370 = vunpack.c.l.b16 %v12048
      %v12371 = vunpack.c.h.b16 %v12048
      %v12372 = vunpack.c.l.b16 %v12049
      %v12373 = vunpack.c.h.b16 %v12049
      %v12374 = vunpack.c.l.b16 %v12050
      %v12375 = vunpack.c.h.b16 %v12050
      %v12376 = vunpack.c.l.b16 %v12051
      %v12377 = vunpack.c.h.b16 %v12051
      %v12378 = vunpack.c.l.b16 %v12052
      %v12379 = vunpack.c.h.b16 %v12052
      %v12380 = vunpack.c.l.b16 %v12053
      %v12381 = vunpack.c.h.b16 %v12053
      %v12382 = vunpack.c.l.b16 %v12054
      %v12383 = vunpack.c.h.b16 %v12054
      %v12384 = vunpack.c.l.b16 %v12055
      %v12385 = vunpack.c.h.b16 %v12055
      %v12386 = vunpack.c.l.b16 %v12056
      %v12387 = vunpack.c.h.b16 %v12056
      %v12388 = vunpack.c.l.b16 %v12057
      %v12389 = vunpack.c.h.b16 %v12057
      %v12390 = vunpack.c.l.b16 %v12058
      %v12391 = vunpack.c.h.b16 %v12058
      %v12392 = vunpack.c.l.b16 %v12059
      %v12393 = vunpack.c.h.b16 %v12059
      %v12394 = vunpack.c.l.b16 %v12060
      %v12395 = vunpack.c.h.b16 %v12060
      %v12396 = vunpack.c.l.b16 %v12061
      %v12397 = vunpack.c.h.b16 %v12061
      %v12398 = vunpack.c.l.b16 %v12062
      %v12399 = vunpack.c.h.b16 %v12062
      %v12400 = vunpack.c.l.b16 %v12063
      %v12401 = vunpack.c.h.b16 %v12063
      %v12402 = vunpack.c.l.b16 %v12064
      %v12403 = vunpack.c.h.b16 %v12064
      %v12404 = vunpack.c.l.b16 %v12065
      %v12405 = vunpack.c.h.b16 %v12065
      %v12406 = vunpack.c.l.b16 %v12066
      %v12407 = vunpack.c.h.b16 %v12066
      %v12408 = vunpack.c.l.b16 %v12067
      %v12409 = vunpack.c.h.b16 %v12067
      %v12410 = vunpack.c.l.b16 %v12068
      %v12411 = vunpack.c.h.b16 %v12068
      %v12412 = vunpack.c.l.b16 %v12069
      %v12413 = vunpack.c.h.b16 %v12069
      %v12414 = vunpack.c.l.b16 %v12070
      %v12415 = vunpack.c.h.b16 %v12070
      %v12416 = vunpack.c.l.b16 %v12071
      %v12417 = vunpack.c.h.b16 %v12071
      %v12418 = vunpack.c.l.b16 %v12072
      %v12419 = vunpack.c.h.b16 %v12072
      %v12420 = vunpack.c.l.b16 %v12073
      %v12421 = vunpack.c.h.b16 %v12073
      %v12422 = vunpack.c.l.b16 %v12074
      %v12423 = vunpack.c.h.b16 %v12074
      %v12424 = vunpack.c.l.b16 %v12075
      %v12425 = vunpack.c.h.b16 %v12075
      %v12426 = vunpack.c.l.b16 %v12076
      %v12427 = vunpack.c.h.b16 %v12076
      %v12428 = vunpack.c.l.b16 %v12077
      %v12429 = vunpack.c.h.b16 %v12077
      %v12430 = vunpack.c.l.b16 %v12078
      %v12431 = vunpack.c.h.b16 %v12078
      %v12432 = vunpack.c.l.b16 %v12079
      %v12433 = vunpack.c.h.b16 %v12079
      %v12434 = vunpack.c.l.b16 %v12080
      %v12435 = vunpack.c.h.b16 %v12080
      %v12436 = vunpack.c.l.b16 %v12081
      %v12437 = vunpack.c.h.b16 %v12081
      %v12438 = vunpack.c.l.b16 %v12082
      %v12439 = vunpack.c.h.b16 %v12082
      %v12440 = vunpack.c.l.b16 %v12083
      %v12441 = vunpack.c.h.b16 %v12083
      %v12442 = vunpack.c.l.b16 %v12084
      %v12443 = vunpack.c.h.b16 %v12084
      %v12444 = vunpack.c.l.b16 %v12085
      %v12445 = vunpack.c.h.b16 %v12085
      %v12446 = vunpack.c.l.b16 %v12086
      %v12447 = vunpack.c.h.b16 %v12086
      %v12448 = vunpack.c.l.b16 %v12087
      %v12449 = vunpack.c.h.b16 %v12087
      %v12450 = vunpack.c.l.b16 %v12088
      %v12451 = vunpack.c.h.b16 %v12088
      %v12452 = vunpack.c.l.b16 %v12089
      %v12453 = vunpack.c.h.b16 %v12089
      %v12454 = vunpack.c.l.b16 %v12090
      %v12455 = vunpack.c.h.b16 %v12090
      %v12456 = vunpack.c.l.b16 %v12091
      %v12457 = vunpack.c.h.b16 %v12091
      %v12458 = vunpack.c.l.b16 %v12092
      %v12459 = vunpack.c.h.b16 %v12092
      %v12460 = vunpack.c.l.b16 %v12093
      %v12461 = vunpack.c.h.b16 %v12093
      %v12462 = vunpack.c.l.b16 %v12094
      %v12463 = vunpack.c.h.b16 %v12094
      %v12464 = vunpack.c.l.b16 %v12095
      %v12465 = vunpack.c.h.b16 %v12095
      %v12466 = vunpack.c.l.b16 %v12096
      %v12467 = vunpack.c.h.b16 %v12096
      %v12468 = vunpack.c.l.b16 %v12097
      %v12469 = vunpack.c.h.b16 %v12097
      %v12470 = vunpack.c.l.b16 %v12098
      %v12471 = vunpack.c.h.b16 %v12098
      %v12472 = vunpack.c.l.b16 %v12099
      %v12473 = vunpack.c.h.b16 %v12099
      %v12474 = vunpack.c.l.b16 %v12100
      %v12475 = vunpack.c.h.b16 %v12100
      %v12476 = vunpack.c.l.b16 %v12101
      %v12477 = vunpack.c.h.b16 %v12101
      %v12478 = vunpack.c.l.b16 %v12102
      %v12479 = vunpack.c.h.b16 %v12102
      %v12480 = vunpack.c.l.b16 %v12103
      %v12481 = vunpack.c.h.b16 %v12103
      %v12482 = vunpack.c.l.b16 %v12104
      %v12483 = vunpack.c.h.b16 %v12104
      %v12484 = vunpack.c.l.b16 %v12105
      %v12485 = vunpack.c.h.b16 %v12105
      %v12486 = vunpack.c.l.b16 %v12106
      %v12487 = vunpack.c.h.b16 %v12106
      %v12488 = vunpack.c.l.b16 %v12107
      %v12489 = vunpack.c.h.b16 %v12107
      %v12490 = vunpack.c.l.b16 %v12108
      %v12491 = vunpack.c.h.b16 %v12108
      %v12492 = vunpack.c.l.b16 %v12109
      %v12493 = vunpack.c.h.b16 %v12109
      %v12494 = vunpack.c.l.b16 %v12110
      %v12495 = vunpack.c.h.b16 %v12110
      %v12496 = vunpack.c.l.b16 %v12111
      %v12497 = vunpack.c.h.b16 %v12111
      %v12498 = vunpack.c.l.b16 %v12112
      %v12499 = vunpack.c.h.b16 %v12112
      %v12500 = vunpack.c.l.b16 %v12113
      %v12501 = vunpack.c.h.b16 %v12113
      %v12502 = vunpack.c.l.b16 %v12114
      %v12503 = vunpack.c.h.b16 %v12114
      %v12504 = vunpack.c.l.b16 %v12115
      %v12505 = vunpack.c.h.b16 %v12115
      %v12506 = vpack.c.b16 %v12252, %v12250
      %v12507 = vpack.c.b16 %v12253, %v12251
      %v12508 = vpack.c.b16 %v12256, %v12254
      %v12509 = vpack.c.b16 %v12257, %v12255
      %v12510 = vpack.c.b16 %v12260, %v12258
      %v12511 = vpack.c.b16 %v12261, %v12259
      %v12512 = vpack.c.b16 %v12264, %v12262
      %v12513 = vpack.c.b16 %v12265, %v12263
      %v12514 = vpack.c.b16 %v12268, %v12266
      %v12515 = vpack.c.b16 %v12269, %v12267
      %v12516 = vpack.c.b16 %v12272, %v12270
      %v12517 = vpack.c.b16 %v12273, %v12271
      %v12518 = vpack.c.b16 %v12276, %v12274
      %v12519 = vpack.c.b16 %v12277, %v12275
      %v12520 = vpack.c.b16 %v12280, %v12278
      %v12521 = vpack.c.b16 %v12281, %v12279
      %v12522 = vpack.c.b16 %v12284, %v12282
      %v12523 = vpack.c.b16 %v12285, %v12283
      %v12524 = vpack.c.b16 %v12288, %v12286
      %v12525 = vpack.c.b16 %v12289, %v12287
      %v12526 = vpack.c.b16 %v12292, %v12290
      %v12527 = vpack.c.b16 %v12293, %v12291
      %v12528 = vpack.c.b16 %v12296, %v12294
      %v12529 = vpack.c.b16 %v12297, %v12295
      %v12530 = vpack.c.b16 %v12300, %v12298
      %v12531 = vpack.c.b16 %v12301, %v12299
      %v12532 = vpack.c.b16 %v12304, %v12302
      %v12533 = vpack.c.b16 %v12305, %v12303
      %v12534 = vpack.c.b16 %v12308, %v12306
      %v12535 = vpack.c.b16 %v12309, %v12307
      %v12536 = vpack.c.b16 %v12312, %v12310
      %v12537 = vpack.c.b16 %v12313, %v12311
      %v12538 = vpack.c.b16 %v12316, %v12314
      %v12539 = vpack.c.b16 %v12317, %v12315
      %v12540 = vpack.c.b16 %v12320, %v12318
      %v12541 = vpack.c.b16 %v12321, %v12319
      %v12542 = vpack.c.b16 %v12324, %v12322
      %v12543 = vpack.c.b16 %v12325, %v12323
      %v12544 = vpack.c.b16 %v12328, %v12326
      %v12545 = vpack.c.b16 %v12329, %v12327
      %v12546 = vpack.c.b16 %v12332, %v12330
      %v12547 = vpack.c.b16 %v12333, %v12331
      %v12548 = vpack.c.b16 %v12336, %v12334
      %v12549 = vpack.c.b16 %v12337, %v12335
      %v12550 = vpack.c.b16 %v12340, %v12338
      %v12551 = vpack.c.b16 %v12341, %v12339
      %v12552 = vpack.c.b16 %v12344, %v12342
      %v12553 = vpack.c.b16 %v12345, %v12343
      %v12554 = vpack.c.b16 %v12348, %v12346
      %v12555 = vpack.c.b16 %v12349, %v12347
      %v12556 = vpack.c.b16 %v12352, %v12350
      %v12557 = vpack.c.b16 %v12353, %v12351
      %v12558 = vpack.c.b16 %v12356, %v12354
      %v12559 = vpack.c.b16 %v12357, %v12355
      %v12560 = vpack.c.b16 %v12360, %v12358
      %v12561 = vpack.c.b16 %v12361, %v12359
      %v12562 = vpack.c.b16 %v12364, %v12362
      %v12563 = vpack.c.b16 %v12365, %v12363
      %v12564 = vpack.c.b16 %v12368, %v12366
      %v12565 = vpack.c.b16 %v12369, %v12367
      %v12566 = vpack.c.b16 %v12372, %v12370
      %v12567 = vpack.c.b16 %v12373, %v12371
      %v12568 = vpack.c.b16 %v12376, %v12374
      %v12569 = vpack.c.b16 %v12377, %v12375
      %v12570 = vpack.c.b16 %v12380, %v12378
      %v12571 = vpack.c.b16 %v12381, %v12379
      %v12572 = vpack.c.b16 %v12384, %v12382
      %v12573 = vpack.c.b16 %v12385, %v12383
      %v12574 = vpack.c.b16 %v12388, %v12386
      %v12575 = vpack.c.b16 %v12389, %v12387
      %v12576 = vpack.c.b16 %v12392, %v12390
      %v12577 = vpack.c.b16 %v12393, %v12391
      %v12578 = vpack.c.b16 %v12396, %v12394
      %v12579 = vpack.c.b16 %v12397, %v12395
      %v12580 = vpack.c.b16 %v12400, %v12398
      %v12581 = vpack.c.b16 %v12401, %v12399
      %v12582 = vpack.c.b16 %v12404, %v12402
      %v12583 = vpack.c.b16 %v12405, %v12403
      %v12584 = vpack.c.b16 %v12408, %v12406
      %v12585 = vpack.c.b16 %v12409, %v12407
      %v12586 = vpack.c.b16 %v12412, %v12410
      %v12587 = vpack.c.b16 %v12413, %v12411
      %v12588 = vpack.c.b16 %v12416, %v12414
      %v12589 = vpack.c.b16 %v12417, %v12415
      %v12590 = vpack.c.b16 %v12420, %v12418
      %v12591 = vpack.c.b16 %v12421, %v12419
      %v12592 = vpack.c.b16 %v12424, %v12422
      %v12593 = vpack.c.b16 %v12425, %v12423
      %v12594 = vpack.c.b16 %v12428, %v12426
      %v12595 = vpack.c.b16 %v12429, %v12427
      %v12596 = vpack.c.b16 %v12432, %v12430
      %v12597 = vpack.c.b16 %v12433, %v12431
      %v12598 = vpack.c.b16 %v12436, %v12434
      %v12599 = vpack.c.b16 %v12437, %v12435
      %v12600 = vpack.c.b16 %v12440, %v12438
      %v12601 = vpack.c.b16 %v12441, %v12439
      %v12602 = vpack.c.b16 %v12444, %v12442
      %v12603 = vpack.c.b16 %v12445, %v12443
      %v12604 = vpack.c.b16 %v12448, %v12446
      %v12605 = vpack.c.b16 %v12449, %v12447
      %v12606 = vpack.c.b16 %v12452, %v12450
      %v12607 = vpack.c.b16 %v12453, %v12451
      %v12608 = vpack.c.b16 %v12456, %v12454
      %v12609 = vpack.c.b16 %v12457, %v12455
      %v12610 = vpack.c.b16 %v12460, %v12458
      %v12611 = vpack.c.b16 %v12461, %v12459
      %v12612 = vpack.c.b16 %v12464, %v12462
      %v12613 = vpack.c.b16 %v12465, %v12463
      %v12614 = vpack.c.b16 %v12468, %v12466
      %v12615 = vpack.c.b16 %v12469, %v12467
      %v12616 = vpack.c.b16 %v12472, %v12470
      %v12617 = vpack.c.b16 %v12473, %v12471
      %v12618 = vpack.c.b16 %v12476, %v12474
      %v12619 = vpack.c.b16 %v12477, %v12475
      %v12620 = vpack.c.b16 %v12480, %v12478
      %v12621 = vpack.c.b16 %v12481, %v12479
      %v12622 = vpack.c.b16 %v12484, %v12482
      %v12623 = vpack.c.b16 %v12485, %v12483
      %v12624 = vpack.c.b16 %v12488, %v12486
      %v12625 = vpack.c.b16 %v12489, %v12487
      %v12626 = vpack.c.b16 %v12492, %v12490
      %v12627 = vpack.c.b16 %v12493, %v12491
      %v12628 = vpack.c.b16 %v12496, %v12494
      %v12629 = vpack.c.b16 %v12497, %v12495
      %v12630 = vpack.c.b16 %v12500, %v12498
      %v12631 = vpack.c.b16 %v12501, %v12499
      %v12632 = vpack.c.b16 %v12504, %v12502
      %v12633 = vpack.c.b16 %v12505, %v12503
      %12762 = vmatpush.bf16.msra.mxu0 %v12520
      %12763 = vmatpush.bf16.msra.mxu0 %v12518
      %12764 = vmatpush.bf16.msra.mxu0 %v12516
      %12765 = vmatpush.bf16.msra.mxu0 %v12514
      %12766 = vmatpush.bf16.msra.mxu0 %v12512
      %12767 = vmatpush.bf16.msra.mxu0 %v12510
      %12768 = vmatpush.bf16.msra.mxu0 %v12508
      %12769 = vmatpush.bf16.msra.mxu0 %v12506
      %12770 = vmatmul.bf16.gmra.mxu0 %v11980
      %v12771 = vpop.f32.mrf.mxu0
      %v12772 = vadd.f32 %v12118, %v12771
      %v12773 = vpop.f32.mrf.mxu0
      %12774 = vdwg.mxu0
      %12775 = vmatpush.bf16.msra.mxu0 %v12536
      %12776 = vmatpush.bf16.msra.mxu0 %v12534
      %12777 = vmatpush.bf16.msra.mxu0 %v12532
      %12778 = vmatpush.bf16.msra.mxu0 %v12530
      %12779 = vmatpush.bf16.msra.mxu0 %v12528
      %12780 = vmatpush.bf16.msra.mxu0 %v12526
      %12781 = vmatpush.bf16.msra.mxu0 %v12524
      %12782 = vmatpush.bf16.msra.mxu0 %v12522
      %12783 = vmatmul.bf16.gmra.mxu0 %v11981
      %v12784 = vpop.f32.mrf.mxu0
      %v12785 = vadd.f32 %v12772, %v12784
      %v12786 = vpop.f32.mrf.mxu0
      %12787 = vdwg.mxu0
      %12788 = vmatpush.bf16.msra.mxu0 %v12552
      %12789 = vmatpush.bf16.msra.mxu0 %v12550
      %12790 = vmatpush.bf16.msra.mxu0 %v12548
      %12791 = vmatpush.bf16.msra.mxu0 %v12546
      %12792 = vmatpush.bf16.msra.mxu0 %v12544
      %12793 = vmatpush.bf16.msra.mxu0 %v12542
      %12794 = vmatpush.bf16.msra.mxu0 %v12540
      %12795 = vmatpush.bf16.msra.mxu0 %v12538
      %12796 = vmatmul.bf16.gmra.mxu0 %v11982
      %v12797 = vpop.f32.mrf.mxu0
      %v12798 = vadd.f32 %v12785, %v12797
      %v12799 = vpop.f32.mrf.mxu0
      %12800 = vdwg.mxu0
      %12801 = vmatpush.bf16.msra.mxu0 %v12568
      %12802 = vmatpush.bf16.msra.mxu0 %v12566
      %12803 = vmatpush.bf16.msra.mxu0 %v12564
      %12804 = vmatpush.bf16.msra.mxu0 %v12562
      %12805 = vmatpush.bf16.msra.mxu0 %v12560
      %12806 = vmatpush.bf16.msra.mxu0 %v12558
      %12807 = vmatpush.bf16.msra.mxu0 %v12556
      %12808 = vmatpush.bf16.msra.mxu0 %v12554
      %12809 = vmatmul.bf16.gmra.mxu0 %v11983
      %v12810 = vpop.f32.mrf.mxu0
      %v12811 = vadd.f32 %v12798, %v12810
      %v12812 = vpop.f32.mrf.mxu0
      %12813 = vdwg.mxu0
      %12814 = vmatpush.bf16.msra.mxu0 %v12584
      %12815 = vmatpush.bf16.msra.mxu0 %v12582
      %12816 = vmatpush.bf16.msra.mxu0 %v12580
      %12817 = vmatpush.bf16.msra.mxu0 %v12578
      %12818 = vmatpush.bf16.msra.mxu0 %v12576
      %12819 = vmatpush.bf16.msra.mxu0 %v12574
      %12820 = vmatpush.bf16.msra.mxu0 %v12572
      %12821 = vmatpush.bf16.msra.mxu0 %v12570
      %12822 = vmatmul.bf16.gmra.mxu0 %v11984
      %v12823 = vpop.f32.mrf.mxu0
      %v12824 = vadd.f32 %v12811, %v12823
      %v12825 = vpop.f32.mrf.mxu0
      %12826 = vdwg.mxu0
      %12827 = vmatpush.bf16.msra.mxu0 %v12600
      %12828 = vmatpush.bf16.msra.mxu0 %v12598
      %12829 = vmatpush.bf16.msra.mxu0 %v12596
      %12830 = vmatpush.bf16.msra.mxu0 %v12594
      %12831 = vmatpush.bf16.msra.mxu0 %v12592
      %12832 = vmatpush.bf16.msra.mxu0 %v12590
      %12833 = vmatpush.bf16.msra.mxu0 %v12588
      %12834 = vmatpush.bf16.msra.mxu0 %v12586
      %12835 = vmatmul.bf16.gmra.mxu0 %v11985
      %v12836 = vpop.f32.mrf.mxu0
      %v12837 = vadd.f32 %v12824, %v12836
      %v12838 = vpop.f32.mrf.mxu0
      %12839 = vdwg.mxu0
      %12840 = vmatpush.bf16.msra.mxu0 %v12616
      %12841 = vmatpush.bf16.msra.mxu0 %v12614
      %12842 = vmatpush.bf16.msra.mxu0 %v12612
      %12843 = vmatpush.bf16.msra.mxu0 %v12610
      %12844 = vmatpush.bf16.msra.mxu0 %v12608
      %12845 = vmatpush.bf16.msra.mxu0 %v12606
      %12846 = vmatpush.bf16.msra.mxu0 %v12604
      %12847 = vmatpush.bf16.msra.mxu0 %v12602
      %12848 = vmatmul.bf16.gmra.mxu0 %v11986
      %v12849 = vpop.f32.mrf.mxu0
      %v12850 = vadd.f32 %v12837, %v12849
      %v12851 = vpop.f32.mrf.mxu0
      %12852 = vdwg.mxu0
      %12853 = vmatpush.bf16.msra.mxu0 %v12632
      %12854 = vmatpush.bf16.msra.mxu0 %v12630
      %12855 = vmatpush.bf16.msra.mxu0 %v12628
      %12856 = vmatpush.bf16.msra.mxu0 %v12626
      %12857 = vmatpush.bf16.msra.mxu0 %v12624
      %12858 = vmatpush.bf16.msra.mxu0 %v12622
      %12859 = vmatpush.bf16.msra.mxu0 %v12620
      %12860 = vmatpush.bf16.msra.mxu0 %v12618
      %12861 = vmatmul.bf16.gmra.mxu0 %v11987
      %v12862 = vpop.f32.mrf.mxu0
      %v12863 = vadd.f32 %v12850, %v12862
      %v12864 = vpop.f32.mrf.mxu0
      %12865 = vdwg.mxu0
      %12866 = vmatpush.bf16.msra.mxu0 %v12521
      %12867 = vmatpush.bf16.msra.mxu0 %v12519
      %12868 = vmatpush.bf16.msra.mxu0 %v12517
      %12869 = vmatpush.bf16.msra.mxu0 %v12515
      %12870 = vmatpush.bf16.msra.mxu0 %v12513
      %12871 = vmatpush.bf16.msra.mxu0 %v12511
      %12872 = vmatpush.bf16.msra.mxu0 %v12509
      %12873 = vmatpush.bf16.msra.mxu0 %v12507
      %12874 = vmatmul.bf16.gmra.mxu0 %v11980
      %v12875 = vpop.f32.mrf.mxu0
      %v12876 = vadd.f32 %v12119, %v12875
      %v12877 = vpop.f32.mrf.mxu0
      %12878 = vdwg.mxu0
      %12879 = vmatpush.bf16.msra.mxu0 %v12537
      %12880 = vmatpush.bf16.msra.mxu0 %v12535
      %12881 = vmatpush.bf16.msra.mxu0 %v12533
      %12882 = vmatpush.bf16.msra.mxu0 %v12531
      %12883 = vmatpush.bf16.msra.mxu0 %v12529
      %12884 = vmatpush.bf16.msra.mxu0 %v12527
      %12885 = vmatpush.bf16.msra.mxu0 %v12525
      %12886 = vmatpush.bf16.msra.mxu0 %v12523
      %12887 = vmatmul.bf16.gmra.mxu0 %v11981
      %v12888 = vpop.f32.mrf.mxu0
      %v12889 = vadd.f32 %v12876, %v12888
      %v12890 = vpop.f32.mrf.mxu0
      %12891 = vdwg.mxu0
      %12892 = vmatpush.bf16.msra.mxu0 %v12553
      %12893 = vmatpush.bf16.msra.mxu0 %v12551
      %12894 = vmatpush.bf16.msra.mxu0 %v12549
      %12895 = vmatpush.bf16.msra.mxu0 %v12547
      %12896 = vmatpush.bf16.msra.mxu0 %v12545
      %12897 = vmatpush.bf16.msra.mxu0 %v12543
      %12898 = vmatpush.bf16.msra.mxu0 %v12541
      %12899 = vmatpush.bf16.msra.mxu0 %v12539
      %12900 = vmatmul.bf16.gmra.mxu0 %v11982
      %v12901 = vpop.f32.mrf.mxu0
      %v12902 = vadd.f32 %v12889, %v12901
      %v12903 = vpop.f32.mrf.mxu0
      %12904 = vdwg.mxu0
      %12905 = vmatpush.bf16.msra.mxu0 %v12569
      %12906 = vmatpush.bf16.msra.mxu0 %v12567
      %12907 = vmatpush.bf16.msra.mxu0 %v12565
      %12908 = vmatpush.bf16.msra.mxu0 %v12563
      %12909 = vmatpush.bf16.msra.mxu0 %v12561
      %12910 = vmatpush.bf16.msra.mxu0 %v12559
      %12911 = vmatpush.bf16.msra.mxu0 %v12557
      %12912 = vmatpush.bf16.msra.mxu0 %v12555
      %12913 = vmatmul.bf16.gmra.mxu0 %v11983
      %v12914 = vpop.f32.mrf.mxu0
      %v12915 = vadd.f32 %v12902, %v12914
      %v12916 = vpop.f32.mrf.mxu0
      %12917 = vdwg.mxu0
      %12918 = vmatpush.bf16.msra.mxu0 %v12585
      %12919 = vmatpush.bf16.msra.mxu0 %v12583
      %12920 = vmatpush.bf16.msra.mxu0 %v12581
      %12921 = vmatpush.bf16.msra.mxu0 %v12579
      %12922 = vmatpush.bf16.msra.mxu0 %v12577
      %12923 = vmatpush.bf16.msra.mxu0 %v12575
      %12924 = vmatpush.bf16.msra.mxu0 %v12573
      %12925 = vmatpush.bf16.msra.mxu0 %v12571
      %12926 = vmatmul.bf16.gmra.mxu0 %v11984
      %v12927 = vpop.f32.mrf.mxu0
      %v12928 = vadd.f32 %v12915, %v12927
      %v12929 = vpop.f32.mrf.mxu0
      %12930 = vdwg.mxu0
      %12931 = vmatpush.bf16.msra.mxu0 %v12601
      %12932 = vmatpush.bf16.msra.mxu0 %v12599
      %12933 = vmatpush.bf16.msra.mxu0 %v12597
      %12934 = vmatpush.bf16.msra.mxu0 %v12595
      %12935 = vmatpush.bf16.msra.mxu0 %v12593
      %12936 = vmatpush.bf16.msra.mxu0 %v12591
      %12937 = vmatpush.bf16.msra.mxu0 %v12589
      %12938 = vmatpush.bf16.msra.mxu0 %v12587
      %12939 = vmatmul.bf16.gmra.mxu0 %v11985
      %v12940 = vpop.f32.mrf.mxu0
      %v12941 = vadd.f32 %v12928, %v12940
      %v12942 = vpop.f32.mrf.mxu0
      %12943 = vdwg.mxu0
      %12944 = vmatpush.bf16.msra.mxu0 %v12617
      %12945 = vmatpush.bf16.msra.mxu0 %v12615
      %12946 = vmatpush.bf16.msra.mxu0 %v12613
      %12947 = vmatpush.bf16.msra.mxu0 %v12611
      %12948 = vmatpush.bf16.msra.mxu0 %v12609
      %12949 = vmatpush.bf16.msra.mxu0 %v12607
      %12950 = vmatpush.bf16.msra.mxu0 %v12605
      %12951 = vmatpush.bf16.msra.mxu0 %v12603
      %12952 = vmatmul.bf16.gmra.mxu0 %v11986
      %v12953 = vpop.f32.mrf.mxu0
      %v12954 = vadd.f32 %v12941, %v12953
      %v12955 = vpop.f32.mrf.mxu0
      %12956 = vdwg.mxu0
      %12957 = vmatpush.bf16.msra.mxu0 %v12633
      %12958 = vmatpush.bf16.msra.mxu0 %v12631
      %12959 = vmatpush.bf16.msra.mxu0 %v12629
      %12960 = vmatpush.bf16.msra.mxu0 %v12627
      %12961 = vmatpush.bf16.msra.mxu0 %v12625
      %12962 = vmatpush.bf16.msra.mxu0 %v12623
      %12963 = vmatpush.bf16.msra.mxu0 %v12621
      %12964 = vmatpush.bf16.msra.mxu0 %v12619
      %12965 = vmatmul.bf16.gmra.mxu0 %v11987
      %v12966 = vpop.f32.mrf.mxu0
      %v12967 = vadd.f32 %v12954, %v12966
      %v12968 = vpop.f32.mrf.mxu0
      %12969 = vdwg.mxu0
      %v12970 = vmax.f32 %v12863, 0.0
      %v12971 = vmax.f32 %v12967, 0.0
      %v12972 = vpack.c.bf16 %v12970, %v12970
      %v12973 = vpack.c.bf16 %v12971, %v12971
      %v12974 = vld [vmem:[#allocation11] sm:$0xf]
      %v12975 = vld [vmem:[#allocation11 + $0x4] sm:$0xf]
      %v12976 = vld [vmem:[#allocation11 + $0x8] sm:$0xf]
      %v12977 = vld [vmem:[#allocation11 + $0xc] sm:$0xf]
      %v12978 = vld [vmem:[#allocation11 + $0x10] sm:$0xf]
      %v12979 = vld [vmem:[#allocation11 + $0x14] sm:$0xf]
      %v12980 = vld [vmem:[#allocation11 + $0x18] sm:$0xf]
      %v12981 = vld [vmem:[#allocation11 + $0x1c] sm:$0xf]
      %v12982 = vld [vmem:[#allocation11 + $0x20] sm:$0xf]
      %v12983 = vld [vmem:[#allocation11 + $0x24] sm:$0xf]
      %v12984 = vld [vmem:[#allocation11 + $0x28] sm:$0xf]
      %v12985 = vld [vmem:[#allocation11 + $0x2c] sm:$0xf]
      %v12986 = vld [vmem:[#allocation11 + $0x30] sm:$0xf]
      %v12987 = vld [vmem:[#allocation11 + $0x34] sm:$0xf]
      %v12988 = vld [vmem:[#allocation11 + $0x38] sm:$0xf]
      %v12989 = vld [vmem:[#allocation11 + $0x3c] sm:$0xf]
      %v12990 = vld [vmem:[#allocation11 + $0x40] sm:$0xf]
      %v12991 = vld [vmem:[#allocation11 + $0x44] sm:$0xf]
      %v12992 = vld [vmem:[#allocation11 + $0x48] sm:$0xf]
      %v12993 = vld [vmem:[#allocation11 + $0x4c] sm:$0xf]
      %v12994 = vld [vmem:[#allocation11 + $0x50] sm:$0xf]
      %v12995 = vld [vmem:[#allocation11 + $0x54] sm:$0xf]
      %v12996 = vld [vmem:[#allocation11 + $0x58] sm:$0xf]
      %v12997 = vld [vmem:[#allocation11 + $0x5c] sm:$0xf]
      %v12998 = vld [vmem:[#allocation11 + $0x60] sm:$0xf]
      %v12999 = vld [vmem:[#allocation11 + $0x64] sm:$0xf]
      %v13000 = vld [vmem:[#allocation11 + $0x68] sm:$0xf]
      %v13001 = vld [vmem:[#allocation11 + $0x6c] sm:$0xf]
      %v13002 = vld [vmem:[#allocation11 + $0x70] sm:$0xf]
      %v13003 = vld [vmem:[#allocation11 + $0x74] sm:$0xf]
      %v13004 = vld [vmem:[#allocation11 + $0x78] sm:$0xf]
      %v13005 = vld [vmem:[#allocation11 + $0x7c] sm:$0xf]
      %v13006 = vld [vmem:[#allocation13] sm:$0x1]
      %v13008 = vperm.slane %v13006, 0
      %v13042 = vunpack.c.l.b16 %v12974
      %v13043 = vunpack.c.l.b16 %v12975
      %v13044 = vunpack.c.l.b16 %v12976
      %v13045 = vunpack.c.l.b16 %v12977
      %v13046 = vunpack.c.l.b16 %v12978
      %v13047 = vunpack.c.l.b16 %v12979
      %v13048 = vunpack.c.l.b16 %v12980
      %v13049 = vunpack.c.l.b16 %v12981
      %v13050 = vunpack.c.l.b16 %v12982
      %v13051 = vunpack.c.l.b16 %v12983
      %v13052 = vunpack.c.l.b16 %v12984
      %v13053 = vunpack.c.l.b16 %v12985
      %v13054 = vunpack.c.l.b16 %v12986
      %v13055 = vunpack.c.l.b16 %v12987
      %v13056 = vunpack.c.l.b16 %v12988
      %v13057 = vunpack.c.l.b16 %v12989
      %v13058 = vunpack.c.l.b16 %v12990
      %v13059 = vunpack.c.l.b16 %v12991
      %v13060 = vunpack.c.l.b16 %v12992
      %v13061 = vunpack.c.l.b16 %v12993
      %v13062 = vunpack.c.l.b16 %v12994
      %v13063 = vunpack.c.l.b16 %v12995
      %v13064 = vunpack.c.l.b16 %v12996
      %v13065 = vunpack.c.l.b16 %v12997
      %v13066 = vunpack.c.l.b16 %v12998
      %v13067 = vunpack.c.l.b16 %v12999
      %v13068 = vunpack.c.l.b16 %v13000
      %v13069 = vunpack.c.l.b16 %v13001
      %v13070 = vunpack.c.l.b16 %v13002
      %v13071 = vunpack.c.l.b16 %v13003
      %v13072 = vunpack.c.l.b16 %v13004
      %v13073 = vunpack.c.l.b16 %v13005
      %v13074 = vpack.c.b16 %v13043, %v13042
      %v13075 = vpack.c.b16 %v13045, %v13044
      %v13076 = vpack.c.b16 %v13047, %v13046
      %v13077 = vpack.c.b16 %v13049, %v13048
      %v13078 = vpack.c.b16 %v13051, %v13050
      %v13079 = vpack.c.b16 %v13053, %v13052
      %v13080 = vpack.c.b16 %v13055, %v13054
      %v13081 = vpack.c.b16 %v13057, %v13056
      %v13082 = vpack.c.b16 %v13059, %v13058
      %v13083 = vpack.c.b16 %v13061, %v13060
      %v13084 = vpack.c.b16 %v13063, %v13062
      %v13085 = vpack.c.b16 %v13065, %v13064
      %v13086 = vpack.c.b16 %v13067, %v13066
      %v13087 = vpack.c.b16 %v13069, %v13068
      %v13088 = vpack.c.b16 %v13071, %v13070
      %v13089 = vpack.c.b16 %v13073, %v13072
      %13106 = vmatpush.bf16.msra.mxu0 %v13081
      %13107 = vmatpush.bf16.msra.mxu0 %v13080
      %13108 = vmatpush.bf16.msra.mxu0 %v13079
      %13109 = vmatpush.bf16.msra.mxu0 %v13078
      %13110 = vmatpush.bf16.msra.mxu0 %v13077
      %13111 = vmatpush.bf16.msra.mxu0 %v13076
      %13112 = vmatpush.bf16.msra.mxu0 %v13075
      %13113 = vmatpush.bf16.msra.mxu0 %v13074
      %13114 = vmatmul.bf16.gmra.mxu0 %v12972
      %v13115 = vpop.f32.mrf.mxu0
      %v13116 = vadd.f32 %v13008, %v13115
      %v13117 = vpop.f32.mrf.mxu0
      %13118 = vdwg.mxu0
      %13119 = vmatpush.bf16.msra.mxu0 %v13089
      %13120 = vmatpush.bf16.msra.mxu0 %v13088
      %13121 = vmatpush.bf16.msra.mxu0 %v13087
      %13122 = vmatpush.bf16.msra.mxu0 %v13086
      %13123 = vmatpush.bf16.msra.mxu0 %v13085
      %13124 = vmatpush.bf16.msra.mxu0 %v13084
      %13125 = vmatpush.bf16.msra.mxu0 %v13083
      %13126 = vmatpush.bf16.msra.mxu0 %v13082
      %13127 = vmatmul.bf16.gmra.mxu0 %v12973
      %v13128 = vpop.f32.mrf.mxu0
      %v13129 = vadd.f32 %v13116, %v13128
      %v13130 = vpop.f32.mrf.mxu0
      %13131 = vdwg.mxu0
      %13132 = vst [vmem:[#allocation15] sm:$0xff] %v13129
    $region65: #{tpu_custom_call.1} parent=1 // pred_fallthru
      _
    // Predicated region
    $region66: #{tpu_custom_call.1} parent=1 // pred_check
      _
    $region67: #{tpu_custom_call.1} parent=1 // pred_check_branch
      %13134 = sbr.rel (0) target = $region69
    $region68: #{tpu_custom_call.1} parent=1 // pred_region
      %13136 = vsyncadd [#allocation4], 0
      %s13138 = sshll.u32 [#allocation14], 4
      %s13139 = int_to_ptr.vmem [resolvable:$true] %s13138
      %s13140 = sshll.u32 %s7, 4
      %s13141 = int_to_ptr.hbm [resolvable:$true] %s13140
      %13143 = dma.vmem_to_hbm [thread:$0]  %s13139, 1024, %s13141, [#allocation4]
    $region69: #{tpu_custom_call.1} parent=1 // pred_fallthru
      _
    // Predicated region
    $region70: #{tpu_custom_call.1} parent=1 // pred_check
      _
    $region71: #{tpu_custom_call.1} parent=1 // pred_check_branch
      %13145 = sbr.rel (0) target = $region73
    $region72: #{tpu_custom_call.1} parent=1 // pred_region
      %13147 = vsyncadd [#allocation16], 0
      %s13149 = sshll.u32 [#allocation15], 4
      %s13150 = int_to_ptr.vmem [resolvable:$true] %s13149
      %s13151 = sshll.u32 %s8, 4
      %s13152 = int_to_ptr.hbm [resolvable:$true] %s13151
      %13154 = dma.vmem_to_hbm [thread:$0]  %s13150, 128, %s13152, [#allocation16]
    $region73: #{tpu_custom_call.1} parent=1 // pred_fallthru
      _
    // Predicated region
    $region74: #{tpu_custom_call.1} parent=1 // pred_check
      _
    $region75: #{tpu_custom_call.1} parent=1 // pred_check_branch
      %13156 = sbr.rel (0) target = $region77
    $region76: #{tpu_custom_call.1} parent=1 // pred_region
      %13158 = dma.done [#allocation4], 1024
    $region77: #{tpu_custom_call.1} parent=1 // pred_fallthru
      _
    // Predicated region
    $region78: #{tpu_custom_call.1} parent=1 // pred_check
      _
    $region79: #{tpu_custom_call.1} parent=1 // pred_check_branch
      %13160 = sbr.rel (0) target = $region81
    $region80: #{tpu_custom_call.1} parent=1 // pred_region
      %13162 = dma.done [#allocation16], 128
    $region81: #{tpu_custom_call.1} parent=1 // pred_fallthru
      _
    %13163 = vsyncpa [#allocation3], 1
    %13164 = vsyncpa [#allocation6], 1
    %13165 = vsyncpa [#allocation9], 1
    %13166 = vsyncpa [#allocation12], 1
    %13167 = vsyncpa [#allocation4], 1
    %13168 = vsyncpa [#allocation16], 1

</llo_original>
